<compile_context>
chip_gen: v5e
topology: v5e:2x2
jax: 0.10.0
libtpu: 0.0.40
codegen_flags: <defaults>
</compile_context>

<pallas_src>
import math

import numpy as np
import jax
import jax.numpy as jnp
from jax.experimental import pallas as pl
from jax.experimental.pallas import tpu as pltpu  # noqa: F401  (TPU backend)

# ----------------------------- configuration -------------------------------
B = 2            # batch
C = 3            # image channels
IMG = 16         # spatial size
PATCH = 4        # patch size
HIDDEN = 32      # hidden dim
HEADS = 4
HEAD_DIM = HIDDEN // HEADS
MLP = 64         # mlp dim
LAYERS = 2       # encoder blocks
N_PATCH = (IMG // PATCH) ** 2          # 16
SEQ = N_PATCH + 1                      # 17 (class token + patches)
CPP = C * PATCH * PATCH                # flattened patch size (48)
LN_EPS = 1e-6
DTYPE = jnp.float32


# --------------------------- fused Pallas kernel ----------------------------
def _vit_fused_kernel(
    patches_ref,            # (B, SEQ, CPP)   row 0 of each batch = zeros (class slot)
    patch_w_ref,            # (CPP, HIDDEN)
    pos_ref,                # (SEQ, HIDDEN)   pos + conv bias; row 0 = cls + pos[0]
    ln1_g_ref, ln1_b_ref,   # (LAYERS, 1, HIDDEN)
    wqkv_ref, bqkv_ref,     # (LAYERS, HIDDEN, 3H), (LAYERS, 1, 3H)
    wo_ref, bo_ref,         # (LAYERS, HIDDEN, HIDDEN), (LAYERS, 1, HIDDEN)
    ln2_g_ref, ln2_b_ref,   # (LAYERS, 1, HIDDEN)
    w1_ref, b1_ref,         # (LAYERS, HIDDEN, MLP), (LAYERS, 1, MLP)
    w2_ref, b2_ref,         # (LAYERS, MLP, HIDDEN), (LAYERS, 1, HIDDEN)
    lnf_g_ref, lnf_b_ref,   # (1, HIDDEN)
    q_sel_ref,              # (HEADS, 3H, HEAD_DIM)  (1/sqrt(dh) folded in)
    k_sel_ref,              # (HEADS, 3H, HEAD_DIM)
    v_sel_ref,              # (HEADS, 3H, HEAD_DIM)
    merge_ref,              # (HEADS, HEAD_DIM, HIDDEN)
    o_ref,                  # (B, HIDDEN)
):
    patch_w = patch_w_ref[...]
    pos_all = pos_ref[...]

    def layer_norm(x, gamma, beta):
        # one-pass statistics: var = E[x^2] - mean^2
        mean = jnp.mean(x, axis=-1, keepdims=True)
        var = jnp.mean(x * x, axis=-1, keepdims=True) - mean * mean
        return (x - mean) * jax.lax.rsqrt(var + LN_EPS) * gamma + beta

    for bi in range(B):
        # --- patch embedding + class token + positional embedding (fused) ---
        # row 0 of patches is zeros, so h[0] = pos_all[0] = cls + pos[0];
        # rows 1.. get patch@W + (pos + conv_bias).
        h = jnp.dot(patches_ref[bi], patch_w,
                    preferred_element_type=jnp.float32) + pos_all      # (SEQ, H)

        # --- transformer encoder blocks (pre-LN, as in torchvision ViT) ---
        for l in range(LAYERS):
            # LN1 fused into the merged QKV projection
            y = layer_norm(h, ln1_g_ref[l], ln1_b_ref[l])
            qkv = jnp.dot(y, wqkv_ref[l],
                          preferred_element_type=jnp.float32) + bqkv_ref[l]  # (SEQ, 3H)

            attn = None
            for head in range(HEADS):
                # head extraction via constant selection matrices (MXU dots);
                # the 1/sqrt(head_dim) scale is folded into q_sel.
                qh = jnp.dot(qkv, q_sel_ref[head],
                             preferred_element_type=jnp.float32)       # (SEQ, DH)
                kh = jnp.dot(qkv, k_sel_ref[head],
                             preferred_element_type=jnp.float32)
                vh = jnp.dot(qkv, v_sel_ref[head],
                             preferred_element_type=jnp.float32)
                # scores = qh @ kh^T  (contract last dims, no explicit transpose)
                s = jax.lax.dot_general(qh, kh, (((1,), (1,)), ((), ())),
                                        preferred_element_type=jnp.float32)  # (SEQ, SEQ)
                s = s - jnp.max(s, axis=-1, keepdims=True)
                p = jnp.exp(s)
                p = p * pl.reciprocal(jnp.sum(p, axis=-1, keepdims=True),
                                      approx=True)
                oh = jnp.dot(p, vh, preferred_element_type=jnp.float32)      # (SEQ, DH)
                contrib = jnp.dot(oh, merge_ref[head],
                                  preferred_element_type=jnp.float32)        # (SEQ, H)
                attn = contrib if attn is None else attn + contrib

            attn = jnp.dot(attn, wo_ref[l],
                           preferred_element_type=jnp.float32) + bo_ref[l]
            h = h + attn

            # LN2 fused into the MLP
            y = layer_norm(h, ln2_g_ref[l], ln2_b_ref[l])
            m = jnp.dot(y, w1_ref[l],
                        preferred_element_type=jnp.float32) + b1_ref[l]
            # TODO(synk): PyTorch nn.GELU default is the exact erf-GELU; the tanh
            # approximation is used here for robust TPU (EUP) lowering.
            m = jax.nn.gelu(m, approximate=True)
            m = jnp.dot(m, w2_ref[l],
                        preferred_element_type=jnp.float32) + b2_ref[l]
            h = h + m

        # --- final encoder LayerNorm, emit class-token row ---
        h = layer_norm(h, lnf_g_ref[...], lnf_b_ref[...])
        o_ref[bi:bi + 1, :] = h[0:1, :].astype(o_ref.dtype)


# ------------------------------- parameters ---------------------------------
def init_params(key):
    def nrm(k, shape, scale=0.02):
        return (scale * jax.random.normal(k, shape)).astype(DTYPE)

    keys = jax.random.split(key, 8 + LAYERS)
    params = {
        # conv_proj rewritten as a (C*P*P, D) matmul; flatten order (c, kh, kw)
        "patch_w": nrm(keys[0], (CPP, HIDDEN)),
        "patch_b": jnp.zeros((HIDDEN,), DTYPE),
        "class_token": nrm(keys[1], (1, 1, HIDDEN)),
        "pos_emb": nrm(keys[2], (1, SEQ, HIDDEN)),
        "lnf_g": jnp.ones((HIDDEN,), DTYPE),
        "lnf_b": jnp.zeros((HIDDEN,), DTYPE),
        "layers": [],
    }
    for l in range(LAYERS):
        lk = jax.random.split(keys[8 + l], 8)
        params["layers"].append({
            "ln1_g": jnp.ones((HIDDEN,), DTYPE), "ln1_b": jnp.zeros((HIDDEN,), DTYPE),
            "wq": nrm(lk[0], (HIDDEN, HIDDEN)), "bq": jnp.zeros((HIDDEN,), DTYPE),
            "wk": nrm(lk[1], (HIDDEN, HIDDEN)), "bk": jnp.zeros((HIDDEN,), DTYPE),
            "wv": nrm(lk[2], (HIDDEN, HIDDEN)), "bv": jnp.zeros((HIDDEN,), DTYPE),
            "wo": nrm(lk[3], (HIDDEN, HIDDEN)), "bo": jnp.zeros((HIDDEN,), DTYPE),
            "ln2_g": jnp.ones((HIDDEN,), DTYPE), "ln2_b": jnp.zeros((HIDDEN,), DTYPE),
            "w1": nrm(lk[4], (HIDDEN, MLP)), "b1": jnp.zeros((MLP,), DTYPE),
            "w2": nrm(lk[5], (MLP, HIDDEN)), "b2": jnp.zeros((HIDDEN,), DTYPE),
        })
    return params


def pack_params(params):
    """Stack / merge parameters into the operand layout of the fused kernel."""
    L = params["layers"]

    def stack_vec(name, dim):
        return jnp.stack([l[name].reshape(1, dim) for l in L])    # (LAYERS, 1, dim)

    kp = {
        "patch_w": params["patch_w"],
        "ln1_g": stack_vec("ln1_g", HIDDEN), "ln1_b": stack_vec("ln1_b", HIDDEN),
        "ln2_g": stack_vec("ln2_g", HIDDEN), "ln2_b": stack_vec("ln2_b", HIDDEN),
        "wqkv": jnp.stack([jnp.concatenate([l["wq"], l["wk"], l["wv"]], axis=1)
                           for l in L]),                           # (LAYERS, H, 3H)
        "bqkv": jnp.stack([jnp.concatenate([l["bq"], l["bk"], l["bv"]]).reshape(1, 3 * HIDDEN)
                           for l in L]),                           # (LAYERS, 1, 3H)
        "wo": jnp.stack([l["wo"] for l in L]),
        "bo": stack_vec("bo", HIDDEN),
        "w1": jnp.stack([l["w1"] for l in L]),
        "b1": stack_vec("b1", MLP),
        "w2": jnp.stack([l["w2"] for l in L]),
        "b2": stack_vec("b2", HIDDEN),
        "lnf_g": params["lnf_g"].reshape(1, HIDDEN),
        "lnf_b": params["lnf_b"].reshape(1, HIDDEN),
    }

    # class token + positional embedding + conv bias folded into one additive
    # table (the kernel adds it right after the patch matmul; row 0 pairs with
    # the zero "class slot" row of the padded patches).
    pos = params["pos_emb"][0]                        # (SEQ, HIDDEN)
    cls = params["class_token"][0, 0]                 # (HIDDEN,)
    pos_all = pos + params["patch_b"][None, :]
    pos_all = pos_all.at[0].set(pos[0] + cls)
    kp["pos_all"] = pos_all

    # per-head selection / merge matrices; 1/sqrt(head_dim) folded into q_sel
    scale = 1.0 / math.sqrt(HEAD_DIM)
    q_sel = np.zeros((HEADS, 3 * HIDDEN, HEAD_DIM), np.float32)
    k_sel = np.zeros((HEADS, 3 * HIDDEN, HEAD_DIM), np.float32)
    v_sel = np.zeros((HEADS, 3 * HIDDEN, HEAD_DIM), np.float32)
    h_merge = np.zeros((HEADS, HEAD_DIM, HIDDEN), np.float32)
    for h in range(HEADS):
        for d in range(HEAD_DIM):
            col = h * HEAD_DIM + d
            q_sel[h, 0 * HIDDEN + col, d] = scale
            k_sel[h, 1 * HIDDEN + col, d] = 1.0
            v_sel[h, 2 * HIDDEN + col, d] = 1.0
            h_merge[h, d, col] = 1.0
    kp["q_sel"] = jnp.asarray(q_sel)
    kp["k_sel"] = jnp.asarray(k_sel)
    kp["v_sel"] = jnp.asarray(v_sel)
    kp["h_merge"] = jnp.asarray(h_merge)
    return kp


# ------------------------------- forward pass -------------------------------
def patchify(x):
    """NCHW image -> (B, num_patches, C*P*P); patch order row-major (h, w),
    per-patch flatten order (c, kh, kw) to match the conv-weight layout."""
    b, c, hh, ww = x.shape
    nh, nw = hh // PATCH, ww // PATCH
    x = x.reshape(b, c, nh, PATCH, nw, PATCH)
    x = x.transpose(0, 2, 4, 1, 3, 5)                 # (B, nh, nw, C, P, P)
    return x.reshape(b, nh * nw, c * PATCH * PATCH)


@jax.jit
def vit_image_encoder_forward(x, kp):
    patches = patchify(x)                                      # (B, N_PATCH, CPP)
    patches_aug = jnp.pad(patches, ((0, 0), (1, 0), (0, 0)))   # zero class-slot row
    return pl.pallas_call(
        _vit_fused_kernel,
        out_shape=jax.ShapeDtypeStruct((B, HIDDEN), DTYPE),
    )(
        patches_aug,
        kp["patch_w"], kp["pos_all"],
        kp["ln1_g"], kp["ln1_b"],
        kp["wqkv"], kp["bqkv"],
        kp["wo"], kp["bo"],
        kp["ln2_g"], kp["ln2_b"],
        kp["w1"], kp["b1"],
        kp["w2"], kp["b2"],
        kp["lnf_g"], kp["lnf_b"],
        kp["q_sel"], kp["k_sel"], kp["v_sel"], kp["h_merge"],
    )


# --------------------------- pure-JAX reference ------------------------------
def _ln_ref(x, g, b):
    mean = jnp.mean(x, axis=-1, keepdims=True)
    var = jnp.mean((x - mean) ** 2, axis=-1, keepdims=True)
    return (x - mean) * jax.lax.rsqrt(var + LN_EPS) * g + b


def vit_reference(x, params):
    patches = patchify(x)
    tok = patches @ params["patch_w"] + params["patch_b"]      # (B, N_PATCH, H)
    cls = jnp.broadcast_to(params["class_token"], (B, 1, HIDDEN))
    h = jnp.concatenate([cls, tok], axis=1) + params["pos_emb"]
    for l in range(LAYERS):
        p = params["layers"][l]
        y = _ln_ref(h, p["ln1_g"], p["ln1_b"])
        q = (y @ p["wq"] + p["bq"]).reshape(B, SEQ, HEADS, HEAD_DIM).transpose(0, 2, 1, 3)
        k = (y @ p["wk"] + p["bk"]).reshape(B, SEQ, HEADS, HEAD_DIM).transpose(0, 2, 1, 3)
        v = (y @ p["wv"] + p["bv"]).reshape(B, SEQ, HEADS, HEAD_DIM).transpose(0, 2, 1, 3)
        s = jnp.einsum("bhqd,bhkd->bhqk", q, k) / math.sqrt(HEAD_DIM)
        a = jax.nn.softmax(s, axis=-1)
        o = jnp.einsum("bhqk,bhkd->bhqd", a, v).transpose(0, 2, 1, 3).reshape(B, SEQ, HIDDEN)
        h = h + (o @ p["wo"] + p["bo"])
        y = _ln_ref(h, p["ln2_g"], p["ln2_b"])
        m = jax.nn.gelu(y @ p["w1"] + p["b1"], approximate=True)
        h = h + (m @ p["w2"] + p["b2"])
    h = _ln_ref(h, params["lnf_g"], params["lnf_b"])
    return h[:, 0]


# ----------------------------------- main ------------------------------------
if __name__ == "__main__":
    key = jax.random.PRNGKey(0)
    k_x, k_p = jax.random.split(key)
    x = jax.random.normal(k_x, (B, C, IMG, IMG), dtype=DTYPE)   # NCHW like PyTorch
    params = init_params(k_p)
    kp = pack_params(params)

    out = vit_image_encoder_forward(x, kp)
    out = jax.block_until_ready(out)

    assert out.shape == (B, HIDDEN) and out.dtype == DTYPE
    assert bool(jnp.all(jnp.isfinite(out)))

    ref = vit_reference(x, params)
    max_err = float(jnp.max(jnp.abs(out - ref)))
    assert bool(jnp.allclose(out, ref, rtol=2e-2, atol=2e-2)), max_err

    print("KERNEL_OK")
</pallas_src>

<mosaic_0001>
module attributes {stable_mosaic.version = 11 : i64} {
  func.func @_vit_fused_kernel(%arg0: memref<2x17x48xf32, #tpu.memory_space<vmem>>, %arg1: memref<48x32xf32, #tpu.memory_space<vmem>>, %arg2: memref<17x32xf32, #tpu.memory_space<vmem>>, %arg3: memref<2x1x32xf32, #tpu.memory_space<vmem>>, %arg4: memref<2x1x32xf32, #tpu.memory_space<vmem>>, %arg5: memref<2x32x96xf32, #tpu.memory_space<vmem>>, %arg6: memref<2x1x96xf32, #tpu.memory_space<vmem>>, %arg7: memref<2x32x32xf32, #tpu.memory_space<vmem>>, %arg8: memref<2x1x32xf32, #tpu.memory_space<vmem>>, %arg9: memref<2x1x32xf32, #tpu.memory_space<vmem>>, %arg10: memref<2x1x32xf32, #tpu.memory_space<vmem>>, %arg11: memref<2x32x64xf32, #tpu.memory_space<vmem>>, %arg12: memref<2x1x64xf32, #tpu.memory_space<vmem>>, %arg13: memref<2x64x32xf32, #tpu.memory_space<vmem>>, %arg14: memref<2x1x32xf32, #tpu.memory_space<vmem>>, %arg15: memref<1x32xf32, #tpu.memory_space<vmem>>, %arg16: memref<1x32xf32, #tpu.memory_space<vmem>>, %arg17: memref<4x96x8xf32, #tpu.memory_space<vmem>>, %arg18: memref<4x96x8xf32, #tpu.memory_space<vmem>>, %arg19: memref<4x96x8xf32, #tpu.memory_space<vmem>>, %arg20: memref<4x8x32xf32, #tpu.memory_space<vmem>>, %arg21: memref<2x32xf32, #tpu.memory_space<vmem>>) attributes {dimension_semantics = [], scalar_prefetch = 0 : i64, scratch_operands = 0 : i64, tpu.core_type = #tpu.core_type<tc>} {
    %c0 = arith.constant 0 : index
    %c0_0 = arith.constant 0 : index
    %0 = vector.load %arg1[%c0, %c0_0] : memref<48x32xf32, #tpu.memory_space<vmem>>, vector<48x32xf32>
    %c0_1 = arith.constant 0 : index
    %c0_2 = arith.constant 0 : index
    %1 = vector.load %arg2[%c0_1, %c0_2] : memref<17x32xf32, #tpu.memory_space<vmem>>, vector<17x32xf32>
    %c0_3 = arith.constant 0 : index
    %c0_4 = arith.constant 0 : index
    %c0_5 = arith.constant 0 : index
    %2 = vector.load %arg0[%c0_3, %c0_4, %c0_5] : memref<2x17x48xf32, #tpu.memory_space<vmem>>, vector<1x17x48xf32>
    %3 = vector.shape_cast %2 : vector<1x17x48xf32> to vector<17x48xf32>
    %cst = arith.constant dense<0.000000e+00> : vector<17x32xf32>
    %4 = tpu.matmul %3, %0, %cst {dimension_numbers = #tpu.dot_dimension_numbers<[1], [0], [0], [1], [0, 0, 1, 1], [], []>} : vector<17x48xf32>, vector<48x32xf32>, vector<17x32xf32> -> vector<17x32xf32>
    %5 = arith.addf %4, %1 : vector<17x32xf32>
    %c0_6 = arith.constant 0 : index
    %c0_7 = arith.constant 0 : index
    %c0_8 = arith.constant 0 : index
    %6 = vector.load %arg3[%c0_6, %c0_7, %c0_8] : memref<2x1x32xf32, #tpu.memory_space<vmem>>, vector<1x1x32xf32>
    %7 = vector.shape_cast %6 : vector<1x1x32xf32> to vector<1x32xf32>
    %c0_9 = arith.constant 0 : index
    %c0_10 = arith.constant 0 : index
    %c0_11 = arith.constant 0 : index
    %8 = vector.load %arg4[%c0_9, %c0_10, %c0_11] : memref<2x1x32xf32, #tpu.memory_space<vmem>>, vector<1x1x32xf32>
    %9 = vector.shape_cast %8 : vector<1x1x32xf32> to vector<1x32xf32>
    %cst_12 = arith.constant dense<0.000000e+00> : vector<17xf32>
    %10 = vector.multi_reduction <add>, %5, %cst_12 [1] : vector<17x32xf32> to vector<17xf32>
    %11 = vector.shape_cast %10 : vector<17xf32> to vector<17x1xf32>
    %cst_13 = arith.constant 3.200000e+01 : f32
    %12 = vector.broadcast %cst_13 : f32 to vector<17x1xf32>
    %13 = arith.divf %11, %12 : vector<17x1xf32>
    %14 = arith.mulf %5, %5 : vector<17x32xf32>
    %cst_14 = arith.constant dense<0.000000e+00> : vector<17xf32>
    %15 = vector.multi_reduction <add>, %14, %cst_14 [1] : vector<17x32xf32> to vector<17xf32>
    %16 = vector.shape_cast %15 : vector<17xf32> to vector<17x1xf32>
    %cst_15 = arith.constant 3.200000e+01 : f32
    %17 = vector.broadcast %cst_15 : f32 to vector<17x1xf32>
    %18 = arith.divf %16, %17 : vector<17x1xf32>
    %19 = arith.mulf %13, %13 : vector<17x1xf32>
    %20 = arith.subf %18, %19 : vector<17x1xf32>
    %21 = vector.broadcast %13 : vector<17x1xf32> to vector<17x32xf32>
    %22 = arith.subf %5, %21 : vector<17x32xf32>
    %cst_16 = arith.constant 9.99999997E-7 : f32
    %23 = vector.broadcast %cst_16 : f32 to vector<17x1xf32>
    %24 = arith.addf %20, %23 : vector<17x1xf32>
    %25 = math.rsqrt %24 : vector<17x1xf32>
    %26 = vector.broadcast %25 : vector<17x1xf32> to vector<17x32xf32>
    %27 = arith.mulf %22, %26 : vector<17x32xf32>
    %28 = vector.broadcast %7 : vector<1x32xf32> to vector<17x32xf32>
    %29 = arith.mulf %27, %28 : vector<17x32xf32>
    %30 = vector.broadcast %9 : vector<1x32xf32> to vector<17x32xf32>
    %31 = arith.addf %29, %30 : vector<17x32xf32>
    %c0_17 = arith.constant 0 : index
    %c0_18 = arith.constant 0 : index
    %c0_19 = arith.constant 0 : index
    %32 = vector.load %arg5[%c0_17, %c0_18, %c0_19] : memref<2x32x96xf32, #tpu.memory_space<vmem>>, vector<1x32x96xf32>
    %33 = vector.shape_cast %32 : vector<1x32x96xf32> to vector<32x96xf32>
    %cst_20 = arith.constant dense<0.000000e+00> : vector<17x96xf32>
    %34 = tpu.matmul %31, %33, %cst_20 {dimension_numbers = #tpu.dot_dimension_numbers<[1], [0], [0], [1], [0, 0, 1, 1], [], []>} : vector<17x32xf32>, vector<32x96xf32>, vector<17x96xf32> -> vector<17x96xf32>
    %c0_21 = arith.constant 0 : index
    %c0_22 = arith.constant 0 : index
    %c0_23 = arith.constant 0 : index
    %35 = vector.load %arg6[%c0_21, %c0_22, %c0_23] : memref<2x1x96xf32, #tpu.memory_space<vmem>>, vector<1x1x96xf32>
    %36 = vector.shape_cast %35 : vector<1x1x96xf32> to vector<1x96xf32>
    %37 = vector.broadcast %36 : vector<1x96xf32> to vector<17x96xf32>
    %38 = arith.addf %34, %37 : vector<17x96xf32>
    %c0_24 = arith.constant 0 : index
    %c0_25 = arith.constant 0 : index
    %c0_26 = arith.constant 0 : index
    %39 = vector.load %arg17[%c0_24, %c0_25, %c0_26] : memref<4x96x8xf32, #tpu.memory_space<vmem>>, vector<1x96x8xf32>
    %40 = vector.shape_cast %39 : vector<1x96x8xf32> to vector<96x8xf32>
    %cst_27 = arith.constant dense<0.000000e+00> : vector<17x8xf32>
    %41 = tpu.matmul %38, %40, %cst_27 {dimension_numbers = #tpu.dot_dimension_numbers<[1], [0], [0], [1], [0, 0, 1, 1], [], []>} : vector<17x96xf32>, vector<96x8xf32>, vector<17x8xf32> -> vector<17x8xf32>
    %c0_28 = arith.constant 0 : index
    %c0_29 = arith.constant 0 : index
    %c0_30 = arith.constant 0 : index
    %42 = vector.load %arg18[%c0_28, %c0_29, %c0_30] : memref<4x96x8xf32, #tpu.memory_space<vmem>>, vector<1x96x8xf32>
    %43 = vector.shape_cast %42 : vector<1x96x8xf32> to vector<96x8xf32>
    %cst_31 = arith.constant dense<0.000000e+00> : vector<17x8xf32>
    %44 = tpu.matmul %38, %43, %cst_31 {dimension_numbers = #tpu.dot_dimension_numbers<[1], [0], [0], [1], [0, 0, 1, 1], [], []>} : vector<17x96xf32>, vector<96x8xf32>, vector<17x8xf32> -> vector<17x8xf32>
    %c0_32 = arith.constant 0 : index
    %c0_33 = arith.constant 0 : index
    %c0_34 = arith.constant 0 : index
    %45 = vector.load %arg19[%c0_32, %c0_33, %c0_34] : memref<4x96x8xf32, #tpu.memory_space<vmem>>, vector<1x96x8xf32>
    %46 = vector.shape_cast %45 : vector<1x96x8xf32> to vector<96x8xf32>
    %cst_35 = arith.constant dense<0.000000e+00> : vector<17x8xf32>
    %47 = tpu.matmul %38, %46, %cst_35 {dimension_numbers = #tpu.dot_dimension_numbers<[1], [0], [0], [1], [0, 0, 1, 1], [], []>} : vector<17x96xf32>, vector<96x8xf32>, vector<17x8xf32> -> vector<17x8xf32>
    %cst_36 = arith.constant dense<0.000000e+00> : vector<17x17xf32>
    %48 = tpu.matmul %41, %44, %cst_36 {dimension_numbers = #tpu.dot_dimension_numbers<[1], [1], [0], [0], [0, 0, 1, 0], [], []>} : vector<17x8xf32>, vector<17x8xf32>, vector<17x17xf32> -> vector<17x17xf32>
    %cst_37 = arith.constant dense<0xFF800000> : vector<17xf32>
    %49 = vector.multi_reduction <maximumf>, %48, %cst_37 [1] : vector<17x17xf32> to vector<17xf32>
    %50 = vector.shape_cast %49 : vector<17xf32> to vector<17x1xf32>
    %51 = vector.broadcast %50 : vector<17x1xf32> to vector<17x17xf32>
    %52 = arith.subf %48, %51 : vector<17x17xf32>
    %53 = math.exp %52 : vector<17x17xf32>
    %cst_38 = arith.constant dense<0.000000e+00> : vector<17xf32>
    %54 = vector.multi_reduction <add>, %53, %cst_38 [1] : vector<17x17xf32> to vector<17xf32>
    %55 = vector.shape_cast %54 : vector<17xf32> to vector<17x1xf32>
    %56 = tpu.reciprocal %55 {approx = true} : vector<17x1xf32> -> vector<17x1xf32>
    %57 = vector.broadcast %56 : vector<17x1xf32> to vector<17x17xf32>
    %58 = arith.mulf %53, %57 : vector<17x17xf32>
    %cst_39 = arith.constant dense<0.000000e+00> : vector<17x8xf32>
    %59 = tpu.matmul %58, %47, %cst_39 {dimension_numbers = #tpu.dot_dimension_numbers<[1], [0], [0], [1], [0, 0, 1, 1], [], []>} : vector<17x17xf32>, vector<17x8xf32>, vector<17x8xf32> -> vector<17x8xf32>
    %c0_40 = arith.constant 0 : index
    %c0_41 = arith.constant 0 : index
    %c0_42 = arith.constant 0 : index
    %60 = vector.load %arg20[%c0_40, %c0_41, %c0_42] : memref<4x8x32xf32, #tpu.memory_space<vmem>>, vector<1x8x32xf32>
    %61 = vector.shape_cast %60 : vector<1x8x32xf32> to vector<8x32xf32>
    %cst_43 = arith.constant dense<0.000000e+00> : vector<17x32xf32>
    %62 = tpu.matmul %59, %61, %cst_43 {dimension_numbers = #tpu.dot_dimension_numbers<[1], [0], [0], [1], [0, 0, 1, 1], [], []>} : vector<17x8xf32>, vector<8x32xf32>, vector<17x32xf32> -> vector<17x32xf32>
    %c1 = arith.constant 1 : index
    %c0_44 = arith.constant 0 : index
    %c0_45 = arith.constant 0 : index
    %63 = vector.load %arg17[%c1, %c0_44, %c0_45] : memref<4x96x8xf32, #tpu.memory_space<vmem>>, vector<1x96x8xf32>
    %64 = vector.shape_cast %63 : vector<1x96x8xf32> to vector<96x8xf32>
    %cst_46 = arith.constant dense<0.000000e+00> : vector<17x8xf32>
    %65 = tpu.matmul %38, %64, %cst_46 {dimension_numbers = #tpu.dot_dimension_numbers<[1], [0], [0], [1], [0, 0, 1, 1], [], []>} : vector<17x96xf32>, vector<96x8xf32>, vector<17x8xf32> -> vector<17x8xf32>
    %c1_47 = arith.constant 1 : index
    %c0_48 = arith.constant 0 : index
    %c0_49 = arith.constant 0 : index
    %66 = vector.load %arg18[%c1_47, %c0_48, %c0_49] : memref<4x96x8xf32, #tpu.memory_space<vmem>>, vector<1x96x8xf32>
    %67 = vector.shape_cast %66 : vector<1x96x8xf32> to vector<96x8xf32>
    %cst_50 = arith.constant dense<0.000000e+00> : vector<17x8xf32>
    %68 = tpu.matmul %38, %67, %cst_50 {dimension_numbers = #tpu.dot_dimension_numbers<[1], [0], [0], [1], [0, 0, 1, 1], [], []>} : vector<17x96xf32>, vector<96x8xf32>, vector<17x8xf32> -> vector<17x8xf32>
    %c1_51 = arith.constant 1 : index
    %c0_52 = arith.constant 0 : index
    %c0_53 = arith.constant 0 : index
    %69 = vector.load %arg19[%c1_51, %c0_52, %c0_53] : memref<4x96x8xf32, #tpu.memory_space<vmem>>, vector<1x96x8xf32>
    %70 = vector.shape_cast %69 : vector<1x96x8xf32> to vector<96x8xf32>
    %cst_54 = arith.constant dense<0.000000e+00> : vector<17x8xf32>
    %71 = tpu.matmul %38, %70, %cst_54 {dimension_numbers = #tpu.dot_dimension_numbers<[1], [0], [0], [1], [0, 0, 1, 1], [], []>} : vector<17x96xf32>, vector<96x8xf32>, vector<17x8xf32> -> vector<17x8xf32>
    %cst_55 = arith.constant dense<0.000000e+00> : vector<17x17xf32>
    %72 = tpu.matmul %65, %68, %cst_55 {dimension_numbers = #tpu.dot_dimension_numbers<[1], [1], [0], [0], [0, 0, 1, 0], [], []>} : vector<17x8xf32>, vector<17x8xf32>, vector<17x17xf32> -> vector<17x17xf32>
    %cst_56 = arith.constant dense<0xFF800000> : vector<17xf32>
    %73 = vector.multi_reduction <maximumf>, %72, %cst_56 [1] : vector<17x17xf32> to vector<17xf32>
    %74 = vector.shape_cast %73 : vector<17xf32> to vector<17x1xf32>
    %75 = vector.broadcast %74 : vector<17x1xf32> to vector<17x17xf32>
    %76 = arith.subf %72, %75 : vector<17x17xf32>
    %77 = math.exp %76 : vector<17x17xf32>
    %cst_57 = arith.constant dense<0.000000e+00> : vector<17xf32>
    %78 = vector.multi_reduction <add>, %77, %cst_57 [1] : vector<17x17xf32> to vector<17xf32>
    %79 = vector.shape_cast %78 : vector<17xf32> to vector<17x1xf32>
    %80 = tpu.reciprocal %79 {approx = true} : vector<17x1xf32> -> vector<17x1xf32>
    %81 = vector.broadcast %80 : vector<17x1xf32> to vector<17x17xf32>
    %82 = arith.mulf %77, %81 : vector<17x17xf32>
    %cst_58 = arith.constant dense<0.000000e+00> : vector<17x8xf32>
    %83 = tpu.matmul %82, %71, %cst_58 {dimension_numbers = #tpu.dot_dimension_numbers<[1], [0], [0], [1], [0, 0, 1, 1], [], []>} : vector<17x17xf32>, vector<17x8xf32>, vector<17x8xf32> -> vector<17x8xf32>
    %c1_59 = arith.constant 1 : index
    %c0_60 = arith.constant 0 : index
    %c0_61 = arith.constant 0 : index
    %84 = vector.load %arg20[%c1_59, %c0_60, %c0_61] : memref<4x8x32xf32, #tpu.memory_space<vmem>>, vector<1x8x32xf32>
    %85 = vector.shape_cast %84 : vector<1x8x32xf32> to vector<8x32xf32>
    %cst_62 = arith.constant dense<0.000000e+00> : vector<17x32xf32>
    %86 = tpu.matmul %83, %85, %cst_62 {dimension_numbers = #tpu.dot_dimension_numbers<[1], [0], [0], [1], [0, 0, 1, 1], [], []>} : vector<17x8xf32>, vector<8x32xf32>, vector<17x32xf32> -> vector<17x32xf32>
    %87 = arith.addf %62, %86 : vector<17x32xf32>
    %c2 = arith.constant 2 : index
    %c0_63 = arith.constant 0 : index
    %c0_64 = arith.constant 0 : index
    %88 = vector.load %arg17[%c2, %c0_63, %c0_64] : memref<4x96x8xf32, #tpu.memory_space<vmem>>, vector<1x96x8xf32>
    %89 = vector.shape_cast %88 : vector<1x96x8xf32> to vector<96x8xf32>
    %cst_65 = arith.constant dense<0.000000e+00> : vector<17x8xf32>
    %90 = tpu.matmul %38, %89, %cst_65 {dimension_numbers = #tpu.dot_dimension_numbers<[1], [0], [0], [1], [0, 0, 1, 1], [], []>} : vector<17x96xf32>, vector<96x8xf32>, vector<17x8xf32> -> vector<17x8xf32>
    %c2_66 = arith.constant 2 : index
    %c0_67 = arith.constant 0 : index
    %c0_68 = arith.constant 0 : index
    %91 = vector.load %arg18[%c2_66, %c0_67, %c0_68] : memref<4x96x8xf32, #tpu.memory_space<vmem>>, vector<1x96x8xf32>
    %92 = vector.shape_cast %91 : vector<1x96x8xf32> to vector<96x8xf32>
    %cst_69 = arith.constant dense<0.000000e+00> : vector<17x8xf32>
    %93 = tpu.matmul %38, %92, %cst_69 {dimension_numbers = #tpu.dot_dimension_numbers<[1], [0], [0], [1], [0, 0, 1, 1], [], []>} : vector<17x96xf32>, vector<96x8xf32>, vector<17x8xf32> -> vector<17x8xf32>
    %c2_70 = arith.constant 2 : index
    %c0_71 = arith.constant 0 : index
    %c0_72 = arith.constant 0 : index
    %94 = vector.load %arg19[%c2_70, %c0_71, %c0_72] : memref<4x96x8xf32, #tpu.memory_space<vmem>>, vector<1x96x8xf32>
    %95 = vector.shape_cast %94 : vector<1x96x8xf32> to vector<96x8xf32>
    %cst_73 = arith.constant dense<0.000000e+00> : vector<17x8xf32>
    %96 = tpu.matmul %38, %95, %cst_73 {dimension_numbers = #tpu.dot_dimension_numbers<[1], [0], [0], [1], [0, 0, 1, 1], [], []>} : vector<17x96xf32>, vector<96x8xf32>, vector<17x8xf32> -> vector<17x8xf32>
    %cst_74 = arith.constant dense<0.000000e+00> : vector<17x17xf32>
    %97 = tpu.matmul %90, %93, %cst_74 {dimension_numbers = #tpu.dot_dimension_numbers<[1], [1], [0], [0], [0, 0, 1, 0], [], []>} : vector<17x8xf32>, vector<17x8xf32>, vector<17x17xf32> -> vector<17x17xf32>
    %cst_75 = arith.constant dense<0xFF800000> : vector<17xf32>
    %98 = vector.multi_reduction <maximumf>, %97, %cst_75 [1] : vector<17x17xf32> to vector<17xf32>
    %99 = vector.shape_cast %98 : vector<17xf32> to vector<17x1xf32>
    %100 = vector.broadcast %99 : vector<17x1xf32> to vector<17x17xf32>
    %101 = arith.subf %97, %100 : vector<17x17xf32>
    %102 = math.exp %101 : vector<17x17xf32>
    %cst_76 = arith.constant dense<0.000000e+00> : vector<17xf32>
    %103 = vector.multi_reduction <add>, %102, %cst_76 [1] : vector<17x17xf32> to vector<17xf32>
    %104 = vector.shape_cast %103 : vector<17xf32> to vector<17x1xf32>
    %105 = tpu.reciprocal %104 {approx = true} : vector<17x1xf32> -> vector<17x1xf32>
    %106 = vector.broadcast %105 : vector<17x1xf32> to vector<17x17xf32>
    %107 = arith.mulf %102, %106 : vector<17x17xf32>
    %cst_77 = arith.constant dense<0.000000e+00> : vector<17x8xf32>
    %108 = tpu.matmul %107, %96, %cst_77 {dimension_numbers = #tpu.dot_dimension_numbers<[1], [0], [0], [1], [0, 0, 1, 1], [], []>} : vector<17x17xf32>, vector<17x8xf32>, vector<17x8xf32> -> vector<17x8xf32>
    %c2_78 = arith.constant 2 : index
    %c0_79 = arith.constant 0 : index
    %c0_80 = arith.constant 0 : index
    %109 = vector.load %arg20[%c2_78, %c0_79, %c0_80] : memref<4x8x32xf32, #tpu.memory_space<vmem>>, vector<1x8x32xf32>
    %110 = vector.shape_cast %109 : vector<1x8x32xf32> to vector<8x32xf32>
    %cst_81 = arith.constant dense<0.000000e+00> : vector<17x32xf32>
    %111 = tpu.matmul %108, %110, %cst_81 {dimension_numbers = #tpu.dot_dimension_numbers<[1], [0], [0], [1], [0, 0, 1, 1], [], []>} : vector<17x8xf32>, vector<8x32xf32>, vector<17x32xf32> -> vector<17x32xf32>
    %112 = arith.addf %87, %111 : vector<17x32xf32>
    %c3 = arith.constant 3 : index
    %c0_82 = arith.constant 0 : index
    %c0_83 = arith.constant 0 : index
    %113 = vector.load %arg17[%c3, %c0_82, %c0_83] : memref<4x96x8xf32, #tpu.memory_space<vmem>>, vector<1x96x8xf32>
    %114 = vector.shape_cast %113 : vector<1x96x8xf32> to vector<96x8xf32>
    %cst_84 = arith.constant dense<0.000000e+00> : vector<17x8xf32>
    %115 = tpu.matmul %38, %114, %cst_84 {dimension_numbers = #tpu.dot_dimension_numbers<[1], [0], [0], [1], [0, 0, 1, 1], [], []>} : vector<17x96xf32>, vector<96x8xf32>, vector<17x8xf32> -> vector<17x8xf32>
    %c3_85 = arith.constant 3 : index
    %c0_86 = arith.constant 0 : index
    %c0_87 = arith.constant 0 : index
    %116 = vector.load %arg18[%c3_85, %c0_86, %c0_87] : memref<4x96x8xf32, #tpu.memory_space<vmem>>, vector<1x96x8xf32>
    %117 = vector.shape_cast %116 : vector<1x96x8xf32> to vector<96x8xf32>
    %cst_88 = arith.constant dense<0.000000e+00> : vector<17x8xf32>
    %118 = tpu.matmul %38, %117, %cst_88 {dimension_numbers = #tpu.dot_dimension_numbers<[1], [0], [0], [1], [0, 0, 1, 1], [], []>} : vector<17x96xf32>, vector<96x8xf32>, vector<17x8xf32> -> vector<17x8xf32>
    %c3_89 = arith.constant 3 : index
    %c0_90 = arith.constant 0 : index
    %c0_91 = arith.constant 0 : index
    %119 = vector.load %arg19[%c3_89, %c0_90, %c0_91] : memref<4x96x8xf32, #tpu.memory_space<vmem>>, vector<1x96x8xf32>
    %120 = vector.shape_cast %119 : vector<1x96x8xf32> to vector<96x8xf32>
    %cst_92 = arith.constant dense<0.000000e+00> : vector<17x8xf32>
    %121 = tpu.matmul %38, %120, %cst_92 {dimension_numbers = #tpu.dot_dimension_numbers<[1], [0], [0], [1], [0, 0, 1, 1], [], []>} : vector<17x96xf32>, vector<96x8xf32>, vector<17x8xf32> -> vector<17x8xf32>
    %cst_93 = arith.constant dense<0.000000e+00> : vector<17x17xf32>
    %122 = tpu.matmul %115, %118, %cst_93 {dimension_numbers = #tpu.dot_dimension_numbers<[1], [1], [0], [0], [0, 0, 1, 0], [], []>} : vector<17x8xf32>, vector<17x8xf32>, vector<17x17xf32> -> vector<17x17xf32>
    %cst_94 = arith.constant dense<0xFF800000> : vector<17xf32>
    %123 = vector.multi_reduction <maximumf>, %122, %cst_94 [1] : vector<17x17xf32> to vector<17xf32>
    %124 = vector.shape_cast %123 : vector<17xf32> to vector<17x1xf32>
    %125 = vector.broadcast %124 : vector<17x1xf32> to vector<17x17xf32>
    %126 = arith.subf %122, %125 : vector<17x17xf32>
    %127 = math.exp %126 : vector<17x17xf32>
    %cst_95 = arith.constant dense<0.000000e+00> : vector<17xf32>
    %128 = vector.multi_reduction <add>, %127, %cst_95 [1] : vector<17x17xf32> to vector<17xf32>
    %129 = vector.shape_cast %128 : vector<17xf32> to vector<17x1xf32>
    %130 = tpu.reciprocal %129 {approx = true} : vector<17x1xf32> -> vector<17x1xf32>
    %131 = vector.broadcast %130 : vector<17x1xf32> to vector<17x17xf32>
    %132 = arith.mulf %127, %131 : vector<17x17xf32>
    %cst_96 = arith.constant dense<0.000000e+00> : vector<17x8xf32>
    %133 = tpu.matmul %132, %121, %cst_96 {dimension_numbers = #tpu.dot_dimension_numbers<[1], [0], [0], [1], [0, 0, 1, 1], [], []>} : vector<17x17xf32>, vector<17x8xf32>, vector<17x8xf32> -> vector<17x8xf32>
    %c3_97 = arith.constant 3 : index
    %c0_98 = arith.constant 0 : index
    %c0_99 = arith.constant 0 : index
    %134 = vector.load %arg20[%c3_97, %c0_98, %c0_99] : memref<4x8x32xf32, #tpu.memory_space<vmem>>, vector<1x8x32xf32>
    %135 = vector.shape_cast %134 : vector<1x8x32xf32> to vector<8x32xf32>
    %cst_100 = arith.constant dense<0.000000e+00> : vector<17x32xf32>
    %136 = tpu.matmul %133, %135, %cst_100 {dimension_numbers = #tpu.dot_dimension_numbers<[1], [0], [0], [1], [0, 0, 1, 1], [], []>} : vector<17x8xf32>, vector<8x32xf32>, vector<17x32xf32> -> vector<17x32xf32>
    %137 = arith.addf %112, %136 : vector<17x32xf32>
    %c0_101 = arith.constant 0 : index
    %c0_102 = arith.constant 0 : index
    %c0_103 = arith.constant 0 : index
    %138 = vector.load %arg7[%c0_101, %c0_102, %c0_103] : memref<2x32x32xf32, #tpu.memory_space<vmem>>, vector<1x32x32xf32>
    %139 = vector.shape_cast %138 : vector<1x32x32xf32> to vector<32x32xf32>
    %cst_104 = arith.constant dense<0.000000e+00> : vector<17x32xf32>
    %140 = tpu.matmul %137, %139, %cst_104 {dimension_numbers = #tpu.dot_dimension_numbers<[1], [0], [0], [1], [0, 0, 1, 1], [], []>} : vector<17x32xf32>, vector<32x32xf32>, vector<17x32xf32> -> vector<17x32xf32>
    %c0_105 = arith.constant 0 : index
    %c0_106 = arith.constant 0 : index
    %c0_107 = arith.constant 0 : index
    %141 = vector.load %arg8[%c0_105, %c0_106, %c0_107] : memref<2x1x32xf32, #tpu.memory_space<vmem>>, vector<1x1x32xf32>
    %142 = vector.shape_cast %141 : vector<1x1x32xf32> to vector<1x32xf32>
    %143 = vector.broadcast %142 : vector<1x32xf32> to vector<17x32xf32>
    %144 = arith.addf %140, %143 : vector<17x32xf32>
    %145 = arith.addf %5, %144 : vector<17x32xf32>
    %c0_108 = arith.constant 0 : index
    %c0_109 = arith.constant 0 : index
    %c0_110 = arith.constant 0 : index
    %146 = vector.load %arg9[%c0_108, %c0_109, %c0_110] : memref<2x1x32xf32, #tpu.memory_space<vmem>>, vector<1x1x32xf32>
    %147 = vector.shape_cast %146 : vector<1x1x32xf32> to vector<1x32xf32>
    %c0_111 = arith.constant 0 : index
    %c0_112 = arith.constant 0 : index
    %c0_113 = arith.constant 0 : index
    %148 = vector.load %arg10[%c0_111, %c0_112, %c0_113] : memref<2x1x32xf32, #tpu.memory_space<vmem>>, vector<1x1x32xf32>
    %149 = vector.shape_cast %148 : vector<1x1x32xf32> to vector<1x32xf32>
    %cst_114 = arith.constant dense<0.000000e+00> : vector<17xf32>
    %150 = vector.multi_reduction <add>, %145, %cst_114 [1] : vector<17x32xf32> to vector<17xf32>
    %151 = vector.shape_cast %150 : vector<17xf32> to vector<17x1xf32>
    %cst_115 = arith.constant 3.200000e+01 : f32
    %152 = vector.broadcast %cst_115 : f32 to vector<17x1xf32>
    %153 = arith.divf %151, %152 : vector<17x1xf32>
    %154 = arith.mulf %145, %145 : vector<17x32xf32>
    %cst_116 = arith.constant dense<0.000000e+00> : vector<17xf32>
    %155 = vector.multi_reduction <add>, %154, %cst_116 [1] : vector<17x32xf32> to vector<17xf32>
    %156 = vector.shape_cast %155 : vector<17xf32> to vector<17x1xf32>
    %cst_117 = arith.constant 3.200000e+01 : f32
    %157 = vector.broadcast %cst_117 : f32 to vector<17x1xf32>
    %158 = arith.divf %156, %157 : vector<17x1xf32>
    %159 = arith.mulf %153, %153 : vector<17x1xf32>
    %160 = arith.subf %158, %159 : vector<17x1xf32>
    %161 = vector.broadcast %153 : vector<17x1xf32> to vector<17x32xf32>
    %162 = arith.subf %145, %161 : vector<17x32xf32>
    %cst_118 = arith.constant 9.99999997E-7 : f32
    %163 = vector.broadcast %cst_118 : f32 to vector<17x1xf32>
    %164 = arith.addf %160, %163 : vector<17x1xf32>
    %165 = math.rsqrt %164 : vector<17x1xf32>
    %166 = vector.broadcast %165 : vector<17x1xf32> to vector<17x32xf32>
    %167 = arith.mulf %162, %166 : vector<17x32xf32>
    %168 = vector.broadcast %147 : vector<1x32xf32> to vector<17x32xf32>
    %169 = arith.mulf %167, %168 : vector<17x32xf32>
    %170 = vector.broadcast %149 : vector<1x32xf32> to vector<17x32xf32>
    %171 = arith.addf %169, %170 : vector<17x32xf32>
    %c0_119 = arith.constant 0 : index
    %c0_120 = arith.constant 0 : index
    %c0_121 = arith.constant 0 : index
    %172 = vector.load %arg11[%c0_119, %c0_120, %c0_121] : memref<2x32x64xf32, #tpu.memory_space<vmem>>, vector<1x32x64xf32>
    %173 = vector.shape_cast %172 : vector<1x32x64xf32> to vector<32x64xf32>
    %cst_122 = arith.constant dense<0.000000e+00> : vector<17x64xf32>
    %174 = tpu.matmul %171, %173, %cst_122 {dimension_numbers = #tpu.dot_dimension_numbers<[1], [0], [0], [1], [0, 0, 1, 1], [], []>} : vector<17x32xf32>, vector<32x64xf32>, vector<17x64xf32> -> vector<17x64xf32>
    %c0_123 = arith.constant 0 : index
    %c0_124 = arith.constant 0 : index
    %c0_125 = arith.constant 0 : index
    %175 = vector.load %arg12[%c0_123, %c0_124, %c0_125] : memref<2x1x64xf32, #tpu.memory_space<vmem>>, vector<1x1x64xf32>
    %176 = vector.shape_cast %175 : vector<1x1x64xf32> to vector<1x64xf32>
    %177 = vector.broadcast %176 : vector<1x64xf32> to vector<17x64xf32>
    %178 = arith.addf %174, %177 : vector<17x64xf32>
    %179 = arith.mulf %178, %178 : vector<17x64xf32>
    %180 = arith.mulf %178, %179 : vector<17x64xf32>
    %cst_126 = arith.constant 4.471500e-02 : f32
    %181 = vector.broadcast %cst_126 : f32 to vector<17x64xf32>
    %182 = arith.mulf %181, %180 : vector<17x64xf32>
    %183 = arith.addf %178, %182 : vector<17x64xf32>
    %cst_127 = arith.constant 0.797884583 : f32
    %184 = vector.broadcast %cst_127 : f32 to vector<17x64xf32>
    %185 = arith.mulf %184, %183 : vector<17x64xf32>
    %186 = math.tanh %185 : vector<17x64xf32>
    %cst_128 = arith.constant 1.000000e+00 : f32
    %187 = vector.broadcast %cst_128 : f32 to vector<17x64xf32>
    %188 = arith.addf %187, %186 : vector<17x64xf32>
    %cst_129 = arith.constant 5.000000e-01 : f32
    %189 = vector.broadcast %cst_129 : f32 to vector<17x64xf32>
    %190 = arith.mulf %189, %188 : vector<17x64xf32>
    %191 = arith.mulf %178, %190 : vector<17x64xf32>
    %c0_130 = arith.constant 0 : index
    %c0_131 = arith.constant 0 : index
    %c0_132 = arith.constant 0 : index
    %192 = vector.load %arg13[%c0_130, %c0_131, %c0_132] : memref<2x64x32xf32, #tpu.memory_space<vmem>>, vector<1x64x32xf32>
    %193 = vector.shape_cast %192 : vector<1x64x32xf32> to vector<64x32xf32>
    %cst_133 = arith.constant dense<0.000000e+00> : vector<17x32xf32>
    %194 = tpu.matmul %191, %193, %cst_133 {dimension_numbers = #tpu.dot_dimension_numbers<[1], [0], [0], [1], [0, 0, 1, 1], [], []>} : vector<17x64xf32>, vector<64x32xf32>, vector<17x32xf32> -> vector<17x32xf32>
    %c0_134 = arith.constant 0 : index
    %c0_135 = arith.constant 0 : index
    %c0_136 = arith.constant 0 : index
    %195 = vector.load %arg14[%c0_134, %c0_135, %c0_136] : memref<2x1x32xf32, #tpu.memory_space<vmem>>, vector<1x1x32xf32>
    %196 = vector.shape_cast %195 : vector<1x1x32xf32> to vector<1x32xf32>
    %197 = vector.broadcast %196 : vector<1x32xf32> to vector<17x32xf32>
    %198 = arith.addf %194, %197 : vector<17x32xf32>
    %199 = arith.addf %145, %198 : vector<17x32xf32>
    %c1_137 = arith.constant 1 : index
    %c0_138 = arith.constant 0 : index
    %c0_139 = arith.constant 0 : index
    %200 = vector.load %arg3[%c1_137, %c0_138, %c0_139] : memref<2x1x32xf32, #tpu.memory_space<vmem>>, vector<1x1x32xf32>
    %201 = vector.shape_cast %200 : vector<1x1x32xf32> to vector<1x32xf32>
    %c1_140 = arith.constant 1 : index
    %c0_141 = arith.constant 0 : index
    %c0_142 = arith.constant 0 : index
    %202 = vector.load %arg4[%c1_140, %c0_141, %c0_142] : memref<2x1x32xf32, #tpu.memory_space<vmem>>, vector<1x1x32xf32>
    %203 = vector.shape_cast %202 : vector<1x1x32xf32> to vector<1x32xf32>
    %cst_143 = arith.constant dense<0.000000e+00> : vector<17xf32>
    %204 = vector.multi_reduction <add>, %199, %cst_143 [1] : vector<17x32xf32> to vector<17xf32>
    %205 = vector.shape_cast %204 : vector<17xf32> to vector<17x1xf32>
    %cst_144 = arith.constant 3.200000e+01 : f32
    %206 = vector.broadcast %cst_144 : f32 to vector<17x1xf32>
    %207 = arith.divf %205, %206 : vector<17x1xf32>
    %208 = arith.mulf %199, %199 : vector<17x32xf32>
    %cst_145 = arith.constant dense<0.000000e+00> : vector<17xf32>
    %209 = vector.multi_reduction <add>, %208, %cst_145 [1] : vector<17x32xf32> to vector<17xf32>
    %210 = vector.shape_cast %209 : vector<17xf32> to vector<17x1xf32>
    %cst_146 = arith.constant 3.200000e+01 : f32
    %211 = vector.broadcast %cst_146 : f32 to vector<17x1xf32>
    %212 = arith.divf %210, %211 : vector<17x1xf32>
    %213 = arith.mulf %207, %207 : vector<17x1xf32>
    %214 = arith.subf %212, %213 : vector<17x1xf32>
    %215 = vector.broadcast %207 : vector<17x1xf32> to vector<17x32xf32>
    %216 = arith.subf %199, %215 : vector<17x32xf32>
    %cst_147 = arith.constant 9.99999997E-7 : f32
    %217 = vector.broadcast %cst_147 : f32 to vector<17x1xf32>
    %218 = arith.addf %214, %217 : vector<17x1xf32>
    %219 = math.rsqrt %218 : vector<17x1xf32>
    %220 = vector.broadcast %219 : vector<17x1xf32> to vector<17x32xf32>
    %221 = arith.mulf %216, %220 : vector<17x32xf32>
    %222 = vector.broadcast %201 : vector<1x32xf32> to vector<17x32xf32>
    %223 = arith.mulf %221, %222 : vector<17x32xf32>
    %224 = vector.broadcast %203 : vector<1x32xf32> to vector<17x32xf32>
    %225 = arith.addf %223, %224 : vector<17x32xf32>
    %c1_148 = arith.constant 1 : index
    %c0_149 = arith.constant 0 : index
    %c0_150 = arith.constant 0 : index
    %226 = vector.load %arg5[%c1_148, %c0_149, %c0_150] : memref<2x32x96xf32, #tpu.memory_space<vmem>>, vector<1x32x96xf32>
    %227 = vector.shape_cast %226 : vector<1x32x96xf32> to vector<32x96xf32>
    %cst_151 = arith.constant dense<0.000000e+00> : vector<17x96xf32>
    %228 = tpu.matmul %225, %227, %cst_151 {dimension_numbers = #tpu.dot_dimension_numbers<[1], [0], [0], [1], [0, 0, 1, 1], [], []>} : vector<17x32xf32>, vector<32x96xf32>, vector<17x96xf32> -> vector<17x96xf32>
    %c1_152 = arith.constant 1 : index
    %c0_153 = arith.constant 0 : index
    %c0_154 = arith.constant 0 : index
    %229 = vector.load %arg6[%c1_152, %c0_153, %c0_154] : memref<2x1x96xf32, #tpu.memory_space<vmem>>, vector<1x1x96xf32>
    %230 = vector.shape_cast %229 : vector<1x1x96xf32> to vector<1x96xf32>
    %231 = vector.broadcast %230 : vector<1x96xf32> to vector<17x96xf32>
    %232 = arith.addf %228, %231 : vector<17x96xf32>
    %c0_155 = arith.constant 0 : index
    %c0_156 = arith.constant 0 : index
    %c0_157 = arith.constant 0 : index
    %233 = vector.load %arg17[%c0_155, %c0_156, %c0_157] : memref<4x96x8xf32, #tpu.memory_space<vmem>>, vector<1x96x8xf32>
    %234 = vector.shape_cast %233 : vector<1x96x8xf32> to vector<96x8xf32>
    %cst_158 = arith.constant dense<0.000000e+00> : vector<17x8xf32>
    %235 = tpu.matmul %232, %234, %cst_158 {dimension_numbers = #tpu.dot_dimension_numbers<[1], [0], [0], [1], [0, 0, 1, 1], [], []>} : vector<17x96xf32>, vector<96x8xf32>, vector<17x8xf32> -> vector<17x8xf32>
    %c0_159 = arith.constant 0 : index
    %c0_160 = arith.constant 0 : index
    %c0_161 = arith.constant 0 : index
    %236 = vector.load %arg18[%c0_159, %c0_160, %c0_161] : memref<4x96x8xf32, #tpu.memory_space<vmem>>, vector<1x96x8xf32>
    %237 = vector.shape_cast %236 : vector<1x96x8xf32> to vector<96x8xf32>
    %cst_162 = arith.constant dense<0.000000e+00> : vector<17x8xf32>
    %238 = tpu.matmul %232, %237, %cst_162 {dimension_numbers = #tpu.dot_dimension_numbers<[1], [0], [0], [1], [0, 0, 1, 1], [], []>} : vector<17x96xf32>, vector<96x8xf32>, vector<17x8xf32> -> vector<17x8xf32>
    %c0_163 = arith.constant 0 : index
    %c0_164 = arith.constant 0 : index
    %c0_165 = arith.constant 0 : index
    %239 = vector.load %arg19[%c0_163, %c0_164, %c0_165] : memref<4x96x8xf32, #tpu.memory_space<vmem>>, vector<1x96x8xf32>
    %240 = vector.shape_cast %239 : vector<1x96x8xf32> to vector<96x8xf32>
    %cst_166 = arith.constant dense<0.000000e+00> : vector<17x8xf32>
    %241 = tpu.matmul %232, %240, %cst_166 {dimension_numbers = #tpu.dot_dimension_numbers<[1], [0], [0], [1], [0, 0, 1, 1], [], []>} : vector<17x96xf32>, vector<96x8xf32>, vector<17x8xf32> -> vector<17x8xf32>
    %cst_167 = arith.constant dense<0.000000e+00> : vector<17x17xf32>
    %242 = tpu.matmul %235, %238, %cst_167 {dimension_numbers = #tpu.dot_dimension_numbers<[1], [1], [0], [0], [0, 0, 1, 0], [], []>} : vector<17x8xf32>, vector<17x8xf32>, vector<17x17xf32> -> vector<17x17xf32>
    %cst_168 = arith.constant dense<0xFF800000> : vector<17xf32>
    %243 = vector.multi_reduction <maximumf>, %242, %cst_168 [1] : vector<17x17xf32> to vector<17xf32>
    %244 = vector.shape_cast %243 : vector<17xf32> to vector<17x1xf32>
    %245 = vector.broadcast %244 : vector<17x1xf32> to vector<17x17xf32>
    %246 = arith.subf %242, %245 : vector<17x17xf32>
    %247 = math.exp %246 : vector<17x17xf32>
    %cst_169 = arith.constant dense<0.000000e+00> : vector<17xf32>
    %248 = vector.multi_reduction <add>, %247, %cst_169 [1] : vector<17x17xf32> to vector<17xf32>
    %249 = vector.shape_cast %248 : vector<17xf32> to vector<17x1xf32>
    %250 = tpu.reciprocal %249 {approx = true} : vector<17x1xf32> -> vector<17x1xf32>
    %251 = vector.broadcast %250 : vector<17x1xf32> to vector<17x17xf32>
    %252 = arith.mulf %247, %251 : vector<17x17xf32>
    %cst_170 = arith.constant dense<0.000000e+00> : vector<17x8xf32>
    %253 = tpu.matmul %252, %241, %cst_170 {dimension_numbers = #tpu.dot_dimension_numbers<[1], [0], [0], [1], [0, 0, 1, 1], [], []>} : vector<17x17xf32>, vector<17x8xf32>, vector<17x8xf32> -> vector<17x8xf32>
    %c0_171 = arith.constant 0 : index
    %c0_172 = arith.constant 0 : index
    %c0_173 = arith.constant 0 : index
    %254 = vector.load %arg20[%c0_171, %c0_172, %c0_173] : memref<4x8x32xf32, #tpu.memory_space<vmem>>, vector<1x8x32xf32>
    %255 = vector.shape_cast %254 : vector<1x8x32xf32> to vector<8x32xf32>
    %cst_174 = arith.constant dense<0.000000e+00> : vector<17x32xf32>
    %256 = tpu.matmul %253, %255, %cst_174 {dimension_numbers = #tpu.dot_dimension_numbers<[1], [0], [0], [1], [0, 0, 1, 1], [], []>} : vector<17x8xf32>, vector<8x32xf32>, vector<17x32xf32> -> vector<17x32xf32>
    %c1_175 = arith.constant 1 : index
    %c0_176 = arith.constant 0 : index
    %c0_177 = arith.constant 0 : index
    %257 = vector.load %arg17[%c1_175, %c0_176, %c0_177] : memref<4x96x8xf32, #tpu.memory_space<vmem>>, vector<1x96x8xf32>
    %258 = vector.shape_cast %257 : vector<1x96x8xf32> to vector<96x8xf32>
    %cst_178 = arith.constant dense<0.000000e+00> : vector<17x8xf32>
    %259 = tpu.matmul %232, %258, %cst_178 {dimension_numbers = #tpu.dot_dimension_numbers<[1], [0], [0], [1], [0, 0, 1, 1], [], []>} : vector<17x96xf32>, vector<96x8xf32>, vector<17x8xf32> -> vector<17x8xf32>
    %c1_179 = arith.constant 1 : index
    %c0_180 = arith.constant 0 : index
    %c0_181 = arith.constant 0 : index
    %260 = vector.load %arg18[%c1_179, %c0_180, %c0_181] : memref<4x96x8xf32, #tpu.memory_space<vmem>>, vector<1x96x8xf32>
    %261 = vector.shape_cast %260 : vector<1x96x8xf32> to vector<96x8xf32>
    %cst_182 = arith.constant dense<0.000000e+00> : vector<17x8xf32>
    %262 = tpu.matmul %232, %261, %cst_182 {dimension_numbers = #tpu.dot_dimension_numbers<[1], [0], [0], [1], [0, 0, 1, 1], [], []>} : vector<17x96xf32>, vector<96x8xf32>, vector<17x8xf32> -> vector<17x8xf32>
    %c1_183 = arith.constant 1 : index
    %c0_184 = arith.constant 0 : index
    %c0_185 = arith.constant 0 : index
    %263 = vector.load %arg19[%c1_183, %c0_184, %c0_185] : memref<4x96x8xf32, #tpu.memory_space<vmem>>, vector<1x96x8xf32>
    %264 = vector.shape_cast %263 : vector<1x96x8xf32> to vector<96x8xf32>
    %cst_186 = arith.constant dense<0.000000e+00> : vector<17x8xf32>
    %265 = tpu.matmul %232, %264, %cst_186 {dimension_numbers = #tpu.dot_dimension_numbers<[1], [0], [0], [1], [0, 0, 1, 1], [], []>} : vector<17x96xf32>, vector<96x8xf32>, vector<17x8xf32> -> vector<17x8xf32>
    %cst_187 = arith.constant dense<0.000000e+00> : vector<17x17xf32>
    %266 = tpu.matmul %259, %262, %cst_187 {dimension_numbers = #tpu.dot_dimension_numbers<[1], [1], [0], [0], [0, 0, 1, 0], [], []>} : vector<17x8xf32>, vector<17x8xf32>, vector<17x17xf32> -> vector<17x17xf32>
    %cst_188 = arith.constant dense<0xFF800000> : vector<17xf32>
    %267 = vector.multi_reduction <maximumf>, %266, %cst_188 [1] : vector<17x17xf32> to vector<17xf32>
    %268 = vector.shape_cast %267 : vector<17xf32> to vector<17x1xf32>
    %269 = vector.broadcast %268 : vector<17x1xf32> to vector<17x17xf32>
    %270 = arith.subf %266, %269 : vector<17x17xf32>
    %271 = math.exp %270 : vector<17x17xf32>
    %cst_189 = arith.constant dense<0.000000e+00> : vector<17xf32>
    %272 = vector.multi_reduction <add>, %271, %cst_189 [1] : vector<17x17xf32> to vector<17xf32>
    %273 = vector.shape_cast %272 : vector<17xf32> to vector<17x1xf32>
    %274 = tpu.reciprocal %273 {approx = true} : vector<17x1xf32> -> vector<17x1xf32>
    %275 = vector.broadcast %274 : vector<17x1xf32> to vector<17x17xf32>
    %276 = arith.mulf %271, %275 : vector<17x17xf32>
    %cst_190 = arith.constant dense<0.000000e+00> : vector<17x8xf32>
    %277 = tpu.matmul %276, %265, %cst_190 {dimension_numbers = #tpu.dot_dimension_numbers<[1], [0], [0], [1], [0, 0, 1, 1], [], []>} : vector<17x17xf32>, vector<17x8xf32>, vector<17x8xf32> -> vector<17x8xf32>
    %c1_191 = arith.constant 1 : index
    %c0_192 = arith.constant 0 : index
    %c0_193 = arith.constant 0 : index
    %278 = vector.load %arg20[%c1_191, %c0_192, %c0_193] : memref<4x8x32xf32, #tpu.memory_space<vmem>>, vector<1x8x32xf32>
    %279 = vector.shape_cast %278 : vector<1x8x32xf32> to vector<8x32xf32>
    %cst_194 = arith.constant dense<0.000000e+00> : vector<17x32xf32>
    %280 = tpu.matmul %277, %279, %cst_194 {dimension_numbers = #tpu.dot_dimension_numbers<[1], [0], [0], [1], [0, 0, 1, 1], [], []>} : vector<17x8xf32>, vector<8x32xf32>, vector<17x32xf32> -> vector<17x32xf32>
    %281 = arith.addf %256, %280 : vector<17x32xf32>
    %c2_195 = arith.constant 2 : index
    %c0_196 = arith.constant 0 : index
    %c0_197 = arith.constant 0 : index
    %282 = vector.load %arg17[%c2_195, %c0_196, %c0_197] : memref<4x96x8xf32, #tpu.memory_space<vmem>>, vector<1x96x8xf32>
    %283 = vector.shape_cast %282 : vector<1x96x8xf32> to vector<96x8xf32>
    %cst_198 = arith.constant dense<0.000000e+00> : vector<17x8xf32>
    %284 = tpu.matmul %232, %283, %cst_198 {dimension_numbers = #tpu.dot_dimension_numbers<[1], [0], [0], [1], [0, 0, 1, 1], [], []>} : vector<17x96xf32>, vector<96x8xf32>, vector<17x8xf32> -> vector<17x8xf32>
    %c2_199 = arith.constant 2 : index
    %c0_200 = arith.constant 0 : index
    %c0_201 = arith.constant 0 : index
    %285 = vector.load %arg18[%c2_199, %c0_200, %c0_201] : memref<4x96x8xf32, #tpu.memory_space<vmem>>, vector<1x96x8xf32>
    %286 = vector.shape_cast %285 : vector<1x96x8xf32> to vector<96x8xf32>
    %cst_202 = arith.constant dense<0.000000e+00> : vector<17x8xf32>
    %287 = tpu.matmul %232, %286, %cst_202 {dimension_numbers = #tpu.dot_dimension_numbers<[1], [0], [0], [1], [0, 0, 1, 1], [], []>} : vector<17x96xf32>, vector<96x8xf32>, vector<17x8xf32> -> vector<17x8xf32>
    %c2_203 = arith.constant 2 : index
    %c0_204 = arith.constant 0 : index
    %c0_205 = arith.constant 0 : index
    %288 = vector.load %arg19[%c2_203, %c0_204, %c0_205] : memref<4x96x8xf32, #tpu.memory_space<vmem>>, vector<1x96x8xf32>
    %289 = vector.shape_cast %288 : vector<1x96x8xf32> to vector<96x8xf32>
    %cst_206 = arith.constant dense<0.000000e+00> : vector<17x8xf32>
    %290 = tpu.matmul %232, %289, %cst_206 {dimension_numbers = #tpu.dot_dimension_numbers<[1], [0], [0], [1], [0, 0, 1, 1], [], []>} : vector<17x96xf32>, vector<96x8xf32>, vector<17x8xf32> -> vector<17x8xf32>
    %cst_207 = arith.constant dense<0.000000e+00> : vector<17x17xf32>
    %291 = tpu.matmul %284, %287, %cst_207 {dimension_numbers = #tpu.dot_dimension_numbers<[1], [1], [0], [0], [0, 0, 1, 0], [], []>} : vector<17x8xf32>, vector<17x8xf32>, vector<17x17xf32> -> vector<17x17xf32>
    %cst_208 = arith.constant dense<0xFF800000> : vector<17xf32>
    %292 = vector.multi_reduction <maximumf>, %291, %cst_208 [1] : vector<17x17xf32> to vector<17xf32>
    %293 = vector.shape_cast %292 : vector<17xf32> to vector<17x1xf32>
    %294 = vector.broadcast %293 : vector<17x1xf32> to vector<17x17xf32>
    %295 = arith.subf %291, %294 : vector<17x17xf32>
    %296 = math.exp %295 : vector<17x17xf32>
    %cst_209 = arith.constant dense<0.000000e+00> : vector<17xf32>
    %297 = vector.multi_reduction <add>, %296, %cst_209 [1] : vector<17x17xf32> to vector<17xf32>
    %298 = vector.shape_cast %297 : vector<17xf32> to vector<17x1xf32>
    %299 = tpu.reciprocal %298 {approx = true} : vector<17x1xf32> -> vector<17x1xf32>
    %300 = vector.broadcast %299 : vector<17x1xf32> to vector<17x17xf32>
    %301 = arith.mulf %296, %300 : vector<17x17xf32>
    %cst_210 = arith.constant dense<0.000000e+00> : vector<17x8xf32>
    %302 = tpu.matmul %301, %290, %cst_210 {dimension_numbers = #tpu.dot_dimension_numbers<[1], [0], [0], [1], [0, 0, 1, 1], [], []>} : vector<17x17xf32>, vector<17x8xf32>, vector<17x8xf32> -> vector<17x8xf32>
    %c2_211 = arith.constant 2 : index
    %c0_212 = arith.constant 0 : index
    %c0_213 = arith.constant 0 : index
    %303 = vector.load %arg20[%c2_211, %c0_212, %c0_213] : memref<4x8x32xf32, #tpu.memory_space<vmem>>, vector<1x8x32xf32>
    %304 = vector.shape_cast %303 : vector<1x8x32xf32> to vector<8x32xf32>
    %cst_214 = arith.constant dense<0.000000e+00> : vector<17x32xf32>
    %305 = tpu.matmul %302, %304, %cst_214 {dimension_numbers = #tpu.dot_dimension_numbers<[1], [0], [0], [1], [0, 0, 1, 1], [], []>} : vector<17x8xf32>, vector<8x32xf32>, vector<17x32xf32> -> vector<17x32xf32>
    %306 = arith.addf %281, %305 : vector<17x32xf32>
    %c3_215 = arith.constant 3 : index
    %c0_216 = arith.constant 0 : index
    %c0_217 = arith.constant 0 : index
    %307 = vector.load %arg17[%c3_215, %c0_216, %c0_217] : memref<4x96x8xf32, #tpu.memory_space<vmem>>, vector<1x96x8xf32>
    %308 = vector.shape_cast %307 : vector<1x96x8xf32> to vector<96x8xf32>
    %cst_218 = arith.constant dense<0.000000e+00> : vector<17x8xf32>
    %309 = tpu.matmul %232, %308, %cst_218 {dimension_numbers = #tpu.dot_dimension_numbers<[1], [0], [0], [1], [0, 0, 1, 1], [], []>} : vector<17x96xf32>, vector<96x8xf32>, vector<17x8xf32> -> vector<17x8xf32>
    %c3_219 = arith.constant 3 : index
    %c0_220 = arith.constant 0 : index
    %c0_221 = arith.constant 0 : index
    %310 = vector.load %arg18[%c3_219, %c0_220, %c0_221] : memref<4x96x8xf32, #tpu.memory_space<vmem>>, vector<1x96x8xf32>
    %311 = vector.shape_cast %310 : vector<1x96x8xf32> to vector<96x8xf32>
    %cst_222 = arith.constant dense<0.000000e+00> : vector<17x8xf32>
    %312 = tpu.matmul %232, %311, %cst_222 {dimension_numbers = #tpu.dot_dimension_numbers<[1], [0], [0], [1], [0, 0, 1, 1], [], []>} : vector<17x96xf32>, vector<96x8xf32>, vector<17x8xf32> -> vector<17x8xf32>
    %c3_223 = arith.constant 3 : index
    %c0_224 = arith.constant 0 : index
    %c0_225 = arith.constant 0 : index
    %313 = vector.load %arg19[%c3_223, %c0_224, %c0_225] : memref<4x96x8xf32, #tpu.memory_space<vmem>>, vector<1x96x8xf32>
    %314 = vector.shape_cast %313 : vector<1x96x8xf32> to vector<96x8xf32>
    %cst_226 = arith.constant dense<0.000000e+00> : vector<17x8xf32>
    %315 = tpu.matmul %232, %314, %cst_226 {dimension_numbers = #tpu.dot_dimension_numbers<[1], [0], [0], [1], [0, 0, 1, 1], [], []>} : vector<17x96xf32>, vector<96x8xf32>, vector<17x8xf32> -> vector<17x8xf32>
    %cst_227 = arith.constant dense<0.000000e+00> : vector<17x17xf32>
    %316 = tpu.matmul %309, %312, %cst_227 {dimension_numbers = #tpu.dot_dimension_numbers<[1], [1], [0], [0], [0, 0, 1, 0], [], []>} : vector<17x8xf32>, vector<17x8xf32>, vector<17x17xf32> -> vector<17x17xf32>
    %cst_228 = arith.constant dense<0xFF800000> : vector<17xf32>
    %317 = vector.multi_reduction <maximumf>, %316, %cst_228 [1] : vector<17x17xf32> to vector<17xf32>
    %318 = vector.shape_cast %317 : vector<17xf32> to vector<17x1xf32>
    %319 = vector.broadcast %318 : vector<17x1xf32> to vector<17x17xf32>
    %320 = arith.subf %316, %319 : vector<17x17xf32>
    %321 = math.exp %320 : vector<17x17xf32>
    %cst_229 = arith.constant dense<0.000000e+00> : vector<17xf32>
    %322 = vector.multi_reduction <add>, %321, %cst_229 [1] : vector<17x17xf32> to vector<17xf32>
    %323 = vector.shape_cast %322 : vector<17xf32> to vector<17x1xf32>
    %324 = tpu.reciprocal %323 {approx = true} : vector<17x1xf32> -> vector<17x1xf32>
    %325 = vector.broadcast %324 : vector<17x1xf32> to vector<17x17xf32>
    %326 = arith.mulf %321, %325 : vector<17x17xf32>
    %cst_230 = arith.constant dense<0.000000e+00> : vector<17x8xf32>
    %327 = tpu.matmul %326, %315, %cst_230 {dimension_numbers = #tpu.dot_dimension_numbers<[1], [0], [0], [1], [0, 0, 1, 1], [], []>} : vector<17x17xf32>, vector<17x8xf32>, vector<17x8xf32> -> vector<17x8xf32>
    %c3_231 = arith.constant 3 : index
    %c0_232 = arith.constant 0 : index
    %c0_233 = arith.constant 0 : index
    %328 = vector.load %arg20[%c3_231, %c0_232, %c0_233] : memref<4x8x32xf32, #tpu.memory_space<vmem>>, vector<1x8x32xf32>
    %329 = vector.shape_cast %328 : vector<1x8x32xf32> to vector<8x32xf32>
    %cst_234 = arith.constant dense<0.000000e+00> : vector<17x32xf32>
    %330 = tpu.matmul %327, %329, %cst_234 {dimension_numbers = #tpu.dot_dimension_numbers<[1], [0], [0], [1], [0, 0, 1, 1], [], []>} : vector<17x8xf32>, vector<8x32xf32>, vector<17x32xf32> -> vector<17x32xf32>
    %331 = arith.addf %306, %330 : vector<17x32xf32>
    %c1_235 = arith.constant 1 : index
    %c0_236 = arith.constant 0 : index
    %c0_237 = arith.constant 0 : index
    %332 = vector.load %arg7[%c1_235, %c0_236, %c0_237] : memref<2x32x32xf32, #tpu.memory_space<vmem>>, vector<1x32x32xf32>
    %333 = vector.shape_cast %332 : vector<1x32x32xf32> to vector<32x32xf32>
    %cst_238 = arith.constant dense<0.000000e+00> : vector<17x32xf32>
    %334 = tpu.matmul %331, %333, %cst_238 {dimension_numbers = #tpu.dot_dimension_numbers<[1], [0], [0], [1], [0, 0, 1, 1], [], []>} : vector<17x32xf32>, vector<32x32xf32>, vector<17x32xf32> -> vector<17x32xf32>
    %c1_239 = arith.constant 1 : index
    %c0_240 = arith.constant 0 : index
    %c0_241 = arith.constant 0 : index
    %335 = vector.load %arg8[%c1_239, %c0_240, %c0_241] : memref<2x1x32xf32, #tpu.memory_space<vmem>>, vector<1x1x32xf32>
    %336 = vector.shape_cast %335 : vector<1x1x32xf32> to vector<1x32xf32>
    %337 = vector.broadcast %336 : vector<1x32xf32> to vector<17x32xf32>
    %338 = arith.addf %334, %337 : vector<17x32xf32>
    %339 = arith.addf %199, %338 : vector<17x32xf32>
    %c1_242 = arith.constant 1 : index
    %c0_243 = arith.constant 0 : index
    %c0_244 = arith.constant 0 : index
    %340 = vector.load %arg9[%c1_242, %c0_243, %c0_244] : memref<2x1x32xf32, #tpu.memory_space<vmem>>, vector<1x1x32xf32>
    %341 = vector.shape_cast %340 : vector<1x1x32xf32> to vector<1x32xf32>
    %c1_245 = arith.constant 1 : index
    %c0_246 = arith.constant 0 : index
    %c0_247 = arith.constant 0 : index
    %342 = vector.load %arg10[%c1_245, %c0_246, %c0_247] : memref<2x1x32xf32, #tpu.memory_space<vmem>>, vector<1x1x32xf32>
    %343 = vector.shape_cast %342 : vector<1x1x32xf32> to vector<1x32xf32>
    %cst_248 = arith.constant dense<0.000000e+00> : vector<17xf32>
    %344 = vector.multi_reduction <add>, %339, %cst_248 [1] : vector<17x32xf32> to vector<17xf32>
    %345 = vector.shape_cast %344 : vector<17xf32> to vector<17x1xf32>
    %cst_249 = arith.constant 3.200000e+01 : f32
    %346 = vector.broadcast %cst_249 : f32 to vector<17x1xf32>
    %347 = arith.divf %345, %346 : vector<17x1xf32>
    %348 = arith.mulf %339, %339 : vector<17x32xf32>
    %cst_250 = arith.constant dense<0.000000e+00> : vector<17xf32>
    %349 = vector.multi_reduction <add>, %348, %cst_250 [1] : vector<17x32xf32> to vector<17xf32>
    %350 = vector.shape_cast %349 : vector<17xf32> to vector<17x1xf32>
    %cst_251 = arith.constant 3.200000e+01 : f32
    %351 = vector.broadcast %cst_251 : f32 to vector<17x1xf32>
    %352 = arith.divf %350, %351 : vector<17x1xf32>
    %353 = arith.mulf %347, %347 : vector<17x1xf32>
    %354 = arith.subf %352, %353 : vector<17x1xf32>
    %355 = vector.broadcast %347 : vector<17x1xf32> to vector<17x32xf32>
    %356 = arith.subf %339, %355 : vector<17x32xf32>
    %cst_252 = arith.constant 9.99999997E-7 : f32
    %357 = vector.broadcast %cst_252 : f32 to vector<17x1xf32>
    %358 = arith.addf %354, %357 : vector<17x1xf32>
    %359 = math.rsqrt %358 : vector<17x1xf32>
    %360 = vector.broadcast %359 : vector<17x1xf32> to vector<17x32xf32>
    %361 = arith.mulf %356, %360 : vector<17x32xf32>
    %362 = vector.broadcast %341 : vector<1x32xf32> to vector<17x32xf32>
    %363 = arith.mulf %361, %362 : vector<17x32xf32>
    %364 = vector.broadcast %343 : vector<1x32xf32> to vector<17x32xf32>
    %365 = arith.addf %363, %364 : vector<17x32xf32>
    %c1_253 = arith.constant 1 : index
    %c0_254 = arith.constant 0 : index
    %c0_255 = arith.constant 0 : index
    %366 = vector.load %arg11[%c1_253, %c0_254, %c0_255] : memref<2x32x64xf32, #tpu.memory_space<vmem>>, vector<1x32x64xf32>
    %367 = vector.shape_cast %366 : vector<1x32x64xf32> to vector<32x64xf32>
    %cst_256 = arith.constant dense<0.000000e+00> : vector<17x64xf32>
    %368 = tpu.matmul %365, %367, %cst_256 {dimension_numbers = #tpu.dot_dimension_numbers<[1], [0], [0], [1], [0, 0, 1, 1], [], []>} : vector<17x32xf32>, vector<32x64xf32>, vector<17x64xf32> -> vector<17x64xf32>
    %c1_257 = arith.constant 1 : index
    %c0_258 = arith.constant 0 : index
    %c0_259 = arith.constant 0 : index
    %369 = vector.load %arg12[%c1_257, %c0_258, %c0_259] : memref<2x1x64xf32, #tpu.memory_space<vmem>>, vector<1x1x64xf32>
    %370 = vector.shape_cast %369 : vector<1x1x64xf32> to vector<1x64xf32>
    %371 = vector.broadcast %370 : vector<1x64xf32> to vector<17x64xf32>
    %372 = arith.addf %368, %371 : vector<17x64xf32>
    %373 = arith.mulf %372, %372 : vector<17x64xf32>
    %374 = arith.mulf %372, %373 : vector<17x64xf32>
    %cst_260 = arith.constant 4.471500e-02 : f32
    %375 = vector.broadcast %cst_260 : f32 to vector<17x64xf32>
    %376 = arith.mulf %375, %374 : vector<17x64xf32>
    %377 = arith.addf %372, %376 : vector<17x64xf32>
    %cst_261 = arith.constant 0.797884583 : f32
    %378 = vector.broadcast %cst_261 : f32 to vector<17x64xf32>
    %379 = arith.mulf %378, %377 : vector<17x64xf32>
    %380 = math.tanh %379 : vector<17x64xf32>
    %cst_262 = arith.constant 1.000000e+00 : f32
    %381 = vector.broadcast %cst_262 : f32 to vector<17x64xf32>
    %382 = arith.addf %381, %380 : vector<17x64xf32>
    %cst_263 = arith.constant 5.000000e-01 : f32
    %383 = vector.broadcast %cst_263 : f32 to vector<17x64xf32>
    %384 = arith.mulf %383, %382 : vector<17x64xf32>
    %385 = arith.mulf %372, %384 : vector<17x64xf32>
    %c1_264 = arith.constant 1 : index
    %c0_265 = arith.constant 0 : index
    %c0_266 = arith.constant 0 : index
    %386 = vector.load %arg13[%c1_264, %c0_265, %c0_266] : memref<2x64x32xf32, #tpu.memory_space<vmem>>, vector<1x64x32xf32>
    %387 = vector.shape_cast %386 : vector<1x64x32xf32> to vector<64x32xf32>
    %cst_267 = arith.constant dense<0.000000e+00> : vector<17x32xf32>
    %388 = tpu.matmul %385, %387, %cst_267 {dimension_numbers = #tpu.dot_dimension_numbers<[1], [0], [0], [1], [0, 0, 1, 1], [], []>} : vector<17x64xf32>, vector<64x32xf32>, vector<17x32xf32> -> vector<17x32xf32>
    %c1_268 = arith.constant 1 : index
    %c0_269 = arith.constant 0 : index
    %c0_270 = arith.constant 0 : index
    %389 = vector.load %arg14[%c1_268, %c0_269, %c0_270] : memref<2x1x32xf32, #tpu.memory_space<vmem>>, vector<1x1x32xf32>
    %390 = vector.shape_cast %389 : vector<1x1x32xf32> to vector<1x32xf32>
    %391 = vector.broadcast %390 : vector<1x32xf32> to vector<17x32xf32>
    %392 = arith.addf %388, %391 : vector<17x32xf32>
    %393 = arith.addf %339, %392 : vector<17x32xf32>
    %c0_271 = arith.constant 0 : index
    %c0_272 = arith.constant 0 : index
    %394 = vector.load %arg15[%c0_271, %c0_272] : memref<1x32xf32, #tpu.memory_space<vmem>>, vector<1x32xf32>
    %c0_273 = arith.constant 0 : index
    %c0_274 = arith.constant 0 : index
    %395 = vector.load %arg16[%c0_273, %c0_274] : memref<1x32xf32, #tpu.memory_space<vmem>>, vector<1x32xf32>
    %cst_275 = arith.constant dense<0.000000e+00> : vector<17xf32>
    %396 = vector.multi_reduction <add>, %393, %cst_275 [1] : vector<17x32xf32> to vector<17xf32>
    %397 = vector.shape_cast %396 : vector<17xf32> to vector<17x1xf32>
    %cst_276 = arith.constant 3.200000e+01 : f32
    %398 = vector.broadcast %cst_276 : f32 to vector<17x1xf32>
    %399 = arith.divf %397, %398 : vector<17x1xf32>
    %400 = arith.mulf %393, %393 : vector<17x32xf32>
    %cst_277 = arith.constant dense<0.000000e+00> : vector<17xf32>
    %401 = vector.multi_reduction <add>, %400, %cst_277 [1] : vector<17x32xf32> to vector<17xf32>
    %402 = vector.shape_cast %401 : vector<17xf32> to vector<17x1xf32>
    %cst_278 = arith.constant 3.200000e+01 : f32
    %403 = vector.broadcast %cst_278 : f32 to vector<17x1xf32>
    %404 = arith.divf %402, %403 : vector<17x1xf32>
    %405 = arith.mulf %399, %399 : vector<17x1xf32>
    %406 = arith.subf %404, %405 : vector<17x1xf32>
    %407 = vector.broadcast %399 : vector<17x1xf32> to vector<17x32xf32>
    %408 = arith.subf %393, %407 : vector<17x32xf32>
    %cst_279 = arith.constant 9.99999997E-7 : f32
    %409 = vector.broadcast %cst_279 : f32 to vector<17x1xf32>
    %410 = arith.addf %406, %409 : vector<17x1xf32>
    %411 = math.rsqrt %410 : vector<17x1xf32>
    %412 = vector.broadcast %411 : vector<17x1xf32> to vector<17x32xf32>
    %413 = arith.mulf %408, %412 : vector<17x32xf32>
    %414 = vector.broadcast %394 : vector<1x32xf32> to vector<17x32xf32>
    %415 = arith.mulf %413, %414 : vector<17x32xf32>
    %416 = vector.broadcast %395 : vector<1x32xf32> to vector<17x32xf32>
    %417 = arith.addf %415, %416 : vector<17x32xf32>
    %418 = vector.extract_strided_slice %417 {offsets = [0, 0], sizes = [1, 32], strides = [1, 1]} : vector<17x32xf32> to vector<1x32xf32>
    %c0_280 = arith.constant 0 : index
    %c0_281 = arith.constant 0 : index
    %419 = vector.load %arg21[%c0_280, %c0_281] : memref<2x32xf32, #tpu.memory_space<vmem>>, vector<1x32xf32>
    tpu.vector_store %arg21[%c0_280, %c0_281], %418 {strides = array<i32>} : memref<2x32xf32, #tpu.memory_space<vmem>>, vector<1x32xf32>,
    %c1_282 = arith.constant 1 : index
    %c0_283 = arith.constant 0 : index
    %c0_284 = arith.constant 0 : index
    %420 = vector.load %arg0[%c1_282, %c0_283, %c0_284] : memref<2x17x48xf32, #tpu.memory_space<vmem>>, vector<1x17x48xf32>
    %421 = vector.shape_cast %420 : vector<1x17x48xf32> to vector<17x48xf32>
    %cst_285 = arith.constant dense<0.000000e+00> : vector<17x32xf32>
    %422 = tpu.matmul %421, %0, %cst_285 {dimension_numbers = #tpu.dot_dimension_numbers<[1], [0], [0], [1], [0, 0, 1, 1], [], []>} : vector<17x48xf32>, vector<48x32xf32>, vector<17x32xf32> -> vector<17x32xf32>
    %423 = arith.addf %422, %1 : vector<17x32xf32>
    %c0_286 = arith.constant 0 : index
    %c0_287 = arith.constant 0 : index
    %c0_288 = arith.constant 0 : index
    %424 = vector.load %arg3[%c0_286, %c0_287, %c0_288] : memref<2x1x32xf32, #tpu.memory_space<vmem>>, vector<1x1x32xf32>
    %425 = vector.shape_cast %424 : vector<1x1x32xf32> to vector<1x32xf32>
    %c0_289 = arith.constant 0 : index
    %c0_290 = arith.constant 0 : index
    %c0_291 = arith.constant 0 : index
    %426 = vector.load %arg4[%c0_289, %c0_290, %c0_291] : memref<2x1x32xf32, #tpu.memory_space<vmem>>, vector<1x1x32xf32>
    %427 = vector.shape_cast %426 : vector<1x1x32xf32> to vector<1x32xf32>
    %cst_292 = arith.constant dense<0.000000e+00> : vector<17xf32>
    %428 = vector.multi_reduction <add>, %423, %cst_292 [1] : vector<17x32xf32> to vector<17xf32>
    %429 = vector.shape_cast %428 : vector<17xf32> to vector<17x1xf32>
    %cst_293 = arith.constant 3.200000e+01 : f32
    %430 = vector.broadcast %cst_293 : f32 to vector<17x1xf32>
    %431 = arith.divf %429, %430 : vector<17x1xf32>
    %432 = arith.mulf %423, %423 : vector<17x32xf32>
    %cst_294 = arith.constant dense<0.000000e+00> : vector<17xf32>
    %433 = vector.multi_reduction <add>, %432, %cst_294 [1] : vector<17x32xf32> to vector<17xf32>
    %434 = vector.shape_cast %433 : vector<17xf32> to vector<17x1xf32>
    %cst_295 = arith.constant 3.200000e+01 : f32
    %435 = vector.broadcast %cst_295 : f32 to vector<17x1xf32>
    %436 = arith.divf %434, %435 : vector<17x1xf32>
    %437 = arith.mulf %431, %431 : vector<17x1xf32>
    %438 = arith.subf %436, %437 : vector<17x1xf32>
    %439 = vector.broadcast %431 : vector<17x1xf32> to vector<17x32xf32>
    %440 = arith.subf %423, %439 : vector<17x32xf32>
    %cst_296 = arith.constant 9.99999997E-7 : f32
    %441 = vector.broadcast %cst_296 : f32 to vector<17x1xf32>
    %442 = arith.addf %438, %441 : vector<17x1xf32>
    %443 = math.rsqrt %442 : vector<17x1xf32>
    %444 = vector.broadcast %443 : vector<17x1xf32> to vector<17x32xf32>
    %445 = arith.mulf %440, %444 : vector<17x32xf32>
    %446 = vector.broadcast %425 : vector<1x32xf32> to vector<17x32xf32>
    %447 = arith.mulf %445, %446 : vector<17x32xf32>
    %448 = vector.broadcast %427 : vector<1x32xf32> to vector<17x32xf32>
    %449 = arith.addf %447, %448 : vector<17x32xf32>
    %c0_297 = arith.constant 0 : index
    %c0_298 = arith.constant 0 : index
    %c0_299 = arith.constant 0 : index
    %450 = vector.load %arg5[%c0_297, %c0_298, %c0_299] : memref<2x32x96xf32, #tpu.memory_space<vmem>>, vector<1x32x96xf32>
    %451 = vector.shape_cast %450 : vector<1x32x96xf32> to vector<32x96xf32>
    %cst_300 = arith.constant dense<0.000000e+00> : vector<17x96xf32>
    %452 = tpu.matmul %449, %451, %cst_300 {dimension_numbers = #tpu.dot_dimension_numbers<[1], [0], [0], [1], [0, 0, 1, 1], [], []>} : vector<17x32xf32>, vector<32x96xf32>, vector<17x96xf32> -> vector<17x96xf32>
    %c0_301 = arith.constant 0 : index
    %c0_302 = arith.constant 0 : index
    %c0_303 = arith.constant 0 : index
    %453 = vector.load %arg6[%c0_301, %c0_302, %c0_303] : memref<2x1x96xf32, #tpu.memory_space<vmem>>, vector<1x1x96xf32>
    %454 = vector.shape_cast %453 : vector<1x1x96xf32> to vector<1x96xf32>
    %455 = vector.broadcast %454 : vector<1x96xf32> to vector<17x96xf32>
    %456 = arith.addf %452, %455 : vector<17x96xf32>
    %c0_304 = arith.constant 0 : index
    %c0_305 = arith.constant 0 : index
    %c0_306 = arith.constant 0 : index
    %457 = vector.load %arg17[%c0_304, %c0_305, %c0_306] : memref<4x96x8xf32, #tpu.memory_space<vmem>>, vector<1x96x8xf32>
    %458 = vector.shape_cast %457 : vector<1x96x8xf32> to vector<96x8xf32>
    %cst_307 = arith.constant dense<0.000000e+00> : vector<17x8xf32>
    %459 = tpu.matmul %456, %458, %cst_307 {dimension_numbers = #tpu.dot_dimension_numbers<[1], [0], [0], [1], [0, 0, 1, 1], [], []>} : vector<17x96xf32>, vector<96x8xf32>, vector<17x8xf32> -> vector<17x8xf32>
    %c0_308 = arith.constant 0 : index
    %c0_309 = arith.constant 0 : index
    %c0_310 = arith.constant 0 : index
    %460 = vector.load %arg18[%c0_308, %c0_309, %c0_310] : memref<4x96x8xf32, #tpu.memory_space<vmem>>, vector<1x96x8xf32>
    %461 = vector.shape_cast %460 : vector<1x96x8xf32> to vector<96x8xf32>
    %cst_311 = arith.constant dense<0.000000e+00> : vector<17x8xf32>
    %462 = tpu.matmul %456, %461, %cst_311 {dimension_numbers = #tpu.dot_dimension_numbers<[1], [0], [0], [1], [0, 0, 1, 1], [], []>} : vector<17x96xf32>, vector<96x8xf32>, vector<17x8xf32> -> vector<17x8xf32>
    %c0_312 = arith.constant 0 : index
    %c0_313 = arith.constant 0 : index
    %c0_314 = arith.constant 0 : index
    %463 = vector.load %arg19[%c0_312, %c0_313, %c0_314] : memref<4x96x8xf32, #tpu.memory_space<vmem>>, vector<1x96x8xf32>
    %464 = vector.shape_cast %463 : vector<1x96x8xf32> to vector<96x8xf32>
    %cst_315 = arith.constant dense<0.000000e+00> : vector<17x8xf32>
    %465 = tpu.matmul %456, %464, %cst_315 {dimension_numbers = #tpu.dot_dimension_numbers<[1], [0], [0], [1], [0, 0, 1, 1], [], []>} : vector<17x96xf32>, vector<96x8xf32>, vector<17x8xf32> -> vector<17x8xf32>
    %cst_316 = arith.constant dense<0.000000e+00> : vector<17x17xf32>
    %466 = tpu.matmul %459, %462, %cst_316 {dimension_numbers = #tpu.dot_dimension_numbers<[1], [1], [0], [0], [0, 0, 1, 0], [], []>} : vector<17x8xf32>, vector<17x8xf32>, vector<17x17xf32> -> vector<17x17xf32>
    %cst_317 = arith.constant dense<0xFF800000> : vector<17xf32>
    %467 = vector.multi_reduction <maximumf>, %466, %cst_317 [1] : vector<17x17xf32> to vector<17xf32>
    %468 = vector.shape_cast %467 : vector<17xf32> to vector<17x1xf32>
    %469 = vector.broadcast %468 : vector<17x1xf32> to vector<17x17xf32>
    %470 = arith.subf %466, %469 : vector<17x17xf32>
    %471 = math.exp %470 : vector<17x17xf32>
    %cst_318 = arith.constant dense<0.000000e+00> : vector<17xf32>
    %472 = vector.multi_reduction <add>, %471, %cst_318 [1] : vector<17x17xf32> to vector<17xf32>
    %473 = vector.shape_cast %472 : vector<17xf32> to vector<17x1xf32>
    %474 = tpu.reciprocal %473 {approx = true} : vector<17x1xf32> -> vector<17x1xf32>
    %475 = vector.broadcast %474 : vector<17x1xf32> to vector<17x17xf32>
    %476 = arith.mulf %471, %475 : vector<17x17xf32>
    %cst_319 = arith.constant dense<0.000000e+00> : vector<17x8xf32>
    %477 = tpu.matmul %476, %465, %cst_319 {dimension_numbers = #tpu.dot_dimension_numbers<[1], [0], [0], [1], [0, 0, 1, 1], [], []>} : vector<17x17xf32>, vector<17x8xf32>, vector<17x8xf32> -> vector<17x8xf32>
    %c0_320 = arith.constant 0 : index
    %c0_321 = arith.constant 0 : index
    %c0_322 = arith.constant 0 : index
    %478 = vector.load %arg20[%c0_320, %c0_321, %c0_322] : memref<4x8x32xf32, #tpu.memory_space<vmem>>, vector<1x8x32xf32>
    %479 = vector.shape_cast %478 : vector<1x8x32xf32> to vector<8x32xf32>
    %cst_323 = arith.constant dense<0.000000e+00> : vector<17x32xf32>
    %480 = tpu.matmul %477, %479, %cst_323 {dimension_numbers = #tpu.dot_dimension_numbers<[1], [0], [0], [1], [0, 0, 1, 1], [], []>} : vector<17x8xf32>, vector<8x32xf32>, vector<17x32xf32> -> vector<17x32xf32>
    %c1_324 = arith.constant 1 : index
    %c0_325 = arith.constant 0 : index
    %c0_326 = arith.constant 0 : index
    %481 = vector.load %arg17[%c1_324, %c0_325, %c0_326] : memref<4x96x8xf32, #tpu.memory_space<vmem>>, vector<1x96x8xf32>
    %482 = vector.shape_cast %481 : vector<1x96x8xf32> to vector<96x8xf32>
    %cst_327 = arith.constant dense<0.000000e+00> : vector<17x8xf32>
    %483 = tpu.matmul %456, %482, %cst_327 {dimension_numbers = #tpu.dot_dimension_numbers<[1], [0], [0], [1], [0, 0, 1, 1], [], []>} : vector<17x96xf32>, vector<96x8xf32>, vector<17x8xf32> -> vector<17x8xf32>
    %c1_328 = arith.constant 1 : index
    %c0_329 = arith.constant 0 : index
    %c0_330 = arith.constant 0 : index
    %484 = vector.load %arg18[%c1_328, %c0_329, %c0_330] : memref<4x96x8xf32, #tpu.memory_space<vmem>>, vector<1x96x8xf32>
    %485 = vector.shape_cast %484 : vector<1x96x8xf32> to vector<96x8xf32>
    %cst_331 = arith.constant dense<0.000000e+00> : vector<17x8xf32>
    %486 = tpu.matmul %456, %485, %cst_331 {dimension_numbers = #tpu.dot_dimension_numbers<[1], [0], [0], [1], [0, 0, 1, 1], [], []>} : vector<17x96xf32>, vector<96x8xf32>, vector<17x8xf32> -> vector<17x8xf32>
    %c1_332 = arith.constant 1 : index
    %c0_333 = arith.constant 0 : index
    %c0_334 = arith.constant 0 : index
    %487 = vector.load %arg19[%c1_332, %c0_333, %c0_334] : memref<4x96x8xf32, #tpu.memory_space<vmem>>, vector<1x96x8xf32>
    %488 = vector.shape_cast %487 : vector<1x96x8xf32> to vector<96x8xf32>
    %cst_335 = arith.constant dense<0.000000e+00> : vector<17x8xf32>
    %489 = tpu.matmul %456, %488, %cst_335 {dimension_numbers = #tpu.dot_dimension_numbers<[1], [0], [0], [1], [0, 0, 1, 1], [], []>} : vector<17x96xf32>, vector<96x8xf32>, vector<17x8xf32> -> vector<17x8xf32>
    %cst_336 = arith.constant dense<0.000000e+00> : vector<17x17xf32>
    %490 = tpu.matmul %483, %486, %cst_336 {dimension_numbers = #tpu.dot_dimension_numbers<[1], [1], [0], [0], [0, 0, 1, 0], [], []>} : vector<17x8xf32>, vector<17x8xf32>, vector<17x17xf32> -> vector<17x17xf32>
    %cst_337 = arith.constant dense<0xFF800000> : vector<17xf32>
    %491 = vector.multi_reduction <maximumf>, %490, %cst_337 [1] : vector<17x17xf32> to vector<17xf32>
    %492 = vector.shape_cast %491 : vector<17xf32> to vector<17x1xf32>
    %493 = vector.broadcast %492 : vector<17x1xf32> to vector<17x17xf32>
    %494 = arith.subf %490, %493 : vector<17x17xf32>
    %495 = math.exp %494 : vector<17x17xf32>
    %cst_338 = arith.constant dense<0.000000e+00> : vector<17xf32>
    %496 = vector.multi_reduction <add>, %495, %cst_338 [1] : vector<17x17xf32> to vector<17xf32>
    %497 = vector.shape_cast %496 : vector<17xf32> to vector<17x1xf32>
    %498 = tpu.reciprocal %497 {approx = true} : vector<17x1xf32> -> vector<17x1xf32>
    %499 = vector.broadcast %498 : vector<17x1xf32> to vector<17x17xf32>
    %500 = arith.mulf %495, %499 : vector<17x17xf32>
    %cst_339 = arith.constant dense<0.000000e+00> : vector<17x8xf32>
    %501 = tpu.matmul %500, %489, %cst_339 {dimension_numbers = #tpu.dot_dimension_numbers<[1], [0], [0], [1], [0, 0, 1, 1], [], []>} : vector<17x17xf32>, vector<17x8xf32>, vector<17x8xf32> -> vector<17x8xf32>
    %c1_340 = arith.constant 1 : index
    %c0_341 = arith.constant 0 : index
    %c0_342 = arith.constant 0 : index
    %502 = vector.load %arg20[%c1_340, %c0_341, %c0_342] : memref<4x8x32xf32, #tpu.memory_space<vmem>>, vector<1x8x32xf32>
    %503 = vector.shape_cast %502 : vector<1x8x32xf32> to vector<8x32xf32>
    %cst_343 = arith.constant dense<0.000000e+00> : vector<17x32xf32>
    %504 = tpu.matmul %501, %503, %cst_343 {dimension_numbers = #tpu.dot_dimension_numbers<[1], [0], [0], [1], [0, 0, 1, 1], [], []>} : vector<17x8xf32>, vector<8x32xf32>, vector<17x32xf32> -> vector<17x32xf32>
    %505 = arith.addf %480, %504 : vector<17x32xf32>
    %c2_344 = arith.constant 2 : index
    %c0_345 = arith.constant 0 : index
    %c0_346 = arith.constant 0 : index
    %506 = vector.load %arg17[%c2_344, %c0_345, %c0_346] : memref<4x96x8xf32, #tpu.memory_space<vmem>>, vector<1x96x8xf32>
    %507 = vector.shape_cast %506 : vector<1x96x8xf32> to vector<96x8xf32>
    %cst_347 = arith.constant dense<0.000000e+00> : vector<17x8xf32>
    %508 = tpu.matmul %456, %507, %cst_347 {dimension_numbers = #tpu.dot_dimension_numbers<[1], [0], [0], [1], [0, 0, 1, 1], [], []>} : vector<17x96xf32>, vector<96x8xf32>, vector<17x8xf32> -> vector<17x8xf32>
    %c2_348 = arith.constant 2 : index
    %c0_349 = arith.constant 0 : index
    %c0_350 = arith.constant 0 : index
    %509 = vector.load %arg18[%c2_348, %c0_349, %c0_350] : memref<4x96x8xf32, #tpu.memory_space<vmem>>, vector<1x96x8xf32>
    %510 = vector.shape_cast %509 : vector<1x96x8xf32> to vector<96x8xf32>
    %cst_351 = arith.constant dense<0.000000e+00> : vector<17x8xf32>
    %511 = tpu.matmul %456, %510, %cst_351 {dimension_numbers = #tpu.dot_dimension_numbers<[1], [0], [0], [1], [0, 0, 1, 1], [], []>} : vector<17x96xf32>, vector<96x8xf32>, vector<17x8xf32> -> vector<17x8xf32>
    %c2_352 = arith.constant 2 : index
    %c0_353 = arith.constant 0 : index
    %c0_354 = arith.constant 0 : index
    %512 = vector.load %arg19[%c2_352, %c0_353, %c0_354] : memref<4x96x8xf32, #tpu.memory_space<vmem>>, vector<1x96x8xf32>
    %513 = vector.shape_cast %512 : vector<1x96x8xf32> to vector<96x8xf32>
    %cst_355 = arith.constant dense<0.000000e+00> : vector<17x8xf32>
    %514 = tpu.matmul %456, %513, %cst_355 {dimension_numbers = #tpu.dot_dimension_numbers<[1], [0], [0], [1], [0, 0, 1, 1], [], []>} : vector<17x96xf32>, vector<96x8xf32>, vector<17x8xf32> -> vector<17x8xf32>
    %cst_356 = arith.constant dense<0.000000e+00> : vector<17x17xf32>
    %515 = tpu.matmul %508, %511, %cst_356 {dimension_numbers = #tpu.dot_dimension_numbers<[1], [1], [0], [0], [0, 0, 1, 0], [], []>} : vector<17x8xf32>, vector<17x8xf32>, vector<17x17xf32> -> vector<17x17xf32>
    %cst_357 = arith.constant dense<0xFF800000> : vector<17xf32>
    %516 = vector.multi_reduction <maximumf>, %515, %cst_357 [1] : vector<17x17xf32> to vector<17xf32>
    %517 = vector.shape_cast %516 : vector<17xf32> to vector<17x1xf32>
    %518 = vector.broadcast %517 : vector<17x1xf32> to vector<17x17xf32>
    %519 = arith.subf %515, %518 : vector<17x17xf32>
    %520 = math.exp %519 : vector<17x17xf32>
    %cst_358 = arith.constant dense<0.000000e+00> : vector<17xf32>
    %521 = vector.multi_reduction <add>, %520, %cst_358 [1] : vector<17x17xf32> to vector<17xf32>
    %522 = vector.shape_cast %521 : vector<17xf32> to vector<17x1xf32>
    %523 = tpu.reciprocal %522 {approx = true} : vector<17x1xf32> -> vector<17x1xf32>
    %524 = vector.broadcast %523 : vector<17x1xf32> to vector<17x17xf32>
    %525 = arith.mulf %520, %524 : vector<17x17xf32>
    %cst_359 = arith.constant dense<0.000000e+00> : vector<17x8xf32>
    %526 = tpu.matmul %525, %514, %cst_359 {dimension_numbers = #tpu.dot_dimension_numbers<[1], [0], [0], [1], [0, 0, 1, 1], [], []>} : vector<17x17xf32>, vector<17x8xf32>, vector<17x8xf32> -> vector<17x8xf32>
    %c2_360 = arith.constant 2 : index
    %c0_361 = arith.constant 0 : index
    %c0_362 = arith.constant 0 : index
    %527 = vector.load %arg20[%c2_360, %c0_361, %c0_362] : memref<4x8x32xf32, #tpu.memory_space<vmem>>, vector<1x8x32xf32>
    %528 = vector.shape_cast %527 : vector<1x8x32xf32> to vector<8x32xf32>
    %cst_363 = arith.constant dense<0.000000e+00> : vector<17x32xf32>
    %529 = tpu.matmul %526, %528, %cst_363 {dimension_numbers = #tpu.dot_dimension_numbers<[1], [0], [0], [1], [0, 0, 1, 1], [], []>} : vector<17x8xf32>, vector<8x32xf32>, vector<17x32xf32> -> vector<17x32xf32>
    %530 = arith.addf %505, %529 : vector<17x32xf32>
    %c3_364 = arith.constant 3 : index
    %c0_365 = arith.constant 0 : index
    %c0_366 = arith.constant 0 : index
    %531 = vector.load %arg17[%c3_364, %c0_365, %c0_366] : memref<4x96x8xf32, #tpu.memory_space<vmem>>, vector<1x96x8xf32>
    %532 = vector.shape_cast %531 : vector<1x96x8xf32> to vector<96x8xf32>
    %cst_367 = arith.constant dense<0.000000e+00> : vector<17x8xf32>
    %533 = tpu.matmul %456, %532, %cst_367 {dimension_numbers = #tpu.dot_dimension_numbers<[1], [0], [0], [1], [0, 0, 1, 1], [], []>} : vector<17x96xf32>, vector<96x8xf32>, vector<17x8xf32> -> vector<17x8xf32>
    %c3_368 = arith.constant 3 : index
    %c0_369 = arith.constant 0 : index
    %c0_370 = arith.constant 0 : index
    %534 = vector.load %arg18[%c3_368, %c0_369, %c0_370] : memref<4x96x8xf32, #tpu.memory_space<vmem>>, vector<1x96x8xf32>
    %535 = vector.shape_cast %534 : vector<1x96x8xf32> to vector<96x8xf32>
    %cst_371 = arith.constant dense<0.000000e+00> : vector<17x8xf32>
    %536 = tpu.matmul %456, %535, %cst_371 {dimension_numbers = #tpu.dot_dimension_numbers<[1], [0], [0], [1], [0, 0, 1, 1], [], []>} : vector<17x96xf32>, vector<96x8xf32>, vector<17x8xf32> -> vector<17x8xf32>
    %c3_372 = arith.constant 3 : index
    %c0_373 = arith.constant 0 : index
    %c0_374 = arith.constant 0 : index
    %537 = vector.load %arg19[%c3_372, %c0_373, %c0_374] : memref<4x96x8xf32, #tpu.memory_space<vmem>>, vector<1x96x8xf32>
    %538 = vector.shape_cast %537 : vector<1x96x8xf32> to vector<96x8xf32>
    %cst_375 = arith.constant dense<0.000000e+00> : vector<17x8xf32>
    %539 = tpu.matmul %456, %538, %cst_375 {dimension_numbers = #tpu.dot_dimension_numbers<[1], [0], [0], [1], [0, 0, 1, 1], [], []>} : vector<17x96xf32>, vector<96x8xf32>, vector<17x8xf32> -> vector<17x8xf32>
    %cst_376 = arith.constant dense<0.000000e+00> : vector<17x17xf32>
    %540 = tpu.matmul %533, %536, %cst_376 {dimension_numbers = #tpu.dot_dimension_numbers<[1], [1], [0], [0], [0, 0, 1, 0], [], []>} : vector<17x8xf32>, vector<17x8xf32>, vector<17x17xf32> -> vector<17x17xf32>
    %cst_377 = arith.constant dense<0xFF800000> : vector<17xf32>
    %541 = vector.multi_reduction <maximumf>, %540, %cst_377 [1] : vector<17x17xf32> to vector<17xf32>
    %542 = vector.shape_cast %541 : vector<17xf32> to vector<17x1xf32>
    %543 = vector.broadcast %542 : vector<17x1xf32> to vector<17x17xf32>
    %544 = arith.subf %540, %543 : vector<17x17xf32>
    %545 = math.exp %544 : vector<17x17xf32>
    %cst_378 = arith.constant dense<0.000000e+00> : vector<17xf32>
    %546 = vector.multi_reduction <add>, %545, %cst_378 [1] : vector<17x17xf32> to vector<17xf32>
    %547 = vector.shape_cast %546 : vector<17xf32> to vector<17x1xf32>
    %548 = tpu.reciprocal %547 {approx = true} : vector<17x1xf32> -> vector<17x1xf32>
    %549 = vector.broadcast %548 : vector<17x1xf32> to vector<17x17xf32>
    %550 = arith.mulf %545, %549 : vector<17x17xf32>
    %cst_379 = arith.constant dense<0.000000e+00> : vector<17x8xf32>
    %551 = tpu.matmul %550, %539, %cst_379 {dimension_numbers = #tpu.dot_dimension_numbers<[1], [0], [0], [1], [0, 0, 1, 1], [], []>} : vector<17x17xf32>, vector<17x8xf32>, vector<17x8xf32> -> vector<17x8xf32>
    %c3_380 = arith.constant 3 : index
    %c0_381 = arith.constant 0 : index
    %c0_382 = arith.constant 0 : index
    %552 = vector.load %arg20[%c3_380, %c0_381, %c0_382] : memref<4x8x32xf32, #tpu.memory_space<vmem>>, vector<1x8x32xf32>
    %553 = vector.shape_cast %552 : vector<1x8x32xf32> to vector<8x32xf32>
    %cst_383 = arith.constant dense<0.000000e+00> : vector<17x32xf32>
    %554 = tpu.matmul %551, %553, %cst_383 {dimension_numbers = #tpu.dot_dimension_numbers<[1], [0], [0], [1], [0, 0, 1, 1], [], []>} : vector<17x8xf32>, vector<8x32xf32>, vector<17x32xf32> -> vector<17x32xf32>
    %555 = arith.addf %530, %554 : vector<17x32xf32>
    %c0_384 = arith.constant 0 : index
    %c0_385 = arith.constant 0 : index
    %c0_386 = arith.constant 0 : index
    %556 = vector.load %arg7[%c0_384, %c0_385, %c0_386] : memref<2x32x32xf32, #tpu.memory_space<vmem>>, vector<1x32x32xf32>
    %557 = vector.shape_cast %556 : vector<1x32x32xf32> to vector<32x32xf32>
    %cst_387 = arith.constant dense<0.000000e+00> : vector<17x32xf32>
    %558 = tpu.matmul %555, %557, %cst_387 {dimension_numbers = #tpu.dot_dimension_numbers<[1], [0], [0], [1], [0, 0, 1, 1], [], []>} : vector<17x32xf32>, vector<32x32xf32>, vector<17x32xf32> -> vector<17x32xf32>
    %c0_388 = arith.constant 0 : index
    %c0_389 = arith.constant 0 : index
    %c0_390 = arith.constant 0 : index
    %559 = vector.load %arg8[%c0_388, %c0_389, %c0_390] : memref<2x1x32xf32, #tpu.memory_space<vmem>>, vector<1x1x32xf32>
    %560 = vector.shape_cast %559 : vector<1x1x32xf32> to vector<1x32xf32>
    %561 = vector.broadcast %560 : vector<1x32xf32> to vector<17x32xf32>
    %562 = arith.addf %558, %561 : vector<17x32xf32>
    %563 = arith.addf %423, %562 : vector<17x32xf32>
    %c0_391 = arith.constant 0 : index
    %c0_392 = arith.constant 0 : index
    %c0_393 = arith.constant 0 : index
    %564 = vector.load %arg9[%c0_391, %c0_392, %c0_393] : memref<2x1x32xf32, #tpu.memory_space<vmem>>, vector<1x1x32xf32>
    %565 = vector.shape_cast %564 : vector<1x1x32xf32> to vector<1x32xf32>
    %c0_394 = arith.constant 0 : index
    %c0_395 = arith.constant 0 : index
    %c0_396 = arith.constant 0 : index
    %566 = vector.load %arg10[%c0_394, %c0_395, %c0_396] : memref<2x1x32xf32, #tpu.memory_space<vmem>>, vector<1x1x32xf32>
    %567 = vector.shape_cast %566 : vector<1x1x32xf32> to vector<1x32xf32>
    %cst_397 = arith.constant dense<0.000000e+00> : vector<17xf32>
    %568 = vector.multi_reduction <add>, %563, %cst_397 [1] : vector<17x32xf32> to vector<17xf32>
    %569 = vector.shape_cast %568 : vector<17xf32> to vector<17x1xf32>
    %cst_398 = arith.constant 3.200000e+01 : f32
    %570 = vector.broadcast %cst_398 : f32 to vector<17x1xf32>
    %571 = arith.divf %569, %570 : vector<17x1xf32>
    %572 = arith.mulf %563, %563 : vector<17x32xf32>
    %cst_399 = arith.constant dense<0.000000e+00> : vector<17xf32>
    %573 = vector.multi_reduction <add>, %572, %cst_399 [1] : vector<17x32xf32> to vector<17xf32>
    %574 = vector.shape_cast %573 : vector<17xf32> to vector<17x1xf32>
    %cst_400 = arith.constant 3.200000e+01 : f32
    %575 = vector.broadcast %cst_400 : f32 to vector<17x1xf32>
    %576 = arith.divf %574, %575 : vector<17x1xf32>
    %577 = arith.mulf %571, %571 : vector<17x1xf32>
    %578 = arith.subf %576, %577 : vector<17x1xf32>
    %579 = vector.broadcast %571 : vector<17x1xf32> to vector<17x32xf32>
    %580 = arith.subf %563, %579 : vector<17x32xf32>
    %cst_401 = arith.constant 9.99999997E-7 : f32
    %581 = vector.broadcast %cst_401 : f32 to vector<17x1xf32>
    %582 = arith.addf %578, %581 : vector<17x1xf32>
    %583 = math.rsqrt %582 : vector<17x1xf32>
    %584 = vector.broadcast %583 : vector<17x1xf32> to vector<17x32xf32>
    %585 = arith.mulf %580, %584 : vector<17x32xf32>
    %586 = vector.broadcast %565 : vector<1x32xf32> to vector<17x32xf32>
    %587 = arith.mulf %585, %586 : vector<17x32xf32>
    %588 = vector.broadcast %567 : vector<1x32xf32> to vector<17x32xf32>
    %589 = arith.addf %587, %588 : vector<17x32xf32>
    %c0_402 = arith.constant 0 : index
    %c0_403 = arith.constant 0 : index
    %c0_404 = arith.constant 0 : index
    %590 = vector.load %arg11[%c0_402, %c0_403, %c0_404] : memref<2x32x64xf32, #tpu.memory_space<vmem>>, vector<1x32x64xf32>
    %591 = vector.shape_cast %590 : vector<1x32x64xf32> to vector<32x64xf32>
    %cst_405 = arith.constant dense<0.000000e+00> : vector<17x64xf32>
    %592 = tpu.matmul %589, %591, %cst_405 {dimension_numbers = #tpu.dot_dimension_numbers<[1], [0], [0], [1], [0, 0, 1, 1], [], []>} : vector<17x32xf32>, vector<32x64xf32>, vector<17x64xf32> -> vector<17x64xf32>
    %c0_406 = arith.constant 0 : index
    %c0_407 = arith.constant 0 : index
    %c0_408 = arith.constant 0 : index
    %593 = vector.load %arg12[%c0_406, %c0_407, %c0_408] : memref<2x1x64xf32, #tpu.memory_space<vmem>>, vector<1x1x64xf32>
    %594 = vector.shape_cast %593 : vector<1x1x64xf32> to vector<1x64xf32>
    %595 = vector.broadcast %594 : vector<1x64xf32> to vector<17x64xf32>
    %596 = arith.addf %592, %595 : vector<17x64xf32>
    %597 = arith.mulf %596, %596 : vector<17x64xf32>
    %598 = arith.mulf %596, %597 : vector<17x64xf32>
    %cst_409 = arith.constant 4.471500e-02 : f32
    %599 = vector.broadcast %cst_409 : f32 to vector<17x64xf32>
    %600 = arith.mulf %599, %598 : vector<17x64xf32>
    %601 = arith.addf %596, %600 : vector<17x64xf32>
    %cst_410 = arith.constant 0.797884583 : f32
    %602 = vector.broadcast %cst_410 : f32 to vector<17x64xf32>
    %603 = arith.mulf %602, %601 : vector<17x64xf32>
    %604 = math.tanh %603 : vector<17x64xf32>
    %cst_411 = arith.constant 1.000000e+00 : f32
    %605 = vector.broadcast %cst_411 : f32 to vector<17x64xf32>
    %606 = arith.addf %605, %604 : vector<17x64xf32>
    %cst_412 = arith.constant 5.000000e-01 : f32
    %607 = vector.broadcast %cst_412 : f32 to vector<17x64xf32>
    %608 = arith.mulf %607, %606 : vector<17x64xf32>
    %609 = arith.mulf %596, %608 : vector<17x64xf32>
    %c0_413 = arith.constant 0 : index
    %c0_414 = arith.constant 0 : index
    %c0_415 = arith.constant 0 : index
    %610 = vector.load %arg13[%c0_413, %c0_414, %c0_415] : memref<2x64x32xf32, #tpu.memory_space<vmem>>, vector<1x64x32xf32>
    %611 = vector.shape_cast %610 : vector<1x64x32xf32> to vector<64x32xf32>
    %cst_416 = arith.constant dense<0.000000e+00> : vector<17x32xf32>
    %612 = tpu.matmul %609, %611, %cst_416 {dimension_numbers = #tpu.dot_dimension_numbers<[1], [0], [0], [1], [0, 0, 1, 1], [], []>} : vector<17x64xf32>, vector<64x32xf32>, vector<17x32xf32> -> vector<17x32xf32>
    %c0_417 = arith.constant 0 : index
    %c0_418 = arith.constant 0 : index
    %c0_419 = arith.constant 0 : index
    %613 = vector.load %arg14[%c0_417, %c0_418, %c0_419] : memref<2x1x32xf32, #tpu.memory_space<vmem>>, vector<1x1x32xf32>
    %614 = vector.shape_cast %613 : vector<1x1x32xf32> to vector<1x32xf32>
    %615 = vector.broadcast %614 : vector<1x32xf32> to vector<17x32xf32>
    %616 = arith.addf %612, %615 : vector<17x32xf32>
    %617 = arith.addf %563, %616 : vector<17x32xf32>
    %c1_420 = arith.constant 1 : index
    %c0_421 = arith.constant 0 : index
    %c0_422 = arith.constant 0 : index
    %618 = vector.load %arg3[%c1_420, %c0_421, %c0_422] : memref<2x1x32xf32, #tpu.memory_space<vmem>>, vector<1x1x32xf32>
    %619 = vector.shape_cast %618 : vector<1x1x32xf32> to vector<1x32xf32>
    %c1_423 = arith.constant 1 : index
    %c0_424 = arith.constant 0 : index
    %c0_425 = arith.constant 0 : index
    %620 = vector.load %arg4[%c1_423, %c0_424, %c0_425] : memref<2x1x32xf32, #tpu.memory_space<vmem>>, vector<1x1x32xf32>
    %621 = vector.shape_cast %620 : vector<1x1x32xf32> to vector<1x32xf32>
    %cst_426 = arith.constant dense<0.000000e+00> : vector<17xf32>
    %622 = vector.multi_reduction <add>, %617, %cst_426 [1] : vector<17x32xf32> to vector<17xf32>
    %623 = vector.shape_cast %622 : vector<17xf32> to vector<17x1xf32>
    %cst_427 = arith.constant 3.200000e+01 : f32
    %624 = vector.broadcast %cst_427 : f32 to vector<17x1xf32>
    %625 = arith.divf %623, %624 : vector<17x1xf32>
    %626 = arith.mulf %617, %617 : vector<17x32xf32>
    %cst_428 = arith.constant dense<0.000000e+00> : vector<17xf32>
    %627 = vector.multi_reduction <add>, %626, %cst_428 [1] : vector<17x32xf32> to vector<17xf32>
    %628 = vector.shape_cast %627 : vector<17xf32> to vector<17x1xf32>
    %cst_429 = arith.constant 3.200000e+01 : f32
    %629 = vector.broadcast %cst_429 : f32 to vector<17x1xf32>
    %630 = arith.divf %628, %629 : vector<17x1xf32>
    %631 = arith.mulf %625, %625 : vector<17x1xf32>
    %632 = arith.subf %630, %631 : vector<17x1xf32>
    %633 = vector.broadcast %625 : vector<17x1xf32> to vector<17x32xf32>
    %634 = arith.subf %617, %633 : vector<17x32xf32>
    %cst_430 = arith.constant 9.99999997E-7 : f32
    %635 = vector.broadcast %cst_430 : f32 to vector<17x1xf32>
    %636 = arith.addf %632, %635 : vector<17x1xf32>
    %637 = math.rsqrt %636 : vector<17x1xf32>
    %638 = vector.broadcast %637 : vector<17x1xf32> to vector<17x32xf32>
    %639 = arith.mulf %634, %638 : vector<17x32xf32>
    %640 = vector.broadcast %619 : vector<1x32xf32> to vector<17x32xf32>
    %641 = arith.mulf %639, %640 : vector<17x32xf32>
    %642 = vector.broadcast %621 : vector<1x32xf32> to vector<17x32xf32>
    %643 = arith.addf %641, %642 : vector<17x32xf32>
    %c1_431 = arith.constant 1 : index
    %c0_432 = arith.constant 0 : index
    %c0_433 = arith.constant 0 : index
    %644 = vector.load %arg5[%c1_431, %c0_432, %c0_433] : memref<2x32x96xf32, #tpu.memory_space<vmem>>, vector<1x32x96xf32>
    %645 = vector.shape_cast %644 : vector<1x32x96xf32> to vector<32x96xf32>
    %cst_434 = arith.constant dense<0.000000e+00> : vector<17x96xf32>
    %646 = tpu.matmul %643, %645, %cst_434 {dimension_numbers = #tpu.dot_dimension_numbers<[1], [0], [0], [1], [0, 0, 1, 1], [], []>} : vector<17x32xf32>, vector<32x96xf32>, vector<17x96xf32> -> vector<17x96xf32>
    %c1_435 = arith.constant 1 : index
    %c0_436 = arith.constant 0 : index
    %c0_437 = arith.constant 0 : index
    %647 = vector.load %arg6[%c1_435, %c0_436, %c0_437] : memref<2x1x96xf32, #tpu.memory_space<vmem>>, vector<1x1x96xf32>
    %648 = vector.shape_cast %647 : vector<1x1x96xf32> to vector<1x96xf32>
    %649 = vector.broadcast %648 : vector<1x96xf32> to vector<17x96xf32>
    %650 = arith.addf %646, %649 : vector<17x96xf32>
    %c0_438 = arith.constant 0 : index
    %c0_439 = arith.constant 0 : index
    %c0_440 = arith.constant 0 : index
    %651 = vector.load %arg17[%c0_438, %c0_439, %c0_440] : memref<4x96x8xf32, #tpu.memory_space<vmem>>, vector<1x96x8xf32>
    %652 = vector.shape_cast %651 : vector<1x96x8xf32> to vector<96x8xf32>
    %cst_441 = arith.constant dense<0.000000e+00> : vector<17x8xf32>
    %653 = tpu.matmul %650, %652, %cst_441 {dimension_numbers = #tpu.dot_dimension_numbers<[1], [0], [0], [1], [0, 0, 1, 1], [], []>} : vector<17x96xf32>, vector<96x8xf32>, vector<17x8xf32> -> vector<17x8xf32>
    %c0_442 = arith.constant 0 : index
    %c0_443 = arith.constant 0 : index
    %c0_444 = arith.constant 0 : index
    %654 = vector.load %arg18[%c0_442, %c0_443, %c0_444] : memref<4x96x8xf32, #tpu.memory_space<vmem>>, vector<1x96x8xf32>
    %655 = vector.shape_cast %654 : vector<1x96x8xf32> to vector<96x8xf32>
    %cst_445 = arith.constant dense<0.000000e+00> : vector<17x8xf32>
    %656 = tpu.matmul %650, %655, %cst_445 {dimension_numbers = #tpu.dot_dimension_numbers<[1], [0], [0], [1], [0, 0, 1, 1], [], []>} : vector<17x96xf32>, vector<96x8xf32>, vector<17x8xf32> -> vector<17x8xf32>
    %c0_446 = arith.constant 0 : index
    %c0_447 = arith.constant 0 : index
    %c0_448 = arith.constant 0 : index
    %657 = vector.load %arg19[%c0_446, %c0_447, %c0_448] : memref<4x96x8xf32, #tpu.memory_space<vmem>>, vector<1x96x8xf32>
    %658 = vector.shape_cast %657 : vector<1x96x8xf32> to vector<96x8xf32>
    %cst_449 = arith.constant dense<0.000000e+00> : vector<17x8xf32>
    %659 = tpu.matmul %650, %658, %cst_449 {dimension_numbers = #tpu.dot_dimension_numbers<[1], [0], [0], [1], [0, 0, 1, 1], [], []>} : vector<17x96xf32>, vector<96x8xf32>, vector<17x8xf32> -> vector<17x8xf32>
    %cst_450 = arith.constant dense<0.000000e+00> : vector<17x17xf32>
    %660 = tpu.matmul %653, %656, %cst_450 {dimension_numbers = #tpu.dot_dimension_numbers<[1], [1], [0], [0], [0, 0, 1, 0], [], []>} : vector<17x8xf32>, vector<17x8xf32>, vector<17x17xf32> -> vector<17x17xf32>
    %cst_451 = arith.constant dense<0xFF800000> : vector<17xf32>
    %661 = vector.multi_reduction <maximumf>, %660, %cst_451 [1] : vector<17x17xf32> to vector<17xf32>
    %662 = vector.shape_cast %661 : vector<17xf32> to vector<17x1xf32>
    %663 = vector.broadcast %662 : vector<17x1xf32> to vector<17x17xf32>
    %664 = arith.subf %660, %663 : vector<17x17xf32>
    %665 = math.exp %664 : vector<17x17xf32>
    %cst_452 = arith.constant dense<0.000000e+00> : vector<17xf32>
    %666 = vector.multi_reduction <add>, %665, %cst_452 [1] : vector<17x17xf32> to vector<17xf32>
    %667 = vector.shape_cast %666 : vector<17xf32> to vector<17x1xf32>
    %668 = tpu.reciprocal %667 {approx = true} : vector<17x1xf32> -> vector<17x1xf32>
    %669 = vector.broadcast %668 : vector<17x1xf32> to vector<17x17xf32>
    %670 = arith.mulf %665, %669 : vector<17x17xf32>
    %cst_453 = arith.constant dense<0.000000e+00> : vector<17x8xf32>
    %671 = tpu.matmul %670, %659, %cst_453 {dimension_numbers = #tpu.dot_dimension_numbers<[1], [0], [0], [1], [0, 0, 1, 1], [], []>} : vector<17x17xf32>, vector<17x8xf32>, vector<17x8xf32> -> vector<17x8xf32>
    %c0_454 = arith.constant 0 : index
    %c0_455 = arith.constant 0 : index
    %c0_456 = arith.constant 0 : index
    %672 = vector.load %arg20[%c0_454, %c0_455, %c0_456] : memref<4x8x32xf32, #tpu.memory_space<vmem>>, vector<1x8x32xf32>
    %673 = vector.shape_cast %672 : vector<1x8x32xf32> to vector<8x32xf32>
    %cst_457 = arith.constant dense<0.000000e+00> : vector<17x32xf32>
    %674 = tpu.matmul %671, %673, %cst_457 {dimension_numbers = #tpu.dot_dimension_numbers<[1], [0], [0], [1], [0, 0, 1, 1], [], []>} : vector<17x8xf32>, vector<8x32xf32>, vector<17x32xf32> -> vector<17x32xf32>
    %c1_458 = arith.constant 1 : index
    %c0_459 = arith.constant 0 : index
    %c0_460 = arith.constant 0 : index
    %675 = vector.load %arg17[%c1_458, %c0_459, %c0_460] : memref<4x96x8xf32, #tpu.memory_space<vmem>>, vector<1x96x8xf32>
    %676 = vector.shape_cast %675 : vector<1x96x8xf32> to vector<96x8xf32>
    %cst_461 = arith.constant dense<0.000000e+00> : vector<17x8xf32>
    %677 = tpu.matmul %650, %676, %cst_461 {dimension_numbers = #tpu.dot_dimension_numbers<[1], [0], [0], [1], [0, 0, 1, 1], [], []>} : vector<17x96xf32>, vector<96x8xf32>, vector<17x8xf32> -> vector<17x8xf32>
    %c1_462 = arith.constant 1 : index
    %c0_463 = arith.constant 0 : index
    %c0_464 = arith.constant 0 : index
    %678 = vector.load %arg18[%c1_462, %c0_463, %c0_464] : memref<4x96x8xf32, #tpu.memory_space<vmem>>, vector<1x96x8xf32>
    %679 = vector.shape_cast %678 : vector<1x96x8xf32> to vector<96x8xf32>
    %cst_465 = arith.constant dense<0.000000e+00> : vector<17x8xf32>
    %680 = tpu.matmul %650, %679, %cst_465 {dimension_numbers = #tpu.dot_dimension_numbers<[1], [0], [0], [1], [0, 0, 1, 1], [], []>} : vector<17x96xf32>, vector<96x8xf32>, vector<17x8xf32> -> vector<17x8xf32>
    %c1_466 = arith.constant 1 : index
    %c0_467 = arith.constant 0 : index
    %c0_468 = arith.constant 0 : index
    %681 = vector.load %arg19[%c1_466, %c0_467, %c0_468] : memref<4x96x8xf32, #tpu.memory_space<vmem>>, vector<1x96x8xf32>
    %682 = vector.shape_cast %681 : vector<1x96x8xf32> to vector<96x8xf32>
    %cst_469 = arith.constant dense<0.000000e+00> : vector<17x8xf32>
    %683 = tpu.matmul %650, %682, %cst_469 {dimension_numbers = #tpu.dot_dimension_numbers<[1], [0], [0], [1], [0, 0, 1, 1], [], []>} : vector<17x96xf32>, vector<96x8xf32>, vector<17x8xf32> -> vector<17x8xf32>
    %cst_470 = arith.constant dense<0.000000e+00> : vector<17x17xf32>
    %684 = tpu.matmul %677, %680, %cst_470 {dimension_numbers = #tpu.dot_dimension_numbers<[1], [1], [0], [0], [0, 0, 1, 0], [], []>} : vector<17x8xf32>, vector<17x8xf32>, vector<17x17xf32> -> vector<17x17xf32>
    %cst_471 = arith.constant dense<0xFF800000> : vector<17xf32>
    %685 = vector.multi_reduction <maximumf>, %684, %cst_471 [1] : vector<17x17xf32> to vector<17xf32>
    %686 = vector.shape_cast %685 : vector<17xf32> to vector<17x1xf32>
    %687 = vector.broadcast %686 : vector<17x1xf32> to vector<17x17xf32>
    %688 = arith.subf %684, %687 : vector<17x17xf32>
    %689 = math.exp %688 : vector<17x17xf32>
    %cst_472 = arith.constant dense<0.000000e+00> : vector<17xf32>
    %690 = vector.multi_reduction <add>, %689, %cst_472 [1] : vector<17x17xf32> to vector<17xf32>
    %691 = vector.shape_cast %690 : vector<17xf32> to vector<17x1xf32>
    %692 = tpu.reciprocal %691 {approx = true} : vector<17x1xf32> -> vector<17x1xf32>
    %693 = vector.broadcast %692 : vector<17x1xf32> to vector<17x17xf32>
    %694 = arith.mulf %689, %693 : vector<17x17xf32>
    %cst_473 = arith.constant dense<0.000000e+00> : vector<17x8xf32>
    %695 = tpu.matmul %694, %683, %cst_473 {dimension_numbers = #tpu.dot_dimension_numbers<[1], [0], [0], [1], [0, 0, 1, 1], [], []>} : vector<17x17xf32>, vector<17x8xf32>, vector<17x8xf32> -> vector<17x8xf32>
    %c1_474 = arith.constant 1 : index
    %c0_475 = arith.constant 0 : index
    %c0_476 = arith.constant 0 : index
    %696 = vector.load %arg20[%c1_474, %c0_475, %c0_476] : memref<4x8x32xf32, #tpu.memory_space<vmem>>, vector<1x8x32xf32>
    %697 = vector.shape_cast %696 : vector<1x8x32xf32> to vector<8x32xf32>
    %cst_477 = arith.constant dense<0.000000e+00> : vector<17x32xf32>
    %698 = tpu.matmul %695, %697, %cst_477 {dimension_numbers = #tpu.dot_dimension_numbers<[1], [0], [0], [1], [0, 0, 1, 1], [], []>} : vector<17x8xf32>, vector<8x32xf32>, vector<17x32xf32> -> vector<17x32xf32>
    %699 = arith.addf %674, %698 : vector<17x32xf32>
    %c2_478 = arith.constant 2 : index
    %c0_479 = arith.constant 0 : index
    %c0_480 = arith.constant 0 : index
    %700 = vector.load %arg17[%c2_478, %c0_479, %c0_480] : memref<4x96x8xf32, #tpu.memory_space<vmem>>, vector<1x96x8xf32>
    %701 = vector.shape_cast %700 : vector<1x96x8xf32> to vector<96x8xf32>
    %cst_481 = arith.constant dense<0.000000e+00> : vector<17x8xf32>
    %702 = tpu.matmul %650, %701, %cst_481 {dimension_numbers = #tpu.dot_dimension_numbers<[1], [0], [0], [1], [0, 0, 1, 1], [], []>} : vector<17x96xf32>, vector<96x8xf32>, vector<17x8xf32> -> vector<17x8xf32>
    %c2_482 = arith.constant 2 : index
    %c0_483 = arith.constant 0 : index
    %c0_484 = arith.constant 0 : index
    %703 = vector.load %arg18[%c2_482, %c0_483, %c0_484] : memref<4x96x8xf32, #tpu.memory_space<vmem>>, vector<1x96x8xf32>
    %704 = vector.shape_cast %703 : vector<1x96x8xf32> to vector<96x8xf32>
    %cst_485 = arith.constant dense<0.000000e+00> : vector<17x8xf32>
    %705 = tpu.matmul %650, %704, %cst_485 {dimension_numbers = #tpu.dot_dimension_numbers<[1], [0], [0], [1], [0, 0, 1, 1], [], []>} : vector<17x96xf32>, vector<96x8xf32>, vector<17x8xf32> -> vector<17x8xf32>
    %c2_486 = arith.constant 2 : index
    %c0_487 = arith.constant 0 : index
    %c0_488 = arith.constant 0 : index
    %706 = vector.load %arg19[%c2_486, %c0_487, %c0_488] : memref<4x96x8xf32, #tpu.memory_space<vmem>>, vector<1x96x8xf32>
    %707 = vector.shape_cast %706 : vector<1x96x8xf32> to vector<96x8xf32>
    %cst_489 = arith.constant dense<0.000000e+00> : vector<17x8xf32>
    %708 = tpu.matmul %650, %707, %cst_489 {dimension_numbers = #tpu.dot_dimension_numbers<[1], [0], [0], [1], [0, 0, 1, 1], [], []>} : vector<17x96xf32>, vector<96x8xf32>, vector<17x8xf32> -> vector<17x8xf32>
    %cst_490 = arith.constant dense<0.000000e+00> : vector<17x17xf32>
    %709 = tpu.matmul %702, %705, %cst_490 {dimension_numbers = #tpu.dot_dimension_numbers<[1], [1], [0], [0], [0, 0, 1, 0], [], []>} : vector<17x8xf32>, vector<17x8xf32>, vector<17x17xf32> -> vector<17x17xf32>
    %cst_491 = arith.constant dense<0xFF800000> : vector<17xf32>
    %710 = vector.multi_reduction <maximumf>, %709, %cst_491 [1] : vector<17x17xf32> to vector<17xf32>
    %711 = vector.shape_cast %710 : vector<17xf32> to vector<17x1xf32>
    %712 = vector.broadcast %711 : vector<17x1xf32> to vector<17x17xf32>
    %713 = arith.subf %709, %712 : vector<17x17xf32>
    %714 = math.exp %713 : vector<17x17xf32>
    %cst_492 = arith.constant dense<0.000000e+00> : vector<17xf32>
    %715 = vector.multi_reduction <add>, %714, %cst_492 [1] : vector<17x17xf32> to vector<17xf32>
    %716 = vector.shape_cast %715 : vector<17xf32> to vector<17x1xf32>
    %717 = tpu.reciprocal %716 {approx = true} : vector<17x1xf32> -> vector<17x1xf32>
    %718 = vector.broadcast %717 : vector<17x1xf32> to vector<17x17xf32>
    %719 = arith.mulf %714, %718 : vector<17x17xf32>
    %cst_493 = arith.constant dense<0.000000e+00> : vector<17x8xf32>
    %720 = tpu.matmul %719, %708, %cst_493 {dimension_numbers = #tpu.dot_dimension_numbers<[1], [0], [0], [1], [0, 0, 1, 1], [], []>} : vector<17x17xf32>, vector<17x8xf32>, vector<17x8xf32> -> vector<17x8xf32>
    %c2_494 = arith.constant 2 : index
    %c0_495 = arith.constant 0 : index
    %c0_496 = arith.constant 0 : index
    %721 = vector.load %arg20[%c2_494, %c0_495, %c0_496] : memref<4x8x32xf32, #tpu.memory_space<vmem>>, vector<1x8x32xf32>
    %722 = vector.shape_cast %721 : vector<1x8x32xf32> to vector<8x32xf32>
    %cst_497 = arith.constant dense<0.000000e+00> : vector<17x32xf32>
    %723 = tpu.matmul %720, %722, %cst_497 {dimension_numbers = #tpu.dot_dimension_numbers<[1], [0], [0], [1], [0, 0, 1, 1], [], []>} : vector<17x8xf32>, vector<8x32xf32>, vector<17x32xf32> -> vector<17x32xf32>
    %724 = arith.addf %699, %723 : vector<17x32xf32>
    %c3_498 = arith.constant 3 : index
    %c0_499 = arith.constant 0 : index
    %c0_500 = arith.constant 0 : index
    %725 = vector.load %arg17[%c3_498, %c0_499, %c0_500] : memref<4x96x8xf32, #tpu.memory_space<vmem>>, vector<1x96x8xf32>
    %726 = vector.shape_cast %725 : vector<1x96x8xf32> to vector<96x8xf32>
    %cst_501 = arith.constant dense<0.000000e+00> : vector<17x8xf32>
    %727 = tpu.matmul %650, %726, %cst_501 {dimension_numbers = #tpu.dot_dimension_numbers<[1], [0], [0], [1], [0, 0, 1, 1], [], []>} : vector<17x96xf32>, vector<96x8xf32>, vector<17x8xf32> -> vector<17x8xf32>
    %c3_502 = arith.constant 3 : index
    %c0_503 = arith.constant 0 : index
    %c0_504 = arith.constant 0 : index
    %728 = vector.load %arg18[%c3_502, %c0_503, %c0_504] : memref<4x96x8xf32, #tpu.memory_space<vmem>>, vector<1x96x8xf32>
    %729 = vector.shape_cast %728 : vector<1x96x8xf32> to vector<96x8xf32>
    %cst_505 = arith.constant dense<0.000000e+00> : vector<17x8xf32>
    %730 = tpu.matmul %650, %729, %cst_505 {dimension_numbers = #tpu.dot_dimension_numbers<[1], [0], [0], [1], [0, 0, 1, 1], [], []>} : vector<17x96xf32>, vector<96x8xf32>, vector<17x8xf32> -> vector<17x8xf32>
    %c3_506 = arith.constant 3 : index
    %c0_507 = arith.constant 0 : index
    %c0_508 = arith.constant 0 : index
    %731 = vector.load %arg19[%c3_506, %c0_507, %c0_508] : memref<4x96x8xf32, #tpu.memory_space<vmem>>, vector<1x96x8xf32>
    %732 = vector.shape_cast %731 : vector<1x96x8xf32> to vector<96x8xf32>
    %cst_509 = arith.constant dense<0.000000e+00> : vector<17x8xf32>
    %733 = tpu.matmul %650, %732, %cst_509 {dimension_numbers = #tpu.dot_dimension_numbers<[1], [0], [0], [1], [0, 0, 1, 1], [], []>} : vector<17x96xf32>, vector<96x8xf32>, vector<17x8xf32> -> vector<17x8xf32>
    %cst_510 = arith.constant dense<0.000000e+00> : vector<17x17xf32>
    %734 = tpu.matmul %727, %730, %cst_510 {dimension_numbers = #tpu.dot_dimension_numbers<[1], [1], [0], [0], [0, 0, 1, 0], [], []>} : vector<17x8xf32>, vector<17x8xf32>, vector<17x17xf32> -> vector<17x17xf32>
    %cst_511 = arith.constant dense<0xFF800000> : vector<17xf32>
    %735 = vector.multi_reduction <maximumf>, %734, %cst_511 [1] : vector<17x17xf32> to vector<17xf32>
    %736 = vector.shape_cast %735 : vector<17xf32> to vector<17x1xf32>
    %737 = vector.broadcast %736 : vector<17x1xf32> to vector<17x17xf32>
    %738 = arith.subf %734, %737 : vector<17x17xf32>
    %739 = math.exp %738 : vector<17x17xf32>
    %cst_512 = arith.constant dense<0.000000e+00> : vector<17xf32>
    %740 = vector.multi_reduction <add>, %739, %cst_512 [1] : vector<17x17xf32> to vector<17xf32>
    %741 = vector.shape_cast %740 : vector<17xf32> to vector<17x1xf32>
    %742 = tpu.reciprocal %741 {approx = true} : vector<17x1xf32> -> vector<17x1xf32>
    %743 = vector.broadcast %742 : vector<17x1xf32> to vector<17x17xf32>
    %744 = arith.mulf %739, %743 : vector<17x17xf32>
    %cst_513 = arith.constant dense<0.000000e+00> : vector<17x8xf32>
    %745 = tpu.matmul %744, %733, %cst_513 {dimension_numbers = #tpu.dot_dimension_numbers<[1], [0], [0], [1], [0, 0, 1, 1], [], []>} : vector<17x17xf32>, vector<17x8xf32>, vector<17x8xf32> -> vector<17x8xf32>
    %c3_514 = arith.constant 3 : index
    %c0_515 = arith.constant 0 : index
    %c0_516 = arith.constant 0 : index
    %746 = vector.load %arg20[%c3_514, %c0_515, %c0_516] : memref<4x8x32xf32, #tpu.memory_space<vmem>>, vector<1x8x32xf32>
    %747 = vector.shape_cast %746 : vector<1x8x32xf32> to vector<8x32xf32>
    %cst_517 = arith.constant dense<0.000000e+00> : vector<17x32xf32>
    %748 = tpu.matmul %745, %747, %cst_517 {dimension_numbers = #tpu.dot_dimension_numbers<[1], [0], [0], [1], [0, 0, 1, 1], [], []>} : vector<17x8xf32>, vector<8x32xf32>, vector<17x32xf32> -> vector<17x32xf32>
    %749 = arith.addf %724, %748 : vector<17x32xf32>
    %c1_518 = arith.constant 1 : index
    %c0_519 = arith.constant 0 : index
    %c0_520 = arith.constant 0 : index
    %750 = vector.load %arg7[%c1_518, %c0_519, %c0_520] : memref<2x32x32xf32, #tpu.memory_space<vmem>>, vector<1x32x32xf32>
    %751 = vector.shape_cast %750 : vector<1x32x32xf32> to vector<32x32xf32>
    %cst_521 = arith.constant dense<0.000000e+00> : vector<17x32xf32>
    %752 = tpu.matmul %749, %751, %cst_521 {dimension_numbers = #tpu.dot_dimension_numbers<[1], [0], [0], [1], [0, 0, 1, 1], [], []>} : vector<17x32xf32>, vector<32x32xf32>, vector<17x32xf32> -> vector<17x32xf32>
    %c1_522 = arith.constant 1 : index
    %c0_523 = arith.constant 0 : index
    %c0_524 = arith.constant 0 : index
    %753 = vector.load %arg8[%c1_522, %c0_523, %c0_524] : memref<2x1x32xf32, #tpu.memory_space<vmem>>, vector<1x1x32xf32>
    %754 = vector.shape_cast %753 : vector<1x1x32xf32> to vector<1x32xf32>
    %755 = vector.broadcast %754 : vector<1x32xf32> to vector<17x32xf32>
    %756 = arith.addf %752, %755 : vector<17x32xf32>
    %757 = arith.addf %617, %756 : vector<17x32xf32>
    %c1_525 = arith.constant 1 : index
    %c0_526 = arith.constant 0 : index
    %c0_527 = arith.constant 0 : index
    %758 = vector.load %arg9[%c1_525, %c0_526, %c0_527] : memref<2x1x32xf32, #tpu.memory_space<vmem>>, vector<1x1x32xf32>
    %759 = vector.shape_cast %758 : vector<1x1x32xf32> to vector<1x32xf32>
    %c1_528 = arith.constant 1 : index
    %c0_529 = arith.constant 0 : index
    %c0_530 = arith.constant 0 : index
    %760 = vector.load %arg10[%c1_528, %c0_529, %c0_530] : memref<2x1x32xf32, #tpu.memory_space<vmem>>, vector<1x1x32xf32>
    %761 = vector.shape_cast %760 : vector<1x1x32xf32> to vector<1x32xf32>
    %cst_531 = arith.constant dense<0.000000e+00> : vector<17xf32>
    %762 = vector.multi_reduction <add>, %757, %cst_531 [1] : vector<17x32xf32> to vector<17xf32>
    %763 = vector.shape_cast %762 : vector<17xf32> to vector<17x1xf32>
    %cst_532 = arith.constant 3.200000e+01 : f32
    %764 = vector.broadcast %cst_532 : f32 to vector<17x1xf32>
    %765 = arith.divf %763, %764 : vector<17x1xf32>
    %766 = arith.mulf %757, %757 : vector<17x32xf32>
    %cst_533 = arith.constant dense<0.000000e+00> : vector<17xf32>
    %767 = vector.multi_reduction <add>, %766, %cst_533 [1] : vector<17x32xf32> to vector<17xf32>
    %768 = vector.shape_cast %767 : vector<17xf32> to vector<17x1xf32>
    %cst_534 = arith.constant 3.200000e+01 : f32
    %769 = vector.broadcast %cst_534 : f32 to vector<17x1xf32>
    %770 = arith.divf %768, %769 : vector<17x1xf32>
    %771 = arith.mulf %765, %765 : vector<17x1xf32>
    %772 = arith.subf %770, %771 : vector<17x1xf32>
    %773 = vector.broadcast %765 : vector<17x1xf32> to vector<17x32xf32>
    %774 = arith.subf %757, %773 : vector<17x32xf32>
    %cst_535 = arith.constant 9.99999997E-7 : f32
    %775 = vector.broadcast %cst_535 : f32 to vector<17x1xf32>
    %776 = arith.addf %772, %775 : vector<17x1xf32>
    %777 = math.rsqrt %776 : vector<17x1xf32>
    %778 = vector.broadcast %777 : vector<17x1xf32> to vector<17x32xf32>
    %779 = arith.mulf %774, %778 : vector<17x32xf32>
    %780 = vector.broadcast %759 : vector<1x32xf32> to vector<17x32xf32>
    %781 = arith.mulf %779, %780 : vector<17x32xf32>
    %782 = vector.broadcast %761 : vector<1x32xf32> to vector<17x32xf32>
    %783 = arith.addf %781, %782 : vector<17x32xf32>
    %c1_536 = arith.constant 1 : index
    %c0_537 = arith.constant 0 : index
    %c0_538 = arith.constant 0 : index
    %784 = vector.load %arg11[%c1_536, %c0_537, %c0_538] : memref<2x32x64xf32, #tpu.memory_space<vmem>>, vector<1x32x64xf32>
    %785 = vector.shape_cast %784 : vector<1x32x64xf32> to vector<32x64xf32>
    %cst_539 = arith.constant dense<0.000000e+00> : vector<17x64xf32>
    %786 = tpu.matmul %783, %785, %cst_539 {dimension_numbers = #tpu.dot_dimension_numbers<[1], [0], [0], [1], [0, 0, 1, 1], [], []>} : vector<17x32xf32>, vector<32x64xf32>, vector<17x64xf32> -> vector<17x64xf32>
    %c1_540 = arith.constant 1 : index
    %c0_541 = arith.constant 0 : index
    %c0_542 = arith.constant 0 : index
    %787 = vector.load %arg12[%c1_540, %c0_541, %c0_542] : memref<2x1x64xf32, #tpu.memory_space<vmem>>, vector<1x1x64xf32>
    %788 = vector.shape_cast %787 : vector<1x1x64xf32> to vector<1x64xf32>
    %789 = vector.broadcast %788 : vector<1x64xf32> to vector<17x64xf32>
    %790 = arith.addf %786, %789 : vector<17x64xf32>
    %791 = arith.mulf %790, %790 : vector<17x64xf32>
    %792 = arith.mulf %790, %791 : vector<17x64xf32>
    %cst_543 = arith.constant 4.471500e-02 : f32
    %793 = vector.broadcast %cst_543 : f32 to vector<17x64xf32>
    %794 = arith.mulf %793, %792 : vector<17x64xf32>
    %795 = arith.addf %790, %794 : vector<17x64xf32>
    %cst_544 = arith.constant 0.797884583 : f32
    %796 = vector.broadcast %cst_544 : f32 to vector<17x64xf32>
    %797 = arith.mulf %796, %795 : vector<17x64xf32>
    %798 = math.tanh %797 : vector<17x64xf32>
    %cst_545 = arith.constant 1.000000e+00 : f32
    %799 = vector.broadcast %cst_545 : f32 to vector<17x64xf32>
    %800 = arith.addf %799, %798 : vector<17x64xf32>
    %cst_546 = arith.constant 5.000000e-01 : f32
    %801 = vector.broadcast %cst_546 : f32 to vector<17x64xf32>
    %802 = arith.mulf %801, %800 : vector<17x64xf32>
    %803 = arith.mulf %790, %802 : vector<17x64xf32>
    %c1_547 = arith.constant 1 : index
    %c0_548 = arith.constant 0 : index
    %c0_549 = arith.constant 0 : index
    %804 = vector.load %arg13[%c1_547, %c0_548, %c0_549] : memref<2x64x32xf32, #tpu.memory_space<vmem>>, vector<1x64x32xf32>
    %805 = vector.shape_cast %804 : vector<1x64x32xf32> to vector<64x32xf32>
    %cst_550 = arith.constant dense<0.000000e+00> : vector<17x32xf32>
    %806 = tpu.matmul %803, %805, %cst_550 {dimension_numbers = #tpu.dot_dimension_numbers<[1], [0], [0], [1], [0, 0, 1, 1], [], []>} : vector<17x64xf32>, vector<64x32xf32>, vector<17x32xf32> -> vector<17x32xf32>
    %c1_551 = arith.constant 1 : index
    %c0_552 = arith.constant 0 : index
    %c0_553 = arith.constant 0 : index
    %807 = vector.load %arg14[%c1_551, %c0_552, %c0_553] : memref<2x1x32xf32, #tpu.memory_space<vmem>>, vector<1x1x32xf32>
    %808 = vector.shape_cast %807 : vector<1x1x32xf32> to vector<1x32xf32>
    %809 = vector.broadcast %808 : vector<1x32xf32> to vector<17x32xf32>
    %810 = arith.addf %806, %809 : vector<17x32xf32>
    %811 = arith.addf %757, %810 : vector<17x32xf32>
    %c0_554 = arith.constant 0 : index
    %c0_555 = arith.constant 0 : index
    %812 = vector.load %arg15[%c0_554, %c0_555] : memref<1x32xf32, #tpu.memory_space<vmem>>, vector<1x32xf32>
    %c0_556 = arith.constant 0 : index
    %c0_557 = arith.constant 0 : index
    %813 = vector.load %arg16[%c0_556, %c0_557] : memref<1x32xf32, #tpu.memory_space<vmem>>, vector<1x32xf32>
    %cst_558 = arith.constant dense<0.000000e+00> : vector<17xf32>
    %814 = vector.multi_reduction <add>, %811, %cst_558 [1] : vector<17x32xf32> to vector<17xf32>
    %815 = vector.shape_cast %814 : vector<17xf32> to vector<17x1xf32>
    %cst_559 = arith.constant 3.200000e+01 : f32
    %816 = vector.broadcast %cst_559 : f32 to vector<17x1xf32>
    %817 = arith.divf %815, %816 : vector<17x1xf32>
    %818 = arith.mulf %811, %811 : vector<17x32xf32>
    %cst_560 = arith.constant dense<0.000000e+00> : vector<17xf32>
    %819 = vector.multi_reduction <add>, %818, %cst_560 [1] : vector<17x32xf32> to vector<17xf32>
    %820 = vector.shape_cast %819 : vector<17xf32> to vector<17x1xf32>
    %cst_561 = arith.constant 3.200000e+01 : f32
    %821 = vector.broadcast %cst_561 : f32 to vector<17x1xf32>
    %822 = arith.divf %820, %821 : vector<17x1xf32>
    %823 = arith.mulf %817, %817 : vector<17x1xf32>
    %824 = arith.subf %822, %823 : vector<17x1xf32>
    %825 = vector.broadcast %817 : vector<17x1xf32> to vector<17x32xf32>
    %826 = arith.subf %811, %825 : vector<17x32xf32>
    %cst_562 = arith.constant 9.99999997E-7 : f32
    %827 = vector.broadcast %cst_562 : f32 to vector<17x1xf32>
    %828 = arith.addf %824, %827 : vector<17x1xf32>
    %829 = math.rsqrt %828 : vector<17x1xf32>
    %830 = vector.broadcast %829 : vector<17x1xf32> to vector<17x32xf32>
    %831 = arith.mulf %826, %830 : vector<17x32xf32>
    %832 = vector.broadcast %812 : vector<1x32xf32> to vector<17x32xf32>
    %833 = arith.mulf %831, %832 : vector<17x32xf32>
    %834 = vector.broadcast %813 : vector<1x32xf32> to vector<17x32xf32>
    %835 = arith.addf %833, %834 : vector<17x32xf32>
    %836 = vector.extract_strided_slice %835 {offsets = [0, 0], sizes = [1, 32], strides = [1, 1]} : vector<17x32xf32> to vector<1x32xf32>
    %c1_563 = arith.constant 1 : index
    %c0_564 = arith.constant 0 : index
    %837 = vector.load %arg21[%c1_563, %c0_564] : memref<2x32xf32, #tpu.memory_space<vmem>>, vector<1x32xf32>
    tpu.vector_store %arg21[%c1_563, %c0_564], %836 {strides = array<i32>} : memref<2x32xf32, #tpu.memory_space<vmem>>, vector<1x32xf32>,
    return
  }
}

</mosaic_0001>

<llo_original>
// kernel: vit_image_encoder_forward.1
$region0: #{vit_image_encoder_forward.1}
  #allocation0 [shape = 'u32[]', space=smem, size = 0x4, offset = 0x4, fixed_abs, tag = 'smem constant byte address 0x4 - core index']
  #allocation1 [shape = 'u32[72,128]{1,0:T(1,128)}', space=vmem, size = 0x9000, scoped, tag = 'internal scratch']
  %s0 = inlined_call_operand.vmem [shape: f32[2,17,48], index: 0, kind: input, shape index: {}]
  %s1 = inlined_call_operand.vmem [shape: f32[48,32], index: 1, kind: input, shape index: {}]
  %s2 = inlined_call_operand.vmem [shape: f32[17,32], index: 2, kind: input, shape index: {}]
  %s3 = inlined_call_operand.vmem [shape: f32[2,1,32], index: 3, kind: input, shape index: {}]
  %s4 = inlined_call_operand.vmem [shape: f32[2,1,32], index: 4, kind: input, shape index: {}]
  %s5 = inlined_call_operand.vmem [shape: f32[2,32,96], index: 5, kind: input, shape index: {}]
  %s6 = inlined_call_operand.vmem [shape: f32[2,1,96], index: 6, kind: input, shape index: {}]
  %s7 = inlined_call_operand.vmem [shape: f32[2,32,32], index: 7, kind: input, shape index: {}]
  %s8 = inlined_call_operand.vmem [shape: f32[2,1,32], index: 8, kind: input, shape index: {}]
  %s9 = inlined_call_operand.vmem [shape: f32[2,1,32], index: 9, kind: input, shape index: {}]
  %s10 = inlined_call_operand.vmem [shape: f32[2,1,32], index: 10, kind: input, shape index: {}]
  %s11 = inlined_call_operand.vmem [shape: f32[2,32,64], index: 11, kind: input, shape index: {}]
  %s12 = inlined_call_operand.vmem [shape: f32[2,1,64], index: 12, kind: input, shape index: {}]
  %s13 = inlined_call_operand.vmem [shape: f32[2,64,32], index: 13, kind: input, shape index: {}]
  %s14 = inlined_call_operand.vmem [shape: f32[2,1,32], index: 14, kind: input, shape index: {}]
  %s15 = inlined_call_operand.vmem [shape: f32[1,32], index: 15, kind: input, shape index: {}]
  %s16 = inlined_call_operand.vmem [shape: f32[1,32], index: 16, kind: input, shape index: {}]
  %s17 = inlined_call_operand.vmem [shape: f32[4,96,8], index: 17, kind: input, shape index: {}]
  %s18 = inlined_call_operand.vmem [shape: f32[4,96,8], index: 18, kind: input, shape index: {}]
  %s19 = inlined_call_operand.vmem [shape: f32[4,96,8], index: 19, kind: input, shape index: {}]
  %s20 = inlined_call_operand.vmem [shape: f32[4,8,32], index: 20, kind: input, shape index: {}]
  %s21 = inlined_call_operand.hbm [shape: f32[2,32], index: 21, kind: output, shape index: {}]
  %s22 = sld [smem:[#allocation0]]
  $region94: #{vit_image_encoder_forward.1} parent=0
    _
  %s24 = ssub.s32 1, %s22
  %s25 = scalar_select 0, %s24, %s22
  $region1: #{vit_image_encoder_forward.1} parent=0
    #allocation2 [shape = 'u8[1024]{0}', space=vmem, size = 0x400, scoped, tag = 'output window, operand 0, single buffered']
    #allocation3 [shape = 's32[1]{0}', space=sflag, size = 0x4, scoped, tag = 'scoped memory for vit_image_encoder_forward.1']
    %26 = vsyncpa [#allocation3], 0
    // Predicated region
    $region2: #{vit_image_encoder_forward.1} parent=1 // pred_check
      _
    $region3: #{vit_image_encoder_forward.1} parent=1 // pred_check_branch
      %28 = sbr.rel (0) target = $region5
    $region4: #{vit_image_encoder_forward.1} parent=1 // pred_region
      _
    $region5: #{vit_image_encoder_forward.1} parent=1 // pred_fallthru
      _
    // Predicated region
    $region6: #{vit_image_encoder_forward.1} parent=1 // pred_check
      _
    $region7: #{vit_image_encoder_forward.1} parent=1 // pred_check_branch
      %30 = sbr.rel (0) target = $region9
    $region8: #{vit_image_encoder_forward.1} parent=1 // pred_region
      _
    $region9: #{vit_image_encoder_forward.1} parent=1 // pred_fallthru
      _
    // Predicated region
    $region10: #{vit_image_encoder_forward.1} parent=1 // pred_check
      _
    $region11: #{vit_image_encoder_forward.1} parent=1 // pred_check_branch
      %32 = sbr.rel (0) target = $region13
    $region12: #{vit_image_encoder_forward.1} parent=1 // pred_region
      _
    $region13: #{vit_image_encoder_forward.1} parent=1 // pred_fallthru
      _
    // Predicated region
    $region14: #{vit_image_encoder_forward.1} parent=1 // pred_check
      _
    $region15: #{vit_image_encoder_forward.1} parent=1 // pred_check_branch
      %34 = sbr.rel (0) target = $region17
    $region16: #{vit_image_encoder_forward.1} parent=1 // pred_region
      _
    $region17: #{vit_image_encoder_forward.1} parent=1 // pred_fallthru
      _
    // Predicated region
    $region18: #{vit_image_encoder_forward.1} parent=1 // pred_check
      _
    $region19: #{vit_image_encoder_forward.1} parent=1 // pred_check_branch
      %36 = sbr.rel (0) target = $region21
    $region20: #{vit_image_encoder_forward.1} parent=1 // pred_region
      _
    $region21: #{vit_image_encoder_forward.1} parent=1 // pred_fallthru
      _
    // Predicated region
    $region22: #{vit_image_encoder_forward.1} parent=1 // pred_check
      _
    $region23: #{vit_image_encoder_forward.1} parent=1 // pred_check_branch
      %38 = sbr.rel (0) target = $region25
    $region24: #{vit_image_encoder_forward.1} parent=1 // pred_region
      _
    $region25: #{vit_image_encoder_forward.1} parent=1 // pred_fallthru
      _
    // Predicated region
    $region26: #{vit_image_encoder_forward.1} parent=1 // pred_check
      _
    $region27: #{vit_image_encoder_forward.1} parent=1 // pred_check_branch
      %40 = sbr.rel (0) target = $region29
    $region28: #{vit_image_encoder_forward.1} parent=1 // pred_region
      _
    $region29: #{vit_image_encoder_forward.1} parent=1 // pred_fallthru
      _
    // Predicated region
    $region30: #{vit_image_encoder_forward.1} parent=1 // pred_check
      _
    $region31: #{vit_image_encoder_forward.1} parent=1 // pred_check_branch
      %42 = sbr.rel (0) target = $region33
    $region32: #{vit_image_encoder_forward.1} parent=1 // pred_region
      _
    $region33: #{vit_image_encoder_forward.1} parent=1 // pred_fallthru
      _
    // Predicated region
    $region34: #{vit_image_encoder_forward.1} parent=1 // pred_check
      _
    $region35: #{vit_image_encoder_forward.1} parent=1 // pred_check_branch
      %44 = sbr.rel (0) target = $region37
    $region36: #{vit_image_encoder_forward.1} parent=1 // pred_region
      _
    $region37: #{vit_image_encoder_forward.1} parent=1 // pred_fallthru
      _
    // Predicated region
    $region38: #{vit_image_encoder_forward.1} parent=1 // pred_check
      _
    $region39: #{vit_image_encoder_forward.1} parent=1 // pred_check_branch
      %46 = sbr.rel (0) target = $region41
    $region40: #{vit_image_encoder_forward.1} parent=1 // pred_region
      _
    $region41: #{vit_image_encoder_forward.1} parent=1 // pred_fallthru
      _
    // Predicated region
    $region42: #{vit_image_encoder_forward.1} parent=1 // pred_check
      _
    $region43: #{vit_image_encoder_forward.1} parent=1 // pred_check_branch
      %48 = sbr.rel (0) target = $region45
    $region44: #{vit_image_encoder_forward.1} parent=1 // pred_region
      _
    $region45: #{vit_image_encoder_forward.1} parent=1 // pred_fallthru
      _
    // Predicated region
    $region46: #{vit_image_encoder_forward.1} parent=1 // pred_check
      _
    $region47: #{vit_image_encoder_forward.1} parent=1 // pred_check_branch
      %50 = sbr.rel (0) target = $region49
    $region48: #{vit_image_encoder_forward.1} parent=1 // pred_region
      _
    $region49: #{vit_image_encoder_forward.1} parent=1 // pred_fallthru
      _
    // Predicated region
    $region50: #{vit_image_encoder_forward.1} parent=1 // pred_check
      _
    $region51: #{vit_image_encoder_forward.1} parent=1 // pred_check_branch
      %52 = sbr.rel (0) target = $region53
    $region52: #{vit_image_encoder_forward.1} parent=1 // pred_region
      _
    $region53: #{vit_image_encoder_forward.1} parent=1 // pred_fallthru
      _
    // Predicated region
    $region54: #{vit_image_encoder_forward.1} parent=1 // pred_check
      _
    $region55: #{vit_image_encoder_forward.1} parent=1 // pred_check_branch
      %54 = sbr.rel (0) target = $region57
    $region56: #{vit_image_encoder_forward.1} parent=1 // pred_region
      _
    $region57: #{vit_image_encoder_forward.1} parent=1 // pred_fallthru
      _
    // Predicated region
    $region58: #{vit_image_encoder_forward.1} parent=1 // pred_check
      _
    $region59: #{vit_image_encoder_forward.1} parent=1 // pred_check_branch
      %56 = sbr.rel (0) target = $region61
    $region60: #{vit_image_encoder_forward.1} parent=1 // pred_region
      _
    $region61: #{vit_image_encoder_forward.1} parent=1 // pred_fallthru
      _
    // Predicated region
    $region62: #{vit_image_encoder_forward.1} parent=1 // pred_check
      _
    $region63: #{vit_image_encoder_forward.1} parent=1 // pred_check_branch
      %58 = sbr.rel (0) target = $region65
    $region64: #{vit_image_encoder_forward.1} parent=1 // pred_region
      _
    $region65: #{vit_image_encoder_forward.1} parent=1 // pred_fallthru
      _
    // Predicated region
    $region66: #{vit_image_encoder_forward.1} parent=1 // pred_check
      _
    $region67: #{vit_image_encoder_forward.1} parent=1 // pred_check_branch
      %60 = sbr.rel (0) target = $region69
    $region68: #{vit_image_encoder_forward.1} parent=1 // pred_region
      _
    $region69: #{vit_image_encoder_forward.1} parent=1 // pred_fallthru
      _
    // Predicated region
    $region70: #{vit_image_encoder_forward.1} parent=1 // pred_check
      _
    $region71: #{vit_image_encoder_forward.1} parent=1 // pred_check_branch
      %62 = sbr.rel (0) target = $region73
    $region72: #{vit_image_encoder_forward.1} parent=1 // pred_region
      _
    $region73: #{vit_image_encoder_forward.1} parent=1 // pred_fallthru
      _
    // Predicated region
    $region74: #{vit_image_encoder_forward.1} parent=1 // pred_check
      _
    $region75: #{vit_image_encoder_forward.1} parent=1 // pred_check_branch
      %64 = sbr.rel (0) target = $region77
    $region76: #{vit_image_encoder_forward.1} parent=1 // pred_region
      _
    $region77: #{vit_image_encoder_forward.1} parent=1 // pred_fallthru
      _
    // Predicated region
    $region78: #{vit_image_encoder_forward.1} parent=1 // pred_check
      _
    $region79: #{vit_image_encoder_forward.1} parent=1 // pred_check_branch
      %66 = sbr.rel (0) target = $region81
    $region80: #{vit_image_encoder_forward.1} parent=1 // pred_region
      _
    $region81: #{vit_image_encoder_forward.1} parent=1 // pred_fallthru
      _
    // Predicated region
    $region82: #{vit_image_encoder_forward.1} parent=1 // pred_check
      _
    $region83: #{vit_image_encoder_forward.1} parent=1 // pred_check_branch
      %68 = sbr.rel (0) target = $region85
    $region84: #{vit_image_encoder_forward.1} parent=1 // pred_region
      _
    $region85: #{vit_image_encoder_forward.1} parent=1 // pred_fallthru
      _
    %v69 = vld [vmem:[%s1] sm:$0xff]
    %v70 = vld [vmem:[%s1 + $0x8] sm:$0xff]
    %v71 = vld [vmem:[%s1 + $0x10] sm:$0xff]
    %v72 = vld [vmem:[%s1 + $0x18] sm:$0xff]
    %v73 = vld [vmem:[%s1 + $0x20] sm:$0xff]
    %v74 = vld [vmem:[%s1 + $0x28] sm:$0xff]
    %v75 = vld [vmem:[%s2] sm:$0xff]
    %v76 = vld [vmem:[%s2 + $0x8] sm:$0xff]
    %v77 = vld [vmem:[%s2 + $0x10] sm:$0x1]
    %v78 = vld [vmem:[%s0] sm:$0xff]
    %v79 = vld [vmem:[%s0 + $0x8] sm:$0xff]
    %v80 = vld [vmem:[%s0 + $0x10] sm:$0x1]
    %vm81 = vcmask 392192
    %v83 = vsel %vm81, %v78, 0
    %v86 = vsel %vm81, %v79, 0
    %v89 = vsel %vm81, %v80, 0
    %91 = vmatpush.msra.mxu0 0.0
    %92 = vmatpush.msra.mxu0 0.0
    %93 = vmatpush.msra.mxu0 0.0
    %94 = vmatpush.msra.mxu0 0.0
    %95 = vmatpush.msra.mxu0 0.0
    %96 = vmatpush.msra.mxu0 0.0
    %97 = vmatpush.msra.mxu0 0.0
    %98 = vmatpush.msra.mxu0 0.0
    %99 = vmatpush.msra.mxu0 0.0
    %100 = vmatpush.msra.mxu0 0.0
    %101 = vmatpush.msra.mxu0 %v74
    %102 = vmatpush.msra.mxu0 %v73
    %103 = vmatpush.msra.mxu0 %v72
    %104 = vmatpush.msra.mxu0 %v71
    %105 = vmatpush.msra.mxu0 %v70
    %106 = vmatpush.msra.mxu0 %v69
    %107 = vmatmul.f32.gmra.mxu0 %v83
    %v108 = vpop.f32.mrf.mxu0
    %v109 = vadd.f32 %v75, %v108
    %110 = vmatmul.f32.gmra.mxu0 %v86
    %v111 = vpop.f32.mrf.mxu0
    %v112 = vadd.f32 %v76, %v111
    %113 = vmatmul.f32.gmra.mxu0 %v89
    %v114 = vpop.f32.mrf.mxu0
    %v115 = vadd.f32 %v77, %v114
    %116 = vdwg.mxu0
    %v117 = vld [vmem:[%s3] sm:$0x1]
    %v118 = vld [vmem:[%s4] sm:$0x1]
    %vm119 = vcmask 261120
    %v120 = vsel %vm119, %v109, 0.0
    %121 = vadd.xlane.f32.xlu0 %v120
    %v122 = vpop.xlane.xlu0 %121
    %v123 = vsel %vm119, %v112, 0.0
    %124 = vadd.xlane.f32.xlu0 %v123
    %v125 = vpop.xlane.xlu0 %124
    %vm126 = vcmask 253952
    %v127 = vsel %vm126, %v115, 0.0
    %128 = vadd.xlane.f32.xlu0 %v127
    %v129 = vpop.xlane.xlu0 %128
    %v130 = vrcp.pop 32.0
    %v131 = vmul.f32 32.0, %v130
    %v132 = vsub.f32 1.0, %v131
    %v133 = vmul.f32 %v130, %v132
    %v134 = vadd.f32 %v130, %v133
    %vm135 = vweird.f32 %v130
    %v136 = vsel %vm135, %v130, %v134
    %v137 = vmul.f32 %v122, %v136
    %v138 = vmul.f32 %v125, %v136
    %v139 = vmul.f32 %v129, %v136
    %v140 = vmul.f32 %v109, %v109
    %v141 = vmul.f32 %v112, %v112
    %v142 = vmul.f32 %v115, %v115
    %v143 = vsel %vm119, %v140, 0.0
    %144 = vadd.xlane.f32.xlu0 %v143
    %v145 = vpop.xlane.xlu0 %144
    %v146 = vsel %vm119, %v141, 0.0
    %147 = vadd.xlane.f32.xlu0 %v146
    %v148 = vpop.xlane.xlu0 %147
    %v149 = vsel %vm126, %v142, 0.0
    %150 = vadd.xlane.f32.xlu0 %v149
    %v151 = vpop.xlane.xlu0 %150
    %v152 = vmul.f32 %v145, %v136
    %v153 = vmul.f32 %v148, %v136
    %v154 = vmul.f32 %v151, %v136
    %v155 = vmul.f32 %v137, %v137
    %v156 = vmul.f32 %v138, %v138
    %v157 = vmul.f32 %v139, %v139
    %v158 = vsub.f32 %v152, %v155
    %v159 = vsub.f32 %v153, %v156
    %v160 = vsub.f32 %v154, %v157
    %v161 = vsub.f32 %v109, %v137
    %v162 = vsub.f32 %v112, %v138
    %v163 = vsub.f32 %v115, %v139
    %v164 = vadd.f32 %v158, 1e-06
    %v165 = vadd.f32 %v159, 1e-06
    %v166 = vadd.f32 %v160, 1e-06
    %v167 = vrsqrt.pop %v164
    %v168 = vmul.f32 %v167, %v164
    %v169 = vmul.f32 %v168, %v167
    %v170 = vmul.f32 0.5, %v169
    %v171 = vsub.f32 1.5, %v170
    %v172 = vmul.f32 %v167, %v171
    %vm173 = vweird.f32 %v164
    %vm174 = vweird.f32 %v167
    %vm175 = vmor %vm173, %vm174
    %v176 = vsel %vm175, %v167, %v172
    %v177 = vrsqrt.pop %v165
    %v178 = vmul.f32 %v177, %v165
    %v179 = vmul.f32 %v178, %v177
    %v180 = vmul.f32 0.5, %v179
    %v181 = vsub.f32 1.5, %v180
    %v182 = vmul.f32 %v177, %v181
    %vm183 = vweird.f32 %v165
    %vm184 = vweird.f32 %v177
    %vm185 = vmor %vm183, %vm184
    %v186 = vsel %vm185, %v177, %v182
    %v187 = vrsqrt.pop %v166
    %v188 = vmul.f32 %v187, %v166
    %v189 = vmul.f32 %v188, %v187
    %v190 = vmul.f32 0.5, %v189
    %v191 = vsub.f32 1.5, %v190
    %v192 = vmul.f32 %v187, %v191
    %vm193 = vweird.f32 %v166
    %vm194 = vweird.f32 %v187
    %vm195 = vmor %vm193, %vm194
    %v196 = vsel %vm195, %v187, %v192
    %v197 = vmul.f32 %v161, %v176
    %v198 = vmul.f32 %v162, %v186
    %v199 = vmul.f32 %v163, %v196
    %v201 = vperm.slane %v117, 0
    %v203 = vmul.f32 %v197, %v201
    %v204 = vmul.f32 %v198, %v201
    %v205 = vmul.f32 %v199, %v201
    %v207 = vperm.slane %v118, 0
    %v209 = vadd.f32 %v203, %v207
    %v210 = vadd.f32 %v204, %v207
    %v211 = vadd.f32 %v205, %v207
    %v212 = vld [vmem:[%s5] sm:$0xff]
    %v213 = vld [vmem:[%s5 + $0x8] sm:$0xff]
    %v214 = vld [vmem:[%s5 + $0x10] sm:$0xff]
    %v215 = vld [vmem:[%s5 + $0x18] sm:$0xff]
    %v216 = vld [vmem:[%s6] sm:$0x1]
    %v218 = vperm.slane %v216, 0
    %v221 = vsel %vm119, %v209, 0
    %v224 = vsel %vm119, %v210, 0
    %v227 = vsel %vm119, %v211, 0
    %229 = vmatpush.msra.mxu0 0.0
    %230 = vmatpush.msra.mxu0 0.0
    %231 = vmatpush.msra.mxu0 0.0
    %232 = vmatpush.msra.mxu0 0.0
    %233 = vmatpush.msra.mxu0 0.0
    %234 = vmatpush.msra.mxu0 0.0
    %235 = vmatpush.msra.mxu0 0.0
    %236 = vmatpush.msra.mxu0 0.0
    %237 = vmatpush.msra.mxu0 0.0
    %238 = vmatpush.msra.mxu0 0.0
    %239 = vmatpush.msra.mxu0 0.0
    %240 = vmatpush.msra.mxu0 0.0
    %241 = vmatpush.msra.mxu0 %v215
    %242 = vmatpush.msra.mxu0 %v214
    %243 = vmatpush.msra.mxu0 %v213
    %244 = vmatpush.msra.mxu0 %v212
    %245 = vmatmul.f32.gmra.mxu0 %v221
    %v246 = vpop.f32.mrf.mxu0
    %v247 = vadd.f32 %v218, %v246
    %248 = vmatmul.f32.gmra.mxu0 %v224
    %v249 = vpop.f32.mrf.mxu0
    %v250 = vadd.f32 %v218, %v249
    %251 = vmatmul.f32.gmra.mxu0 %v227
    %v252 = vpop.f32.mrf.mxu0
    %v253 = vadd.f32 %v218, %v252
    %254 = vdwg.mxu0
    %v255 = vld [vmem:[%s17] sm:$0xff]
    %v256 = vld [vmem:[%s17 + $0x8] sm:$0xff]
    %v257 = vld [vmem:[%s17 + $0x10] sm:$0xff]
    %v258 = vld [vmem:[%s17 + $0x18] sm:$0xff]
    %v259 = vld [vmem:[%s17 + $0x20] sm:$0xff]
    %v260 = vld [vmem:[%s17 + $0x28] sm:$0xff]
    %v261 = vld [vmem:[%s17 + $0x30] sm:$0xff]
    %v262 = vld [vmem:[%s17 + $0x38] sm:$0xff]
    %v263 = vld [vmem:[%s17 + $0x40] sm:$0xff]
    %v264 = vld [vmem:[%s17 + $0x48] sm:$0xff]
    %v265 = vld [vmem:[%s17 + $0x50] sm:$0xff]
    %v266 = vld [vmem:[%s17 + $0x58] sm:$0xff]
    %vm267 = vcmask 785408
    %v269 = vsel %vm267, %v247, 0
    %v272 = vsel %vm267, %v250, 0
    %v275 = vsel %vm267, %v253, 0
    %277 = vmatpush.msra.mxu0 0.0
    %278 = vmatpush.msra.mxu0 0.0
    %279 = vmatpush.msra.mxu0 0.0
    %280 = vmatpush.msra.mxu0 0.0
    %281 = vmatpush.msra.mxu0 %v266
    %282 = vmatpush.msra.mxu0 %v265
    %283 = vmatpush.msra.mxu0 %v264
    %284 = vmatpush.msra.mxu0 %v263
    %285 = vmatpush.msra.mxu0 %v262
    %286 = vmatpush.msra.mxu0 %v261
    %287 = vmatpush.msra.mxu0 %v260
    %288 = vmatpush.msra.mxu0 %v259
    %289 = vmatpush.msra.mxu0 %v258
    %290 = vmatpush.msra.mxu0 %v257
    %291 = vmatpush.msra.mxu0 %v256
    %292 = vmatpush.msra.mxu0 %v255
    %293 = vmatmul.f32.gmra.mxu0 %v269
    %v294 = vpop.f32.mrf.mxu0
    %v295 = vadd.f32 0.0, %v294
    %296 = vmatmul.f32.gmra.mxu0 %v272
    %v297 = vpop.f32.mrf.mxu0
    %v298 = vadd.f32 0.0, %v297
    %299 = vmatmul.f32.gmra.mxu0 %v275
    %v300 = vpop.f32.mrf.mxu0
    %v301 = vadd.f32 0.0, %v300
    %302 = vdwg.mxu0
    %v303 = vld [vmem:[%s18] sm:$0xff]
    %v304 = vld [vmem:[%s18 + $0x8] sm:$0xff]
    %v305 = vld [vmem:[%s18 + $0x10] sm:$0xff]
    %v306 = vld [vmem:[%s18 + $0x18] sm:$0xff]
    %v307 = vld [vmem:[%s18 + $0x20] sm:$0xff]
    %v308 = vld [vmem:[%s18 + $0x28] sm:$0xff]
    %v309 = vld [vmem:[%s18 + $0x30] sm:$0xff]
    %v310 = vld [vmem:[%s18 + $0x38] sm:$0xff]
    %v311 = vld [vmem:[%s18 + $0x40] sm:$0xff]
    %v312 = vld [vmem:[%s18 + $0x48] sm:$0xff]
    %v313 = vld [vmem:[%s18 + $0x50] sm:$0xff]
    %v314 = vld [vmem:[%s18 + $0x58] sm:$0xff]
    %315 = vmatpush.msra.mxu0 0.0
    %316 = vmatpush.msra.mxu0 0.0
    %317 = vmatpush.msra.mxu0 0.0
    %318 = vmatpush.msra.mxu0 0.0
    %319 = vmatpush.msra.mxu0 %v314
    %320 = vmatpush.msra.mxu0 %v313
    %321 = vmatpush.msra.mxu0 %v312
    %322 = vmatpush.msra.mxu0 %v311
    %323 = vmatpush.msra.mxu0 %v310
    %324 = vmatpush.msra.mxu0 %v309
    %325 = vmatpush.msra.mxu0 %v308
    %326 = vmatpush.msra.mxu0 %v307
    %327 = vmatpush.msra.mxu0 %v306
    %328 = vmatpush.msra.mxu0 %v305
    %329 = vmatpush.msra.mxu0 %v304
    %330 = vmatpush.msra.mxu0 %v303
    %331 = vmatmul.f32.gmra.mxu0 %v269
    %v332 = vpop.f32.mrf.mxu0
    %v333 = vadd.f32 0.0, %v332
    %334 = vmatmul.f32.gmra.mxu0 %v272
    %v335 = vpop.f32.mrf.mxu0
    %v336 = vadd.f32 0.0, %v335
    %337 = vmatmul.f32.gmra.mxu0 %v275
    %v338 = vpop.f32.mrf.mxu0
    %v339 = vadd.f32 0.0, %v338
    %340 = vdwg.mxu0
    %v341 = vld [vmem:[%s19] sm:$0xff]
    %v342 = vld [vmem:[%s19 + $0x8] sm:$0xff]
    %v343 = vld [vmem:[%s19 + $0x10] sm:$0xff]
    %v344 = vld [vmem:[%s19 + $0x18] sm:$0xff]
    %v345 = vld [vmem:[%s19 + $0x20] sm:$0xff]
    %v346 = vld [vmem:[%s19 + $0x28] sm:$0xff]
    %v347 = vld [vmem:[%s19 + $0x30] sm:$0xff]
    %v348 = vld [vmem:[%s19 + $0x38] sm:$0xff]
    %v349 = vld [vmem:[%s19 + $0x40] sm:$0xff]
    %v350 = vld [vmem:[%s19 + $0x48] sm:$0xff]
    %v351 = vld [vmem:[%s19 + $0x50] sm:$0xff]
    %v352 = vld [vmem:[%s19 + $0x58] sm:$0xff]
    %353 = vmatpush.msra.mxu0 0.0
    %354 = vmatpush.msra.mxu0 0.0
    %355 = vmatpush.msra.mxu0 0.0
    %356 = vmatpush.msra.mxu0 0.0
    %357 = vmatpush.msra.mxu0 %v352
    %358 = vmatpush.msra.mxu0 %v351
    %359 = vmatpush.msra.mxu0 %v350
    %360 = vmatpush.msra.mxu0 %v349
    %361 = vmatpush.msra.mxu0 %v348
    %362 = vmatpush.msra.mxu0 %v347
    %363 = vmatpush.msra.mxu0 %v346
    %364 = vmatpush.msra.mxu0 %v345
    %365 = vmatpush.msra.mxu0 %v344
    %366 = vmatpush.msra.mxu0 %v343
    %367 = vmatpush.msra.mxu0 %v342
    %368 = vmatpush.msra.mxu0 %v341
    %369 = vmatmul.f32.gmra.mxu0 %v269
    %v370 = vpop.f32.mrf.mxu0
    %v371 = vadd.f32 0.0, %v370
    %372 = vmatmul.f32.gmra.mxu0 %v272
    %v373 = vpop.f32.mrf.mxu0
    %v374 = vadd.f32 0.0, %v373
    %375 = vmatmul.f32.gmra.mxu0 %v275
    %v376 = vpop.f32.mrf.mxu0
    %v377 = vadd.f32 0.0, %v376
    %378 = vdwg.mxu0
    %vm379 = vcmask 64512
    %v381 = vsel %vm379, %v295, 0
    %v384 = vsel %vm379, %v298, 0
    %v387 = vsel %vm379, %v301, 0
    %v390 = vsel %vm379, %v333, 0
    %v393 = vsel %vm379, %v336, 0
    %v396 = vsel %vm379, %v339, 0
    %398 = vmatpush.xpose.msra.mxu0 0.0
    %399 = vmatpush.xpose.msra.mxu0 0.0
    %400 = vmatpush.xpose.msra.mxu0 0.0
    %401 = vmatpush.xpose.msra.mxu0 0.0
    %402 = vmatpush.xpose.msra.mxu0 0.0
    %403 = vmatpush.xpose.msra.mxu0 0.0
    %404 = vmatpush.xpose.msra.mxu0 0.0
    %405 = vmatpush.xpose.msra.mxu0 0.0
    %406 = vmatpush.xpose.msra.mxu0 0.0
    %407 = vmatpush.xpose.msra.mxu0 0.0
    %408 = vmatpush.xpose.msra.mxu0 0.0
    %409 = vmatpush.xpose.msra.mxu0 0.0
    %410 = vmatpush.xpose.msra.mxu0 0.0
    %411 = vmatpush.xpose.msra.mxu0 %v396
    %412 = vmatpush.xpose.msra.mxu0 %v393
    %413 = vmatpush.xpose.msra.mxu0 %v390
    %414 = vmatmul.f32.gmra.mxu0 %v381
    %v415 = vpop.f32.mrf.mxu0
    %v416 = vadd.f32 0.0, %v415
    %417 = vmatmul.f32.gmra.mxu0 %v384
    %v418 = vpop.f32.mrf.mxu0
    %v419 = vadd.f32 0.0, %v418
    %420 = vmatmul.f32.gmra.mxu0 %v387
    %v421 = vpop.f32.mrf.mxu0
    %v422 = vadd.f32 0.0, %v421
    %423 = vdwg.mxu0
    %vm424 = vcmask 138240
    %v425 = vsel %vm424, %v416, -inf
    %426 = vmax.xlane.f32.xlu0 %v425
    %v427 = vpop.xlane.xlu0 %426
    %v428 = vsel %vm424, %v419, -inf
    %429 = vmax.xlane.f32.xlu0 %v428
    %v430 = vpop.xlane.xlu0 %429
    %vm431 = vcmask 131072
    %v432 = vsel %vm431, %v422, -inf
    %433 = vmax.xlane.f32.xlu0 %v432
    %v434 = vpop.xlane.xlu0 %433
    %v435 = vsub.f32 %v416, %v427
    %v436 = vsub.f32 %v419, %v430
    %v437 = vsub.f32 %v422, %v434
    %v438 = vmul.f32 %v435, 1.442695
    %v439 = vpow.pop %v438
    %v440 = vmul.f32 %v436, 1.442695
    %v441 = vpow.pop %v440
    %v442 = vmul.f32 %v437, 1.442695
    %v443 = vpow.pop %v442
    %v444 = vsel %vm424, %v439, 0.0
    %445 = vadd.xlane.f32.xlu0 %v444
    %v446 = vpop.xlane.xlu0 %445
    %v447 = vsel %vm424, %v441, 0.0
    %448 = vadd.xlane.f32.xlu0 %v447
    %v449 = vpop.xlane.xlu0 %448
    %v450 = vsel %vm431, %v443, 0.0
    %451 = vadd.xlane.f32.xlu0 %v450
    %v452 = vpop.xlane.xlu0 %451
    %v453 = vrcp.pop %v446
    %v454 = vrcp.pop %v449
    %v455 = vrcp.pop %v452
    %v456 = vmul.f32 %v439, %v453
    %v457 = vmul.f32 %v441, %v454
    %v458 = vmul.f32 %v443, %v455
    %v460 = vsel %vm424, %v456, 0
    %v463 = vsel %vm424, %v457, 0
    %v466 = vsel %vm424, %v458, 0
    %vm468 = vcmask 1040384
    %v470 = vsel %vm468, %v377, 0
    %472 = vmatpush.msra.mxu0 0.0
    %473 = vmatpush.msra.mxu0 0.0
    %474 = vmatpush.msra.mxu0 0.0
    %475 = vmatpush.msra.mxu0 0.0
    %476 = vmatpush.msra.mxu0 0.0
    %477 = vmatpush.msra.mxu0 0.0
    %478 = vmatpush.msra.mxu0 0.0
    %479 = vmatpush.msra.mxu0 0.0
    %480 = vmatpush.msra.mxu0 0.0
    %481 = vmatpush.msra.mxu0 0.0
    %482 = vmatpush.msra.mxu0 0.0
    %483 = vmatpush.msra.mxu0 0.0
    %484 = vmatpush.msra.mxu0 0.0
    %485 = vmatpush.msra.mxu0 %v470
    %486 = vmatpush.msra.mxu0 %v374
    %487 = vmatpush.msra.mxu0 %v371
    %488 = vmatmul.f32.gmra.mxu0 %v460
    %v489 = vpop.f32.mrf.mxu0
    %v490 = vadd.f32 0.0, %v489
    %491 = vmatmul.f32.gmra.mxu0 %v463
    %v492 = vpop.f32.mrf.mxu0
    %v493 = vadd.f32 0.0, %v492
    %494 = vmatmul.f32.gmra.mxu0 %v466
    %v495 = vpop.f32.mrf.mxu0
    %v496 = vadd.f32 0.0, %v495
    %497 = vdwg.mxu0
    %v498 = vld [vmem:[%s20] sm:$0xff]
    %s499 = scalar_lea.vmem %s17, 96
    %v500 = vld [vmem:[%s499] sm:$0xff]
    %v501 = vld [vmem:[%s499 + $0x8] sm:$0xff]
    %v502 = vld [vmem:[%s499 + $0x10] sm:$0xff]
    %v503 = vld [vmem:[%s499 + $0x18] sm:$0xff]
    %v504 = vld [vmem:[%s499 + $0x20] sm:$0xff]
    %v505 = vld [vmem:[%s499 + $0x28] sm:$0xff]
    %v506 = vld [vmem:[%s499 + $0x30] sm:$0xff]
    %v507 = vld [vmem:[%s499 + $0x38] sm:$0xff]
    %v508 = vld [vmem:[%s499 + $0x40] sm:$0xff]
    %v509 = vld [vmem:[%s499 + $0x48] sm:$0xff]
    %v510 = vld [vmem:[%s499 + $0x50] sm:$0xff]
    %v511 = vld [vmem:[%s499 + $0x58] sm:$0xff]
    %512 = vmatpush.msra.mxu0 0.0
    %513 = vmatpush.msra.mxu0 0.0
    %514 = vmatpush.msra.mxu0 0.0
    %515 = vmatpush.msra.mxu0 0.0
    %516 = vmatpush.msra.mxu0 %v511
    %517 = vmatpush.msra.mxu0 %v510
    %518 = vmatpush.msra.mxu0 %v509
    %519 = vmatpush.msra.mxu0 %v508
    %520 = vmatpush.msra.mxu0 %v507
    %521 = vmatpush.msra.mxu0 %v506
    %522 = vmatpush.msra.mxu0 %v505
    %523 = vmatpush.msra.mxu0 %v504
    %524 = vmatpush.msra.mxu0 %v503
    %525 = vmatpush.msra.mxu0 %v502
    %526 = vmatpush.msra.mxu0 %v501
    %527 = vmatpush.msra.mxu0 %v500
    %528 = vmatmul.f32.gmra.mxu0 %v269
    %v529 = vpop.f32.mrf.mxu0
    %v530 = vadd.f32 0.0, %v529
    %531 = vmatmul.f32.gmra.mxu0 %v272
    %v532 = vpop.f32.mrf.mxu0
    %v533 = vadd.f32 0.0, %v532
    %534 = vmatmul.f32.gmra.mxu0 %v275
    %v535 = vpop.f32.mrf.mxu0
    %v536 = vadd.f32 0.0, %v535
    %537 = vdwg.mxu0
    %s538 = scalar_lea.vmem %s18, 96
    %v539 = vld [vmem:[%s538] sm:$0xff]
    %v540 = vld [vmem:[%s538 + $0x8] sm:$0xff]
    %v541 = vld [vmem:[%s538 + $0x10] sm:$0xff]
    %v542 = vld [vmem:[%s538 + $0x18] sm:$0xff]
    %v543 = vld [vmem:[%s538 + $0x20] sm:$0xff]
    %v544 = vld [vmem:[%s538 + $0x28] sm:$0xff]
    %v545 = vld [vmem:[%s538 + $0x30] sm:$0xff]
    %v546 = vld [vmem:[%s538 + $0x38] sm:$0xff]
    %v547 = vld [vmem:[%s538 + $0x40] sm:$0xff]
    %v548 = vld [vmem:[%s538 + $0x48] sm:$0xff]
    %v549 = vld [vmem:[%s538 + $0x50] sm:$0xff]
    %v550 = vld [vmem:[%s538 + $0x58] sm:$0xff]
    %551 = vmatpush.msra.mxu0 0.0
    %552 = vmatpush.msra.mxu0 0.0
    %553 = vmatpush.msra.mxu0 0.0
    %554 = vmatpush.msra.mxu0 0.0
    %555 = vmatpush.msra.mxu0 %v550
    %556 = vmatpush.msra.mxu0 %v549
    %557 = vmatpush.msra.mxu0 %v548
    %558 = vmatpush.msra.mxu0 %v547
    %559 = vmatpush.msra.mxu0 %v546
    %560 = vmatpush.msra.mxu0 %v545
    %561 = vmatpush.msra.mxu0 %v544
    %562 = vmatpush.msra.mxu0 %v543
    %563 = vmatpush.msra.mxu0 %v542
    %564 = vmatpush.msra.mxu0 %v541
    %565 = vmatpush.msra.mxu0 %v540
    %566 = vmatpush.msra.mxu0 %v539
    %567 = vmatmul.f32.gmra.mxu0 %v269
    %v568 = vpop.f32.mrf.mxu0
    %v569 = vadd.f32 0.0, %v568
    %570 = vmatmul.f32.gmra.mxu0 %v272
    %v571 = vpop.f32.mrf.mxu0
    %v572 = vadd.f32 0.0, %v571
    %573 = vmatmul.f32.gmra.mxu0 %v275
    %v574 = vpop.f32.mrf.mxu0
    %v575 = vadd.f32 0.0, %v574
    %576 = vdwg.mxu0
    %s577 = scalar_lea.vmem %s19, 96
    %v578 = vld [vmem:[%s577] sm:$0xff]
    %v579 = vld [vmem:[%s577 + $0x8] sm:$0xff]
    %v580 = vld [vmem:[%s577 + $0x10] sm:$0xff]
    %v581 = vld [vmem:[%s577 + $0x18] sm:$0xff]
    %v582 = vld [vmem:[%s577 + $0x20] sm:$0xff]
    %v583 = vld [vmem:[%s577 + $0x28] sm:$0xff]
    %v584 = vld [vmem:[%s577 + $0x30] sm:$0xff]
    %v585 = vld [vmem:[%s577 + $0x38] sm:$0xff]
    %v586 = vld [vmem:[%s577 + $0x40] sm:$0xff]
    %v587 = vld [vmem:[%s577 + $0x48] sm:$0xff]
    %v588 = vld [vmem:[%s577 + $0x50] sm:$0xff]
    %v589 = vld [vmem:[%s577 + $0x58] sm:$0xff]
    %590 = vmatpush.msra.mxu0 0.0
    %591 = vmatpush.msra.mxu0 0.0
    %592 = vmatpush.msra.mxu0 0.0
    %593 = vmatpush.msra.mxu0 0.0
    %594 = vmatpush.msra.mxu0 %v589
    %595 = vmatpush.msra.mxu0 %v588
    %596 = vmatpush.msra.mxu0 %v587
    %597 = vmatpush.msra.mxu0 %v586
    %598 = vmatpush.msra.mxu0 %v585
    %599 = vmatpush.msra.mxu0 %v584
    %600 = vmatpush.msra.mxu0 %v583
    %601 = vmatpush.msra.mxu0 %v582
    %602 = vmatpush.msra.mxu0 %v581
    %603 = vmatpush.msra.mxu0 %v580
    %604 = vmatpush.msra.mxu0 %v579
    %605 = vmatpush.msra.mxu0 %v578
    %606 = vmatmul.f32.gmra.mxu0 %v269
    %v607 = vpop.f32.mrf.mxu0
    %v608 = vadd.f32 0.0, %v607
    %609 = vmatmul.f32.gmra.mxu0 %v272
    %v610 = vpop.f32.mrf.mxu0
    %v611 = vadd.f32 0.0, %v610
    %612 = vmatmul.f32.gmra.mxu0 %v275
    %v613 = vpop.f32.mrf.mxu0
    %v614 = vadd.f32 0.0, %v613
    %615 = vdwg.mxu0
    %v617 = vsel %vm379, %v530, 0
    %v620 = vsel %vm379, %v533, 0
    %v623 = vsel %vm379, %v536, 0
    %v626 = vsel %vm379, %v569, 0
    %v629 = vsel %vm379, %v572, 0
    %v632 = vsel %vm379, %v575, 0
    %634 = vmatpush.xpose.msra.mxu0 0.0
    %635 = vmatpush.xpose.msra.mxu0 0.0
    %636 = vmatpush.xpose.msra.mxu0 0.0
    %637 = vmatpush.xpose.msra.mxu0 0.0
    %638 = vmatpush.xpose.msra.mxu0 0.0
    %639 = vmatpush.xpose.msra.mxu0 0.0
    %640 = vmatpush.xpose.msra.mxu0 0.0
    %641 = vmatpush.xpose.msra.mxu0 0.0
    %642 = vmatpush.xpose.msra.mxu0 0.0
    %643 = vmatpush.xpose.msra.mxu0 0.0
    %644 = vmatpush.xpose.msra.mxu0 0.0
    %645 = vmatpush.xpose.msra.mxu0 0.0
    %646 = vmatpush.xpose.msra.mxu0 0.0
    %647 = vmatpush.xpose.msra.mxu0 %v632
    %648 = vmatpush.xpose.msra.mxu0 %v629
    %649 = vmatpush.xpose.msra.mxu0 %v626
    %650 = vmatmul.f32.gmra.mxu0 %v617
    %v651 = vpop.f32.mrf.mxu0
    %v652 = vadd.f32 0.0, %v651
    %653 = vmatmul.f32.gmra.mxu0 %v620
    %v654 = vpop.f32.mrf.mxu0
    %v655 = vadd.f32 0.0, %v654
    %656 = vmatmul.f32.gmra.mxu0 %v623
    %v657 = vpop.f32.mrf.mxu0
    %v658 = vadd.f32 0.0, %v657
    %659 = vdwg.mxu0
    %v660 = vsel %vm424, %v652, -inf
    %661 = vmax.xlane.f32.xlu0 %v660
    %v662 = vpop.xlane.xlu0 %661
    %v663 = vsel %vm424, %v655, -inf
    %664 = vmax.xlane.f32.xlu0 %v663
    %v665 = vpop.xlane.xlu0 %664
    %v666 = vsel %vm431, %v658, -inf
    %667 = vmax.xlane.f32.xlu0 %v666
    %v668 = vpop.xlane.xlu0 %667
    %v669 = vsub.f32 %v652, %v662
    %v670 = vsub.f32 %v655, %v665
    %v671 = vsub.f32 %v658, %v668
    %v672 = vmul.f32 %v669, 1.442695
    %v673 = vpow.pop %v672
    %v674 = vmul.f32 %v670, 1.442695
    %v675 = vpow.pop %v674
    %v676 = vmul.f32 %v671, 1.442695
    %v677 = vpow.pop %v676
    %v678 = vsel %vm424, %v673, 0.0
    %679 = vadd.xlane.f32.xlu0 %v678
    %v680 = vpop.xlane.xlu0 %679
    %v681 = vsel %vm424, %v675, 0.0
    %682 = vadd.xlane.f32.xlu0 %v681
    %v683 = vpop.xlane.xlu0 %682
    %v684 = vsel %vm431, %v677, 0.0
    %685 = vadd.xlane.f32.xlu0 %v684
    %v686 = vpop.xlane.xlu0 %685
    %v687 = vrcp.pop %v680
    %v688 = vrcp.pop %v683
    %v689 = vrcp.pop %v686
    %v690 = vmul.f32 %v673, %v687
    %v691 = vmul.f32 %v675, %v688
    %v692 = vmul.f32 %v677, %v689
    %v694 = vsel %vm424, %v690, 0
    %v697 = vsel %vm424, %v691, 0
    %v700 = vsel %vm424, %v692, 0
    %v703 = vsel %vm468, %v614, 0
    %705 = vmatpush.msra.mxu0 0.0
    %706 = vmatpush.msra.mxu0 0.0
    %707 = vmatpush.msra.mxu0 0.0
    %708 = vmatpush.msra.mxu0 0.0
    %709 = vmatpush.msra.mxu0 0.0
    %710 = vmatpush.msra.mxu0 0.0
    %711 = vmatpush.msra.mxu0 0.0
    %712 = vmatpush.msra.mxu0 0.0
    %713 = vmatpush.msra.mxu0 0.0
    %714 = vmatpush.msra.mxu0 0.0
    %715 = vmatpush.msra.mxu0 0.0
    %716 = vmatpush.msra.mxu0 0.0
    %717 = vmatpush.msra.mxu0 0.0
    %718 = vmatpush.msra.mxu0 %v703
    %719 = vmatpush.msra.mxu0 %v611
    %720 = vmatpush.msra.mxu0 %v608
    %721 = vmatmul.f32.gmra.mxu0 %v694
    %v722 = vpop.f32.mrf.mxu0
    %v723 = vadd.f32 0.0, %v722
    %724 = vmatmul.f32.gmra.mxu0 %v697
    %v725 = vpop.f32.mrf.mxu0
    %v726 = vadd.f32 0.0, %v725
    %727 = vmatmul.f32.gmra.mxu0 %v700
    %v728 = vpop.f32.mrf.mxu0
    %v729 = vadd.f32 0.0, %v728
    %730 = vdwg.mxu0
    %s731 = scalar_lea.vmem %s20, 8
    %v732 = vld [vmem:[%s731] sm:$0xff]
    %v734 = vsel %vm379, %v723, 0
    %v737 = vsel %vm379, %v726, 0
    %v740 = vsel %vm379, %v729, 0
    %742 = vmatpush.msra.mxu0 0.0
    %743 = vmatpush.msra.mxu0 0.0
    %744 = vmatpush.msra.mxu0 0.0
    %745 = vmatpush.msra.mxu0 0.0
    %746 = vmatpush.msra.mxu0 0.0
    %747 = vmatpush.msra.mxu0 0.0
    %748 = vmatpush.msra.mxu0 0.0
    %749 = vmatpush.msra.mxu0 0.0
    %750 = vmatpush.msra.mxu0 0.0
    %751 = vmatpush.msra.mxu0 0.0
    %752 = vmatpush.msra.mxu0 0.0
    %753 = vmatpush.msra.mxu0 0.0
    %754 = vmatpush.msra.mxu0 0.0
    %755 = vmatpush.msra.mxu0 0.0
    %756 = vmatpush.msra.mxu0 0.0
    %757 = vmatpush.msra.mxu0 %v732
    %758 = vmatmul.f32.gmra.mxu0 %v734
    %v759 = vpop.f32.mrf.mxu0
    %v760 = vadd.f32 0.0, %v759
    %761 = vmatmul.f32.gmra.mxu0 %v737
    %v762 = vpop.f32.mrf.mxu0
    %v763 = vadd.f32 0.0, %v762
    %764 = vmatmul.f32.gmra.mxu0 %v740
    %v765 = vpop.f32.mrf.mxu0
    %v766 = vadd.f32 0.0, %v765
    %767 = vdwg.mxu0
    %v769 = vsel %vm379, %v490, 0
    %v772 = vsel %vm379, %v493, 0
    %v775 = vsel %vm379, %v496, 0
    %777 = vmatpush.msra.mxu0 0.0
    %778 = vmatpush.msra.mxu0 0.0
    %779 = vmatpush.msra.mxu0 0.0
    %780 = vmatpush.msra.mxu0 0.0
    %781 = vmatpush.msra.mxu0 0.0
    %782 = vmatpush.msra.mxu0 0.0
    %783 = vmatpush.msra.mxu0 0.0
    %784 = vmatpush.msra.mxu0 0.0
    %785 = vmatpush.msra.mxu0 0.0
    %786 = vmatpush.msra.mxu0 0.0
    %787 = vmatpush.msra.mxu0 0.0
    %788 = vmatpush.msra.mxu0 0.0
    %789 = vmatpush.msra.mxu0 0.0
    %790 = vmatpush.msra.mxu0 0.0
    %791 = vmatpush.msra.mxu0 0.0
    %792 = vmatpush.msra.mxu0 %v498
    %793 = vmatmul.f32.gmra.mxu0 %v769
    %v794 = vpop.f32.mrf.mxu0
    %v795 = vadd.f32 %v760, %v794
    %796 = vmatmul.f32.gmra.mxu0 %v772
    %v797 = vpop.f32.mrf.mxu0
    %v798 = vadd.f32 %v763, %v797
    %799 = vmatmul.f32.gmra.mxu0 %v775
    %v800 = vpop.f32.mrf.mxu0
    %v801 = vadd.f32 %v766, %v800
    %802 = vdwg.mxu0
    %s803 = scalar_lea.vmem %s17, 192
    %v804 = vld [vmem:[%s803] sm:$0xff]
    %v805 = vld [vmem:[%s803 + $0x8] sm:$0xff]
    %v806 = vld [vmem:[%s803 + $0x10] sm:$0xff]
    %v807 = vld [vmem:[%s803 + $0x18] sm:$0xff]
    %v808 = vld [vmem:[%s803 + $0x20] sm:$0xff]
    %v809 = vld [vmem:[%s803 + $0x28] sm:$0xff]
    %v810 = vld [vmem:[%s803 + $0x30] sm:$0xff]
    %v811 = vld [vmem:[%s803 + $0x38] sm:$0xff]
    %v812 = vld [vmem:[%s803 + $0x40] sm:$0xff]
    %v813 = vld [vmem:[%s803 + $0x48] sm:$0xff]
    %v814 = vld [vmem:[%s803 + $0x50] sm:$0xff]
    %v815 = vld [vmem:[%s803 + $0x58] sm:$0xff]
    %816 = vmatpush.msra.mxu0 0.0
    %817 = vmatpush.msra.mxu0 0.0
    %818 = vmatpush.msra.mxu0 0.0
    %819 = vmatpush.msra.mxu0 0.0
    %820 = vmatpush.msra.mxu0 %v815
    %821 = vmatpush.msra.mxu0 %v814
    %822 = vmatpush.msra.mxu0 %v813
    %823 = vmatpush.msra.mxu0 %v812
    %824 = vmatpush.msra.mxu0 %v811
    %825 = vmatpush.msra.mxu0 %v810
    %826 = vmatpush.msra.mxu0 %v809
    %827 = vmatpush.msra.mxu0 %v808
    %828 = vmatpush.msra.mxu0 %v807
    %829 = vmatpush.msra.mxu0 %v806
    %830 = vmatpush.msra.mxu0 %v805
    %831 = vmatpush.msra.mxu0 %v804
    %832 = vmatmul.f32.gmra.mxu0 %v269
    %v833 = vpop.f32.mrf.mxu0
    %v834 = vadd.f32 0.0, %v833
    %835 = vmatmul.f32.gmra.mxu0 %v272
    %v836 = vpop.f32.mrf.mxu0
    %v837 = vadd.f32 0.0, %v836
    %838 = vmatmul.f32.gmra.mxu0 %v275
    %v839 = vpop.f32.mrf.mxu0
    %v840 = vadd.f32 0.0, %v839
    %841 = vdwg.mxu0
    %s842 = scalar_lea.vmem %s18, 192
    %v843 = vld [vmem:[%s842] sm:$0xff]
    %v844 = vld [vmem:[%s842 + $0x8] sm:$0xff]
    %v845 = vld [vmem:[%s842 + $0x10] sm:$0xff]
    %v846 = vld [vmem:[%s842 + $0x18] sm:$0xff]
    %v847 = vld [vmem:[%s842 + $0x20] sm:$0xff]
    %v848 = vld [vmem:[%s842 + $0x28] sm:$0xff]
    %v849 = vld [vmem:[%s842 + $0x30] sm:$0xff]
    %v850 = vld [vmem:[%s842 + $0x38] sm:$0xff]
    %v851 = vld [vmem:[%s842 + $0x40] sm:$0xff]
    %v852 = vld [vmem:[%s842 + $0x48] sm:$0xff]
    %v853 = vld [vmem:[%s842 + $0x50] sm:$0xff]
    %v854 = vld [vmem:[%s842 + $0x58] sm:$0xff]
    %855 = vmatpush.msra.mxu0 0.0
    %856 = vmatpush.msra.mxu0 0.0
    %857 = vmatpush.msra.mxu0 0.0
    %858 = vmatpush.msra.mxu0 0.0
    %859 = vmatpush.msra.mxu0 %v854
    %860 = vmatpush.msra.mxu0 %v853
    %861 = vmatpush.msra.mxu0 %v852
    %862 = vmatpush.msra.mxu0 %v851
    %863 = vmatpush.msra.mxu0 %v850
    %864 = vmatpush.msra.mxu0 %v849
    %865 = vmatpush.msra.mxu0 %v848
    %866 = vmatpush.msra.mxu0 %v847
    %867 = vmatpush.msra.mxu0 %v846
    %868 = vmatpush.msra.mxu0 %v845
    %869 = vmatpush.msra.mxu0 %v844
    %870 = vmatpush.msra.mxu0 %v843
    %871 = vmatmul.f32.gmra.mxu0 %v269
    %v872 = vpop.f32.mrf.mxu0
    %v873 = vadd.f32 0.0, %v872
    %874 = vmatmul.f32.gmra.mxu0 %v272
    %v875 = vpop.f32.mrf.mxu0
    %v876 = vadd.f32 0.0, %v875
    %877 = vmatmul.f32.gmra.mxu0 %v275
    %v878 = vpop.f32.mrf.mxu0
    %v879 = vadd.f32 0.0, %v878
    %880 = vdwg.mxu0
    %s881 = scalar_lea.vmem %s19, 192
    %v882 = vld [vmem:[%s881] sm:$0xff]
    %v883 = vld [vmem:[%s881 + $0x8] sm:$0xff]
    %v884 = vld [vmem:[%s881 + $0x10] sm:$0xff]
    %v885 = vld [vmem:[%s881 + $0x18] sm:$0xff]
    %v886 = vld [vmem:[%s881 + $0x20] sm:$0xff]
    %v887 = vld [vmem:[%s881 + $0x28] sm:$0xff]
    %v888 = vld [vmem:[%s881 + $0x30] sm:$0xff]
    %v889 = vld [vmem:[%s881 + $0x38] sm:$0xff]
    %v890 = vld [vmem:[%s881 + $0x40] sm:$0xff]
    %v891 = vld [vmem:[%s881 + $0x48] sm:$0xff]
    %v892 = vld [vmem:[%s881 + $0x50] sm:$0xff]
    %v893 = vld [vmem:[%s881 + $0x58] sm:$0xff]
    %894 = vmatpush.msra.mxu0 0.0
    %895 = vmatpush.msra.mxu0 0.0
    %896 = vmatpush.msra.mxu0 0.0
    %897 = vmatpush.msra.mxu0 0.0
    %898 = vmatpush.msra.mxu0 %v893
    %899 = vmatpush.msra.mxu0 %v892
    %900 = vmatpush.msra.mxu0 %v891
    %901 = vmatpush.msra.mxu0 %v890
    %902 = vmatpush.msra.mxu0 %v889
    %903 = vmatpush.msra.mxu0 %v888
    %904 = vmatpush.msra.mxu0 %v887
    %905 = vmatpush.msra.mxu0 %v886
    %906 = vmatpush.msra.mxu0 %v885
    %907 = vmatpush.msra.mxu0 %v884
    %908 = vmatpush.msra.mxu0 %v883
    %909 = vmatpush.msra.mxu0 %v882
    %910 = vmatmul.f32.gmra.mxu0 %v269
    %v911 = vpop.f32.mrf.mxu0
    %v912 = vadd.f32 0.0, %v911
    %913 = vmatmul.f32.gmra.mxu0 %v272
    %v914 = vpop.f32.mrf.mxu0
    %v915 = vadd.f32 0.0, %v914
    %916 = vmatmul.f32.gmra.mxu0 %v275
    %v917 = vpop.f32.mrf.mxu0
    %v918 = vadd.f32 0.0, %v917
    %919 = vdwg.mxu0
    %v921 = vsel %vm379, %v834, 0
    %v924 = vsel %vm379, %v837, 0
    %v927 = vsel %vm379, %v840, 0
    %v930 = vsel %vm379, %v873, 0
    %v933 = vsel %vm379, %v876, 0
    %v936 = vsel %vm379, %v879, 0
    %938 = vmatpush.xpose.msra.mxu0 0.0
    %939 = vmatpush.xpose.msra.mxu0 0.0
    %940 = vmatpush.xpose.msra.mxu0 0.0
    %941 = vmatpush.xpose.msra.mxu0 0.0
    %942 = vmatpush.xpose.msra.mxu0 0.0
    %943 = vmatpush.xpose.msra.mxu0 0.0
    %944 = vmatpush.xpose.msra.mxu0 0.0
    %945 = vmatpush.xpose.msra.mxu0 0.0
    %946 = vmatpush.xpose.msra.mxu0 0.0
    %947 = vmatpush.xpose.msra.mxu0 0.0
    %948 = vmatpush.xpose.msra.mxu0 0.0
    %949 = vmatpush.xpose.msra.mxu0 0.0
    %950 = vmatpush.xpose.msra.mxu0 0.0
    %951 = vmatpush.xpose.msra.mxu0 %v936
    %952 = vmatpush.xpose.msra.mxu0 %v933
    %953 = vmatpush.xpose.msra.mxu0 %v930
    %954 = vmatmul.f32.gmra.mxu0 %v921
    %v955 = vpop.f32.mrf.mxu0
    %v956 = vadd.f32 0.0, %v955
    %957 = vmatmul.f32.gmra.mxu0 %v924
    %v958 = vpop.f32.mrf.mxu0
    %v959 = vadd.f32 0.0, %v958
    %960 = vmatmul.f32.gmra.mxu0 %v927
    %v961 = vpop.f32.mrf.mxu0
    %v962 = vadd.f32 0.0, %v961
    %963 = vdwg.mxu0
    %v964 = vsel %vm424, %v956, -inf
    %965 = vmax.xlane.f32.xlu0 %v964
    %v966 = vpop.xlane.xlu0 %965
    %v967 = vsel %vm424, %v959, -inf
    %968 = vmax.xlane.f32.xlu0 %v967
    %v969 = vpop.xlane.xlu0 %968
    %v970 = vsel %vm431, %v962, -inf
    %971 = vmax.xlane.f32.xlu0 %v970
    %v972 = vpop.xlane.xlu0 %971
    %v973 = vsub.f32 %v956, %v966
    %v974 = vsub.f32 %v959, %v969
    %v975 = vsub.f32 %v962, %v972
    %v976 = vmul.f32 %v973, 1.442695
    %v977 = vpow.pop %v976
    %v978 = vmul.f32 %v974, 1.442695
    %v979 = vpow.pop %v978
    %v980 = vmul.f32 %v975, 1.442695
    %v981 = vpow.pop %v980
    %v982 = vsel %vm424, %v977, 0.0
    %983 = vadd.xlane.f32.xlu0 %v982
    %v984 = vpop.xlane.xlu0 %983
    %v985 = vsel %vm424, %v979, 0.0
    %986 = vadd.xlane.f32.xlu0 %v985
    %v987 = vpop.xlane.xlu0 %986
    %v988 = vsel %vm431, %v981, 0.0
    %989 = vadd.xlane.f32.xlu0 %v988
    %v990 = vpop.xlane.xlu0 %989
    %v991 = vrcp.pop %v984
    %v992 = vrcp.pop %v987
    %v993 = vrcp.pop %v990
    %v994 = vmul.f32 %v977, %v991
    %v995 = vmul.f32 %v979, %v992
    %v996 = vmul.f32 %v981, %v993
    %v998 = vsel %vm424, %v994, 0
    %v1001 = vsel %vm424, %v995, 0
    %v1004 = vsel %vm424, %v996, 0
    %v1007 = vsel %vm468, %v918, 0
    %1009 = vmatpush.msra.mxu0 0.0
    %1010 = vmatpush.msra.mxu0 0.0
    %1011 = vmatpush.msra.mxu0 0.0
    %1012 = vmatpush.msra.mxu0 0.0
    %1013 = vmatpush.msra.mxu0 0.0
    %1014 = vmatpush.msra.mxu0 0.0
    %1015 = vmatpush.msra.mxu0 0.0
    %1016 = vmatpush.msra.mxu0 0.0
    %1017 = vmatpush.msra.mxu0 0.0
    %1018 = vmatpush.msra.mxu0 0.0
    %1019 = vmatpush.msra.mxu0 0.0
    %1020 = vmatpush.msra.mxu0 0.0
    %1021 = vmatpush.msra.mxu0 0.0
    %1022 = vmatpush.msra.mxu0 %v1007
    %1023 = vmatpush.msra.mxu0 %v915
    %1024 = vmatpush.msra.mxu0 %v912
    %1025 = vmatmul.f32.gmra.mxu0 %v998
    %v1026 = vpop.f32.mrf.mxu0
    %v1027 = vadd.f32 0.0, %v1026
    %1028 = vmatmul.f32.gmra.mxu0 %v1001
    %v1029 = vpop.f32.mrf.mxu0
    %v1030 = vadd.f32 0.0, %v1029
    %1031 = vmatmul.f32.gmra.mxu0 %v1004
    %v1032 = vpop.f32.mrf.mxu0
    %v1033 = vadd.f32 0.0, %v1032
    %1034 = vdwg.mxu0
    %s1035 = scalar_lea.vmem %s20, 16
    %v1036 = vld [vmem:[%s1035] sm:$0xff]
    %v1038 = vsel %vm379, %v1027, 0
    %v1041 = vsel %vm379, %v1030, 0
    %v1044 = vsel %vm379, %v1033, 0
    %1046 = vmatpush.msra.mxu0 0.0
    %1047 = vmatpush.msra.mxu0 0.0
    %1048 = vmatpush.msra.mxu0 0.0
    %1049 = vmatpush.msra.mxu0 0.0
    %1050 = vmatpush.msra.mxu0 0.0
    %1051 = vmatpush.msra.mxu0 0.0
    %1052 = vmatpush.msra.mxu0 0.0
    %1053 = vmatpush.msra.mxu0 0.0
    %1054 = vmatpush.msra.mxu0 0.0
    %1055 = vmatpush.msra.mxu0 0.0
    %1056 = vmatpush.msra.mxu0 0.0
    %1057 = vmatpush.msra.mxu0 0.0
    %1058 = vmatpush.msra.mxu0 0.0
    %1059 = vmatpush.msra.mxu0 0.0
    %1060 = vmatpush.msra.mxu0 0.0
    %1061 = vmatpush.msra.mxu0 %v1036
    %1062 = vmatmul.f32.gmra.mxu0 %v1038
    %v1063 = vpop.f32.mrf.mxu0
    %v1064 = vadd.f32 0.0, %v1063
    %1065 = vmatmul.f32.gmra.mxu0 %v1041
    %v1066 = vpop.f32.mrf.mxu0
    %v1067 = vadd.f32 0.0, %v1066
    %1068 = vmatmul.f32.gmra.mxu0 %v1044
    %v1069 = vpop.f32.mrf.mxu0
    %v1070 = vadd.f32 0.0, %v1069
    %1071 = vdwg.mxu0
    %v1072 = vadd.f32 %v795, %v1064
    %v1073 = vadd.f32 %v798, %v1067
    %v1074 = vadd.f32 %v801, %v1070
    %s1075 = scalar_lea.vmem %s17, 288
    %v1076 = vld [vmem:[%s1075] sm:$0xff]
    %v1077 = vld [vmem:[%s1075 + $0x8] sm:$0xff]
    %v1078 = vld [vmem:[%s1075 + $0x10] sm:$0xff]
    %v1079 = vld [vmem:[%s1075 + $0x18] sm:$0xff]
    %v1080 = vld [vmem:[%s1075 + $0x20] sm:$0xff]
    %v1081 = vld [vmem:[%s1075 + $0x28] sm:$0xff]
    %v1082 = vld [vmem:[%s1075 + $0x30] sm:$0xff]
    %v1083 = vld [vmem:[%s1075 + $0x38] sm:$0xff]
    %v1084 = vld [vmem:[%s1075 + $0x40] sm:$0xff]
    %v1085 = vld [vmem:[%s1075 + $0x48] sm:$0xff]
    %v1086 = vld [vmem:[%s1075 + $0x50] sm:$0xff]
    %v1087 = vld [vmem:[%s1075 + $0x58] sm:$0xff]
    %1088 = vmatpush.msra.mxu0 0.0
    %1089 = vmatpush.msra.mxu0 0.0
    %1090 = vmatpush.msra.mxu0 0.0
    %1091 = vmatpush.msra.mxu0 0.0
    %1092 = vmatpush.msra.mxu0 %v1087
    %1093 = vmatpush.msra.mxu0 %v1086
    %1094 = vmatpush.msra.mxu0 %v1085
    %1095 = vmatpush.msra.mxu0 %v1084
    %1096 = vmatpush.msra.mxu0 %v1083
    %1097 = vmatpush.msra.mxu0 %v1082
    %1098 = vmatpush.msra.mxu0 %v1081
    %1099 = vmatpush.msra.mxu0 %v1080
    %1100 = vmatpush.msra.mxu0 %v1079
    %1101 = vmatpush.msra.mxu0 %v1078
    %1102 = vmatpush.msra.mxu0 %v1077
    %1103 = vmatpush.msra.mxu0 %v1076
    %1104 = vmatmul.f32.gmra.mxu0 %v269
    %v1105 = vpop.f32.mrf.mxu0
    %v1106 = vadd.f32 0.0, %v1105
    %1107 = vmatmul.f32.gmra.mxu0 %v272
    %v1108 = vpop.f32.mrf.mxu0
    %v1109 = vadd.f32 0.0, %v1108
    %1110 = vmatmul.f32.gmra.mxu0 %v275
    %v1111 = vpop.f32.mrf.mxu0
    %v1112 = vadd.f32 0.0, %v1111
    %1113 = vdwg.mxu0
    %s1114 = scalar_lea.vmem %s18, 288
    %v1115 = vld [vmem:[%s1114] sm:$0xff]
    %v1116 = vld [vmem:[%s1114 + $0x8] sm:$0xff]
    %v1117 = vld [vmem:[%s1114 + $0x10] sm:$0xff]
    %v1118 = vld [vmem:[%s1114 + $0x18] sm:$0xff]
    %v1119 = vld [vmem:[%s1114 + $0x20] sm:$0xff]
    %v1120 = vld [vmem:[%s1114 + $0x28] sm:$0xff]
    %v1121 = vld [vmem:[%s1114 + $0x30] sm:$0xff]
    %v1122 = vld [vmem:[%s1114 + $0x38] sm:$0xff]
    %v1123 = vld [vmem:[%s1114 + $0x40] sm:$0xff]
    %v1124 = vld [vmem:[%s1114 + $0x48] sm:$0xff]
    %v1125 = vld [vmem:[%s1114 + $0x50] sm:$0xff]
    %v1126 = vld [vmem:[%s1114 + $0x58] sm:$0xff]
    %1127 = vmatpush.msra.mxu0 0.0
    %1128 = vmatpush.msra.mxu0 0.0
    %1129 = vmatpush.msra.mxu0 0.0
    %1130 = vmatpush.msra.mxu0 0.0
    %1131 = vmatpush.msra.mxu0 %v1126
    %1132 = vmatpush.msra.mxu0 %v1125
    %1133 = vmatpush.msra.mxu0 %v1124
    %1134 = vmatpush.msra.mxu0 %v1123
    %1135 = vmatpush.msra.mxu0 %v1122
    %1136 = vmatpush.msra.mxu0 %v1121
    %1137 = vmatpush.msra.mxu0 %v1120
    %1138 = vmatpush.msra.mxu0 %v1119
    %1139 = vmatpush.msra.mxu0 %v1118
    %1140 = vmatpush.msra.mxu0 %v1117
    %1141 = vmatpush.msra.mxu0 %v1116
    %1142 = vmatpush.msra.mxu0 %v1115
    %1143 = vmatmul.f32.gmra.mxu0 %v269
    %v1144 = vpop.f32.mrf.mxu0
    %v1145 = vadd.f32 0.0, %v1144
    %1146 = vmatmul.f32.gmra.mxu0 %v272
    %v1147 = vpop.f32.mrf.mxu0
    %v1148 = vadd.f32 0.0, %v1147
    %1149 = vmatmul.f32.gmra.mxu0 %v275
    %v1150 = vpop.f32.mrf.mxu0
    %v1151 = vadd.f32 0.0, %v1150
    %1152 = vdwg.mxu0
    %s1153 = scalar_lea.vmem %s19, 288
    %v1154 = vld [vmem:[%s1153] sm:$0xff]
    %v1155 = vld [vmem:[%s1153 + $0x8] sm:$0xff]
    %v1156 = vld [vmem:[%s1153 + $0x10] sm:$0xff]
    %v1157 = vld [vmem:[%s1153 + $0x18] sm:$0xff]
    %v1158 = vld [vmem:[%s1153 + $0x20] sm:$0xff]
    %v1159 = vld [vmem:[%s1153 + $0x28] sm:$0xff]
    %v1160 = vld [vmem:[%s1153 + $0x30] sm:$0xff]
    %v1161 = vld [vmem:[%s1153 + $0x38] sm:$0xff]
    %v1162 = vld [vmem:[%s1153 + $0x40] sm:$0xff]
    %v1163 = vld [vmem:[%s1153 + $0x48] sm:$0xff]
    %v1164 = vld [vmem:[%s1153 + $0x50] sm:$0xff]
    %v1165 = vld [vmem:[%s1153 + $0x58] sm:$0xff]
    %1166 = vmatpush.msra.mxu0 0.0
    %1167 = vmatpush.msra.mxu0 0.0
    %1168 = vmatpush.msra.mxu0 0.0
    %1169 = vmatpush.msra.mxu0 0.0
    %1170 = vmatpush.msra.mxu0 %v1165
    %1171 = vmatpush.msra.mxu0 %v1164
    %1172 = vmatpush.msra.mxu0 %v1163
    %1173 = vmatpush.msra.mxu0 %v1162
    %1174 = vmatpush.msra.mxu0 %v1161
    %1175 = vmatpush.msra.mxu0 %v1160
    %1176 = vmatpush.msra.mxu0 %v1159
    %1177 = vmatpush.msra.mxu0 %v1158
    %1178 = vmatpush.msra.mxu0 %v1157
    %1179 = vmatpush.msra.mxu0 %v1156
    %1180 = vmatpush.msra.mxu0 %v1155
    %1181 = vmatpush.msra.mxu0 %v1154
    %1182 = vmatmul.f32.gmra.mxu0 %v269
    %v1183 = vpop.f32.mrf.mxu0
    %v1184 = vadd.f32 0.0, %v1183
    %1185 = vmatmul.f32.gmra.mxu0 %v272
    %v1186 = vpop.f32.mrf.mxu0
    %v1187 = vadd.f32 0.0, %v1186
    %1188 = vmatmul.f32.gmra.mxu0 %v275
    %v1189 = vpop.f32.mrf.mxu0
    %v1190 = vadd.f32 0.0, %v1189
    %1191 = vdwg.mxu0
    %v1193 = vsel %vm379, %v1106, 0
    %v1196 = vsel %vm379, %v1109, 0
    %v1199 = vsel %vm379, %v1112, 0
    %v1202 = vsel %vm379, %v1145, 0
    %v1205 = vsel %vm379, %v1148, 0
    %v1208 = vsel %vm379, %v1151, 0
    %1210 = vmatpush.xpose.msra.mxu0 0.0
    %1211 = vmatpush.xpose.msra.mxu0 0.0
    %1212 = vmatpush.xpose.msra.mxu0 0.0
    %1213 = vmatpush.xpose.msra.mxu0 0.0
    %1214 = vmatpush.xpose.msra.mxu0 0.0
    %1215 = vmatpush.xpose.msra.mxu0 0.0
    %1216 = vmatpush.xpose.msra.mxu0 0.0
    %1217 = vmatpush.xpose.msra.mxu0 0.0
    %1218 = vmatpush.xpose.msra.mxu0 0.0
    %1219 = vmatpush.xpose.msra.mxu0 0.0
    %1220 = vmatpush.xpose.msra.mxu0 0.0
    %1221 = vmatpush.xpose.msra.mxu0 0.0
    %1222 = vmatpush.xpose.msra.mxu0 0.0
    %1223 = vmatpush.xpose.msra.mxu0 %v1208
    %1224 = vmatpush.xpose.msra.mxu0 %v1205
    %1225 = vmatpush.xpose.msra.mxu0 %v1202
    %1226 = vmatmul.f32.gmra.mxu0 %v1193
    %v1227 = vpop.f32.mrf.mxu0
    %v1228 = vadd.f32 0.0, %v1227
    %1229 = vmatmul.f32.gmra.mxu0 %v1196
    %v1230 = vpop.f32.mrf.mxu0
    %v1231 = vadd.f32 0.0, %v1230
    %1232 = vmatmul.f32.gmra.mxu0 %v1199
    %v1233 = vpop.f32.mrf.mxu0
    %v1234 = vadd.f32 0.0, %v1233
    %1235 = vdwg.mxu0
    %v1236 = vsel %vm424, %v1228, -inf
    %1237 = vmax.xlane.f32.xlu0 %v1236
    %v1238 = vpop.xlane.xlu0 %1237
    %v1239 = vsel %vm424, %v1231, -inf
    %1240 = vmax.xlane.f32.xlu0 %v1239
    %v1241 = vpop.xlane.xlu0 %1240
    %v1242 = vsel %vm431, %v1234, -inf
    %1243 = vmax.xlane.f32.xlu0 %v1242
    %v1244 = vpop.xlane.xlu0 %1243
    %v1245 = vsub.f32 %v1228, %v1238
    %v1246 = vsub.f32 %v1231, %v1241
    %v1247 = vsub.f32 %v1234, %v1244
    %v1248 = vmul.f32 %v1245, 1.442695
    %v1249 = vpow.pop %v1248
    %v1250 = vmul.f32 %v1246, 1.442695
    %v1251 = vpow.pop %v1250
    %v1252 = vmul.f32 %v1247, 1.442695
    %v1253 = vpow.pop %v1252
    %v1254 = vsel %vm424, %v1249, 0.0
    %1255 = vadd.xlane.f32.xlu0 %v1254
    %v1256 = vpop.xlane.xlu0 %1255
    %v1257 = vsel %vm424, %v1251, 0.0
    %1258 = vadd.xlane.f32.xlu0 %v1257
    %v1259 = vpop.xlane.xlu0 %1258
    %v1260 = vsel %vm431, %v1253, 0.0
    %1261 = vadd.xlane.f32.xlu0 %v1260
    %v1262 = vpop.xlane.xlu0 %1261
    %v1263 = vrcp.pop %v1256
    %v1264 = vrcp.pop %v1259
    %v1265 = vrcp.pop %v1262
    %v1266 = vmul.f32 %v1249, %v1263
    %v1267 = vmul.f32 %v1251, %v1264
    %v1268 = vmul.f32 %v1253, %v1265
    %v1270 = vsel %vm424, %v1266, 0
    %v1273 = vsel %vm424, %v1267, 0
    %v1276 = vsel %vm424, %v1268, 0
    %v1279 = vsel %vm468, %v1190, 0
    %1281 = vmatpush.msra.mxu0 0.0
    %1282 = vmatpush.msra.mxu0 0.0
    %1283 = vmatpush.msra.mxu0 0.0
    %1284 = vmatpush.msra.mxu0 0.0
    %1285 = vmatpush.msra.mxu0 0.0
    %1286 = vmatpush.msra.mxu0 0.0
    %1287 = vmatpush.msra.mxu0 0.0
    %1288 = vmatpush.msra.mxu0 0.0
    %1289 = vmatpush.msra.mxu0 0.0
    %1290 = vmatpush.msra.mxu0 0.0
    %1291 = vmatpush.msra.mxu0 0.0
    %1292 = vmatpush.msra.mxu0 0.0
    %1293 = vmatpush.msra.mxu0 0.0
    %1294 = vmatpush.msra.mxu0 %v1279
    %1295 = vmatpush.msra.mxu0 %v1187
    %1296 = vmatpush.msra.mxu0 %v1184
    %1297 = vmatmul.f32.gmra.mxu0 %v1270
    %v1298 = vpop.f32.mrf.mxu0
    %v1299 = vadd.f32 0.0, %v1298
    %1300 = vmatmul.f32.gmra.mxu0 %v1273
    %v1301 = vpop.f32.mrf.mxu0
    %v1302 = vadd.f32 0.0, %v1301
    %1303 = vmatmul.f32.gmra.mxu0 %v1276
    %v1304 = vpop.f32.mrf.mxu0
    %v1305 = vadd.f32 0.0, %v1304
    %1306 = vdwg.mxu0
    %s1307 = scalar_lea.vmem %s20, 24
    %v1308 = vld [vmem:[%s1307] sm:$0xff]
    %v1310 = vsel %vm379, %v1299, 0
    %v1313 = vsel %vm379, %v1302, 0
    %v1316 = vsel %vm379, %v1305, 0
    %1318 = vmatpush.msra.mxu0 0.0
    %1319 = vmatpush.msra.mxu0 0.0
    %1320 = vmatpush.msra.mxu0 0.0
    %1321 = vmatpush.msra.mxu0 0.0
    %1322 = vmatpush.msra.mxu0 0.0
    %1323 = vmatpush.msra.mxu0 0.0
    %1324 = vmatpush.msra.mxu0 0.0
    %1325 = vmatpush.msra.mxu0 0.0
    %1326 = vmatpush.msra.mxu0 0.0
    %1327 = vmatpush.msra.mxu0 0.0
    %1328 = vmatpush.msra.mxu0 0.0
    %1329 = vmatpush.msra.mxu0 0.0
    %1330 = vmatpush.msra.mxu0 0.0
    %1331 = vmatpush.msra.mxu0 0.0
    %1332 = vmatpush.msra.mxu0 0.0
    %1333 = vmatpush.msra.mxu0 %v1308
    %1334 = vmatmul.f32.gmra.mxu0 %v1310
    %v1335 = vpop.f32.mrf.mxu0
    %v1336 = vadd.f32 0.0, %v1335
    %1337 = vmatmul.f32.gmra.mxu0 %v1313
    %v1338 = vpop.f32.mrf.mxu0
    %v1339 = vadd.f32 0.0, %v1338
    %1340 = vmatmul.f32.gmra.mxu0 %v1316
    %v1341 = vpop.f32.mrf.mxu0
    %v1342 = vadd.f32 0.0, %v1341
    %1343 = vdwg.mxu0
    %v1344 = vadd.f32 %v1072, %v1336
    %v1345 = vadd.f32 %v1073, %v1339
    %v1346 = vadd.f32 %v1074, %v1342
    %v1347 = vld [vmem:[%s7] sm:$0xff]
    %v1348 = vld [vmem:[%s7 + $0x8] sm:$0xff]
    %v1349 = vld [vmem:[%s7 + $0x10] sm:$0xff]
    %v1350 = vld [vmem:[%s7 + $0x18] sm:$0xff]
    %v1351 = vld [vmem:[%s8] sm:$0x1]
    %v1353 = vperm.slane %v1351, 0
    %v1356 = vsel %vm119, %v1344, 0
    %v1359 = vsel %vm119, %v1345, 0
    %v1362 = vsel %vm119, %v1346, 0
    %1364 = vmatpush.msra.mxu0 0.0
    %1365 = vmatpush.msra.mxu0 0.0
    %1366 = vmatpush.msra.mxu0 0.0
    %1367 = vmatpush.msra.mxu0 0.0
    %1368 = vmatpush.msra.mxu0 0.0
    %1369 = vmatpush.msra.mxu0 0.0
    %1370 = vmatpush.msra.mxu0 0.0
    %1371 = vmatpush.msra.mxu0 0.0
    %1372 = vmatpush.msra.mxu0 0.0
    %1373 = vmatpush.msra.mxu0 0.0
    %1374 = vmatpush.msra.mxu0 0.0
    %1375 = vmatpush.msra.mxu0 0.0
    %1376 = vmatpush.msra.mxu0 %v1350
    %1377 = vmatpush.msra.mxu0 %v1349
    %1378 = vmatpush.msra.mxu0 %v1348
    %1379 = vmatpush.msra.mxu0 %v1347
    %1380 = vmatmul.f32.gmra.mxu0 %v1356
    %v1381 = vpop.f32.mrf.mxu0
    %v1382 = vadd.f32 %v1353, %v1381
    %1383 = vmatmul.f32.gmra.mxu0 %v1359
    %v1384 = vpop.f32.mrf.mxu0
    %v1385 = vadd.f32 %v1353, %v1384
    %1386 = vmatmul.f32.gmra.mxu0 %v1362
    %v1387 = vpop.f32.mrf.mxu0
    %v1388 = vadd.f32 %v1353, %v1387
    %1389 = vdwg.mxu0
    %v1390 = vadd.f32 %v109, %v1382
    %v1391 = vadd.f32 %v112, %v1385
    %v1392 = vadd.f32 %v115, %v1388
    %v1393 = vld [vmem:[%s9] sm:$0x1]
    %v1394 = vld [vmem:[%s10] sm:$0x1]
    %v1395 = vsel %vm119, %v1390, 0.0
    %1396 = vadd.xlane.f32.xlu0 %v1395
    %v1397 = vpop.xlane.xlu0 %1396
    %v1398 = vsel %vm119, %v1391, 0.0
    %1399 = vadd.xlane.f32.xlu0 %v1398
    %v1400 = vpop.xlane.xlu0 %1399
    %v1401 = vsel %vm126, %v1392, 0.0
    %1402 = vadd.xlane.f32.xlu0 %v1401
    %v1403 = vpop.xlane.xlu0 %1402
    %v1404 = vmul.f32 %v1397, %v136
    %v1405 = vmul.f32 %v1400, %v136
    %v1406 = vmul.f32 %v1403, %v136
    %v1407 = vmul.f32 %v1390, %v1390
    %v1408 = vmul.f32 %v1391, %v1391
    %v1409 = vmul.f32 %v1392, %v1392
    %v1410 = vsel %vm119, %v1407, 0.0
    %1411 = vadd.xlane.f32.xlu0 %v1410
    %v1412 = vpop.xlane.xlu0 %1411
    %v1413 = vsel %vm119, %v1408, 0.0
    %1414 = vadd.xlane.f32.xlu0 %v1413
    %v1415 = vpop.xlane.xlu0 %1414
    %v1416 = vsel %vm126, %v1409, 0.0
    %1417 = vadd.xlane.f32.xlu0 %v1416
    %v1418 = vpop.xlane.xlu0 %1417
    %v1419 = vmul.f32 %v1412, %v136
    %v1420 = vmul.f32 %v1415, %v136
    %v1421 = vmul.f32 %v1418, %v136
    %v1422 = vmul.f32 %v1404, %v1404
    %v1423 = vmul.f32 %v1405, %v1405
    %v1424 = vmul.f32 %v1406, %v1406
    %v1425 = vsub.f32 %v1419, %v1422
    %v1426 = vsub.f32 %v1420, %v1423
    %v1427 = vsub.f32 %v1421, %v1424
    %v1428 = vsub.f32 %v1390, %v1404
    %v1429 = vsub.f32 %v1391, %v1405
    %v1430 = vsub.f32 %v1392, %v1406
    %v1431 = vadd.f32 %v1425, 1e-06
    %v1432 = vadd.f32 %v1426, 1e-06
    %v1433 = vadd.f32 %v1427, 1e-06
    %v1434 = vrsqrt.pop %v1431
    %v1435 = vmul.f32 %v1434, %v1431
    %v1436 = vmul.f32 %v1435, %v1434
    %v1437 = vmul.f32 0.5, %v1436
    %v1438 = vsub.f32 1.5, %v1437
    %v1439 = vmul.f32 %v1434, %v1438
    %vm1440 = vweird.f32 %v1431
    %vm1441 = vweird.f32 %v1434
    %vm1442 = vmor %vm1440, %vm1441
    %v1443 = vsel %vm1442, %v1434, %v1439
    %v1444 = vrsqrt.pop %v1432
    %v1445 = vmul.f32 %v1444, %v1432
    %v1446 = vmul.f32 %v1445, %v1444
    %v1447 = vmul.f32 0.5, %v1446
    %v1448 = vsub.f32 1.5, %v1447
    %v1449 = vmul.f32 %v1444, %v1448
    %vm1450 = vweird.f32 %v1432
    %vm1451 = vweird.f32 %v1444
    %vm1452 = vmor %vm1450, %vm1451
    %v1453 = vsel %vm1452, %v1444, %v1449
    %v1454 = vrsqrt.pop %v1433
    %v1455 = vmul.f32 %v1454, %v1433
    %v1456 = vmul.f32 %v1455, %v1454
    %v1457 = vmul.f32 0.5, %v1456
    %v1458 = vsub.f32 1.5, %v1457
    %v1459 = vmul.f32 %v1454, %v1458
    %vm1460 = vweird.f32 %v1433
    %vm1461 = vweird.f32 %v1454
    %vm1462 = vmor %vm1460, %vm1461
    %v1463 = vsel %vm1462, %v1454, %v1459
    %v1464 = vmul.f32 %v1428, %v1443
    %v1465 = vmul.f32 %v1429, %v1453
    %v1466 = vmul.f32 %v1430, %v1463
    %v1468 = vperm.slane %v1393, 0
    %v1470 = vmul.f32 %v1464, %v1468
    %v1471 = vmul.f32 %v1465, %v1468
    %v1472 = vmul.f32 %v1466, %v1468
    %v1474 = vperm.slane %v1394, 0
    %v1476 = vadd.f32 %v1470, %v1474
    %v1477 = vadd.f32 %v1471, %v1474
    %v1478 = vadd.f32 %v1472, %v1474
    %v1479 = vld [vmem:[%s11] sm:$0xff]
    %v1480 = vld [vmem:[%s11 + $0x8] sm:$0xff]
    %v1481 = vld [vmem:[%s11 + $0x10] sm:$0xff]
    %v1482 = vld [vmem:[%s11 + $0x18] sm:$0xff]
    %v1483 = vld [vmem:[%s12] sm:$0x1]
    %v1485 = vperm.slane %v1483, 0
    %v1488 = vsel %vm119, %v1476, 0
    %v1491 = vsel %vm119, %v1477, 0
    %v1494 = vsel %vm119, %v1478, 0
    %1496 = vmatpush.msra.mxu0 0.0
    %1497 = vmatpush.msra.mxu0 0.0
    %1498 = vmatpush.msra.mxu0 0.0
    %1499 = vmatpush.msra.mxu0 0.0
    %1500 = vmatpush.msra.mxu0 0.0
    %1501 = vmatpush.msra.mxu0 0.0
    %1502 = vmatpush.msra.mxu0 0.0
    %1503 = vmatpush.msra.mxu0 0.0
    %1504 = vmatpush.msra.mxu0 0.0
    %1505 = vmatpush.msra.mxu0 0.0
    %1506 = vmatpush.msra.mxu0 0.0
    %1507 = vmatpush.msra.mxu0 0.0
    %1508 = vmatpush.msra.mxu0 %v1482
    %1509 = vmatpush.msra.mxu0 %v1481
    %1510 = vmatpush.msra.mxu0 %v1480
    %1511 = vmatpush.msra.mxu0 %v1479
    %1512 = vmatmul.f32.gmra.mxu0 %v1488
    %v1513 = vpop.f32.mrf.mxu0
    %v1514 = vadd.f32 %v1485, %v1513
    %1515 = vmatmul.f32.gmra.mxu0 %v1491
    %v1516 = vpop.f32.mrf.mxu0
    %v1517 = vadd.f32 %v1485, %v1516
    %1518 = vmatmul.f32.gmra.mxu0 %v1494
    %v1519 = vpop.f32.mrf.mxu0
    %v1520 = vadd.f32 %v1485, %v1519
    %1521 = vdwg.mxu0
    %v1522 = vmul.f32 %v1514, %v1514
    %v1523 = vmul.f32 %v1517, %v1517
    %v1524 = vmul.f32 %v1520, %v1520
    %v1525 = vmul.f32 %v1514, %v1522
    %v1526 = vmul.f32 %v1517, %v1523
    %v1527 = vmul.f32 %v1520, %v1524
    %v1528 = vmul.f32 %v1525, 0.044715
    %v1529 = vmul.f32 %v1526, 0.044715
    %v1530 = vmul.f32 %v1527, 0.044715
    %v1531 = vadd.f32 %v1514, %v1528
    %v1532 = vadd.f32 %v1517, %v1529
    %v1533 = vadd.f32 %v1520, %v1530
    %v1534 = vmul.f32 %v1531, 0.7978846
    %v1535 = vmul.f32 %v1532, 0.7978846
    %v1536 = vmul.f32 %v1533, 0.7978846
    %v1537 = vtanh.pop %v1534
    %v1538 = vtanh.pop %v1535
    %v1539 = vtanh.pop %v1536
    %v1540 = vadd.f32 %v1537, 1.0
    %v1541 = vadd.f32 %v1538, 1.0
    %v1542 = vadd.f32 %v1539, 1.0
    %v1543 = vmul.f32 %v1540, 0.5
    %v1544 = vmul.f32 %v1541, 0.5
    %v1545 = vmul.f32 %v1542, 0.5
    %v1546 = vmul.f32 %v1514, %v1543
    %v1547 = vmul.f32 %v1517, %v1544
    %v1548 = vmul.f32 %v1520, %v1545
    %v1549 = vld [vmem:[%s13] sm:$0xff]
    %v1550 = vld [vmem:[%s13 + $0x8] sm:$0xff]
    %v1551 = vld [vmem:[%s13 + $0x10] sm:$0xff]
    %v1552 = vld [vmem:[%s13 + $0x18] sm:$0xff]
    %v1553 = vld [vmem:[%s13 + $0x20] sm:$0xff]
    %v1554 = vld [vmem:[%s13 + $0x28] sm:$0xff]
    %v1555 = vld [vmem:[%s13 + $0x30] sm:$0xff]
    %v1556 = vld [vmem:[%s13 + $0x38] sm:$0xff]
    %v1557 = vld [vmem:[%s14] sm:$0x1]
    %v1559 = vperm.slane %v1557, 0
    %vm1561 = vcmask 523264
    %v1563 = vsel %vm1561, %v1546, 0
    %v1566 = vsel %vm1561, %v1547, 0
    %v1569 = vsel %vm1561, %v1548, 0
    %1571 = vmatpush.msra.mxu0 0.0
    %1572 = vmatpush.msra.mxu0 0.0
    %1573 = vmatpush.msra.mxu0 0.0
    %1574 = vmatpush.msra.mxu0 0.0
    %1575 = vmatpush.msra.mxu0 0.0
    %1576 = vmatpush.msra.mxu0 0.0
    %1577 = vmatpush.msra.mxu0 0.0
    %1578 = vmatpush.msra.mxu0 0.0
    %1579 = vmatpush.msra.mxu0 %v1556
    %1580 = vmatpush.msra.mxu0 %v1555
    %1581 = vmatpush.msra.mxu0 %v1554
    %1582 = vmatpush.msra.mxu0 %v1553
    %1583 = vmatpush.msra.mxu0 %v1552
    %1584 = vmatpush.msra.mxu0 %v1551
    %1585 = vmatpush.msra.mxu0 %v1550
    %1586 = vmatpush.msra.mxu0 %v1549
    %1587 = vmatmul.f32.gmra.mxu0 %v1563
    %v1588 = vpop.f32.mrf.mxu0
    %v1589 = vadd.f32 %v1559, %v1588
    %1590 = vmatmul.f32.gmra.mxu0 %v1566
    %v1591 = vpop.f32.mrf.mxu0
    %v1592 = vadd.f32 %v1559, %v1591
    %1593 = vmatmul.f32.gmra.mxu0 %v1569
    %v1594 = vpop.f32.mrf.mxu0
    %v1595 = vadd.f32 %v1559, %v1594
    %1596 = vdwg.mxu0
    %v1597 = vadd.f32 %v1390, %v1589
    %v1598 = vadd.f32 %v1391, %v1592
    %v1599 = vadd.f32 %v1392, %v1595
    %s1600 = scalar_lea.vmem %s3, 1
    %v1601 = vld [vmem:[%s1600] sm:$0x1]
    %s1602 = scalar_lea.vmem %s4, 1
    %v1603 = vld [vmem:[%s1602] sm:$0x1]
    %v1604 = vsel %vm119, %v1597, 0.0
    %1605 = vadd.xlane.f32.xlu0 %v1604
    %v1606 = vpop.xlane.xlu0 %1605
    %v1607 = vsel %vm119, %v1598, 0.0
    %1608 = vadd.xlane.f32.xlu0 %v1607
    %v1609 = vpop.xlane.xlu0 %1608
    %v1610 = vsel %vm126, %v1599, 0.0
    %1611 = vadd.xlane.f32.xlu0 %v1610
    %v1612 = vpop.xlane.xlu0 %1611
    %v1613 = vmul.f32 %v1606, %v136
    %v1614 = vmul.f32 %v1609, %v136
    %v1615 = vmul.f32 %v1612, %v136
    %v1616 = vmul.f32 %v1597, %v1597
    %v1617 = vmul.f32 %v1598, %v1598
    %v1618 = vmul.f32 %v1599, %v1599
    %v1619 = vsel %vm119, %v1616, 0.0
    %1620 = vadd.xlane.f32.xlu0 %v1619
    %v1621 = vpop.xlane.xlu0 %1620
    %v1622 = vsel %vm119, %v1617, 0.0
    %1623 = vadd.xlane.f32.xlu0 %v1622
    %v1624 = vpop.xlane.xlu0 %1623
    %v1625 = vsel %vm126, %v1618, 0.0
    %1626 = vadd.xlane.f32.xlu0 %v1625
    %v1627 = vpop.xlane.xlu0 %1626
    %v1628 = vmul.f32 %v1621, %v136
    %v1629 = vmul.f32 %v1624, %v136
    %v1630 = vmul.f32 %v1627, %v136
    %v1631 = vmul.f32 %v1613, %v1613
    %v1632 = vmul.f32 %v1614, %v1614
    %v1633 = vmul.f32 %v1615, %v1615
    %v1634 = vsub.f32 %v1628, %v1631
    %v1635 = vsub.f32 %v1629, %v1632
    %v1636 = vsub.f32 %v1630, %v1633
    %v1637 = vsub.f32 %v1597, %v1613
    %v1638 = vsub.f32 %v1598, %v1614
    %v1639 = vsub.f32 %v1599, %v1615
    %v1640 = vadd.f32 %v1634, 1e-06
    %v1641 = vadd.f32 %v1635, 1e-06
    %v1642 = vadd.f32 %v1636, 1e-06
    %v1643 = vrsqrt.pop %v1640
    %v1644 = vmul.f32 %v1643, %v1640
    %v1645 = vmul.f32 %v1644, %v1643
    %v1646 = vmul.f32 0.5, %v1645
    %v1647 = vsub.f32 1.5, %v1646
    %v1648 = vmul.f32 %v1643, %v1647
    %vm1649 = vweird.f32 %v1640
    %vm1650 = vweird.f32 %v1643
    %vm1651 = vmor %vm1649, %vm1650
    %v1652 = vsel %vm1651, %v1643, %v1648
    %v1653 = vrsqrt.pop %v1641
    %v1654 = vmul.f32 %v1653, %v1641
    %v1655 = vmul.f32 %v1654, %v1653
    %v1656 = vmul.f32 0.5, %v1655
    %v1657 = vsub.f32 1.5, %v1656
    %v1658 = vmul.f32 %v1653, %v1657
    %vm1659 = vweird.f32 %v1641
    %vm1660 = vweird.f32 %v1653
    %vm1661 = vmor %vm1659, %vm1660
    %v1662 = vsel %vm1661, %v1653, %v1658
    %v1663 = vrsqrt.pop %v1642
    %v1664 = vmul.f32 %v1663, %v1642
    %v1665 = vmul.f32 %v1664, %v1663
    %v1666 = vmul.f32 0.5, %v1665
    %v1667 = vsub.f32 1.5, %v1666
    %v1668 = vmul.f32 %v1663, %v1667
    %vm1669 = vweird.f32 %v1642
    %vm1670 = vweird.f32 %v1663
    %vm1671 = vmor %vm1669, %vm1670
    %v1672 = vsel %vm1671, %v1663, %v1668
    %v1673 = vmul.f32 %v1637, %v1652
    %v1674 = vmul.f32 %v1638, %v1662
    %v1675 = vmul.f32 %v1639, %v1672
    %v1677 = vperm.slane %v1601, 0
    %v1679 = vmul.f32 %v1673, %v1677
    %v1680 = vmul.f32 %v1674, %v1677
    %v1681 = vmul.f32 %v1675, %v1677
    %v1683 = vperm.slane %v1603, 0
    %v1685 = vadd.f32 %v1679, %v1683
    %v1686 = vadd.f32 %v1680, %v1683
    %v1687 = vadd.f32 %v1681, %v1683
    %s1688 = scalar_lea.vmem %s5, 32
    %v1689 = vld [vmem:[%s1688] sm:$0xff]
    %v1690 = vld [vmem:[%s1688 + $0x8] sm:$0xff]
    %v1691 = vld [vmem:[%s1688 + $0x10] sm:$0xff]
    %v1692 = vld [vmem:[%s1688 + $0x18] sm:$0xff]
    %s1693 = scalar_lea.vmem %s6, 1
    %v1694 = vld [vmem:[%s1693] sm:$0x1]
    %v1696 = vperm.slane %v1694, 0
    %v1699 = vsel %vm119, %v1685, 0
    %v1702 = vsel %vm119, %v1686, 0
    %v1705 = vsel %vm119, %v1687, 0
    %1707 = vmatpush.msra.mxu0 0.0
    %1708 = vmatpush.msra.mxu0 0.0
    %1709 = vmatpush.msra.mxu0 0.0
    %1710 = vmatpush.msra.mxu0 0.0
    %1711 = vmatpush.msra.mxu0 0.0
    %1712 = vmatpush.msra.mxu0 0.0
    %1713 = vmatpush.msra.mxu0 0.0
    %1714 = vmatpush.msra.mxu0 0.0
    %1715 = vmatpush.msra.mxu0 0.0
    %1716 = vmatpush.msra.mxu0 0.0
    %1717 = vmatpush.msra.mxu0 0.0
    %1718 = vmatpush.msra.mxu0 0.0
    %1719 = vmatpush.msra.mxu0 %v1692
    %1720 = vmatpush.msra.mxu0 %v1691
    %1721 = vmatpush.msra.mxu0 %v1690
    %1722 = vmatpush.msra.mxu0 %v1689
    %1723 = vmatmul.f32.gmra.mxu0 %v1699
    %v1724 = vpop.f32.mrf.mxu0
    %v1725 = vadd.f32 %v1696, %v1724
    %1726 = vmatmul.f32.gmra.mxu0 %v1702
    %v1727 = vpop.f32.mrf.mxu0
    %v1728 = vadd.f32 %v1696, %v1727
    %1729 = vmatmul.f32.gmra.mxu0 %v1705
    %v1730 = vpop.f32.mrf.mxu0
    %v1731 = vadd.f32 %v1696, %v1730
    %1732 = vdwg.mxu0
    %v1734 = vsel %vm267, %v1725, 0
    %v1737 = vsel %vm267, %v1728, 0
    %v1740 = vsel %vm267, %v1731, 0
    %1742 = vmatpush.msra.mxu0 0.0
    %1743 = vmatpush.msra.mxu0 0.0
    %1744 = vmatpush.msra.mxu0 0.0
    %1745 = vmatpush.msra.mxu0 0.0
    %1746 = vmatpush.msra.mxu0 %v266
    %1747 = vmatpush.msra.mxu0 %v265
    %1748 = vmatpush.msra.mxu0 %v264
    %1749 = vmatpush.msra.mxu0 %v263
    %1750 = vmatpush.msra.mxu0 %v262
    %1751 = vmatpush.msra.mxu0 %v261
    %1752 = vmatpush.msra.mxu0 %v260
    %1753 = vmatpush.msra.mxu0 %v259
    %1754 = vmatpush.msra.mxu0 %v258
    %1755 = vmatpush.msra.mxu0 %v257
    %1756 = vmatpush.msra.mxu0 %v256
    %1757 = vmatpush.msra.mxu0 %v255
    %1758 = vmatmul.f32.gmra.mxu0 %v1734
    %v1759 = vpop.f32.mrf.mxu0
    %v1760 = vadd.f32 0.0, %v1759
    %1761 = vmatmul.f32.gmra.mxu0 %v1737
    %v1762 = vpop.f32.mrf.mxu0
    %v1763 = vadd.f32 0.0, %v1762
    %1764 = vmatmul.f32.gmra.mxu0 %v1740
    %v1765 = vpop.f32.mrf.mxu0
    %v1766 = vadd.f32 0.0, %v1765
    %1767 = vdwg.mxu0
    %1768 = vmatpush.msra.mxu0 0.0
    %1769 = vmatpush.msra.mxu0 0.0
    %1770 = vmatpush.msra.mxu0 0.0
    %1771 = vmatpush.msra.mxu0 0.0
    %1772 = vmatpush.msra.mxu0 %v314
    %1773 = vmatpush.msra.mxu0 %v313
    %1774 = vmatpush.msra.mxu0 %v312
    %1775 = vmatpush.msra.mxu0 %v311
    %1776 = vmatpush.msra.mxu0 %v310
    %1777 = vmatpush.msra.mxu0 %v309
    %1778 = vmatpush.msra.mxu0 %v308
    %1779 = vmatpush.msra.mxu0 %v307
    %1780 = vmatpush.msra.mxu0 %v306
    %1781 = vmatpush.msra.mxu0 %v305
    %1782 = vmatpush.msra.mxu0 %v304
    %1783 = vmatpush.msra.mxu0 %v303
    %1784 = vmatmul.f32.gmra.mxu0 %v1734
    %v1785 = vpop.f32.mrf.mxu0
    %v1786 = vadd.f32 0.0, %v1785
    %1787 = vmatmul.f32.gmra.mxu0 %v1737
    %v1788 = vpop.f32.mrf.mxu0
    %v1789 = vadd.f32 0.0, %v1788
    %1790 = vmatmul.f32.gmra.mxu0 %v1740
    %v1791 = vpop.f32.mrf.mxu0
    %v1792 = vadd.f32 0.0, %v1791
    %1793 = vdwg.mxu0
    %1794 = vmatpush.msra.mxu0 0.0
    %1795 = vmatpush.msra.mxu0 0.0
    %1796 = vmatpush.msra.mxu0 0.0
    %1797 = vmatpush.msra.mxu0 0.0
    %1798 = vmatpush.msra.mxu0 %v352
    %1799 = vmatpush.msra.mxu0 %v351
    %1800 = vmatpush.msra.mxu0 %v350
    %1801 = vmatpush.msra.mxu0 %v349
    %1802 = vmatpush.msra.mxu0 %v348
    %1803 = vmatpush.msra.mxu0 %v347
    %1804 = vmatpush.msra.mxu0 %v346
    %1805 = vmatpush.msra.mxu0 %v345
    %1806 = vmatpush.msra.mxu0 %v344
    %1807 = vmatpush.msra.mxu0 %v343
    %1808 = vmatpush.msra.mxu0 %v342
    %1809 = vmatpush.msra.mxu0 %v341
    %1810 = vmatmul.f32.gmra.mxu0 %v1734
    %v1811 = vpop.f32.mrf.mxu0
    %v1812 = vadd.f32 0.0, %v1811
    %1813 = vmatmul.f32.gmra.mxu0 %v1737
    %v1814 = vpop.f32.mrf.mxu0
    %v1815 = vadd.f32 0.0, %v1814
    %1816 = vmatmul.f32.gmra.mxu0 %v1740
    %v1817 = vpop.f32.mrf.mxu0
    %v1818 = vadd.f32 0.0, %v1817
    %1819 = vdwg.mxu0
    %v1821 = vsel %vm379, %v1760, 0
    %v1824 = vsel %vm379, %v1763, 0
    %v1827 = vsel %vm379, %v1766, 0
    %v1830 = vsel %vm379, %v1786, 0
    %v1833 = vsel %vm379, %v1789, 0
    %v1836 = vsel %vm379, %v1792, 0
    %1838 = vmatpush.xpose.msra.mxu0 0.0
    %1839 = vmatpush.xpose.msra.mxu0 0.0
    %1840 = vmatpush.xpose.msra.mxu0 0.0
    %1841 = vmatpush.xpose.msra.mxu0 0.0
    %1842 = vmatpush.xpose.msra.mxu0 0.0
    %1843 = vmatpush.xpose.msra.mxu0 0.0
    %1844 = vmatpush.xpose.msra.mxu0 0.0
    %1845 = vmatpush.xpose.msra.mxu0 0.0
    %1846 = vmatpush.xpose.msra.mxu0 0.0
    %1847 = vmatpush.xpose.msra.mxu0 0.0
    %1848 = vmatpush.xpose.msra.mxu0 0.0
    %1849 = vmatpush.xpose.msra.mxu0 0.0
    %1850 = vmatpush.xpose.msra.mxu0 0.0
    %1851 = vmatpush.xpose.msra.mxu0 %v1836
    %1852 = vmatpush.xpose.msra.mxu0 %v1833
    %1853 = vmatpush.xpose.msra.mxu0 %v1830
    %1854 = vmatmul.f32.gmra.mxu0 %v1821
    %v1855 = vpop.f32.mrf.mxu0
    %v1856 = vadd.f32 0.0, %v1855
    %1857 = vmatmul.f32.gmra.mxu0 %v1824
    %v1858 = vpop.f32.mrf.mxu0
    %v1859 = vadd.f32 0.0, %v1858
    %1860 = vmatmul.f32.gmra.mxu0 %v1827
    %v1861 = vpop.f32.mrf.mxu0
    %v1862 = vadd.f32 0.0, %v1861
    %1863 = vdwg.mxu0
    %v1864 = vsel %vm424, %v1856, -inf
    %1865 = vmax.xlane.f32.xlu0 %v1864
    %v1866 = vpop.xlane.xlu0 %1865
    %v1867 = vsel %vm424, %v1859, -inf
    %1868 = vmax.xlane.f32.xlu0 %v1867
    %v1869 = vpop.xlane.xlu0 %1868
    %v1870 = vsel %vm431, %v1862, -inf
    %1871 = vmax.xlane.f32.xlu0 %v1870
    %v1872 = vpop.xlane.xlu0 %1871
    %v1873 = vsub.f32 %v1856, %v1866
    %v1874 = vsub.f32 %v1859, %v1869
    %v1875 = vsub.f32 %v1862, %v1872
    %v1876 = vmul.f32 %v1873, 1.442695
    %v1877 = vpow.pop %v1876
    %v1878 = vmul.f32 %v1874, 1.442695
    %v1879 = vpow.pop %v1878
    %v1880 = vmul.f32 %v1875, 1.442695
    %v1881 = vpow.pop %v1880
    %v1882 = vsel %vm424, %v1877, 0.0
    %1883 = vadd.xlane.f32.xlu0 %v1882
    %v1884 = vpop.xlane.xlu0 %1883
    %v1885 = vsel %vm424, %v1879, 0.0
    %1886 = vadd.xlane.f32.xlu0 %v1885
    %v1887 = vpop.xlane.xlu0 %1886
    %v1888 = vsel %vm431, %v1881, 0.0
    %1889 = vadd.xlane.f32.xlu0 %v1888
    %v1890 = vpop.xlane.xlu0 %1889
    %v1891 = vrcp.pop %v1884
    %v1892 = vrcp.pop %v1887
    %v1893 = vrcp.pop %v1890
    %v1894 = vmul.f32 %v1877, %v1891
    %v1895 = vmul.f32 %v1879, %v1892
    %v1896 = vmul.f32 %v1881, %v1893
    %v1898 = vsel %vm424, %v1894, 0
    %v1901 = vsel %vm424, %v1895, 0
    %v1904 = vsel %vm424, %v1896, 0
    %v1907 = vsel %vm468, %v1818, 0
    %1909 = vmatpush.msra.mxu0 0.0
    %1910 = vmatpush.msra.mxu0 0.0
    %1911 = vmatpush.msra.mxu0 0.0
    %1912 = vmatpush.msra.mxu0 0.0
    %1913 = vmatpush.msra.mxu0 0.0
    %1914 = vmatpush.msra.mxu0 0.0
    %1915 = vmatpush.msra.mxu0 0.0
    %1916 = vmatpush.msra.mxu0 0.0
    %1917 = vmatpush.msra.mxu0 0.0
    %1918 = vmatpush.msra.mxu0 0.0
    %1919 = vmatpush.msra.mxu0 0.0
    %1920 = vmatpush.msra.mxu0 0.0
    %1921 = vmatpush.msra.mxu0 0.0
    %1922 = vmatpush.msra.mxu0 %v1907
    %1923 = vmatpush.msra.mxu0 %v1815
    %1924 = vmatpush.msra.mxu0 %v1812
    %1925 = vmatmul.f32.gmra.mxu0 %v1898
    %v1926 = vpop.f32.mrf.mxu0
    %v1927 = vadd.f32 0.0, %v1926
    %1928 = vmatmul.f32.gmra.mxu0 %v1901
    %v1929 = vpop.f32.mrf.mxu0
    %v1930 = vadd.f32 0.0, %v1929
    %1931 = vmatmul.f32.gmra.mxu0 %v1904
    %v1932 = vpop.f32.mrf.mxu0
    %v1933 = vadd.f32 0.0, %v1932
    %1934 = vdwg.mxu0
    %1935 = vmatpush.msra.mxu0 0.0
    %1936 = vmatpush.msra.mxu0 0.0
    %1937 = vmatpush.msra.mxu0 0.0
    %1938 = vmatpush.msra.mxu0 0.0
    %1939 = vmatpush.msra.mxu0 %v511
    %1940 = vmatpush.msra.mxu0 %v510
    %1941 = vmatpush.msra.mxu0 %v509
    %1942 = vmatpush.msra.mxu0 %v508
    %1943 = vmatpush.msra.mxu0 %v507
    %1944 = vmatpush.msra.mxu0 %v506
    %1945 = vmatpush.msra.mxu0 %v505
    %1946 = vmatpush.msra.mxu0 %v504
    %1947 = vmatpush.msra.mxu0 %v503
    %1948 = vmatpush.msra.mxu0 %v502
    %1949 = vmatpush.msra.mxu0 %v501
    %1950 = vmatpush.msra.mxu0 %v500
    %1951 = vmatmul.f32.gmra.mxu0 %v1734
    %v1952 = vpop.f32.mrf.mxu0
    %v1953 = vadd.f32 0.0, %v1952
    %1954 = vmatmul.f32.gmra.mxu0 %v1737
    %v1955 = vpop.f32.mrf.mxu0
    %v1956 = vadd.f32 0.0, %v1955
    %1957 = vmatmul.f32.gmra.mxu0 %v1740
    %v1958 = vpop.f32.mrf.mxu0
    %v1959 = vadd.f32 0.0, %v1958
    %1960 = vdwg.mxu0
    %1961 = vmatpush.msra.mxu0 0.0
    %1962 = vmatpush.msra.mxu0 0.0
    %1963 = vmatpush.msra.mxu0 0.0
    %1964 = vmatpush.msra.mxu0 0.0
    %1965 = vmatpush.msra.mxu0 %v550
    %1966 = vmatpush.msra.mxu0 %v549
    %1967 = vmatpush.msra.mxu0 %v548
    %1968 = vmatpush.msra.mxu0 %v547
    %1969 = vmatpush.msra.mxu0 %v546
    %1970 = vmatpush.msra.mxu0 %v545
    %1971 = vmatpush.msra.mxu0 %v544
    %1972 = vmatpush.msra.mxu0 %v543
    %1973 = vmatpush.msra.mxu0 %v542
    %1974 = vmatpush.msra.mxu0 %v541
    %1975 = vmatpush.msra.mxu0 %v540
    %1976 = vmatpush.msra.mxu0 %v539
    %1977 = vmatmul.f32.gmra.mxu0 %v1734
    %v1978 = vpop.f32.mrf.mxu0
    %v1979 = vadd.f32 0.0, %v1978
    %1980 = vmatmul.f32.gmra.mxu0 %v1737
    %v1981 = vpop.f32.mrf.mxu0
    %v1982 = vadd.f32 0.0, %v1981
    %1983 = vmatmul.f32.gmra.mxu0 %v1740
    %v1984 = vpop.f32.mrf.mxu0
    %v1985 = vadd.f32 0.0, %v1984
    %1986 = vdwg.mxu0
    %1987 = vmatpush.msra.mxu0 0.0
    %1988 = vmatpush.msra.mxu0 0.0
    %1989 = vmatpush.msra.mxu0 0.0
    %1990 = vmatpush.msra.mxu0 0.0
    %1991 = vmatpush.msra.mxu0 %v589
    %1992 = vmatpush.msra.mxu0 %v588
    %1993 = vmatpush.msra.mxu0 %v587
    %1994 = vmatpush.msra.mxu0 %v586
    %1995 = vmatpush.msra.mxu0 %v585
    %1996 = vmatpush.msra.mxu0 %v584
    %1997 = vmatpush.msra.mxu0 %v583
    %1998 = vmatpush.msra.mxu0 %v582
    %1999 = vmatpush.msra.mxu0 %v581
    %2000 = vmatpush.msra.mxu0 %v580
    %2001 = vmatpush.msra.mxu0 %v579
    %2002 = vmatpush.msra.mxu0 %v578
    %2003 = vmatmul.f32.gmra.mxu0 %v1734
    %v2004 = vpop.f32.mrf.mxu0
    %v2005 = vadd.f32 0.0, %v2004
    %2006 = vmatmul.f32.gmra.mxu0 %v1737
    %v2007 = vpop.f32.mrf.mxu0
    %v2008 = vadd.f32 0.0, %v2007
    %2009 = vmatmul.f32.gmra.mxu0 %v1740
    %v2010 = vpop.f32.mrf.mxu0
    %v2011 = vadd.f32 0.0, %v2010
    %2012 = vdwg.mxu0
    %v2014 = vsel %vm379, %v1953, 0
    %v2017 = vsel %vm379, %v1956, 0
    %v2020 = vsel %vm379, %v1959, 0
    %v2023 = vsel %vm379, %v1979, 0
    %v2026 = vsel %vm379, %v1982, 0
    %v2029 = vsel %vm379, %v1985, 0
    %2031 = vmatpush.xpose.msra.mxu0 0.0
    %2032 = vmatpush.xpose.msra.mxu0 0.0
    %2033 = vmatpush.xpose.msra.mxu0 0.0
    %2034 = vmatpush.xpose.msra.mxu0 0.0
    %2035 = vmatpush.xpose.msra.mxu0 0.0
    %2036 = vmatpush.xpose.msra.mxu0 0.0
    %2037 = vmatpush.xpose.msra.mxu0 0.0
    %2038 = vmatpush.xpose.msra.mxu0 0.0
    %2039 = vmatpush.xpose.msra.mxu0 0.0
    %2040 = vmatpush.xpose.msra.mxu0 0.0
    %2041 = vmatpush.xpose.msra.mxu0 0.0
    %2042 = vmatpush.xpose.msra.mxu0 0.0
    %2043 = vmatpush.xpose.msra.mxu0 0.0
    %2044 = vmatpush.xpose.msra.mxu0 %v2029
    %2045 = vmatpush.xpose.msra.mxu0 %v2026
    %2046 = vmatpush.xpose.msra.mxu0 %v2023
    %2047 = vmatmul.f32.gmra.mxu0 %v2014
    %v2048 = vpop.f32.mrf.mxu0
    %v2049 = vadd.f32 0.0, %v2048
    %2050 = vmatmul.f32.gmra.mxu0 %v2017
    %v2051 = vpop.f32.mrf.mxu0
    %v2052 = vadd.f32 0.0, %v2051
    %2053 = vmatmul.f32.gmra.mxu0 %v2020
    %v2054 = vpop.f32.mrf.mxu0
    %v2055 = vadd.f32 0.0, %v2054
    %2056 = vdwg.mxu0
    %v2057 = vsel %vm424, %v2049, -inf
    %2058 = vmax.xlane.f32.xlu0 %v2057
    %v2059 = vpop.xlane.xlu0 %2058
    %v2060 = vsel %vm424, %v2052, -inf
    %2061 = vmax.xlane.f32.xlu0 %v2060
    %v2062 = vpop.xlane.xlu0 %2061
    %v2063 = vsel %vm431, %v2055, -inf
    %2064 = vmax.xlane.f32.xlu0 %v2063
    %v2065 = vpop.xlane.xlu0 %2064
    %v2066 = vsub.f32 %v2049, %v2059
    %v2067 = vsub.f32 %v2052, %v2062
    %v2068 = vsub.f32 %v2055, %v2065
    %v2069 = vmul.f32 %v2066, 1.442695
    %v2070 = vpow.pop %v2069
    %v2071 = vmul.f32 %v2067, 1.442695
    %v2072 = vpow.pop %v2071
    %v2073 = vmul.f32 %v2068, 1.442695
    %v2074 = vpow.pop %v2073
    %v2075 = vsel %vm424, %v2070, 0.0
    %2076 = vadd.xlane.f32.xlu0 %v2075
    %v2077 = vpop.xlane.xlu0 %2076
    %v2078 = vsel %vm424, %v2072, 0.0
    %2079 = vadd.xlane.f32.xlu0 %v2078
    %v2080 = vpop.xlane.xlu0 %2079
    %v2081 = vsel %vm431, %v2074, 0.0
    %2082 = vadd.xlane.f32.xlu0 %v2081
    %v2083 = vpop.xlane.xlu0 %2082
    %v2084 = vrcp.pop %v2077
    %v2085 = vrcp.pop %v2080
    %v2086 = vrcp.pop %v2083
    %v2087 = vmul.f32 %v2070, %v2084
    %v2088 = vmul.f32 %v2072, %v2085
    %v2089 = vmul.f32 %v2074, %v2086
    %v2091 = vsel %vm424, %v2087, 0
    %v2094 = vsel %vm424, %v2088, 0
    %v2097 = vsel %vm424, %v2089, 0
    %v2100 = vsel %vm468, %v2011, 0
    %2102 = vmatpush.msra.mxu0 0.0
    %2103 = vmatpush.msra.mxu0 0.0
    %2104 = vmatpush.msra.mxu0 0.0
    %2105 = vmatpush.msra.mxu0 0.0
    %2106 = vmatpush.msra.mxu0 0.0
    %2107 = vmatpush.msra.mxu0 0.0
    %2108 = vmatpush.msra.mxu0 0.0
    %2109 = vmatpush.msra.mxu0 0.0
    %2110 = vmatpush.msra.mxu0 0.0
    %2111 = vmatpush.msra.mxu0 0.0
    %2112 = vmatpush.msra.mxu0 0.0
    %2113 = vmatpush.msra.mxu0 0.0
    %2114 = vmatpush.msra.mxu0 0.0
    %2115 = vmatpush.msra.mxu0 %v2100
    %2116 = vmatpush.msra.mxu0 %v2008
    %2117 = vmatpush.msra.mxu0 %v2005
    %2118 = vmatmul.f32.gmra.mxu0 %v2091
    %v2119 = vpop.f32.mrf.mxu0
    %v2120 = vadd.f32 0.0, %v2119
    %2121 = vmatmul.f32.gmra.mxu0 %v2094
    %v2122 = vpop.f32.mrf.mxu0
    %v2123 = vadd.f32 0.0, %v2122
    %2124 = vmatmul.f32.gmra.mxu0 %v2097
    %v2125 = vpop.f32.mrf.mxu0
    %v2126 = vadd.f32 0.0, %v2125
    %2127 = vdwg.mxu0
    %v2129 = vsel %vm379, %v2120, 0
    %v2132 = vsel %vm379, %v2123, 0
    %v2135 = vsel %vm379, %v2126, 0
    %2137 = vmatpush.msra.mxu0 0.0
    %2138 = vmatpush.msra.mxu0 0.0
    %2139 = vmatpush.msra.mxu0 0.0
    %2140 = vmatpush.msra.mxu0 0.0
    %2141 = vmatpush.msra.mxu0 0.0
    %2142 = vmatpush.msra.mxu0 0.0
    %2143 = vmatpush.msra.mxu0 0.0
    %2144 = vmatpush.msra.mxu0 0.0
    %2145 = vmatpush.msra.mxu0 0.0
    %2146 = vmatpush.msra.mxu0 0.0
    %2147 = vmatpush.msra.mxu0 0.0
    %2148 = vmatpush.msra.mxu0 0.0
    %2149 = vmatpush.msra.mxu0 0.0
    %2150 = vmatpush.msra.mxu0 0.0
    %2151 = vmatpush.msra.mxu0 0.0
    %2152 = vmatpush.msra.mxu0 %v732
    %2153 = vmatmul.f32.gmra.mxu0 %v2129
    %v2154 = vpop.f32.mrf.mxu0
    %v2155 = vadd.f32 0.0, %v2154
    %2156 = vmatmul.f32.gmra.mxu0 %v2132
    %v2157 = vpop.f32.mrf.mxu0
    %v2158 = vadd.f32 0.0, %v2157
    %2159 = vmatmul.f32.gmra.mxu0 %v2135
    %v2160 = vpop.f32.mrf.mxu0
    %v2161 = vadd.f32 0.0, %v2160
    %2162 = vdwg.mxu0
    %v2164 = vsel %vm379, %v1927, 0
    %v2167 = vsel %vm379, %v1930, 0
    %v2170 = vsel %vm379, %v1933, 0
    %2172 = vmatpush.msra.mxu0 0.0
    %2173 = vmatpush.msra.mxu0 0.0
    %2174 = vmatpush.msra.mxu0 0.0
    %2175 = vmatpush.msra.mxu0 0.0
    %2176 = vmatpush.msra.mxu0 0.0
    %2177 = vmatpush.msra.mxu0 0.0
    %2178 = vmatpush.msra.mxu0 0.0
    %2179 = vmatpush.msra.mxu0 0.0
    %2180 = vmatpush.msra.mxu0 0.0
    %2181 = vmatpush.msra.mxu0 0.0
    %2182 = vmatpush.msra.mxu0 0.0
    %2183 = vmatpush.msra.mxu0 0.0
    %2184 = vmatpush.msra.mxu0 0.0
    %2185 = vmatpush.msra.mxu0 0.0
    %2186 = vmatpush.msra.mxu0 0.0
    %2187 = vmatpush.msra.mxu0 %v498
    %2188 = vmatmul.f32.gmra.mxu0 %v2164
    %v2189 = vpop.f32.mrf.mxu0
    %v2190 = vadd.f32 %v2155, %v2189
    %2191 = vmatmul.f32.gmra.mxu0 %v2167
    %v2192 = vpop.f32.mrf.mxu0
    %v2193 = vadd.f32 %v2158, %v2192
    %2194 = vmatmul.f32.gmra.mxu0 %v2170
    %v2195 = vpop.f32.mrf.mxu0
    %v2196 = vadd.f32 %v2161, %v2195
    %2197 = vdwg.mxu0
    %2198 = vmatpush.msra.mxu0 0.0
    %2199 = vmatpush.msra.mxu0 0.0
    %2200 = vmatpush.msra.mxu0 0.0
    %2201 = vmatpush.msra.mxu0 0.0
    %2202 = vmatpush.msra.mxu0 %v815
    %2203 = vmatpush.msra.mxu0 %v814
    %2204 = vmatpush.msra.mxu0 %v813
    %2205 = vmatpush.msra.mxu0 %v812
    %2206 = vmatpush.msra.mxu0 %v811
    %2207 = vmatpush.msra.mxu0 %v810
    %2208 = vmatpush.msra.mxu0 %v809
    %2209 = vmatpush.msra.mxu0 %v808
    %2210 = vmatpush.msra.mxu0 %v807
    %2211 = vmatpush.msra.mxu0 %v806
    %2212 = vmatpush.msra.mxu0 %v805
    %2213 = vmatpush.msra.mxu0 %v804
    %2214 = vmatmul.f32.gmra.mxu0 %v1734
    %v2215 = vpop.f32.mrf.mxu0
    %v2216 = vadd.f32 0.0, %v2215
    %2217 = vmatmul.f32.gmra.mxu0 %v1737
    %v2218 = vpop.f32.mrf.mxu0
    %v2219 = vadd.f32 0.0, %v2218
    %2220 = vmatmul.f32.gmra.mxu0 %v1740
    %v2221 = vpop.f32.mrf.mxu0
    %v2222 = vadd.f32 0.0, %v2221
    %2223 = vdwg.mxu0
    %2224 = vmatpush.msra.mxu0 0.0
    %2225 = vmatpush.msra.mxu0 0.0
    %2226 = vmatpush.msra.mxu0 0.0
    %2227 = vmatpush.msra.mxu0 0.0
    %2228 = vmatpush.msra.mxu0 %v854
    %2229 = vmatpush.msra.mxu0 %v853
    %2230 = vmatpush.msra.mxu0 %v852
    %2231 = vmatpush.msra.mxu0 %v851
    %2232 = vmatpush.msra.mxu0 %v850
    %2233 = vmatpush.msra.mxu0 %v849
    %2234 = vmatpush.msra.mxu0 %v848
    %2235 = vmatpush.msra.mxu0 %v847
    %2236 = vmatpush.msra.mxu0 %v846
    %2237 = vmatpush.msra.mxu0 %v845
    %2238 = vmatpush.msra.mxu0 %v844
    %2239 = vmatpush.msra.mxu0 %v843
    %2240 = vmatmul.f32.gmra.mxu0 %v1734
    %v2241 = vpop.f32.mrf.mxu0
    %v2242 = vadd.f32 0.0, %v2241
    %2243 = vmatmul.f32.gmra.mxu0 %v1737
    %v2244 = vpop.f32.mrf.mxu0
    %v2245 = vadd.f32 0.0, %v2244
    %2246 = vmatmul.f32.gmra.mxu0 %v1740
    %v2247 = vpop.f32.mrf.mxu0
    %v2248 = vadd.f32 0.0, %v2247
    %2249 = vdwg.mxu0
    %2250 = vmatpush.msra.mxu0 0.0
    %2251 = vmatpush.msra.mxu0 0.0
    %2252 = vmatpush.msra.mxu0 0.0
    %2253 = vmatpush.msra.mxu0 0.0
    %2254 = vmatpush.msra.mxu0 %v893
    %2255 = vmatpush.msra.mxu0 %v892
    %2256 = vmatpush.msra.mxu0 %v891
    %2257 = vmatpush.msra.mxu0 %v890
    %2258 = vmatpush.msra.mxu0 %v889
    %2259 = vmatpush.msra.mxu0 %v888
    %2260 = vmatpush.msra.mxu0 %v887
    %2261 = vmatpush.msra.mxu0 %v886
    %2262 = vmatpush.msra.mxu0 %v885
    %2263 = vmatpush.msra.mxu0 %v884
    %2264 = vmatpush.msra.mxu0 %v883
    %2265 = vmatpush.msra.mxu0 %v882
    %2266 = vmatmul.f32.gmra.mxu0 %v1734
    %v2267 = vpop.f32.mrf.mxu0
    %v2268 = vadd.f32 0.0, %v2267
    %2269 = vmatmul.f32.gmra.mxu0 %v1737
    %v2270 = vpop.f32.mrf.mxu0
    %v2271 = vadd.f32 0.0, %v2270
    %2272 = vmatmul.f32.gmra.mxu0 %v1740
    %v2273 = vpop.f32.mrf.mxu0
    %v2274 = vadd.f32 0.0, %v2273
    %2275 = vdwg.mxu0
    %v2277 = vsel %vm379, %v2216, 0
    %v2280 = vsel %vm379, %v2219, 0
    %v2283 = vsel %vm379, %v2222, 0
    %v2286 = vsel %vm379, %v2242, 0
    %v2289 = vsel %vm379, %v2245, 0
    %v2292 = vsel %vm379, %v2248, 0
    %2294 = vmatpush.xpose.msra.mxu0 0.0
    %2295 = vmatpush.xpose.msra.mxu0 0.0
    %2296 = vmatpush.xpose.msra.mxu0 0.0
    %2297 = vmatpush.xpose.msra.mxu0 0.0
    %2298 = vmatpush.xpose.msra.mxu0 0.0
    %2299 = vmatpush.xpose.msra.mxu0 0.0
    %2300 = vmatpush.xpose.msra.mxu0 0.0
    %2301 = vmatpush.xpose.msra.mxu0 0.0
    %2302 = vmatpush.xpose.msra.mxu0 0.0
    %2303 = vmatpush.xpose.msra.mxu0 0.0
    %2304 = vmatpush.xpose.msra.mxu0 0.0
    %2305 = vmatpush.xpose.msra.mxu0 0.0
    %2306 = vmatpush.xpose.msra.mxu0 0.0
    %2307 = vmatpush.xpose.msra.mxu0 %v2292
    %2308 = vmatpush.xpose.msra.mxu0 %v2289
    %2309 = vmatpush.xpose.msra.mxu0 %v2286
    %2310 = vmatmul.f32.gmra.mxu0 %v2277
    %v2311 = vpop.f32.mrf.mxu0
    %v2312 = vadd.f32 0.0, %v2311
    %2313 = vmatmul.f32.gmra.mxu0 %v2280
    %v2314 = vpop.f32.mrf.mxu0
    %v2315 = vadd.f32 0.0, %v2314
    %2316 = vmatmul.f32.gmra.mxu0 %v2283
    %v2317 = vpop.f32.mrf.mxu0
    %v2318 = vadd.f32 0.0, %v2317
    %2319 = vdwg.mxu0
    %v2320 = vsel %vm424, %v2312, -inf
    %2321 = vmax.xlane.f32.xlu0 %v2320
    %v2322 = vpop.xlane.xlu0 %2321
    %v2323 = vsel %vm424, %v2315, -inf
    %2324 = vmax.xlane.f32.xlu0 %v2323
    %v2325 = vpop.xlane.xlu0 %2324
    %v2326 = vsel %vm431, %v2318, -inf
    %2327 = vmax.xlane.f32.xlu0 %v2326
    %v2328 = vpop.xlane.xlu0 %2327
    %v2329 = vsub.f32 %v2312, %v2322
    %v2330 = vsub.f32 %v2315, %v2325
    %v2331 = vsub.f32 %v2318, %v2328
    %v2332 = vmul.f32 %v2329, 1.442695
    %v2333 = vpow.pop %v2332
    %v2334 = vmul.f32 %v2330, 1.442695
    %v2335 = vpow.pop %v2334
    %v2336 = vmul.f32 %v2331, 1.442695
    %v2337 = vpow.pop %v2336
    %v2338 = vsel %vm424, %v2333, 0.0
    %2339 = vadd.xlane.f32.xlu0 %v2338
    %v2340 = vpop.xlane.xlu0 %2339
    %v2341 = vsel %vm424, %v2335, 0.0
    %2342 = vadd.xlane.f32.xlu0 %v2341
    %v2343 = vpop.xlane.xlu0 %2342
    %v2344 = vsel %vm431, %v2337, 0.0
    %2345 = vadd.xlane.f32.xlu0 %v2344
    %v2346 = vpop.xlane.xlu0 %2345
    %v2347 = vrcp.pop %v2340
    %v2348 = vrcp.pop %v2343
    %v2349 = vrcp.pop %v2346
    %v2350 = vmul.f32 %v2333, %v2347
    %v2351 = vmul.f32 %v2335, %v2348
    %v2352 = vmul.f32 %v2337, %v2349
    %v2354 = vsel %vm424, %v2350, 0
    %v2357 = vsel %vm424, %v2351, 0
    %v2360 = vsel %vm424, %v2352, 0
    %v2363 = vsel %vm468, %v2274, 0
    %2365 = vmatpush.msra.mxu0 0.0
    %2366 = vmatpush.msra.mxu0 0.0
    %2367 = vmatpush.msra.mxu0 0.0
    %2368 = vmatpush.msra.mxu0 0.0
    %2369 = vmatpush.msra.mxu0 0.0
    %2370 = vmatpush.msra.mxu0 0.0
    %2371 = vmatpush.msra.mxu0 0.0
    %2372 = vmatpush.msra.mxu0 0.0
    %2373 = vmatpush.msra.mxu0 0.0
    %2374 = vmatpush.msra.mxu0 0.0
    %2375 = vmatpush.msra.mxu0 0.0
    %2376 = vmatpush.msra.mxu0 0.0
    %2377 = vmatpush.msra.mxu0 0.0
    %2378 = vmatpush.msra.mxu0 %v2363
    %2379 = vmatpush.msra.mxu0 %v2271
    %2380 = vmatpush.msra.mxu0 %v2268
    %2381 = vmatmul.f32.gmra.mxu0 %v2354
    %v2382 = vpop.f32.mrf.mxu0
    %v2383 = vadd.f32 0.0, %v2382
    %2384 = vmatmul.f32.gmra.mxu0 %v2357
    %v2385 = vpop.f32.mrf.mxu0
    %v2386 = vadd.f32 0.0, %v2385
    %2387 = vmatmul.f32.gmra.mxu0 %v2360
    %v2388 = vpop.f32.mrf.mxu0
    %v2389 = vadd.f32 0.0, %v2388
    %2390 = vdwg.mxu0
    %v2392 = vsel %vm379, %v2383, 0
    %v2395 = vsel %vm379, %v2386, 0
    %v2398 = vsel %vm379, %v2389, 0
    %2400 = vmatpush.msra.mxu0 0.0
    %2401 = vmatpush.msra.mxu0 0.0
    %2402 = vmatpush.msra.mxu0 0.0
    %2403 = vmatpush.msra.mxu0 0.0
    %2404 = vmatpush.msra.mxu0 0.0
    %2405 = vmatpush.msra.mxu0 0.0
    %2406 = vmatpush.msra.mxu0 0.0
    %2407 = vmatpush.msra.mxu0 0.0
    %2408 = vmatpush.msra.mxu0 0.0
    %2409 = vmatpush.msra.mxu0 0.0
    %2410 = vmatpush.msra.mxu0 0.0
    %2411 = vmatpush.msra.mxu0 0.0
    %2412 = vmatpush.msra.mxu0 0.0
    %2413 = vmatpush.msra.mxu0 0.0
    %2414 = vmatpush.msra.mxu0 0.0
    %2415 = vmatpush.msra.mxu0 %v1036
    %2416 = vmatmul.f32.gmra.mxu0 %v2392
    %v2417 = vpop.f32.mrf.mxu0
    %v2418 = vadd.f32 0.0, %v2417
    %2419 = vmatmul.f32.gmra.mxu0 %v2395
    %v2420 = vpop.f32.mrf.mxu0
    %v2421 = vadd.f32 0.0, %v2420
    %2422 = vmatmul.f32.gmra.mxu0 %v2398
    %v2423 = vpop.f32.mrf.mxu0
    %v2424 = vadd.f32 0.0, %v2423
    %2425 = vdwg.mxu0
    %v2426 = vadd.f32 %v2190, %v2418
    %v2427 = vadd.f32 %v2193, %v2421
    %v2428 = vadd.f32 %v2196, %v2424
    %2429 = vmatpush.msra.mxu0 0.0
    %2430 = vmatpush.msra.mxu0 0.0
    %2431 = vmatpush.msra.mxu0 0.0
    %2432 = vmatpush.msra.mxu0 0.0
    %2433 = vmatpush.msra.mxu0 %v1087
    %2434 = vmatpush.msra.mxu0 %v1086
    %2435 = vmatpush.msra.mxu0 %v1085
    %2436 = vmatpush.msra.mxu0 %v1084
    %2437 = vmatpush.msra.mxu0 %v1083
    %2438 = vmatpush.msra.mxu0 %v1082
    %2439 = vmatpush.msra.mxu0 %v1081
    %2440 = vmatpush.msra.mxu0 %v1080
    %2441 = vmatpush.msra.mxu0 %v1079
    %2442 = vmatpush.msra.mxu0 %v1078
    %2443 = vmatpush.msra.mxu0 %v1077
    %2444 = vmatpush.msra.mxu0 %v1076
    %2445 = vmatmul.f32.gmra.mxu0 %v1734
    %v2446 = vpop.f32.mrf.mxu0
    %v2447 = vadd.f32 0.0, %v2446
    %2448 = vmatmul.f32.gmra.mxu0 %v1737
    %v2449 = vpop.f32.mrf.mxu0
    %v2450 = vadd.f32 0.0, %v2449
    %2451 = vmatmul.f32.gmra.mxu0 %v1740
    %v2452 = vpop.f32.mrf.mxu0
    %v2453 = vadd.f32 0.0, %v2452
    %2454 = vdwg.mxu0
    %2455 = vmatpush.msra.mxu0 0.0
    %2456 = vmatpush.msra.mxu0 0.0
    %2457 = vmatpush.msra.mxu0 0.0
    %2458 = vmatpush.msra.mxu0 0.0
    %2459 = vmatpush.msra.mxu0 %v1126
    %2460 = vmatpush.msra.mxu0 %v1125
    %2461 = vmatpush.msra.mxu0 %v1124
    %2462 = vmatpush.msra.mxu0 %v1123
    %2463 = vmatpush.msra.mxu0 %v1122
    %2464 = vmatpush.msra.mxu0 %v1121
    %2465 = vmatpush.msra.mxu0 %v1120
    %2466 = vmatpush.msra.mxu0 %v1119
    %2467 = vmatpush.msra.mxu0 %v1118
    %2468 = vmatpush.msra.mxu0 %v1117
    %2469 = vmatpush.msra.mxu0 %v1116
    %2470 = vmatpush.msra.mxu0 %v1115
    %2471 = vmatmul.f32.gmra.mxu0 %v1734
    %v2472 = vpop.f32.mrf.mxu0
    %v2473 = vadd.f32 0.0, %v2472
    %2474 = vmatmul.f32.gmra.mxu0 %v1737
    %v2475 = vpop.f32.mrf.mxu0
    %v2476 = vadd.f32 0.0, %v2475
    %2477 = vmatmul.f32.gmra.mxu0 %v1740
    %v2478 = vpop.f32.mrf.mxu0
    %v2479 = vadd.f32 0.0, %v2478
    %2480 = vdwg.mxu0
    %2481 = vmatpush.msra.mxu0 0.0
    %2482 = vmatpush.msra.mxu0 0.0
    %2483 = vmatpush.msra.mxu0 0.0
    %2484 = vmatpush.msra.mxu0 0.0
    %2485 = vmatpush.msra.mxu0 %v1165
    %2486 = vmatpush.msra.mxu0 %v1164
    %2487 = vmatpush.msra.mxu0 %v1163
    %2488 = vmatpush.msra.mxu0 %v1162
    %2489 = vmatpush.msra.mxu0 %v1161
    %2490 = vmatpush.msra.mxu0 %v1160
    %2491 = vmatpush.msra.mxu0 %v1159
    %2492 = vmatpush.msra.mxu0 %v1158
    %2493 = vmatpush.msra.mxu0 %v1157
    %2494 = vmatpush.msra.mxu0 %v1156
    %2495 = vmatpush.msra.mxu0 %v1155
    %2496 = vmatpush.msra.mxu0 %v1154
    %2497 = vmatmul.f32.gmra.mxu0 %v1734
    %v2498 = vpop.f32.mrf.mxu0
    %v2499 = vadd.f32 0.0, %v2498
    %2500 = vmatmul.f32.gmra.mxu0 %v1737
    %v2501 = vpop.f32.mrf.mxu0
    %v2502 = vadd.f32 0.0, %v2501
    %2503 = vmatmul.f32.gmra.mxu0 %v1740
    %v2504 = vpop.f32.mrf.mxu0
    %v2505 = vadd.f32 0.0, %v2504
    %2506 = vdwg.mxu0
    %v2508 = vsel %vm379, %v2447, 0
    %v2511 = vsel %vm379, %v2450, 0
    %v2514 = vsel %vm379, %v2453, 0
    %v2517 = vsel %vm379, %v2473, 0
    %v2520 = vsel %vm379, %v2476, 0
    %v2523 = vsel %vm379, %v2479, 0
    %2525 = vmatpush.xpose.msra.mxu0 0.0
    %2526 = vmatpush.xpose.msra.mxu0 0.0
    %2527 = vmatpush.xpose.msra.mxu0 0.0
    %2528 = vmatpush.xpose.msra.mxu0 0.0
    %2529 = vmatpush.xpose.msra.mxu0 0.0
    %2530 = vmatpush.xpose.msra.mxu0 0.0
    %2531 = vmatpush.xpose.msra.mxu0 0.0
    %2532 = vmatpush.xpose.msra.mxu0 0.0
    %2533 = vmatpush.xpose.msra.mxu0 0.0
    %2534 = vmatpush.xpose.msra.mxu0 0.0
    %2535 = vmatpush.xpose.msra.mxu0 0.0
    %2536 = vmatpush.xpose.msra.mxu0 0.0
    %2537 = vmatpush.xpose.msra.mxu0 0.0
    %2538 = vmatpush.xpose.msra.mxu0 %v2523
    %2539 = vmatpush.xpose.msra.mxu0 %v2520
    %2540 = vmatpush.xpose.msra.mxu0 %v2517
    %2541 = vmatmul.f32.gmra.mxu0 %v2508
    %v2542 = vpop.f32.mrf.mxu0
    %v2543 = vadd.f32 0.0, %v2542
    %2544 = vmatmul.f32.gmra.mxu0 %v2511
    %v2545 = vpop.f32.mrf.mxu0
    %v2546 = vadd.f32 0.0, %v2545
    %2547 = vmatmul.f32.gmra.mxu0 %v2514
    %v2548 = vpop.f32.mrf.mxu0
    %v2549 = vadd.f32 0.0, %v2548
    %2550 = vdwg.mxu0
    %v2551 = vsel %vm424, %v2543, -inf
    %2552 = vmax.xlane.f32.xlu0 %v2551
    %v2553 = vpop.xlane.xlu0 %2552
    %v2554 = vsel %vm424, %v2546, -inf
    %2555 = vmax.xlane.f32.xlu0 %v2554
    %v2556 = vpop.xlane.xlu0 %2555
    %v2557 = vsel %vm431, %v2549, -inf
    %2558 = vmax.xlane.f32.xlu0 %v2557
    %v2559 = vpop.xlane.xlu0 %2558
    %v2560 = vsub.f32 %v2543, %v2553
    %v2561 = vsub.f32 %v2546, %v2556
    %v2562 = vsub.f32 %v2549, %v2559
    %v2563 = vmul.f32 %v2560, 1.442695
    %v2564 = vpow.pop %v2563
    %v2565 = vmul.f32 %v2561, 1.442695
    %v2566 = vpow.pop %v2565
    %v2567 = vmul.f32 %v2562, 1.442695
    %v2568 = vpow.pop %v2567
    %v2569 = vsel %vm424, %v2564, 0.0
    %2570 = vadd.xlane.f32.xlu0 %v2569
    %v2571 = vpop.xlane.xlu0 %2570
    %v2572 = vsel %vm424, %v2566, 0.0
    %2573 = vadd.xlane.f32.xlu0 %v2572
    %v2574 = vpop.xlane.xlu0 %2573
    %v2575 = vsel %vm431, %v2568, 0.0
    %2576 = vadd.xlane.f32.xlu0 %v2575
    %v2577 = vpop.xlane.xlu0 %2576
    %v2578 = vrcp.pop %v2571
    %v2579 = vrcp.pop %v2574
    %v2580 = vrcp.pop %v2577
    %v2581 = vmul.f32 %v2564, %v2578
    %v2582 = vmul.f32 %v2566, %v2579
    %v2583 = vmul.f32 %v2568, %v2580
    %v2585 = vsel %vm424, %v2581, 0
    %v2588 = vsel %vm424, %v2582, 0
    %v2591 = vsel %vm424, %v2583, 0
    %v2594 = vsel %vm468, %v2505, 0
    %2596 = vmatpush.msra.mxu0 0.0
    %2597 = vmatpush.msra.mxu0 0.0
    %2598 = vmatpush.msra.mxu0 0.0
    %2599 = vmatpush.msra.mxu0 0.0
    %2600 = vmatpush.msra.mxu0 0.0
    %2601 = vmatpush.msra.mxu0 0.0
    %2602 = vmatpush.msra.mxu0 0.0
    %2603 = vmatpush.msra.mxu0 0.0
    %2604 = vmatpush.msra.mxu0 0.0
    %2605 = vmatpush.msra.mxu0 0.0
    %2606 = vmatpush.msra.mxu0 0.0
    %2607 = vmatpush.msra.mxu0 0.0
    %2608 = vmatpush.msra.mxu0 0.0
    %2609 = vmatpush.msra.mxu0 %v2594
    %2610 = vmatpush.msra.mxu0 %v2502
    %2611 = vmatpush.msra.mxu0 %v2499
    %2612 = vmatmul.f32.gmra.mxu0 %v2585
    %v2613 = vpop.f32.mrf.mxu0
    %v2614 = vadd.f32 0.0, %v2613
    %2615 = vmatmul.f32.gmra.mxu0 %v2588
    %v2616 = vpop.f32.mrf.mxu0
    %v2617 = vadd.f32 0.0, %v2616
    %2618 = vmatmul.f32.gmra.mxu0 %v2591
    %v2619 = vpop.f32.mrf.mxu0
    %v2620 = vadd.f32 0.0, %v2619
    %2621 = vdwg.mxu0
    %v2623 = vsel %vm379, %v2614, 0
    %v2626 = vsel %vm379, %v2617, 0
    %v2629 = vsel %vm379, %v2620, 0
    %2631 = vmatpush.msra.mxu0 0.0
    %2632 = vmatpush.msra.mxu0 0.0
    %2633 = vmatpush.msra.mxu0 0.0
    %2634 = vmatpush.msra.mxu0 0.0
    %2635 = vmatpush.msra.mxu0 0.0
    %2636 = vmatpush.msra.mxu0 0.0
    %2637 = vmatpush.msra.mxu0 0.0
    %2638 = vmatpush.msra.mxu0 0.0
    %2639 = vmatpush.msra.mxu0 0.0
    %2640 = vmatpush.msra.mxu0 0.0
    %2641 = vmatpush.msra.mxu0 0.0
    %2642 = vmatpush.msra.mxu0 0.0
    %2643 = vmatpush.msra.mxu0 0.0
    %2644 = vmatpush.msra.mxu0 0.0
    %2645 = vmatpush.msra.mxu0 0.0
    %2646 = vmatpush.msra.mxu0 %v1308
    %2647 = vmatmul.f32.gmra.mxu0 %v2623
    %v2648 = vpop.f32.mrf.mxu0
    %v2649 = vadd.f32 0.0, %v2648
    %2650 = vmatmul.f32.gmra.mxu0 %v2626
    %v2651 = vpop.f32.mrf.mxu0
    %v2652 = vadd.f32 0.0, %v2651
    %2653 = vmatmul.f32.gmra.mxu0 %v2629
    %v2654 = vpop.f32.mrf.mxu0
    %v2655 = vadd.f32 0.0, %v2654
    %2656 = vdwg.mxu0
    %v2657 = vadd.f32 %v2426, %v2649
    %v2658 = vadd.f32 %v2427, %v2652
    %v2659 = vadd.f32 %v2428, %v2655
    %s2660 = scalar_lea.vmem %s7, 32
    %v2661 = vld [vmem:[%s2660] sm:$0xff]
    %v2662 = vld [vmem:[%s2660 + $0x8] sm:$0xff]
    %v2663 = vld [vmem:[%s2660 + $0x10] sm:$0xff]
    %v2664 = vld [vmem:[%s2660 + $0x18] sm:$0xff]
    %s2665 = scalar_lea.vmem %s8, 1
    %v2666 = vld [vmem:[%s2665] sm:$0x1]
    %v2668 = vperm.slane %v2666, 0
    %v2671 = vsel %vm119, %v2657, 0
    %v2674 = vsel %vm119, %v2658, 0
    %v2677 = vsel %vm119, %v2659, 0
    %2679 = vmatpush.msra.mxu0 0.0
    %2680 = vmatpush.msra.mxu0 0.0
    %2681 = vmatpush.msra.mxu0 0.0
    %2682 = vmatpush.msra.mxu0 0.0
    %2683 = vmatpush.msra.mxu0 0.0
    %2684 = vmatpush.msra.mxu0 0.0
    %2685 = vmatpush.msra.mxu0 0.0
    %2686 = vmatpush.msra.mxu0 0.0
    %2687 = vmatpush.msra.mxu0 0.0
    %2688 = vmatpush.msra.mxu0 0.0
    %2689 = vmatpush.msra.mxu0 0.0
    %2690 = vmatpush.msra.mxu0 0.0
    %2691 = vmatpush.msra.mxu0 %v2664
    %2692 = vmatpush.msra.mxu0 %v2663
    %2693 = vmatpush.msra.mxu0 %v2662
    %2694 = vmatpush.msra.mxu0 %v2661
    %2695 = vmatmul.f32.gmra.mxu0 %v2671
    %v2696 = vpop.f32.mrf.mxu0
    %v2697 = vadd.f32 %v2668, %v2696
    %2698 = vmatmul.f32.gmra.mxu0 %v2674
    %v2699 = vpop.f32.mrf.mxu0
    %v2700 = vadd.f32 %v2668, %v2699
    %2701 = vmatmul.f32.gmra.mxu0 %v2677
    %v2702 = vpop.f32.mrf.mxu0
    %v2703 = vadd.f32 %v2668, %v2702
    %2704 = vdwg.mxu0
    %v2705 = vadd.f32 %v1597, %v2697
    %v2706 = vadd.f32 %v1598, %v2700
    %v2707 = vadd.f32 %v1599, %v2703
    %s2708 = scalar_lea.vmem %s9, 1
    %v2709 = vld [vmem:[%s2708] sm:$0x1]
    %s2710 = scalar_lea.vmem %s10, 1
    %v2711 = vld [vmem:[%s2710] sm:$0x1]
    %v2712 = vsel %vm119, %v2705, 0.0
    %2713 = vadd.xlane.f32.xlu0 %v2712
    %v2714 = vpop.xlane.xlu0 %2713
    %v2715 = vsel %vm119, %v2706, 0.0
    %2716 = vadd.xlane.f32.xlu0 %v2715
    %v2717 = vpop.xlane.xlu0 %2716
    %v2718 = vsel %vm126, %v2707, 0.0
    %2719 = vadd.xlane.f32.xlu0 %v2718
    %v2720 = vpop.xlane.xlu0 %2719
    %v2721 = vmul.f32 %v2714, %v136
    %v2722 = vmul.f32 %v2717, %v136
    %v2723 = vmul.f32 %v2720, %v136
    %v2724 = vmul.f32 %v2705, %v2705
    %v2725 = vmul.f32 %v2706, %v2706
    %v2726 = vmul.f32 %v2707, %v2707
    %v2727 = vsel %vm119, %v2724, 0.0
    %2728 = vadd.xlane.f32.xlu0 %v2727
    %v2729 = vpop.xlane.xlu0 %2728
    %v2730 = vsel %vm119, %v2725, 0.0
    %2731 = vadd.xlane.f32.xlu0 %v2730
    %v2732 = vpop.xlane.xlu0 %2731
    %v2733 = vsel %vm126, %v2726, 0.0
    %2734 = vadd.xlane.f32.xlu0 %v2733
    %v2735 = vpop.xlane.xlu0 %2734
    %v2736 = vmul.f32 %v2729, %v136
    %v2737 = vmul.f32 %v2732, %v136
    %v2738 = vmul.f32 %v2735, %v136
    %v2739 = vmul.f32 %v2721, %v2721
    %v2740 = vmul.f32 %v2722, %v2722
    %v2741 = vmul.f32 %v2723, %v2723
    %v2742 = vsub.f32 %v2736, %v2739
    %v2743 = vsub.f32 %v2737, %v2740
    %v2744 = vsub.f32 %v2738, %v2741
    %v2745 = vsub.f32 %v2705, %v2721
    %v2746 = vsub.f32 %v2706, %v2722
    %v2747 = vsub.f32 %v2707, %v2723
    %v2748 = vadd.f32 %v2742, 1e-06
    %v2749 = vadd.f32 %v2743, 1e-06
    %v2750 = vadd.f32 %v2744, 1e-06
    %v2751 = vrsqrt.pop %v2748
    %v2752 = vmul.f32 %v2751, %v2748
    %v2753 = vmul.f32 %v2752, %v2751
    %v2754 = vmul.f32 0.5, %v2753
    %v2755 = vsub.f32 1.5, %v2754
    %v2756 = vmul.f32 %v2751, %v2755
    %vm2757 = vweird.f32 %v2748
    %vm2758 = vweird.f32 %v2751
    %vm2759 = vmor %vm2757, %vm2758
    %v2760 = vsel %vm2759, %v2751, %v2756
    %v2761 = vrsqrt.pop %v2749
    %v2762 = vmul.f32 %v2761, %v2749
    %v2763 = vmul.f32 %v2762, %v2761
    %v2764 = vmul.f32 0.5, %v2763
    %v2765 = vsub.f32 1.5, %v2764
    %v2766 = vmul.f32 %v2761, %v2765
    %vm2767 = vweird.f32 %v2749
    %vm2768 = vweird.f32 %v2761
    %vm2769 = vmor %vm2767, %vm2768
    %v2770 = vsel %vm2769, %v2761, %v2766
    %v2771 = vrsqrt.pop %v2750
    %v2772 = vmul.f32 %v2771, %v2750
    %v2773 = vmul.f32 %v2772, %v2771
    %v2774 = vmul.f32 0.5, %v2773
    %v2775 = vsub.f32 1.5, %v2774
    %v2776 = vmul.f32 %v2771, %v2775
    %vm2777 = vweird.f32 %v2750
    %vm2778 = vweird.f32 %v2771
    %vm2779 = vmor %vm2777, %vm2778
    %v2780 = vsel %vm2779, %v2771, %v2776
    %v2781 = vmul.f32 %v2745, %v2760
    %v2782 = vmul.f32 %v2746, %v2770
    %v2783 = vmul.f32 %v2747, %v2780
    %v2785 = vperm.slane %v2709, 0
    %v2787 = vmul.f32 %v2781, %v2785
    %v2788 = vmul.f32 %v2782, %v2785
    %v2789 = vmul.f32 %v2783, %v2785
    %v2791 = vperm.slane %v2711, 0
    %v2793 = vadd.f32 %v2787, %v2791
    %v2794 = vadd.f32 %v2788, %v2791
    %v2795 = vadd.f32 %v2789, %v2791
    %s2796 = scalar_lea.vmem %s11, 32
    %v2797 = vld [vmem:[%s2796] sm:$0xff]
    %v2798 = vld [vmem:[%s2796 + $0x8] sm:$0xff]
    %v2799 = vld [vmem:[%s2796 + $0x10] sm:$0xff]
    %v2800 = vld [vmem:[%s2796 + $0x18] sm:$0xff]
    %s2801 = scalar_lea.vmem %s12, 1
    %v2802 = vld [vmem:[%s2801] sm:$0x1]
    %v2804 = vperm.slane %v2802, 0
    %v2807 = vsel %vm119, %v2793, 0
    %v2810 = vsel %vm119, %v2794, 0
    %v2813 = vsel %vm119, %v2795, 0
    %2815 = vmatpush.msra.mxu0 0.0
    %2816 = vmatpush.msra.mxu0 0.0
    %2817 = vmatpush.msra.mxu0 0.0
    %2818 = vmatpush.msra.mxu0 0.0
    %2819 = vmatpush.msra.mxu0 0.0
    %2820 = vmatpush.msra.mxu0 0.0
    %2821 = vmatpush.msra.mxu0 0.0
    %2822 = vmatpush.msra.mxu0 0.0
    %2823 = vmatpush.msra.mxu0 0.0
    %2824 = vmatpush.msra.mxu0 0.0
    %2825 = vmatpush.msra.mxu0 0.0
    %2826 = vmatpush.msra.mxu0 0.0
    %2827 = vmatpush.msra.mxu0 %v2800
    %2828 = vmatpush.msra.mxu0 %v2799
    %2829 = vmatpush.msra.mxu0 %v2798
    %2830 = vmatpush.msra.mxu0 %v2797
    %2831 = vmatmul.f32.gmra.mxu0 %v2807
    %v2832 = vpop.f32.mrf.mxu0
    %v2833 = vadd.f32 %v2804, %v2832
    %2834 = vmatmul.f32.gmra.mxu0 %v2810
    %v2835 = vpop.f32.mrf.mxu0
    %v2836 = vadd.f32 %v2804, %v2835
    %2837 = vmatmul.f32.gmra.mxu0 %v2813
    %v2838 = vpop.f32.mrf.mxu0
    %v2839 = vadd.f32 %v2804, %v2838
    %2840 = vdwg.mxu0
    %v2841 = vmul.f32 %v2833, %v2833
    %v2842 = vmul.f32 %v2836, %v2836
    %v2843 = vmul.f32 %v2839, %v2839
    %v2844 = vmul.f32 %v2833, %v2841
    %v2845 = vmul.f32 %v2836, %v2842
    %v2846 = vmul.f32 %v2839, %v2843
    %v2847 = vmul.f32 %v2844, 0.044715
    %v2848 = vmul.f32 %v2845, 0.044715
    %v2849 = vmul.f32 %v2846, 0.044715
    %v2850 = vadd.f32 %v2833, %v2847
    %v2851 = vadd.f32 %v2836, %v2848
    %v2852 = vadd.f32 %v2839, %v2849
    %v2853 = vmul.f32 %v2850, 0.7978846
    %v2854 = vmul.f32 %v2851, 0.7978846
    %v2855 = vmul.f32 %v2852, 0.7978846
    %v2856 = vtanh.pop %v2853
    %v2857 = vtanh.pop %v2854
    %v2858 = vtanh.pop %v2855
    %v2859 = vadd.f32 %v2856, 1.0
    %v2860 = vadd.f32 %v2857, 1.0
    %v2861 = vadd.f32 %v2858, 1.0
    %v2862 = vmul.f32 %v2859, 0.5
    %v2863 = vmul.f32 %v2860, 0.5
    %v2864 = vmul.f32 %v2861, 0.5
    %v2865 = vmul.f32 %v2833, %v2862
    %v2866 = vmul.f32 %v2836, %v2863
    %v2867 = vmul.f32 %v2839, %v2864
    %s2868 = scalar_lea.vmem %s13, 64
    %v2869 = vld [vmem:[%s2868] sm:$0xff]
    %v2870 = vld [vmem:[%s2868 + $0x8] sm:$0xff]
    %v2871 = vld [vmem:[%s2868 + $0x10] sm:$0xff]
    %v2872 = vld [vmem:[%s2868 + $0x18] sm:$0xff]
    %v2873 = vld [vmem:[%s2868 + $0x20] sm:$0xff]
    %v2874 = vld [vmem:[%s2868 + $0x28] sm:$0xff]
    %v2875 = vld [vmem:[%s2868 + $0x30] sm:$0xff]
    %v2876 = vld [vmem:[%s2868 + $0x38] sm:$0xff]
    %s2877 = scalar_lea.vmem %s14, 1
    %v2878 = vld [vmem:[%s2877] sm:$0x1]
    %v2880 = vperm.slane %v2878, 0
    %v2883 = vsel %vm1561, %v2865, 0
    %v2886 = vsel %vm1561, %v2866, 0
    %v2889 = vsel %vm1561, %v2867, 0
    %2891 = vmatpush.msra.mxu0 0.0
    %2892 = vmatpush.msra.mxu0 0.0
    %2893 = vmatpush.msra.mxu0 0.0
    %2894 = vmatpush.msra.mxu0 0.0
    %2895 = vmatpush.msra.mxu0 0.0
    %2896 = vmatpush.msra.mxu0 0.0
    %2897 = vmatpush.msra.mxu0 0.0
    %2898 = vmatpush.msra.mxu0 0.0
    %2899 = vmatpush.msra.mxu0 %v2876
    %2900 = vmatpush.msra.mxu0 %v2875
    %2901 = vmatpush.msra.mxu0 %v2874
    %2902 = vmatpush.msra.mxu0 %v2873
    %2903 = vmatpush.msra.mxu0 %v2872
    %2904 = vmatpush.msra.mxu0 %v2871
    %2905 = vmatpush.msra.mxu0 %v2870
    %2906 = vmatpush.msra.mxu0 %v2869
    %2907 = vmatmul.f32.gmra.mxu0 %v2883
    %v2908 = vpop.f32.mrf.mxu0
    %v2909 = vadd.f32 %v2880, %v2908
    %2910 = vmatmul.f32.gmra.mxu0 %v2886
    %v2911 = vpop.f32.mrf.mxu0
    %2912 = vmatmul.f32.gmra.mxu0 %v2889
    %v2913 = vpop.f32.mrf.mxu0
    %2914 = vdwg.mxu0
    %v2915 = vadd.f32 %v2705, %v2909
    %v2916 = vld [vmem:[%s15] sm:$0x1]
    %v2917 = vld [vmem:[%s16] sm:$0x1]
    %v2918 = vsel %vm119, %v2915, 0.0
    %2919 = vadd.xlane.f32.xlu0 %v2918
    %v2920 = vpop.xlane.xlu0 %2919
    %v2921 = vmul.f32 %v2920, %v136
    %v2922 = vmul.f32 %v2915, %v2915
    %v2923 = vsel %vm119, %v2922, 0.0
    %2924 = vadd.xlane.f32.xlu0 %v2923
    %v2925 = vpop.xlane.xlu0 %2924
    %v2926 = vmul.f32 %v2925, %v136
    %v2927 = vmul.f32 %v2921, %v2921
    %v2928 = vsub.f32 %v2926, %v2927
    %v2929 = vsub.f32 %v2915, %v2921
    %v2930 = vadd.f32 %v2928, 1e-06
    %v2931 = vrsqrt.pop %v2930
    %v2932 = vmul.f32 %v2931, %v2930
    %v2933 = vmul.f32 %v2932, %v2931
    %v2934 = vmul.f32 0.5, %v2933
    %v2935 = vsub.f32 1.5, %v2934
    %v2936 = vmul.f32 %v2931, %v2935
    %vm2937 = vweird.f32 %v2930
    %vm2938 = vweird.f32 %v2931
    %vm2939 = vmor %vm2937, %vm2938
    %v2940 = vsel %vm2939, %v2931, %v2936
    %v2941 = vmul.f32 %v2929, %v2940
    %v2943 = vperm.slane %v2916, 0
    %v2945 = vmul.f32 %v2941, %v2943
    %v2947 = vperm.slane %v2917, 0
    %v2949 = vadd.f32 %v2945, %v2947
    %2950 = vst.msk [vmem:[#allocation2] sm:$0x1] %vm126, %v2949
    %s2951 = scalar_lea.vmem %s0, 24
    %v2952 = vld [vmem:[%s2951] sm:$0xff]
    %v2953 = vld [vmem:[%s2951 + $0x8] sm:$0xff]
    %v2954 = vld [vmem:[%s2951 + $0x10] sm:$0x1]
    %v2956 = vsel %vm81, %v2952, 0
    %v2959 = vsel %vm81, %v2953, 0
    %v2962 = vsel %vm81, %v2954, 0
    %2964 = vmatpush.msra.mxu0 0.0
    %2965 = vmatpush.msra.mxu0 0.0
    %2966 = vmatpush.msra.mxu0 0.0
    %2967 = vmatpush.msra.mxu0 0.0
    %2968 = vmatpush.msra.mxu0 0.0
    %2969 = vmatpush.msra.mxu0 0.0
    %2970 = vmatpush.msra.mxu0 0.0
    %2971 = vmatpush.msra.mxu0 0.0
    %2972 = vmatpush.msra.mxu0 0.0
    %2973 = vmatpush.msra.mxu0 0.0
    %2974 = vmatpush.msra.mxu0 %v74
    %2975 = vmatpush.msra.mxu0 %v73
    %2976 = vmatpush.msra.mxu0 %v72
    %2977 = vmatpush.msra.mxu0 %v71
    %2978 = vmatpush.msra.mxu0 %v70
    %2979 = vmatpush.msra.mxu0 %v69
    %2980 = vmatmul.f32.gmra.mxu0 %v2956
    %v2981 = vpop.f32.mrf.mxu0
    %v2982 = vadd.f32 %v75, %v2981
    %2983 = vmatmul.f32.gmra.mxu0 %v2959
    %v2984 = vpop.f32.mrf.mxu0
    %v2985 = vadd.f32 %v76, %v2984
    %2986 = vmatmul.f32.gmra.mxu0 %v2962
    %v2987 = vpop.f32.mrf.mxu0
    %v2988 = vadd.f32 %v77, %v2987
    %2989 = vdwg.mxu0
    %v2990 = vld [vmem:[%s3] sm:$0x1]
    %v2991 = vld [vmem:[%s4] sm:$0x1]
    %v2992 = vsel %vm119, %v2982, 0.0
    %2993 = vadd.xlane.f32.xlu0 %v2992
    %v2994 = vpop.xlane.xlu0 %2993
    %v2995 = vsel %vm119, %v2985, 0.0
    %2996 = vadd.xlane.f32.xlu0 %v2995
    %v2997 = vpop.xlane.xlu0 %2996
    %v2998 = vsel %vm126, %v2988, 0.0
    %2999 = vadd.xlane.f32.xlu0 %v2998
    %v3000 = vpop.xlane.xlu0 %2999
    %v3001 = vmul.f32 %v2994, %v136
    %v3002 = vmul.f32 %v2997, %v136
    %v3003 = vmul.f32 %v3000, %v136
    %v3004 = vmul.f32 %v2982, %v2982
    %v3005 = vmul.f32 %v2985, %v2985
    %v3006 = vmul.f32 %v2988, %v2988
    %v3007 = vsel %vm119, %v3004, 0.0
    %3008 = vadd.xlane.f32.xlu0 %v3007
    %v3009 = vpop.xlane.xlu0 %3008
    %v3010 = vsel %vm119, %v3005, 0.0
    %3011 = vadd.xlane.f32.xlu0 %v3010
    %v3012 = vpop.xlane.xlu0 %3011
    %v3013 = vsel %vm126, %v3006, 0.0
    %3014 = vadd.xlane.f32.xlu0 %v3013
    %v3015 = vpop.xlane.xlu0 %3014
    %v3016 = vmul.f32 %v3009, %v136
    %v3017 = vmul.f32 %v3012, %v136
    %v3018 = vmul.f32 %v3015, %v136
    %v3019 = vmul.f32 %v3001, %v3001
    %v3020 = vmul.f32 %v3002, %v3002
    %v3021 = vmul.f32 %v3003, %v3003
    %v3022 = vsub.f32 %v3016, %v3019
    %v3023 = vsub.f32 %v3017, %v3020
    %v3024 = vsub.f32 %v3018, %v3021
    %v3025 = vsub.f32 %v2982, %v3001
    %v3026 = vsub.f32 %v2985, %v3002
    %v3027 = vsub.f32 %v2988, %v3003
    %v3028 = vadd.f32 %v3022, 1e-06
    %v3029 = vadd.f32 %v3023, 1e-06
    %v3030 = vadd.f32 %v3024, 1e-06
    %v3031 = vrsqrt.pop %v3028
    %v3032 = vmul.f32 %v3031, %v3028
    %v3033 = vmul.f32 %v3032, %v3031
    %v3034 = vmul.f32 0.5, %v3033
    %v3035 = vsub.f32 1.5, %v3034
    %v3036 = vmul.f32 %v3031, %v3035
    %vm3037 = vweird.f32 %v3028
    %vm3038 = vweird.f32 %v3031
    %vm3039 = vmor %vm3037, %vm3038
    %v3040 = vsel %vm3039, %v3031, %v3036
    %v3041 = vrsqrt.pop %v3029
    %v3042 = vmul.f32 %v3041, %v3029
    %v3043 = vmul.f32 %v3042, %v3041
    %v3044 = vmul.f32 0.5, %v3043
    %v3045 = vsub.f32 1.5, %v3044
    %v3046 = vmul.f32 %v3041, %v3045
    %vm3047 = vweird.f32 %v3029
    %vm3048 = vweird.f32 %v3041
    %vm3049 = vmor %vm3047, %vm3048
    %v3050 = vsel %vm3049, %v3041, %v3046
    %v3051 = vrsqrt.pop %v3030
    %v3052 = vmul.f32 %v3051, %v3030
    %v3053 = vmul.f32 %v3052, %v3051
    %v3054 = vmul.f32 0.5, %v3053
    %v3055 = vsub.f32 1.5, %v3054
    %v3056 = vmul.f32 %v3051, %v3055
    %vm3057 = vweird.f32 %v3030
    %vm3058 = vweird.f32 %v3051
    %vm3059 = vmor %vm3057, %vm3058
    %v3060 = vsel %vm3059, %v3051, %v3056
    %v3061 = vmul.f32 %v3025, %v3040
    %v3062 = vmul.f32 %v3026, %v3050
    %v3063 = vmul.f32 %v3027, %v3060
    %v3065 = vperm.slane %v2990, 0
    %v3067 = vmul.f32 %v3061, %v3065
    %v3068 = vmul.f32 %v3062, %v3065
    %v3069 = vmul.f32 %v3063, %v3065
    %v3071 = vperm.slane %v2991, 0
    %v3073 = vadd.f32 %v3067, %v3071
    %v3074 = vadd.f32 %v3068, %v3071
    %v3075 = vadd.f32 %v3069, %v3071
    %v3076 = vld [vmem:[%s5] sm:$0xff]
    %v3077 = vld [vmem:[%s5 + $0x8] sm:$0xff]
    %v3078 = vld [vmem:[%s5 + $0x10] sm:$0xff]
    %v3079 = vld [vmem:[%s5 + $0x18] sm:$0xff]
    %v3080 = vld [vmem:[%s6] sm:$0x1]
    %v3082 = vperm.slane %v3080, 0
    %v3085 = vsel %vm119, %v3073, 0
    %v3088 = vsel %vm119, %v3074, 0
    %v3091 = vsel %vm119, %v3075, 0
    %3093 = vmatpush.msra.mxu0 0.0
    %3094 = vmatpush.msra.mxu0 0.0
    %3095 = vmatpush.msra.mxu0 0.0
    %3096 = vmatpush.msra.mxu0 0.0
    %3097 = vmatpush.msra.mxu0 0.0
    %3098 = vmatpush.msra.mxu0 0.0
    %3099 = vmatpush.msra.mxu0 0.0
    %3100 = vmatpush.msra.mxu0 0.0
    %3101 = vmatpush.msra.mxu0 0.0
    %3102 = vmatpush.msra.mxu0 0.0
    %3103 = vmatpush.msra.mxu0 0.0
    %3104 = vmatpush.msra.mxu0 0.0
    %3105 = vmatpush.msra.mxu0 %v3079
    %3106 = vmatpush.msra.mxu0 %v3078
    %3107 = vmatpush.msra.mxu0 %v3077
    %3108 = vmatpush.msra.mxu0 %v3076
    %3109 = vmatmul.f32.gmra.mxu0 %v3085
    %v3110 = vpop.f32.mrf.mxu0
    %v3111 = vadd.f32 %v3082, %v3110
    %3112 = vmatmul.f32.gmra.mxu0 %v3088
    %v3113 = vpop.f32.mrf.mxu0
    %v3114 = vadd.f32 %v3082, %v3113
    %3115 = vmatmul.f32.gmra.mxu0 %v3091
    %v3116 = vpop.f32.mrf.mxu0
    %v3117 = vadd.f32 %v3082, %v3116
    %3118 = vdwg.mxu0
    %v3119 = vld [vmem:[%s17] sm:$0xff]
    %v3120 = vld [vmem:[%s17 + $0x8] sm:$0xff]
    %v3121 = vld [vmem:[%s17 + $0x10] sm:$0xff]
    %v3122 = vld [vmem:[%s17 + $0x18] sm:$0xff]
    %v3123 = vld [vmem:[%s17 + $0x20] sm:$0xff]
    %v3124 = vld [vmem:[%s17 + $0x28] sm:$0xff]
    %v3125 = vld [vmem:[%s17 + $0x30] sm:$0xff]
    %v3126 = vld [vmem:[%s17 + $0x38] sm:$0xff]
    %v3127 = vld [vmem:[%s17 + $0x40] sm:$0xff]
    %v3128 = vld [vmem:[%s17 + $0x48] sm:$0xff]
    %v3129 = vld [vmem:[%s17 + $0x50] sm:$0xff]
    %v3130 = vld [vmem:[%s17 + $0x58] sm:$0xff]
    %v3132 = vsel %vm267, %v3111, 0
    %v3135 = vsel %vm267, %v3114, 0
    %v3138 = vsel %vm267, %v3117, 0
    %3140 = vmatpush.msra.mxu0 0.0
    %3141 = vmatpush.msra.mxu0 0.0
    %3142 = vmatpush.msra.mxu0 0.0
    %3143 = vmatpush.msra.mxu0 0.0
    %3144 = vmatpush.msra.mxu0 %v3130
    %3145 = vmatpush.msra.mxu0 %v3129
    %3146 = vmatpush.msra.mxu0 %v3128
    %3147 = vmatpush.msra.mxu0 %v3127
    %3148 = vmatpush.msra.mxu0 %v3126
    %3149 = vmatpush.msra.mxu0 %v3125
    %3150 = vmatpush.msra.mxu0 %v3124
    %3151 = vmatpush.msra.mxu0 %v3123
    %3152 = vmatpush.msra.mxu0 %v3122
    %3153 = vmatpush.msra.mxu0 %v3121
    %3154 = vmatpush.msra.mxu0 %v3120
    %3155 = vmatpush.msra.mxu0 %v3119
    %3156 = vmatmul.f32.gmra.mxu0 %v3132
    %v3157 = vpop.f32.mrf.mxu0
    %v3158 = vadd.f32 0.0, %v3157
    %3159 = vmatmul.f32.gmra.mxu0 %v3135
    %v3160 = vpop.f32.mrf.mxu0
    %v3161 = vadd.f32 0.0, %v3160
    %3162 = vmatmul.f32.gmra.mxu0 %v3138
    %v3163 = vpop.f32.mrf.mxu0
    %v3164 = vadd.f32 0.0, %v3163
    %3165 = vdwg.mxu0
    %v3166 = vld [vmem:[%s18] sm:$0xff]
    %v3167 = vld [vmem:[%s18 + $0x8] sm:$0xff]
    %v3168 = vld [vmem:[%s18 + $0x10] sm:$0xff]
    %v3169 = vld [vmem:[%s18 + $0x18] sm:$0xff]
    %v3170 = vld [vmem:[%s18 + $0x20] sm:$0xff]
    %v3171 = vld [vmem:[%s18 + $0x28] sm:$0xff]
    %v3172 = vld [vmem:[%s18 + $0x30] sm:$0xff]
    %v3173 = vld [vmem:[%s18 + $0x38] sm:$0xff]
    %v3174 = vld [vmem:[%s18 + $0x40] sm:$0xff]
    %v3175 = vld [vmem:[%s18 + $0x48] sm:$0xff]
    %v3176 = vld [vmem:[%s18 + $0x50] sm:$0xff]
    %v3177 = vld [vmem:[%s18 + $0x58] sm:$0xff]
    %3178 = vmatpush.msra.mxu0 0.0
    %3179 = vmatpush.msra.mxu0 0.0
    %3180 = vmatpush.msra.mxu0 0.0
    %3181 = vmatpush.msra.mxu0 0.0
    %3182 = vmatpush.msra.mxu0 %v3177
    %3183 = vmatpush.msra.mxu0 %v3176
    %3184 = vmatpush.msra.mxu0 %v3175
    %3185 = vmatpush.msra.mxu0 %v3174
    %3186 = vmatpush.msra.mxu0 %v3173
    %3187 = vmatpush.msra.mxu0 %v3172
    %3188 = vmatpush.msra.mxu0 %v3171
    %3189 = vmatpush.msra.mxu0 %v3170
    %3190 = vmatpush.msra.mxu0 %v3169
    %3191 = vmatpush.msra.mxu0 %v3168
    %3192 = vmatpush.msra.mxu0 %v3167
    %3193 = vmatpush.msra.mxu0 %v3166
    %3194 = vmatmul.f32.gmra.mxu0 %v3132
    %v3195 = vpop.f32.mrf.mxu0
    %v3196 = vadd.f32 0.0, %v3195
    %3197 = vmatmul.f32.gmra.mxu0 %v3135
    %v3198 = vpop.f32.mrf.mxu0
    %v3199 = vadd.f32 0.0, %v3198
    %3200 = vmatmul.f32.gmra.mxu0 %v3138
    %v3201 = vpop.f32.mrf.mxu0
    %v3202 = vadd.f32 0.0, %v3201
    %3203 = vdwg.mxu0
    %v3204 = vld [vmem:[%s19] sm:$0xff]
    %v3205 = vld [vmem:[%s19 + $0x8] sm:$0xff]
    %v3206 = vld [vmem:[%s19 + $0x10] sm:$0xff]
    %v3207 = vld [vmem:[%s19 + $0x18] sm:$0xff]
    %v3208 = vld [vmem:[%s19 + $0x20] sm:$0xff]
    %v3209 = vld [vmem:[%s19 + $0x28] sm:$0xff]
    %v3210 = vld [vmem:[%s19 + $0x30] sm:$0xff]
    %v3211 = vld [vmem:[%s19 + $0x38] sm:$0xff]
    %v3212 = vld [vmem:[%s19 + $0x40] sm:$0xff]
    %v3213 = vld [vmem:[%s19 + $0x48] sm:$0xff]
    %v3214 = vld [vmem:[%s19 + $0x50] sm:$0xff]
    %v3215 = vld [vmem:[%s19 + $0x58] sm:$0xff]
    %3216 = vmatpush.msra.mxu0 0.0
    %3217 = vmatpush.msra.mxu0 0.0
    %3218 = vmatpush.msra.mxu0 0.0
    %3219 = vmatpush.msra.mxu0 0.0
    %3220 = vmatpush.msra.mxu0 %v3215
    %3221 = vmatpush.msra.mxu0 %v3214
    %3222 = vmatpush.msra.mxu0 %v3213
    %3223 = vmatpush.msra.mxu0 %v3212
    %3224 = vmatpush.msra.mxu0 %v3211
    %3225 = vmatpush.msra.mxu0 %v3210
    %3226 = vmatpush.msra.mxu0 %v3209
    %3227 = vmatpush.msra.mxu0 %v3208
    %3228 = vmatpush.msra.mxu0 %v3207
    %3229 = vmatpush.msra.mxu0 %v3206
    %3230 = vmatpush.msra.mxu0 %v3205
    %3231 = vmatpush.msra.mxu0 %v3204
    %3232 = vmatmul.f32.gmra.mxu0 %v3132
    %v3233 = vpop.f32.mrf.mxu0
    %v3234 = vadd.f32 0.0, %v3233
    %3235 = vmatmul.f32.gmra.mxu0 %v3135
    %v3236 = vpop.f32.mrf.mxu0
    %v3237 = vadd.f32 0.0, %v3236
    %3238 = vmatmul.f32.gmra.mxu0 %v3138
    %v3239 = vpop.f32.mrf.mxu0
    %v3240 = vadd.f32 0.0, %v3239
    %3241 = vdwg.mxu0
    %v3243 = vsel %vm379, %v3158, 0
    %v3246 = vsel %vm379, %v3161, 0
    %v3249 = vsel %vm379, %v3164, 0
    %v3252 = vsel %vm379, %v3196, 0
    %v3255 = vsel %vm379, %v3199, 0
    %v3258 = vsel %vm379, %v3202, 0
    %3260 = vmatpush.xpose.msra.mxu0 0.0
    %3261 = vmatpush.xpose.msra.mxu0 0.0
    %3262 = vmatpush.xpose.msra.mxu0 0.0
    %3263 = vmatpush.xpose.msra.mxu0 0.0
    %3264 = vmatpush.xpose.msra.mxu0 0.0
    %3265 = vmatpush.xpose.msra.mxu0 0.0
    %3266 = vmatpush.xpose.msra.mxu0 0.0
    %3267 = vmatpush.xpose.msra.mxu0 0.0
    %3268 = vmatpush.xpose.msra.mxu0 0.0
    %3269 = vmatpush.xpose.msra.mxu0 0.0
    %3270 = vmatpush.xpose.msra.mxu0 0.0
    %3271 = vmatpush.xpose.msra.mxu0 0.0
    %3272 = vmatpush.xpose.msra.mxu0 0.0
    %3273 = vmatpush.xpose.msra.mxu0 %v3258
    %3274 = vmatpush.xpose.msra.mxu0 %v3255
    %3275 = vmatpush.xpose.msra.mxu0 %v3252
    %3276 = vmatmul.f32.gmra.mxu0 %v3243
    %v3277 = vpop.f32.mrf.mxu0
    %v3278 = vadd.f32 0.0, %v3277
    %3279 = vmatmul.f32.gmra.mxu0 %v3246
    %v3280 = vpop.f32.mrf.mxu0
    %v3281 = vadd.f32 0.0, %v3280
    %3282 = vmatmul.f32.gmra.mxu0 %v3249
    %v3283 = vpop.f32.mrf.mxu0
    %v3284 = vadd.f32 0.0, %v3283
    %3285 = vdwg.mxu0
    %v3286 = vsel %vm424, %v3278, -inf
    %3287 = vmax.xlane.f32.xlu0 %v3286
    %v3288 = vpop.xlane.xlu0 %3287
    %v3289 = vsel %vm424, %v3281, -inf
    %3290 = vmax.xlane.f32.xlu0 %v3289
    %v3291 = vpop.xlane.xlu0 %3290
    %v3292 = vsel %vm431, %v3284, -inf
    %3293 = vmax.xlane.f32.xlu0 %v3292
    %v3294 = vpop.xlane.xlu0 %3293
    %v3295 = vsub.f32 %v3278, %v3288
    %v3296 = vsub.f32 %v3281, %v3291
    %v3297 = vsub.f32 %v3284, %v3294
    %v3298 = vmul.f32 %v3295, 1.442695
    %v3299 = vpow.pop %v3298
    %v3300 = vmul.f32 %v3296, 1.442695
    %v3301 = vpow.pop %v3300
    %v3302 = vmul.f32 %v3297, 1.442695
    %v3303 = vpow.pop %v3302
    %v3304 = vsel %vm424, %v3299, 0.0
    %3305 = vadd.xlane.f32.xlu0 %v3304
    %v3306 = vpop.xlane.xlu0 %3305
    %v3307 = vsel %vm424, %v3301, 0.0
    %3308 = vadd.xlane.f32.xlu0 %v3307
    %v3309 = vpop.xlane.xlu0 %3308
    %v3310 = vsel %vm431, %v3303, 0.0
    %3311 = vadd.xlane.f32.xlu0 %v3310
    %v3312 = vpop.xlane.xlu0 %3311
    %v3313 = vrcp.pop %v3306
    %v3314 = vrcp.pop %v3309
    %v3315 = vrcp.pop %v3312
    %v3316 = vmul.f32 %v3299, %v3313
    %v3317 = vmul.f32 %v3301, %v3314
    %v3318 = vmul.f32 %v3303, %v3315
    %v3320 = vsel %vm424, %v3316, 0
    %v3323 = vsel %vm424, %v3317, 0
    %v3326 = vsel %vm424, %v3318, 0
    %v3329 = vsel %vm468, %v3240, 0
    %3331 = vmatpush.msra.mxu0 0.0
    %3332 = vmatpush.msra.mxu0 0.0
    %3333 = vmatpush.msra.mxu0 0.0
    %3334 = vmatpush.msra.mxu0 0.0
    %3335 = vmatpush.msra.mxu0 0.0
    %3336 = vmatpush.msra.mxu0 0.0
    %3337 = vmatpush.msra.mxu0 0.0
    %3338 = vmatpush.msra.mxu0 0.0
    %3339 = vmatpush.msra.mxu0 0.0
    %3340 = vmatpush.msra.mxu0 0.0
    %3341 = vmatpush.msra.mxu0 0.0
    %3342 = vmatpush.msra.mxu0 0.0
    %3343 = vmatpush.msra.mxu0 0.0
    %3344 = vmatpush.msra.mxu0 %v3329
    %3345 = vmatpush.msra.mxu0 %v3237
    %3346 = vmatpush.msra.mxu0 %v3234
    %3347 = vmatmul.f32.gmra.mxu0 %v3320
    %v3348 = vpop.f32.mrf.mxu0
    %v3349 = vadd.f32 0.0, %v3348
    %3350 = vmatmul.f32.gmra.mxu0 %v3323
    %v3351 = vpop.f32.mrf.mxu0
    %v3352 = vadd.f32 0.0, %v3351
    %3353 = vmatmul.f32.gmra.mxu0 %v3326
    %v3354 = vpop.f32.mrf.mxu0
    %v3355 = vadd.f32 0.0, %v3354
    %3356 = vdwg.mxu0
    %v3357 = vld [vmem:[%s20] sm:$0xff]
    %v3358 = vld [vmem:[%s499] sm:$0xff]
    %v3359 = vld [vmem:[%s499 + $0x8] sm:$0xff]
    %v3360 = vld [vmem:[%s499 + $0x10] sm:$0xff]
    %v3361 = vld [vmem:[%s499 + $0x18] sm:$0xff]
    %v3362 = vld [vmem:[%s499 + $0x20] sm:$0xff]
    %v3363 = vld [vmem:[%s499 + $0x28] sm:$0xff]
    %v3364 = vld [vmem:[%s499 + $0x30] sm:$0xff]
    %v3365 = vld [vmem:[%s499 + $0x38] sm:$0xff]
    %v3366 = vld [vmem:[%s499 + $0x40] sm:$0xff]
    %v3367 = vld [vmem:[%s499 + $0x48] sm:$0xff]
    %v3368 = vld [vmem:[%s499 + $0x50] sm:$0xff]
    %v3369 = vld [vmem:[%s499 + $0x58] sm:$0xff]
    %3370 = vmatpush.msra.mxu0 0.0
    %3371 = vmatpush.msra.mxu0 0.0
    %3372 = vmatpush.msra.mxu0 0.0
    %3373 = vmatpush.msra.mxu0 0.0
    %3374 = vmatpush.msra.mxu0 %v3369
    %3375 = vmatpush.msra.mxu0 %v3368
    %3376 = vmatpush.msra.mxu0 %v3367
    %3377 = vmatpush.msra.mxu0 %v3366
    %3378 = vmatpush.msra.mxu0 %v3365
    %3379 = vmatpush.msra.mxu0 %v3364
    %3380 = vmatpush.msra.mxu0 %v3363
    %3381 = vmatpush.msra.mxu0 %v3362
    %3382 = vmatpush.msra.mxu0 %v3361
    %3383 = vmatpush.msra.mxu0 %v3360
    %3384 = vmatpush.msra.mxu0 %v3359
    %3385 = vmatpush.msra.mxu0 %v3358
    %3386 = vmatmul.f32.gmra.mxu0 %v3132
    %v3387 = vpop.f32.mrf.mxu0
    %v3388 = vadd.f32 0.0, %v3387
    %3389 = vmatmul.f32.gmra.mxu0 %v3135
    %v3390 = vpop.f32.mrf.mxu0
    %v3391 = vadd.f32 0.0, %v3390
    %3392 = vmatmul.f32.gmra.mxu0 %v3138
    %v3393 = vpop.f32.mrf.mxu0
    %v3394 = vadd.f32 0.0, %v3393
    %3395 = vdwg.mxu0
    %v3396 = vld [vmem:[%s538] sm:$0xff]
    %v3397 = vld [vmem:[%s538 + $0x8] sm:$0xff]
    %v3398 = vld [vmem:[%s538 + $0x10] sm:$0xff]
    %v3399 = vld [vmem:[%s538 + $0x18] sm:$0xff]
    %v3400 = vld [vmem:[%s538 + $0x20] sm:$0xff]
    %v3401 = vld [vmem:[%s538 + $0x28] sm:$0xff]
    %v3402 = vld [vmem:[%s538 + $0x30] sm:$0xff]
    %v3403 = vld [vmem:[%s538 + $0x38] sm:$0xff]
    %v3404 = vld [vmem:[%s538 + $0x40] sm:$0xff]
    %v3405 = vld [vmem:[%s538 + $0x48] sm:$0xff]
    %v3406 = vld [vmem:[%s538 + $0x50] sm:$0xff]
    %v3407 = vld [vmem:[%s538 + $0x58] sm:$0xff]
    %3408 = vmatpush.msra.mxu0 0.0
    %3409 = vmatpush.msra.mxu0 0.0
    %3410 = vmatpush.msra.mxu0 0.0
    %3411 = vmatpush.msra.mxu0 0.0
    %3412 = vmatpush.msra.mxu0 %v3407
    %3413 = vmatpush.msra.mxu0 %v3406
    %3414 = vmatpush.msra.mxu0 %v3405
    %3415 = vmatpush.msra.mxu0 %v3404
    %3416 = vmatpush.msra.mxu0 %v3403
    %3417 = vmatpush.msra.mxu0 %v3402
    %3418 = vmatpush.msra.mxu0 %v3401
    %3419 = vmatpush.msra.mxu0 %v3400
    %3420 = vmatpush.msra.mxu0 %v3399
    %3421 = vmatpush.msra.mxu0 %v3398
    %3422 = vmatpush.msra.mxu0 %v3397
    %3423 = vmatpush.msra.mxu0 %v3396
    %3424 = vmatmul.f32.gmra.mxu0 %v3132
    %v3425 = vpop.f32.mrf.mxu0
    %v3426 = vadd.f32 0.0, %v3425
    %3427 = vmatmul.f32.gmra.mxu0 %v3135
    %v3428 = vpop.f32.mrf.mxu0
    %v3429 = vadd.f32 0.0, %v3428
    %3430 = vmatmul.f32.gmra.mxu0 %v3138
    %v3431 = vpop.f32.mrf.mxu0
    %v3432 = vadd.f32 0.0, %v3431
    %3433 = vdwg.mxu0
    %v3434 = vld [vmem:[%s577] sm:$0xff]
    %v3435 = vld [vmem:[%s577 + $0x8] sm:$0xff]
    %v3436 = vld [vmem:[%s577 + $0x10] sm:$0xff]
    %v3437 = vld [vmem:[%s577 + $0x18] sm:$0xff]
    %v3438 = vld [vmem:[%s577 + $0x20] sm:$0xff]
    %v3439 = vld [vmem:[%s577 + $0x28] sm:$0xff]
    %v3440 = vld [vmem:[%s577 + $0x30] sm:$0xff]
    %v3441 = vld [vmem:[%s577 + $0x38] sm:$0xff]
    %v3442 = vld [vmem:[%s577 + $0x40] sm:$0xff]
    %v3443 = vld [vmem:[%s577 + $0x48] sm:$0xff]
    %v3444 = vld [vmem:[%s577 + $0x50] sm:$0xff]
    %v3445 = vld [vmem:[%s577 + $0x58] sm:$0xff]
    %3446 = vmatpush.msra.mxu0 0.0
    %3447 = vmatpush.msra.mxu0 0.0
    %3448 = vmatpush.msra.mxu0 0.0
    %3449 = vmatpush.msra.mxu0 0.0
    %3450 = vmatpush.msra.mxu0 %v3445
    %3451 = vmatpush.msra.mxu0 %v3444
    %3452 = vmatpush.msra.mxu0 %v3443
    %3453 = vmatpush.msra.mxu0 %v3442
    %3454 = vmatpush.msra.mxu0 %v3441
    %3455 = vmatpush.msra.mxu0 %v3440
    %3456 = vmatpush.msra.mxu0 %v3439
    %3457 = vmatpush.msra.mxu0 %v3438
    %3458 = vmatpush.msra.mxu0 %v3437
    %3459 = vmatpush.msra.mxu0 %v3436
    %3460 = vmatpush.msra.mxu0 %v3435
    %3461 = vmatpush.msra.mxu0 %v3434
    %3462 = vmatmul.f32.gmra.mxu0 %v3132
    %v3463 = vpop.f32.mrf.mxu0
    %v3464 = vadd.f32 0.0, %v3463
    %3465 = vmatmul.f32.gmra.mxu0 %v3135
    %v3466 = vpop.f32.mrf.mxu0
    %v3467 = vadd.f32 0.0, %v3466
    %3468 = vmatmul.f32.gmra.mxu0 %v3138
    %v3469 = vpop.f32.mrf.mxu0
    %v3470 = vadd.f32 0.0, %v3469
    %3471 = vdwg.mxu0
    %v3473 = vsel %vm379, %v3388, 0
    %v3476 = vsel %vm379, %v3391, 0
    %v3479 = vsel %vm379, %v3394, 0
    %v3482 = vsel %vm379, %v3426, 0
    %v3485 = vsel %vm379, %v3429, 0
    %v3488 = vsel %vm379, %v3432, 0
    %3490 = vmatpush.xpose.msra.mxu0 0.0
    %3491 = vmatpush.xpose.msra.mxu0 0.0
    %3492 = vmatpush.xpose.msra.mxu0 0.0
    %3493 = vmatpush.xpose.msra.mxu0 0.0
    %3494 = vmatpush.xpose.msra.mxu0 0.0
    %3495 = vmatpush.xpose.msra.mxu0 0.0
    %3496 = vmatpush.xpose.msra.mxu0 0.0
    %3497 = vmatpush.xpose.msra.mxu0 0.0
    %3498 = vmatpush.xpose.msra.mxu0 0.0
    %3499 = vmatpush.xpose.msra.mxu0 0.0
    %3500 = vmatpush.xpose.msra.mxu0 0.0
    %3501 = vmatpush.xpose.msra.mxu0 0.0
    %3502 = vmatpush.xpose.msra.mxu0 0.0
    %3503 = vmatpush.xpose.msra.mxu0 %v3488
    %3504 = vmatpush.xpose.msra.mxu0 %v3485
    %3505 = vmatpush.xpose.msra.mxu0 %v3482
    %3506 = vmatmul.f32.gmra.mxu0 %v3473
    %v3507 = vpop.f32.mrf.mxu0
    %v3508 = vadd.f32 0.0, %v3507
    %3509 = vmatmul.f32.gmra.mxu0 %v3476
    %v3510 = vpop.f32.mrf.mxu0
    %v3511 = vadd.f32 0.0, %v3510
    %3512 = vmatmul.f32.gmra.mxu0 %v3479
    %v3513 = vpop.f32.mrf.mxu0
    %v3514 = vadd.f32 0.0, %v3513
    %3515 = vdwg.mxu0
    %v3516 = vsel %vm424, %v3508, -inf
    %3517 = vmax.xlane.f32.xlu0 %v3516
    %v3518 = vpop.xlane.xlu0 %3517
    %v3519 = vsel %vm424, %v3511, -inf
    %3520 = vmax.xlane.f32.xlu0 %v3519
    %v3521 = vpop.xlane.xlu0 %3520
    %v3522 = vsel %vm431, %v3514, -inf
    %3523 = vmax.xlane.f32.xlu0 %v3522
    %v3524 = vpop.xlane.xlu0 %3523
    %v3525 = vsub.f32 %v3508, %v3518
    %v3526 = vsub.f32 %v3511, %v3521
    %v3527 = vsub.f32 %v3514, %v3524
    %v3528 = vmul.f32 %v3525, 1.442695
    %v3529 = vpow.pop %v3528
    %v3530 = vmul.f32 %v3526, 1.442695
    %v3531 = vpow.pop %v3530
    %v3532 = vmul.f32 %v3527, 1.442695
    %v3533 = vpow.pop %v3532
    %v3534 = vsel %vm424, %v3529, 0.0
    %3535 = vadd.xlane.f32.xlu0 %v3534
    %v3536 = vpop.xlane.xlu0 %3535
    %v3537 = vsel %vm424, %v3531, 0.0
    %3538 = vadd.xlane.f32.xlu0 %v3537
    %v3539 = vpop.xlane.xlu0 %3538
    %v3540 = vsel %vm431, %v3533, 0.0
    %3541 = vadd.xlane.f32.xlu0 %v3540
    %v3542 = vpop.xlane.xlu0 %3541
    %v3543 = vrcp.pop %v3536
    %v3544 = vrcp.pop %v3539
    %v3545 = vrcp.pop %v3542
    %v3546 = vmul.f32 %v3529, %v3543
    %v3547 = vmul.f32 %v3531, %v3544
    %v3548 = vmul.f32 %v3533, %v3545
    %v3550 = vsel %vm424, %v3546, 0
    %v3553 = vsel %vm424, %v3547, 0
    %v3556 = vsel %vm424, %v3548, 0
    %v3559 = vsel %vm468, %v3470, 0
    %3561 = vmatpush.msra.mxu0 0.0
    %3562 = vmatpush.msra.mxu0 0.0
    %3563 = vmatpush.msra.mxu0 0.0
    %3564 = vmatpush.msra.mxu0 0.0
    %3565 = vmatpush.msra.mxu0 0.0
    %3566 = vmatpush.msra.mxu0 0.0
    %3567 = vmatpush.msra.mxu0 0.0
    %3568 = vmatpush.msra.mxu0 0.0
    %3569 = vmatpush.msra.mxu0 0.0
    %3570 = vmatpush.msra.mxu0 0.0
    %3571 = vmatpush.msra.mxu0 0.0
    %3572 = vmatpush.msra.mxu0 0.0
    %3573 = vmatpush.msra.mxu0 0.0
    %3574 = vmatpush.msra.mxu0 %v3559
    %3575 = vmatpush.msra.mxu0 %v3467
    %3576 = vmatpush.msra.mxu0 %v3464
    %3577 = vmatmul.f32.gmra.mxu0 %v3550
    %v3578 = vpop.f32.mrf.mxu0
    %v3579 = vadd.f32 0.0, %v3578
    %3580 = vmatmul.f32.gmra.mxu0 %v3553
    %v3581 = vpop.f32.mrf.mxu0
    %v3582 = vadd.f32 0.0, %v3581
    %3583 = vmatmul.f32.gmra.mxu0 %v3556
    %v3584 = vpop.f32.mrf.mxu0
    %v3585 = vadd.f32 0.0, %v3584
    %3586 = vdwg.mxu0
    %v3587 = vld [vmem:[%s731] sm:$0xff]
    %v3589 = vsel %vm379, %v3579, 0
    %v3592 = vsel %vm379, %v3582, 0
    %v3595 = vsel %vm379, %v3585, 0
    %3597 = vmatpush.msra.mxu0 0.0
    %3598 = vmatpush.msra.mxu0 0.0
    %3599 = vmatpush.msra.mxu0 0.0
    %3600 = vmatpush.msra.mxu0 0.0
    %3601 = vmatpush.msra.mxu0 0.0
    %3602 = vmatpush.msra.mxu0 0.0
    %3603 = vmatpush.msra.mxu0 0.0
    %3604 = vmatpush.msra.mxu0 0.0
    %3605 = vmatpush.msra.mxu0 0.0
    %3606 = vmatpush.msra.mxu0 0.0
    %3607 = vmatpush.msra.mxu0 0.0
    %3608 = vmatpush.msra.mxu0 0.0
    %3609 = vmatpush.msra.mxu0 0.0
    %3610 = vmatpush.msra.mxu0 0.0
    %3611 = vmatpush.msra.mxu0 0.0
    %3612 = vmatpush.msra.mxu0 %v3587
    %3613 = vmatmul.f32.gmra.mxu0 %v3589
    %v3614 = vpop.f32.mrf.mxu0
    %v3615 = vadd.f32 0.0, %v3614
    %3616 = vmatmul.f32.gmra.mxu0 %v3592
    %v3617 = vpop.f32.mrf.mxu0
    %v3618 = vadd.f32 0.0, %v3617
    %3619 = vmatmul.f32.gmra.mxu0 %v3595
    %v3620 = vpop.f32.mrf.mxu0
    %v3621 = vadd.f32 0.0, %v3620
    %3622 = vdwg.mxu0
    %v3624 = vsel %vm379, %v3349, 0
    %v3627 = vsel %vm379, %v3352, 0
    %v3630 = vsel %vm379, %v3355, 0
    %3632 = vmatpush.msra.mxu0 0.0
    %3633 = vmatpush.msra.mxu0 0.0
    %3634 = vmatpush.msra.mxu0 0.0
    %3635 = vmatpush.msra.mxu0 0.0
    %3636 = vmatpush.msra.mxu0 0.0
    %3637 = vmatpush.msra.mxu0 0.0
    %3638 = vmatpush.msra.mxu0 0.0
    %3639 = vmatpush.msra.mxu0 0.0
    %3640 = vmatpush.msra.mxu0 0.0
    %3641 = vmatpush.msra.mxu0 0.0
    %3642 = vmatpush.msra.mxu0 0.0
    %3643 = vmatpush.msra.mxu0 0.0
    %3644 = vmatpush.msra.mxu0 0.0
    %3645 = vmatpush.msra.mxu0 0.0
    %3646 = vmatpush.msra.mxu0 0.0
    %3647 = vmatpush.msra.mxu0 %v3357
    %3648 = vmatmul.f32.gmra.mxu0 %v3624
    %v3649 = vpop.f32.mrf.mxu0
    %v3650 = vadd.f32 %v3615, %v3649
    %3651 = vmatmul.f32.gmra.mxu0 %v3627
    %v3652 = vpop.f32.mrf.mxu0
    %v3653 = vadd.f32 %v3618, %v3652
    %3654 = vmatmul.f32.gmra.mxu0 %v3630
    %v3655 = vpop.f32.mrf.mxu0
    %v3656 = vadd.f32 %v3621, %v3655
    %3657 = vdwg.mxu0
    %v3658 = vld [vmem:[%s803] sm:$0xff]
    %v3659 = vld [vmem:[%s803 + $0x8] sm:$0xff]
    %v3660 = vld [vmem:[%s803 + $0x10] sm:$0xff]
    %v3661 = vld [vmem:[%s803 + $0x18] sm:$0xff]
    %v3662 = vld [vmem:[%s803 + $0x20] sm:$0xff]
    %v3663 = vld [vmem:[%s803 + $0x28] sm:$0xff]
    %v3664 = vld [vmem:[%s803 + $0x30] sm:$0xff]
    %v3665 = vld [vmem:[%s803 + $0x38] sm:$0xff]
    %v3666 = vld [vmem:[%s803 + $0x40] sm:$0xff]
    %v3667 = vld [vmem:[%s803 + $0x48] sm:$0xff]
    %v3668 = vld [vmem:[%s803 + $0x50] sm:$0xff]
    %v3669 = vld [vmem:[%s803 + $0x58] sm:$0xff]
    %3670 = vmatpush.msra.mxu0 0.0
    %3671 = vmatpush.msra.mxu0 0.0
    %3672 = vmatpush.msra.mxu0 0.0
    %3673 = vmatpush.msra.mxu0 0.0
    %3674 = vmatpush.msra.mxu0 %v3669
    %3675 = vmatpush.msra.mxu0 %v3668
    %3676 = vmatpush.msra.mxu0 %v3667
    %3677 = vmatpush.msra.mxu0 %v3666
    %3678 = vmatpush.msra.mxu0 %v3665
    %3679 = vmatpush.msra.mxu0 %v3664
    %3680 = vmatpush.msra.mxu0 %v3663
    %3681 = vmatpush.msra.mxu0 %v3662
    %3682 = vmatpush.msra.mxu0 %v3661
    %3683 = vmatpush.msra.mxu0 %v3660
    %3684 = vmatpush.msra.mxu0 %v3659
    %3685 = vmatpush.msra.mxu0 %v3658
    %3686 = vmatmul.f32.gmra.mxu0 %v3132
    %v3687 = vpop.f32.mrf.mxu0
    %v3688 = vadd.f32 0.0, %v3687
    %3689 = vmatmul.f32.gmra.mxu0 %v3135
    %v3690 = vpop.f32.mrf.mxu0
    %v3691 = vadd.f32 0.0, %v3690
    %3692 = vmatmul.f32.gmra.mxu0 %v3138
    %v3693 = vpop.f32.mrf.mxu0
    %v3694 = vadd.f32 0.0, %v3693
    %3695 = vdwg.mxu0
    %v3696 = vld [vmem:[%s842] sm:$0xff]
    %v3697 = vld [vmem:[%s842 + $0x8] sm:$0xff]
    %v3698 = vld [vmem:[%s842 + $0x10] sm:$0xff]
    %v3699 = vld [vmem:[%s842 + $0x18] sm:$0xff]
    %v3700 = vld [vmem:[%s842 + $0x20] sm:$0xff]
    %v3701 = vld [vmem:[%s842 + $0x28] sm:$0xff]
    %v3702 = vld [vmem:[%s842 + $0x30] sm:$0xff]
    %v3703 = vld [vmem:[%s842 + $0x38] sm:$0xff]
    %v3704 = vld [vmem:[%s842 + $0x40] sm:$0xff]
    %v3705 = vld [vmem:[%s842 + $0x48] sm:$0xff]
    %v3706 = vld [vmem:[%s842 + $0x50] sm:$0xff]
    %v3707 = vld [vmem:[%s842 + $0x58] sm:$0xff]
    %3708 = vmatpush.msra.mxu0 0.0
    %3709 = vmatpush.msra.mxu0 0.0
    %3710 = vmatpush.msra.mxu0 0.0
    %3711 = vmatpush.msra.mxu0 0.0
    %3712 = vmatpush.msra.mxu0 %v3707
    %3713 = vmatpush.msra.mxu0 %v3706
    %3714 = vmatpush.msra.mxu0 %v3705
    %3715 = vmatpush.msra.mxu0 %v3704
    %3716 = vmatpush.msra.mxu0 %v3703
    %3717 = vmatpush.msra.mxu0 %v3702
    %3718 = vmatpush.msra.mxu0 %v3701
    %3719 = vmatpush.msra.mxu0 %v3700
    %3720 = vmatpush.msra.mxu0 %v3699
    %3721 = vmatpush.msra.mxu0 %v3698
    %3722 = vmatpush.msra.mxu0 %v3697
    %3723 = vmatpush.msra.mxu0 %v3696
    %3724 = vmatmul.f32.gmra.mxu0 %v3132
    %v3725 = vpop.f32.mrf.mxu0
    %v3726 = vadd.f32 0.0, %v3725
    %3727 = vmatmul.f32.gmra.mxu0 %v3135
    %v3728 = vpop.f32.mrf.mxu0
    %v3729 = vadd.f32 0.0, %v3728
    %3730 = vmatmul.f32.gmra.mxu0 %v3138
    %v3731 = vpop.f32.mrf.mxu0
    %v3732 = vadd.f32 0.0, %v3731
    %3733 = vdwg.mxu0
    %v3734 = vld [vmem:[%s881] sm:$0xff]
    %v3735 = vld [vmem:[%s881 + $0x8] sm:$0xff]
    %v3736 = vld [vmem:[%s881 + $0x10] sm:$0xff]
    %v3737 = vld [vmem:[%s881 + $0x18] sm:$0xff]
    %v3738 = vld [vmem:[%s881 + $0x20] sm:$0xff]
    %v3739 = vld [vmem:[%s881 + $0x28] sm:$0xff]
    %v3740 = vld [vmem:[%s881 + $0x30] sm:$0xff]
    %v3741 = vld [vmem:[%s881 + $0x38] sm:$0xff]
    %v3742 = vld [vmem:[%s881 + $0x40] sm:$0xff]
    %v3743 = vld [vmem:[%s881 + $0x48] sm:$0xff]
    %v3744 = vld [vmem:[%s881 + $0x50] sm:$0xff]
    %v3745 = vld [vmem:[%s881 + $0x58] sm:$0xff]
    %3746 = vmatpush.msra.mxu0 0.0
    %3747 = vmatpush.msra.mxu0 0.0
    %3748 = vmatpush.msra.mxu0 0.0
    %3749 = vmatpush.msra.mxu0 0.0
    %3750 = vmatpush.msra.mxu0 %v3745
    %3751 = vmatpush.msra.mxu0 %v3744
    %3752 = vmatpush.msra.mxu0 %v3743
    %3753 = vmatpush.msra.mxu0 %v3742
    %3754 = vmatpush.msra.mxu0 %v3741
    %3755 = vmatpush.msra.mxu0 %v3740
    %3756 = vmatpush.msra.mxu0 %v3739
    %3757 = vmatpush.msra.mxu0 %v3738
    %3758 = vmatpush.msra.mxu0 %v3737
    %3759 = vmatpush.msra.mxu0 %v3736
    %3760 = vmatpush.msra.mxu0 %v3735
    %3761 = vmatpush.msra.mxu0 %v3734
    %3762 = vmatmul.f32.gmra.mxu0 %v3132
    %v3763 = vpop.f32.mrf.mxu0
    %v3764 = vadd.f32 0.0, %v3763
    %3765 = vmatmul.f32.gmra.mxu0 %v3135
    %v3766 = vpop.f32.mrf.mxu0
    %v3767 = vadd.f32 0.0, %v3766
    %3768 = vmatmul.f32.gmra.mxu0 %v3138
    %v3769 = vpop.f32.mrf.mxu0
    %v3770 = vadd.f32 0.0, %v3769
    %3771 = vdwg.mxu0
    %v3773 = vsel %vm379, %v3688, 0
    %v3776 = vsel %vm379, %v3691, 0
    %v3779 = vsel %vm379, %v3694, 0
    %v3782 = vsel %vm379, %v3726, 0
    %v3785 = vsel %vm379, %v3729, 0
    %v3788 = vsel %vm379, %v3732, 0
    %3790 = vmatpush.xpose.msra.mxu0 0.0
    %3791 = vmatpush.xpose.msra.mxu0 0.0
    %3792 = vmatpush.xpose.msra.mxu0 0.0
    %3793 = vmatpush.xpose.msra.mxu0 0.0
    %3794 = vmatpush.xpose.msra.mxu0 0.0
    %3795 = vmatpush.xpose.msra.mxu0 0.0
    %3796 = vmatpush.xpose.msra.mxu0 0.0
    %3797 = vmatpush.xpose.msra.mxu0 0.0
    %3798 = vmatpush.xpose.msra.mxu0 0.0
    %3799 = vmatpush.xpose.msra.mxu0 0.0
    %3800 = vmatpush.xpose.msra.mxu0 0.0
    %3801 = vmatpush.xpose.msra.mxu0 0.0
    %3802 = vmatpush.xpose.msra.mxu0 0.0
    %3803 = vmatpush.xpose.msra.mxu0 %v3788
    %3804 = vmatpush.xpose.msra.mxu0 %v3785
    %3805 = vmatpush.xpose.msra.mxu0 %v3782
    %3806 = vmatmul.f32.gmra.mxu0 %v3773
    %v3807 = vpop.f32.mrf.mxu0
    %v3808 = vadd.f32 0.0, %v3807
    %3809 = vmatmul.f32.gmra.mxu0 %v3776
    %v3810 = vpop.f32.mrf.mxu0
    %v3811 = vadd.f32 0.0, %v3810
    %3812 = vmatmul.f32.gmra.mxu0 %v3779
    %v3813 = vpop.f32.mrf.mxu0
    %v3814 = vadd.f32 0.0, %v3813
    %3815 = vdwg.mxu0
    %v3816 = vsel %vm424, %v3808, -inf
    %3817 = vmax.xlane.f32.xlu0 %v3816
    %v3818 = vpop.xlane.xlu0 %3817
    %v3819 = vsel %vm424, %v3811, -inf
    %3820 = vmax.xlane.f32.xlu0 %v3819
    %v3821 = vpop.xlane.xlu0 %3820
    %v3822 = vsel %vm431, %v3814, -inf
    %3823 = vmax.xlane.f32.xlu0 %v3822
    %v3824 = vpop.xlane.xlu0 %3823
    %v3825 = vsub.f32 %v3808, %v3818
    %v3826 = vsub.f32 %v3811, %v3821
    %v3827 = vsub.f32 %v3814, %v3824
    %v3828 = vmul.f32 %v3825, 1.442695
    %v3829 = vpow.pop %v3828
    %v3830 = vmul.f32 %v3826, 1.442695
    %v3831 = vpow.pop %v3830
    %v3832 = vmul.f32 %v3827, 1.442695
    %v3833 = vpow.pop %v3832
    %v3834 = vsel %vm424, %v3829, 0.0
    %3835 = vadd.xlane.f32.xlu0 %v3834
    %v3836 = vpop.xlane.xlu0 %3835
    %v3837 = vsel %vm424, %v3831, 0.0
    %3838 = vadd.xlane.f32.xlu0 %v3837
    %v3839 = vpop.xlane.xlu0 %3838
    %v3840 = vsel %vm431, %v3833, 0.0
    %3841 = vadd.xlane.f32.xlu0 %v3840
    %v3842 = vpop.xlane.xlu0 %3841
    %v3843 = vrcp.pop %v3836
    %v3844 = vrcp.pop %v3839
    %v3845 = vrcp.pop %v3842
    %v3846 = vmul.f32 %v3829, %v3843
    %v3847 = vmul.f32 %v3831, %v3844
    %v3848 = vmul.f32 %v3833, %v3845
    %v3850 = vsel %vm424, %v3846, 0
    %v3853 = vsel %vm424, %v3847, 0
    %v3856 = vsel %vm424, %v3848, 0
    %v3859 = vsel %vm468, %v3770, 0
    %3861 = vmatpush.msra.mxu0 0.0
    %3862 = vmatpush.msra.mxu0 0.0
    %3863 = vmatpush.msra.mxu0 0.0
    %3864 = vmatpush.msra.mxu0 0.0
    %3865 = vmatpush.msra.mxu0 0.0
    %3866 = vmatpush.msra.mxu0 0.0
    %3867 = vmatpush.msra.mxu0 0.0
    %3868 = vmatpush.msra.mxu0 0.0
    %3869 = vmatpush.msra.mxu0 0.0
    %3870 = vmatpush.msra.mxu0 0.0
    %3871 = vmatpush.msra.mxu0 0.0
    %3872 = vmatpush.msra.mxu0 0.0
    %3873 = vmatpush.msra.mxu0 0.0
    %3874 = vmatpush.msra.mxu0 %v3859
    %3875 = vmatpush.msra.mxu0 %v3767
    %3876 = vmatpush.msra.mxu0 %v3764
    %3877 = vmatmul.f32.gmra.mxu0 %v3850
    %v3878 = vpop.f32.mrf.mxu0
    %v3879 = vadd.f32 0.0, %v3878
    %3880 = vmatmul.f32.gmra.mxu0 %v3853
    %v3881 = vpop.f32.mrf.mxu0
    %v3882 = vadd.f32 0.0, %v3881
    %3883 = vmatmul.f32.gmra.mxu0 %v3856
    %v3884 = vpop.f32.mrf.mxu0
    %v3885 = vadd.f32 0.0, %v3884
    %3886 = vdwg.mxu0
    %v3887 = vld [vmem:[%s1035] sm:$0xff]
    %v3889 = vsel %vm379, %v3879, 0
    %v3892 = vsel %vm379, %v3882, 0
    %v3895 = vsel %vm379, %v3885, 0
    %3897 = vmatpush.msra.mxu0 0.0
    %3898 = vmatpush.msra.mxu0 0.0
    %3899 = vmatpush.msra.mxu0 0.0
    %3900 = vmatpush.msra.mxu0 0.0
    %3901 = vmatpush.msra.mxu0 0.0
    %3902 = vmatpush.msra.mxu0 0.0
    %3903 = vmatpush.msra.mxu0 0.0
    %3904 = vmatpush.msra.mxu0 0.0
    %3905 = vmatpush.msra.mxu0 0.0
    %3906 = vmatpush.msra.mxu0 0.0
    %3907 = vmatpush.msra.mxu0 0.0
    %3908 = vmatpush.msra.mxu0 0.0
    %3909 = vmatpush.msra.mxu0 0.0
    %3910 = vmatpush.msra.mxu0 0.0
    %3911 = vmatpush.msra.mxu0 0.0
    %3912 = vmatpush.msra.mxu0 %v3887
    %3913 = vmatmul.f32.gmra.mxu0 %v3889
    %v3914 = vpop.f32.mrf.mxu0
    %v3915 = vadd.f32 0.0, %v3914
    %3916 = vmatmul.f32.gmra.mxu0 %v3892
    %v3917 = vpop.f32.mrf.mxu0
    %v3918 = vadd.f32 0.0, %v3917
    %3919 = vmatmul.f32.gmra.mxu0 %v3895
    %v3920 = vpop.f32.mrf.mxu0
    %v3921 = vadd.f32 0.0, %v3920
    %3922 = vdwg.mxu0
    %v3923 = vadd.f32 %v3650, %v3915
    %v3924 = vadd.f32 %v3653, %v3918
    %v3925 = vadd.f32 %v3656, %v3921
    %v3926 = vld [vmem:[%s1075] sm:$0xff]
    %v3927 = vld [vmem:[%s1075 + $0x8] sm:$0xff]
    %v3928 = vld [vmem:[%s1075 + $0x10] sm:$0xff]
    %v3929 = vld [vmem:[%s1075 + $0x18] sm:$0xff]
    %v3930 = vld [vmem:[%s1075 + $0x20] sm:$0xff]
    %v3931 = vld [vmem:[%s1075 + $0x28] sm:$0xff]
    %v3932 = vld [vmem:[%s1075 + $0x30] sm:$0xff]
    %v3933 = vld [vmem:[%s1075 + $0x38] sm:$0xff]
    %v3934 = vld [vmem:[%s1075 + $0x40] sm:$0xff]
    %v3935 = vld [vmem:[%s1075 + $0x48] sm:$0xff]
    %v3936 = vld [vmem:[%s1075 + $0x50] sm:$0xff]
    %v3937 = vld [vmem:[%s1075 + $0x58] sm:$0xff]
    %3938 = vmatpush.msra.mxu0 0.0
    %3939 = vmatpush.msra.mxu0 0.0
    %3940 = vmatpush.msra.mxu0 0.0
    %3941 = vmatpush.msra.mxu0 0.0
    %3942 = vmatpush.msra.mxu0 %v3937
    %3943 = vmatpush.msra.mxu0 %v3936
    %3944 = vmatpush.msra.mxu0 %v3935
    %3945 = vmatpush.msra.mxu0 %v3934
    %3946 = vmatpush.msra.mxu0 %v3933
    %3947 = vmatpush.msra.mxu0 %v3932
    %3948 = vmatpush.msra.mxu0 %v3931
    %3949 = vmatpush.msra.mxu0 %v3930
    %3950 = vmatpush.msra.mxu0 %v3929
    %3951 = vmatpush.msra.mxu0 %v3928
    %3952 = vmatpush.msra.mxu0 %v3927
    %3953 = vmatpush.msra.mxu0 %v3926
    %3954 = vmatmul.f32.gmra.mxu0 %v3132
    %v3955 = vpop.f32.mrf.mxu0
    %v3956 = vadd.f32 0.0, %v3955
    %3957 = vmatmul.f32.gmra.mxu0 %v3135
    %v3958 = vpop.f32.mrf.mxu0
    %v3959 = vadd.f32 0.0, %v3958
    %3960 = vmatmul.f32.gmra.mxu0 %v3138
    %v3961 = vpop.f32.mrf.mxu0
    %v3962 = vadd.f32 0.0, %v3961
    %3963 = vdwg.mxu0
    %v3964 = vld [vmem:[%s1114] sm:$0xff]
    %v3965 = vld [vmem:[%s1114 + $0x8] sm:$0xff]
    %v3966 = vld [vmem:[%s1114 + $0x10] sm:$0xff]
    %v3967 = vld [vmem:[%s1114 + $0x18] sm:$0xff]
    %v3968 = vld [vmem:[%s1114 + $0x20] sm:$0xff]
    %v3969 = vld [vmem:[%s1114 + $0x28] sm:$0xff]
    %v3970 = vld [vmem:[%s1114 + $0x30] sm:$0xff]
    %v3971 = vld [vmem:[%s1114 + $0x38] sm:$0xff]
    %v3972 = vld [vmem:[%s1114 + $0x40] sm:$0xff]
    %v3973 = vld [vmem:[%s1114 + $0x48] sm:$0xff]
    %v3974 = vld [vmem:[%s1114 + $0x50] sm:$0xff]
    %v3975 = vld [vmem:[%s1114 + $0x58] sm:$0xff]
    %3976 = vmatpush.msra.mxu0 0.0
    %3977 = vmatpush.msra.mxu0 0.0
    %3978 = vmatpush.msra.mxu0 0.0
    %3979 = vmatpush.msra.mxu0 0.0
    %3980 = vmatpush.msra.mxu0 %v3975
    %3981 = vmatpush.msra.mxu0 %v3974
    %3982 = vmatpush.msra.mxu0 %v3973
    %3983 = vmatpush.msra.mxu0 %v3972
    %3984 = vmatpush.msra.mxu0 %v3971
    %3985 = vmatpush.msra.mxu0 %v3970
    %3986 = vmatpush.msra.mxu0 %v3969
    %3987 = vmatpush.msra.mxu0 %v3968
    %3988 = vmatpush.msra.mxu0 %v3967
    %3989 = vmatpush.msra.mxu0 %v3966
    %3990 = vmatpush.msra.mxu0 %v3965
    %3991 = vmatpush.msra.mxu0 %v3964
    %3992 = vmatmul.f32.gmra.mxu0 %v3132
    %v3993 = vpop.f32.mrf.mxu0
    %v3994 = vadd.f32 0.0, %v3993
    %3995 = vmatmul.f32.gmra.mxu0 %v3135
    %v3996 = vpop.f32.mrf.mxu0
    %v3997 = vadd.f32 0.0, %v3996
    %3998 = vmatmul.f32.gmra.mxu0 %v3138
    %v3999 = vpop.f32.mrf.mxu0
    %v4000 = vadd.f32 0.0, %v3999
    %4001 = vdwg.mxu0
    %v4002 = vld [vmem:[%s1153] sm:$0xff]
    %v4003 = vld [vmem:[%s1153 + $0x8] sm:$0xff]
    %v4004 = vld [vmem:[%s1153 + $0x10] sm:$0xff]
    %v4005 = vld [vmem:[%s1153 + $0x18] sm:$0xff]
    %v4006 = vld [vmem:[%s1153 + $0x20] sm:$0xff]
    %v4007 = vld [vmem:[%s1153 + $0x28] sm:$0xff]
    %v4008 = vld [vmem:[%s1153 + $0x30] sm:$0xff]
    %v4009 = vld [vmem:[%s1153 + $0x38] sm:$0xff]
    %v4010 = vld [vmem:[%s1153 + $0x40] sm:$0xff]
    %v4011 = vld [vmem:[%s1153 + $0x48] sm:$0xff]
    %v4012 = vld [vmem:[%s1153 + $0x50] sm:$0xff]
    %v4013 = vld [vmem:[%s1153 + $0x58] sm:$0xff]
    %4014 = vmatpush.msra.mxu0 0.0
    %4015 = vmatpush.msra.mxu0 0.0
    %4016 = vmatpush.msra.mxu0 0.0
    %4017 = vmatpush.msra.mxu0 0.0
    %4018 = vmatpush.msra.mxu0 %v4013
    %4019 = vmatpush.msra.mxu0 %v4012
    %4020 = vmatpush.msra.mxu0 %v4011
    %4021 = vmatpush.msra.mxu0 %v4010
    %4022 = vmatpush.msra.mxu0 %v4009
    %4023 = vmatpush.msra.mxu0 %v4008
    %4024 = vmatpush.msra.mxu0 %v4007
    %4025 = vmatpush.msra.mxu0 %v4006
    %4026 = vmatpush.msra.mxu0 %v4005
    %4027 = vmatpush.msra.mxu0 %v4004
    %4028 = vmatpush.msra.mxu0 %v4003
    %4029 = vmatpush.msra.mxu0 %v4002
    %4030 = vmatmul.f32.gmra.mxu0 %v3132
    %v4031 = vpop.f32.mrf.mxu0
    %v4032 = vadd.f32 0.0, %v4031
    %4033 = vmatmul.f32.gmra.mxu0 %v3135
    %v4034 = vpop.f32.mrf.mxu0
    %v4035 = vadd.f32 0.0, %v4034
    %4036 = vmatmul.f32.gmra.mxu0 %v3138
    %v4037 = vpop.f32.mrf.mxu0
    %v4038 = vadd.f32 0.0, %v4037
    %4039 = vdwg.mxu0
    %v4041 = vsel %vm379, %v3956, 0
    %v4044 = vsel %vm379, %v3959, 0
    %v4047 = vsel %vm379, %v3962, 0
    %v4050 = vsel %vm379, %v3994, 0
    %v4053 = vsel %vm379, %v3997, 0
    %v4056 = vsel %vm379, %v4000, 0
    %4058 = vmatpush.xpose.msra.mxu0 0.0
    %4059 = vmatpush.xpose.msra.mxu0 0.0
    %4060 = vmatpush.xpose.msra.mxu0 0.0
    %4061 = vmatpush.xpose.msra.mxu0 0.0
    %4062 = vmatpush.xpose.msra.mxu0 0.0
    %4063 = vmatpush.xpose.msra.mxu0 0.0
    %4064 = vmatpush.xpose.msra.mxu0 0.0
    %4065 = vmatpush.xpose.msra.mxu0 0.0
    %4066 = vmatpush.xpose.msra.mxu0 0.0
    %4067 = vmatpush.xpose.msra.mxu0 0.0
    %4068 = vmatpush.xpose.msra.mxu0 0.0
    %4069 = vmatpush.xpose.msra.mxu0 0.0
    %4070 = vmatpush.xpose.msra.mxu0 0.0
    %4071 = vmatpush.xpose.msra.mxu0 %v4056
    %4072 = vmatpush.xpose.msra.mxu0 %v4053
    %4073 = vmatpush.xpose.msra.mxu0 %v4050
    %4074 = vmatmul.f32.gmra.mxu0 %v4041
    %v4075 = vpop.f32.mrf.mxu0
    %v4076 = vadd.f32 0.0, %v4075
    %4077 = vmatmul.f32.gmra.mxu0 %v4044
    %v4078 = vpop.f32.mrf.mxu0
    %v4079 = vadd.f32 0.0, %v4078
    %4080 = vmatmul.f32.gmra.mxu0 %v4047
    %v4081 = vpop.f32.mrf.mxu0
    %v4082 = vadd.f32 0.0, %v4081
    %4083 = vdwg.mxu0
    %v4084 = vsel %vm424, %v4076, -inf
    %4085 = vmax.xlane.f32.xlu0 %v4084
    %v4086 = vpop.xlane.xlu0 %4085
    %v4087 = vsel %vm424, %v4079, -inf
    %4088 = vmax.xlane.f32.xlu0 %v4087
    %v4089 = vpop.xlane.xlu0 %4088
    %v4090 = vsel %vm431, %v4082, -inf
    %4091 = vmax.xlane.f32.xlu0 %v4090
    %v4092 = vpop.xlane.xlu0 %4091
    %v4093 = vsub.f32 %v4076, %v4086
    %v4094 = vsub.f32 %v4079, %v4089
    %v4095 = vsub.f32 %v4082, %v4092
    %v4096 = vmul.f32 %v4093, 1.442695
    %v4097 = vpow.pop %v4096
    %v4098 = vmul.f32 %v4094, 1.442695
    %v4099 = vpow.pop %v4098
    %v4100 = vmul.f32 %v4095, 1.442695
    %v4101 = vpow.pop %v4100
    %v4102 = vsel %vm424, %v4097, 0.0
    %4103 = vadd.xlane.f32.xlu0 %v4102
    %v4104 = vpop.xlane.xlu0 %4103
    %v4105 = vsel %vm424, %v4099, 0.0
    %4106 = vadd.xlane.f32.xlu0 %v4105
    %v4107 = vpop.xlane.xlu0 %4106
    %v4108 = vsel %vm431, %v4101, 0.0
    %4109 = vadd.xlane.f32.xlu0 %v4108
    %v4110 = vpop.xlane.xlu0 %4109
    %v4111 = vrcp.pop %v4104
    %v4112 = vrcp.pop %v4107
    %v4113 = vrcp.pop %v4110
    %v4114 = vmul.f32 %v4097, %v4111
    %v4115 = vmul.f32 %v4099, %v4112
    %v4116 = vmul.f32 %v4101, %v4113
    %v4118 = vsel %vm424, %v4114, 0
    %v4121 = vsel %vm424, %v4115, 0
    %v4124 = vsel %vm424, %v4116, 0
    %v4127 = vsel %vm468, %v4038, 0
    %4129 = vmatpush.msra.mxu0 0.0
    %4130 = vmatpush.msra.mxu0 0.0
    %4131 = vmatpush.msra.mxu0 0.0
    %4132 = vmatpush.msra.mxu0 0.0
    %4133 = vmatpush.msra.mxu0 0.0
    %4134 = vmatpush.msra.mxu0 0.0
    %4135 = vmatpush.msra.mxu0 0.0
    %4136 = vmatpush.msra.mxu0 0.0
    %4137 = vmatpush.msra.mxu0 0.0
    %4138 = vmatpush.msra.mxu0 0.0
    %4139 = vmatpush.msra.mxu0 0.0
    %4140 = vmatpush.msra.mxu0 0.0
    %4141 = vmatpush.msra.mxu0 0.0
    %4142 = vmatpush.msra.mxu0 %v4127
    %4143 = vmatpush.msra.mxu0 %v4035
    %4144 = vmatpush.msra.mxu0 %v4032
    %4145 = vmatmul.f32.gmra.mxu0 %v4118
    %v4146 = vpop.f32.mrf.mxu0
    %v4147 = vadd.f32 0.0, %v4146
    %4148 = vmatmul.f32.gmra.mxu0 %v4121
    %v4149 = vpop.f32.mrf.mxu0
    %v4150 = vadd.f32 0.0, %v4149
    %4151 = vmatmul.f32.gmra.mxu0 %v4124
    %v4152 = vpop.f32.mrf.mxu0
    %v4153 = vadd.f32 0.0, %v4152
    %4154 = vdwg.mxu0
    %v4155 = vld [vmem:[%s1307] sm:$0xff]
    %v4157 = vsel %vm379, %v4147, 0
    %v4160 = vsel %vm379, %v4150, 0
    %v4163 = vsel %vm379, %v4153, 0
    %4165 = vmatpush.msra.mxu0 0.0
    %4166 = vmatpush.msra.mxu0 0.0
    %4167 = vmatpush.msra.mxu0 0.0
    %4168 = vmatpush.msra.mxu0 0.0
    %4169 = vmatpush.msra.mxu0 0.0
    %4170 = vmatpush.msra.mxu0 0.0
    %4171 = vmatpush.msra.mxu0 0.0
    %4172 = vmatpush.msra.mxu0 0.0
    %4173 = vmatpush.msra.mxu0 0.0
    %4174 = vmatpush.msra.mxu0 0.0
    %4175 = vmatpush.msra.mxu0 0.0
    %4176 = vmatpush.msra.mxu0 0.0
    %4177 = vmatpush.msra.mxu0 0.0
    %4178 = vmatpush.msra.mxu0 0.0
    %4179 = vmatpush.msra.mxu0 0.0
    %4180 = vmatpush.msra.mxu0 %v4155
    %4181 = vmatmul.f32.gmra.mxu0 %v4157
    %v4182 = vpop.f32.mrf.mxu0
    %v4183 = vadd.f32 0.0, %v4182
    %4184 = vmatmul.f32.gmra.mxu0 %v4160
    %v4185 = vpop.f32.mrf.mxu0
    %v4186 = vadd.f32 0.0, %v4185
    %4187 = vmatmul.f32.gmra.mxu0 %v4163
    %v4188 = vpop.f32.mrf.mxu0
    %v4189 = vadd.f32 0.0, %v4188
    %4190 = vdwg.mxu0
    %v4191 = vadd.f32 %v3923, %v4183
    %v4192 = vadd.f32 %v3924, %v4186
    %v4193 = vadd.f32 %v3925, %v4189
    %v4194 = vld [vmem:[%s7] sm:$0xff]
    %v4195 = vld [vmem:[%s7 + $0x8] sm:$0xff]
    %v4196 = vld [vmem:[%s7 + $0x10] sm:$0xff]
    %v4197 = vld [vmem:[%s7 + $0x18] sm:$0xff]
    %v4198 = vld [vmem:[%s8] sm:$0x1]
    %v4200 = vperm.slane %v4198, 0
    %v4203 = vsel %vm119, %v4191, 0
    %v4206 = vsel %vm119, %v4192, 0
    %v4209 = vsel %vm119, %v4193, 0
    %4211 = vmatpush.msra.mxu0 0.0
    %4212 = vmatpush.msra.mxu0 0.0
    %4213 = vmatpush.msra.mxu0 0.0
    %4214 = vmatpush.msra.mxu0 0.0
    %4215 = vmatpush.msra.mxu0 0.0
    %4216 = vmatpush.msra.mxu0 0.0
    %4217 = vmatpush.msra.mxu0 0.0
    %4218 = vmatpush.msra.mxu0 0.0
    %4219 = vmatpush.msra.mxu0 0.0
    %4220 = vmatpush.msra.mxu0 0.0
    %4221 = vmatpush.msra.mxu0 0.0
    %4222 = vmatpush.msra.mxu0 0.0
    %4223 = vmatpush.msra.mxu0 %v4197
    %4224 = vmatpush.msra.mxu0 %v4196
    %4225 = vmatpush.msra.mxu0 %v4195
    %4226 = vmatpush.msra.mxu0 %v4194
    %4227 = vmatmul.f32.gmra.mxu0 %v4203
    %v4228 = vpop.f32.mrf.mxu0
    %v4229 = vadd.f32 %v4200, %v4228
    %4230 = vmatmul.f32.gmra.mxu0 %v4206
    %v4231 = vpop.f32.mrf.mxu0
    %v4232 = vadd.f32 %v4200, %v4231
    %4233 = vmatmul.f32.gmra.mxu0 %v4209
    %v4234 = vpop.f32.mrf.mxu0
    %v4235 = vadd.f32 %v4200, %v4234
    %4236 = vdwg.mxu0
    %v4237 = vadd.f32 %v2982, %v4229
    %v4238 = vadd.f32 %v2985, %v4232
    %v4239 = vadd.f32 %v2988, %v4235
    %v4240 = vld [vmem:[%s9] sm:$0x1]
    %v4241 = vld [vmem:[%s10] sm:$0x1]
    %v4242 = vsel %vm119, %v4237, 0.0
    %4243 = vadd.xlane.f32.xlu0 %v4242
    %v4244 = vpop.xlane.xlu0 %4243
    %v4245 = vsel %vm119, %v4238, 0.0
    %4246 = vadd.xlane.f32.xlu0 %v4245
    %v4247 = vpop.xlane.xlu0 %4246
    %v4248 = vsel %vm126, %v4239, 0.0
    %4249 = vadd.xlane.f32.xlu0 %v4248
    %v4250 = vpop.xlane.xlu0 %4249
    %v4251 = vmul.f32 %v4244, %v136
    %v4252 = vmul.f32 %v4247, %v136
    %v4253 = vmul.f32 %v4250, %v136
    %v4254 = vmul.f32 %v4237, %v4237
    %v4255 = vmul.f32 %v4238, %v4238
    %v4256 = vmul.f32 %v4239, %v4239
    %v4257 = vsel %vm119, %v4254, 0.0
    %4258 = vadd.xlane.f32.xlu0 %v4257
    %v4259 = vpop.xlane.xlu0 %4258
    %v4260 = vsel %vm119, %v4255, 0.0
    %4261 = vadd.xlane.f32.xlu0 %v4260
    %v4262 = vpop.xlane.xlu0 %4261
    %v4263 = vsel %vm126, %v4256, 0.0
    %4264 = vadd.xlane.f32.xlu0 %v4263
    %v4265 = vpop.xlane.xlu0 %4264
    %v4266 = vmul.f32 %v4259, %v136
    %v4267 = vmul.f32 %v4262, %v136
    %v4268 = vmul.f32 %v4265, %v136
    %v4269 = vmul.f32 %v4251, %v4251
    %v4270 = vmul.f32 %v4252, %v4252
    %v4271 = vmul.f32 %v4253, %v4253
    %v4272 = vsub.f32 %v4266, %v4269
    %v4273 = vsub.f32 %v4267, %v4270
    %v4274 = vsub.f32 %v4268, %v4271
    %v4275 = vsub.f32 %v4237, %v4251
    %v4276 = vsub.f32 %v4238, %v4252
    %v4277 = vsub.f32 %v4239, %v4253
    %v4278 = vadd.f32 %v4272, 1e-06
    %v4279 = vadd.f32 %v4273, 1e-06
    %v4280 = vadd.f32 %v4274, 1e-06
    %v4281 = vrsqrt.pop %v4278
    %v4282 = vmul.f32 %v4281, %v4278
    %v4283 = vmul.f32 %v4282, %v4281
    %v4284 = vmul.f32 0.5, %v4283
    %v4285 = vsub.f32 1.5, %v4284
    %v4286 = vmul.f32 %v4281, %v4285
    %vm4287 = vweird.f32 %v4278
    %vm4288 = vweird.f32 %v4281
    %vm4289 = vmor %vm4287, %vm4288
    %v4290 = vsel %vm4289, %v4281, %v4286
    %v4291 = vrsqrt.pop %v4279
    %v4292 = vmul.f32 %v4291, %v4279
    %v4293 = vmul.f32 %v4292, %v4291
    %v4294 = vmul.f32 0.5, %v4293
    %v4295 = vsub.f32 1.5, %v4294
    %v4296 = vmul.f32 %v4291, %v4295
    %vm4297 = vweird.f32 %v4279
    %vm4298 = vweird.f32 %v4291
    %vm4299 = vmor %vm4297, %vm4298
    %v4300 = vsel %vm4299, %v4291, %v4296
    %v4301 = vrsqrt.pop %v4280
    %v4302 = vmul.f32 %v4301, %v4280
    %v4303 = vmul.f32 %v4302, %v4301
    %v4304 = vmul.f32 0.5, %v4303
    %v4305 = vsub.f32 1.5, %v4304
    %v4306 = vmul.f32 %v4301, %v4305
    %vm4307 = vweird.f32 %v4280
    %vm4308 = vweird.f32 %v4301
    %vm4309 = vmor %vm4307, %vm4308
    %v4310 = vsel %vm4309, %v4301, %v4306
    %v4311 = vmul.f32 %v4275, %v4290
    %v4312 = vmul.f32 %v4276, %v4300
    %v4313 = vmul.f32 %v4277, %v4310
    %v4315 = vperm.slane %v4240, 0
    %v4317 = vmul.f32 %v4311, %v4315
    %v4318 = vmul.f32 %v4312, %v4315
    %v4319 = vmul.f32 %v4313, %v4315
    %v4321 = vperm.slane %v4241, 0
    %v4323 = vadd.f32 %v4317, %v4321
    %v4324 = vadd.f32 %v4318, %v4321
    %v4325 = vadd.f32 %v4319, %v4321
    %v4326 = vld [vmem:[%s11] sm:$0xff]
    %v4327 = vld [vmem:[%s11 + $0x8] sm:$0xff]
    %v4328 = vld [vmem:[%s11 + $0x10] sm:$0xff]
    %v4329 = vld [vmem:[%s11 + $0x18] sm:$0xff]
    %v4330 = vld [vmem:[%s12] sm:$0x1]
    %v4332 = vperm.slane %v4330, 0
    %v4335 = vsel %vm119, %v4323, 0
    %v4338 = vsel %vm119, %v4324, 0
    %v4341 = vsel %vm119, %v4325, 0
    %4343 = vmatpush.msra.mxu0 0.0
    %4344 = vmatpush.msra.mxu0 0.0
    %4345 = vmatpush.msra.mxu0 0.0
    %4346 = vmatpush.msra.mxu0 0.0
    %4347 = vmatpush.msra.mxu0 0.0
    %4348 = vmatpush.msra.mxu0 0.0
    %4349 = vmatpush.msra.mxu0 0.0
    %4350 = vmatpush.msra.mxu0 0.0
    %4351 = vmatpush.msra.mxu0 0.0
    %4352 = vmatpush.msra.mxu0 0.0
    %4353 = vmatpush.msra.mxu0 0.0
    %4354 = vmatpush.msra.mxu0 0.0
    %4355 = vmatpush.msra.mxu0 %v4329
    %4356 = vmatpush.msra.mxu0 %v4328
    %4357 = vmatpush.msra.mxu0 %v4327
    %4358 = vmatpush.msra.mxu0 %v4326
    %4359 = vmatmul.f32.gmra.mxu0 %v4335
    %v4360 = vpop.f32.mrf.mxu0
    %v4361 = vadd.f32 %v4332, %v4360
    %4362 = vmatmul.f32.gmra.mxu0 %v4338
    %v4363 = vpop.f32.mrf.mxu0
    %v4364 = vadd.f32 %v4332, %v4363
    %4365 = vmatmul.f32.gmra.mxu0 %v4341
    %v4366 = vpop.f32.mrf.mxu0
    %v4367 = vadd.f32 %v4332, %v4366
    %4368 = vdwg.mxu0
    %v4369 = vmul.f32 %v4361, %v4361
    %v4370 = vmul.f32 %v4364, %v4364
    %v4371 = vmul.f32 %v4367, %v4367
    %v4372 = vmul.f32 %v4361, %v4369
    %v4373 = vmul.f32 %v4364, %v4370
    %v4374 = vmul.f32 %v4367, %v4371
    %v4375 = vmul.f32 %v4372, 0.044715
    %v4376 = vmul.f32 %v4373, 0.044715
    %v4377 = vmul.f32 %v4374, 0.044715
    %v4378 = vadd.f32 %v4361, %v4375
    %v4379 = vadd.f32 %v4364, %v4376
    %v4380 = vadd.f32 %v4367, %v4377
    %v4381 = vmul.f32 %v4378, 0.7978846
    %v4382 = vmul.f32 %v4379, 0.7978846
    %v4383 = vmul.f32 %v4380, 0.7978846
    %v4384 = vtanh.pop %v4381
    %v4385 = vtanh.pop %v4382
    %v4386 = vtanh.pop %v4383
    %v4387 = vadd.f32 %v4384, 1.0
    %v4388 = vadd.f32 %v4385, 1.0
    %v4389 = vadd.f32 %v4386, 1.0
    %v4390 = vmul.f32 %v4387, 0.5
    %v4391 = vmul.f32 %v4388, 0.5
    %v4392 = vmul.f32 %v4389, 0.5
    %v4393 = vmul.f32 %v4361, %v4390
    %v4394 = vmul.f32 %v4364, %v4391
    %v4395 = vmul.f32 %v4367, %v4392
    %v4396 = vld [vmem:[%s13] sm:$0xff]
    %v4397 = vld [vmem:[%s13 + $0x8] sm:$0xff]
    %v4398 = vld [vmem:[%s13 + $0x10] sm:$0xff]
    %v4399 = vld [vmem:[%s13 + $0x18] sm:$0xff]
    %v4400 = vld [vmem:[%s13 + $0x20] sm:$0xff]
    %v4401 = vld [vmem:[%s13 + $0x28] sm:$0xff]
    %v4402 = vld [vmem:[%s13 + $0x30] sm:$0xff]
    %v4403 = vld [vmem:[%s13 + $0x38] sm:$0xff]
    %v4404 = vld [vmem:[%s14] sm:$0x1]
    %v4406 = vperm.slane %v4404, 0
    %v4409 = vsel %vm1561, %v4393, 0
    %v4412 = vsel %vm1561, %v4394, 0
    %v4415 = vsel %vm1561, %v4395, 0
    %4417 = vmatpush.msra.mxu0 0.0
    %4418 = vmatpush.msra.mxu0 0.0
    %4419 = vmatpush.msra.mxu0 0.0
    %4420 = vmatpush.msra.mxu0 0.0
    %4421 = vmatpush.msra.mxu0 0.0
    %4422 = vmatpush.msra.mxu0 0.0
    %4423 = vmatpush.msra.mxu0 0.0
    %4424 = vmatpush.msra.mxu0 0.0
    %4425 = vmatpush.msra.mxu0 %v4403
    %4426 = vmatpush.msra.mxu0 %v4402
    %4427 = vmatpush.msra.mxu0 %v4401
    %4428 = vmatpush.msra.mxu0 %v4400
    %4429 = vmatpush.msra.mxu0 %v4399
    %4430 = vmatpush.msra.mxu0 %v4398
    %4431 = vmatpush.msra.mxu0 %v4397
    %4432 = vmatpush.msra.mxu0 %v4396
    %4433 = vmatmul.f32.gmra.mxu0 %v4409
    %v4434 = vpop.f32.mrf.mxu0
    %v4435 = vadd.f32 %v4406, %v4434
    %4436 = vmatmul.f32.gmra.mxu0 %v4412
    %v4437 = vpop.f32.mrf.mxu0
    %v4438 = vadd.f32 %v4406, %v4437
    %4439 = vmatmul.f32.gmra.mxu0 %v4415
    %v4440 = vpop.f32.mrf.mxu0
    %v4441 = vadd.f32 %v4406, %v4440
    %4442 = vdwg.mxu0
    %v4443 = vadd.f32 %v4237, %v4435
    %v4444 = vadd.f32 %v4238, %v4438
    %v4445 = vadd.f32 %v4239, %v4441
    %v4446 = vld [vmem:[%s1600] sm:$0x1]
    %v4447 = vld [vmem:[%s1602] sm:$0x1]
    %v4448 = vsel %vm119, %v4443, 0.0
    %4449 = vadd.xlane.f32.xlu0 %v4448
    %v4450 = vpop.xlane.xlu0 %4449
    %v4451 = vsel %vm119, %v4444, 0.0
    %4452 = vadd.xlane.f32.xlu0 %v4451
    %v4453 = vpop.xlane.xlu0 %4452
    %v4454 = vsel %vm126, %v4445, 0.0
    %4455 = vadd.xlane.f32.xlu0 %v4454
    %v4456 = vpop.xlane.xlu0 %4455
    %v4457 = vmul.f32 %v4450, %v136
    %v4458 = vmul.f32 %v4453, %v136
    %v4459 = vmul.f32 %v4456, %v136
    %v4460 = vmul.f32 %v4443, %v4443
    %v4461 = vmul.f32 %v4444, %v4444
    %v4462 = vmul.f32 %v4445, %v4445
    %v4463 = vsel %vm119, %v4460, 0.0
    %4464 = vadd.xlane.f32.xlu0 %v4463
    %v4465 = vpop.xlane.xlu0 %4464
    %v4466 = vsel %vm119, %v4461, 0.0
    %4467 = vadd.xlane.f32.xlu0 %v4466
    %v4468 = vpop.xlane.xlu0 %4467
    %v4469 = vsel %vm126, %v4462, 0.0
    %4470 = vadd.xlane.f32.xlu0 %v4469
    %v4471 = vpop.xlane.xlu0 %4470
    %v4472 = vmul.f32 %v4465, %v136
    %v4473 = vmul.f32 %v4468, %v136
    %v4474 = vmul.f32 %v4471, %v136
    %v4475 = vmul.f32 %v4457, %v4457
    %v4476 = vmul.f32 %v4458, %v4458
    %v4477 = vmul.f32 %v4459, %v4459
    %v4478 = vsub.f32 %v4472, %v4475
    %v4479 = vsub.f32 %v4473, %v4476
    %v4480 = vsub.f32 %v4474, %v4477
    %v4481 = vsub.f32 %v4443, %v4457
    %v4482 = vsub.f32 %v4444, %v4458
    %v4483 = vsub.f32 %v4445, %v4459
    %v4484 = vadd.f32 %v4478, 1e-06
    %v4485 = vadd.f32 %v4479, 1e-06
    %v4486 = vadd.f32 %v4480, 1e-06
    %v4487 = vrsqrt.pop %v4484
    %v4488 = vmul.f32 %v4487, %v4484
    %v4489 = vmul.f32 %v4488, %v4487
    %v4490 = vmul.f32 0.5, %v4489
    %v4491 = vsub.f32 1.5, %v4490
    %v4492 = vmul.f32 %v4487, %v4491
    %vm4493 = vweird.f32 %v4484
    %vm4494 = vweird.f32 %v4487
    %vm4495 = vmor %vm4493, %vm4494
    %v4496 = vsel %vm4495, %v4487, %v4492
    %v4497 = vrsqrt.pop %v4485
    %v4498 = vmul.f32 %v4497, %v4485
    %v4499 = vmul.f32 %v4498, %v4497
    %v4500 = vmul.f32 0.5, %v4499
    %v4501 = vsub.f32 1.5, %v4500
    %v4502 = vmul.f32 %v4497, %v4501
    %vm4503 = vweird.f32 %v4485
    %vm4504 = vweird.f32 %v4497
    %vm4505 = vmor %vm4503, %vm4504
    %v4506 = vsel %vm4505, %v4497, %v4502
    %v4507 = vrsqrt.pop %v4486
    %v4508 = vmul.f32 %v4507, %v4486
    %v4509 = vmul.f32 %v4508, %v4507
    %v4510 = vmul.f32 0.5, %v4509
    %v4511 = vsub.f32 1.5, %v4510
    %v4512 = vmul.f32 %v4507, %v4511
    %vm4513 = vweird.f32 %v4486
    %vm4514 = vweird.f32 %v4507
    %vm4515 = vmor %vm4513, %vm4514
    %v4516 = vsel %vm4515, %v4507, %v4512
    %v4517 = vmul.f32 %v4481, %v4496
    %v4518 = vmul.f32 %v4482, %v4506
    %v4519 = vmul.f32 %v4483, %v4516
    %v4521 = vperm.slane %v4446, 0
    %v4523 = vmul.f32 %v4517, %v4521
    %v4524 = vmul.f32 %v4518, %v4521
    %v4525 = vmul.f32 %v4519, %v4521
    %v4527 = vperm.slane %v4447, 0
    %v4529 = vadd.f32 %v4523, %v4527
    %v4530 = vadd.f32 %v4524, %v4527
    %v4531 = vadd.f32 %v4525, %v4527
    %v4532 = vld [vmem:[%s1688] sm:$0xff]
    %v4533 = vld [vmem:[%s1688 + $0x8] sm:$0xff]
    %v4534 = vld [vmem:[%s1688 + $0x10] sm:$0xff]
    %v4535 = vld [vmem:[%s1688 + $0x18] sm:$0xff]
    %v4536 = vld [vmem:[%s1693] sm:$0x1]
    %v4538 = vperm.slane %v4536, 0
    %v4541 = vsel %vm119, %v4529, 0
    %v4544 = vsel %vm119, %v4530, 0
    %v4547 = vsel %vm119, %v4531, 0
    %4549 = vmatpush.msra.mxu0 0.0
    %4550 = vmatpush.msra.mxu0 0.0
    %4551 = vmatpush.msra.mxu0 0.0
    %4552 = vmatpush.msra.mxu0 0.0
    %4553 = vmatpush.msra.mxu0 0.0
    %4554 = vmatpush.msra.mxu0 0.0
    %4555 = vmatpush.msra.mxu0 0.0
    %4556 = vmatpush.msra.mxu0 0.0
    %4557 = vmatpush.msra.mxu0 0.0
    %4558 = vmatpush.msra.mxu0 0.0
    %4559 = vmatpush.msra.mxu0 0.0
    %4560 = vmatpush.msra.mxu0 0.0
    %4561 = vmatpush.msra.mxu0 %v4535
    %4562 = vmatpush.msra.mxu0 %v4534
    %4563 = vmatpush.msra.mxu0 %v4533
    %4564 = vmatpush.msra.mxu0 %v4532
    %4565 = vmatmul.f32.gmra.mxu0 %v4541
    %v4566 = vpop.f32.mrf.mxu0
    %v4567 = vadd.f32 %v4538, %v4566
    %4568 = vmatmul.f32.gmra.mxu0 %v4544
    %v4569 = vpop.f32.mrf.mxu0
    %v4570 = vadd.f32 %v4538, %v4569
    %4571 = vmatmul.f32.gmra.mxu0 %v4547
    %v4572 = vpop.f32.mrf.mxu0
    %v4573 = vadd.f32 %v4538, %v4572
    %4574 = vdwg.mxu0
    %v4576 = vsel %vm267, %v4567, 0
    %v4579 = vsel %vm267, %v4570, 0
    %v4582 = vsel %vm267, %v4573, 0
    %4584 = vmatpush.msra.mxu0 0.0
    %4585 = vmatpush.msra.mxu0 0.0
    %4586 = vmatpush.msra.mxu0 0.0
    %4587 = vmatpush.msra.mxu0 0.0
    %4588 = vmatpush.msra.mxu0 %v3130
    %4589 = vmatpush.msra.mxu0 %v3129
    %4590 = vmatpush.msra.mxu0 %v3128
    %4591 = vmatpush.msra.mxu0 %v3127
    %4592 = vmatpush.msra.mxu0 %v3126
    %4593 = vmatpush.msra.mxu0 %v3125
    %4594 = vmatpush.msra.mxu0 %v3124
    %4595 = vmatpush.msra.mxu0 %v3123
    %4596 = vmatpush.msra.mxu0 %v3122
    %4597 = vmatpush.msra.mxu0 %v3121
    %4598 = vmatpush.msra.mxu0 %v3120
    %4599 = vmatpush.msra.mxu0 %v3119
    %4600 = vmatmul.f32.gmra.mxu0 %v4576
    %v4601 = vpop.f32.mrf.mxu0
    %v4602 = vadd.f32 0.0, %v4601
    %4603 = vmatmul.f32.gmra.mxu0 %v4579
    %v4604 = vpop.f32.mrf.mxu0
    %v4605 = vadd.f32 0.0, %v4604
    %4606 = vmatmul.f32.gmra.mxu0 %v4582
    %v4607 = vpop.f32.mrf.mxu0
    %v4608 = vadd.f32 0.0, %v4607
    %4609 = vdwg.mxu0
    %4610 = vmatpush.msra.mxu0 0.0
    %4611 = vmatpush.msra.mxu0 0.0
    %4612 = vmatpush.msra.mxu0 0.0
    %4613 = vmatpush.msra.mxu0 0.0
    %4614 = vmatpush.msra.mxu0 %v3177
    %4615 = vmatpush.msra.mxu0 %v3176
    %4616 = vmatpush.msra.mxu0 %v3175
    %4617 = vmatpush.msra.mxu0 %v3174
    %4618 = vmatpush.msra.mxu0 %v3173
    %4619 = vmatpush.msra.mxu0 %v3172
    %4620 = vmatpush.msra.mxu0 %v3171
    %4621 = vmatpush.msra.mxu0 %v3170
    %4622 = vmatpush.msra.mxu0 %v3169
    %4623 = vmatpush.msra.mxu0 %v3168
    %4624 = vmatpush.msra.mxu0 %v3167
    %4625 = vmatpush.msra.mxu0 %v3166
    %4626 = vmatmul.f32.gmra.mxu0 %v4576
    %v4627 = vpop.f32.mrf.mxu0
    %v4628 = vadd.f32 0.0, %v4627
    %4629 = vmatmul.f32.gmra.mxu0 %v4579
    %v4630 = vpop.f32.mrf.mxu0
    %v4631 = vadd.f32 0.0, %v4630
    %4632 = vmatmul.f32.gmra.mxu0 %v4582
    %v4633 = vpop.f32.mrf.mxu0
    %v4634 = vadd.f32 0.0, %v4633
    %4635 = vdwg.mxu0
    %4636 = vmatpush.msra.mxu0 0.0
    %4637 = vmatpush.msra.mxu0 0.0
    %4638 = vmatpush.msra.mxu0 0.0
    %4639 = vmatpush.msra.mxu0 0.0
    %4640 = vmatpush.msra.mxu0 %v3215
    %4641 = vmatpush.msra.mxu0 %v3214
    %4642 = vmatpush.msra.mxu0 %v3213
    %4643 = vmatpush.msra.mxu0 %v3212
    %4644 = vmatpush.msra.mxu0 %v3211
    %4645 = vmatpush.msra.mxu0 %v3210
    %4646 = vmatpush.msra.mxu0 %v3209
    %4647 = vmatpush.msra.mxu0 %v3208
    %4648 = vmatpush.msra.mxu0 %v3207
    %4649 = vmatpush.msra.mxu0 %v3206
    %4650 = vmatpush.msra.mxu0 %v3205
    %4651 = vmatpush.msra.mxu0 %v3204
    %4652 = vmatmul.f32.gmra.mxu0 %v4576
    %v4653 = vpop.f32.mrf.mxu0
    %v4654 = vadd.f32 0.0, %v4653
    %4655 = vmatmul.f32.gmra.mxu0 %v4579
    %v4656 = vpop.f32.mrf.mxu0
    %v4657 = vadd.f32 0.0, %v4656
    %4658 = vmatmul.f32.gmra.mxu0 %v4582
    %v4659 = vpop.f32.mrf.mxu0
    %v4660 = vadd.f32 0.0, %v4659
    %4661 = vdwg.mxu0
    %v4663 = vsel %vm379, %v4602, 0
    %v4666 = vsel %vm379, %v4605, 0
    %v4669 = vsel %vm379, %v4608, 0
    %v4672 = vsel %vm379, %v4628, 0
    %v4675 = vsel %vm379, %v4631, 0
    %v4678 = vsel %vm379, %v4634, 0
    %4680 = vmatpush.xpose.msra.mxu0 0.0
    %4681 = vmatpush.xpose.msra.mxu0 0.0
    %4682 = vmatpush.xpose.msra.mxu0 0.0
    %4683 = vmatpush.xpose.msra.mxu0 0.0
    %4684 = vmatpush.xpose.msra.mxu0 0.0
    %4685 = vmatpush.xpose.msra.mxu0 0.0
    %4686 = vmatpush.xpose.msra.mxu0 0.0
    %4687 = vmatpush.xpose.msra.mxu0 0.0
    %4688 = vmatpush.xpose.msra.mxu0 0.0
    %4689 = vmatpush.xpose.msra.mxu0 0.0
    %4690 = vmatpush.xpose.msra.mxu0 0.0
    %4691 = vmatpush.xpose.msra.mxu0 0.0
    %4692 = vmatpush.xpose.msra.mxu0 0.0
    %4693 = vmatpush.xpose.msra.mxu0 %v4678
    %4694 = vmatpush.xpose.msra.mxu0 %v4675
    %4695 = vmatpush.xpose.msra.mxu0 %v4672
    %4696 = vmatmul.f32.gmra.mxu0 %v4663
    %v4697 = vpop.f32.mrf.mxu0
    %v4698 = vadd.f32 0.0, %v4697
    %4699 = vmatmul.f32.gmra.mxu0 %v4666
    %v4700 = vpop.f32.mrf.mxu0
    %v4701 = vadd.f32 0.0, %v4700
    %4702 = vmatmul.f32.gmra.mxu0 %v4669
    %v4703 = vpop.f32.mrf.mxu0
    %v4704 = vadd.f32 0.0, %v4703
    %4705 = vdwg.mxu0
    %v4706 = vsel %vm424, %v4698, -inf
    %4707 = vmax.xlane.f32.xlu0 %v4706
    %v4708 = vpop.xlane.xlu0 %4707
    %v4709 = vsel %vm424, %v4701, -inf
    %4710 = vmax.xlane.f32.xlu0 %v4709
    %v4711 = vpop.xlane.xlu0 %4710
    %v4712 = vsel %vm431, %v4704, -inf
    %4713 = vmax.xlane.f32.xlu0 %v4712
    %v4714 = vpop.xlane.xlu0 %4713
    %v4715 = vsub.f32 %v4698, %v4708
    %v4716 = vsub.f32 %v4701, %v4711
    %v4717 = vsub.f32 %v4704, %v4714
    %v4718 = vmul.f32 %v4715, 1.442695
    %v4719 = vpow.pop %v4718
    %v4720 = vmul.f32 %v4716, 1.442695
    %v4721 = vpow.pop %v4720
    %v4722 = vmul.f32 %v4717, 1.442695
    %v4723 = vpow.pop %v4722
    %v4724 = vsel %vm424, %v4719, 0.0
    %4725 = vadd.xlane.f32.xlu0 %v4724
    %v4726 = vpop.xlane.xlu0 %4725
    %v4727 = vsel %vm424, %v4721, 0.0
    %4728 = vadd.xlane.f32.xlu0 %v4727
    %v4729 = vpop.xlane.xlu0 %4728
    %v4730 = vsel %vm431, %v4723, 0.0
    %4731 = vadd.xlane.f32.xlu0 %v4730
    %v4732 = vpop.xlane.xlu0 %4731
    %v4733 = vrcp.pop %v4726
    %v4734 = vrcp.pop %v4729
    %v4735 = vrcp.pop %v4732
    %v4736 = vmul.f32 %v4719, %v4733
    %v4737 = vmul.f32 %v4721, %v4734
    %v4738 = vmul.f32 %v4723, %v4735
    %v4740 = vsel %vm424, %v4736, 0
    %v4743 = vsel %vm424, %v4737, 0
    %v4746 = vsel %vm424, %v4738, 0
    %v4749 = vsel %vm468, %v4660, 0
    %4751 = vmatpush.msra.mxu0 0.0
    %4752 = vmatpush.msra.mxu0 0.0
    %4753 = vmatpush.msra.mxu0 0.0
    %4754 = vmatpush.msra.mxu0 0.0
    %4755 = vmatpush.msra.mxu0 0.0
    %4756 = vmatpush.msra.mxu0 0.0
    %4757 = vmatpush.msra.mxu0 0.0
    %4758 = vmatpush.msra.mxu0 0.0
    %4759 = vmatpush.msra.mxu0 0.0
    %4760 = vmatpush.msra.mxu0 0.0
    %4761 = vmatpush.msra.mxu0 0.0
    %4762 = vmatpush.msra.mxu0 0.0
    %4763 = vmatpush.msra.mxu0 0.0
    %4764 = vmatpush.msra.mxu0 %v4749
    %4765 = vmatpush.msra.mxu0 %v4657
    %4766 = vmatpush.msra.mxu0 %v4654
    %4767 = vmatmul.f32.gmra.mxu0 %v4740
    %v4768 = vpop.f32.mrf.mxu0
    %v4769 = vadd.f32 0.0, %v4768
    %4770 = vmatmul.f32.gmra.mxu0 %v4743
    %v4771 = vpop.f32.mrf.mxu0
    %v4772 = vadd.f32 0.0, %v4771
    %4773 = vmatmul.f32.gmra.mxu0 %v4746
    %v4774 = vpop.f32.mrf.mxu0
    %v4775 = vadd.f32 0.0, %v4774
    %4776 = vdwg.mxu0
    %4777 = vmatpush.msra.mxu0 0.0
    %4778 = vmatpush.msra.mxu0 0.0
    %4779 = vmatpush.msra.mxu0 0.0
    %4780 = vmatpush.msra.mxu0 0.0
    %4781 = vmatpush.msra.mxu0 %v3369
    %4782 = vmatpush.msra.mxu0 %v3368
    %4783 = vmatpush.msra.mxu0 %v3367
    %4784 = vmatpush.msra.mxu0 %v3366
    %4785 = vmatpush.msra.mxu0 %v3365
    %4786 = vmatpush.msra.mxu0 %v3364
    %4787 = vmatpush.msra.mxu0 %v3363
    %4788 = vmatpush.msra.mxu0 %v3362
    %4789 = vmatpush.msra.mxu0 %v3361
    %4790 = vmatpush.msra.mxu0 %v3360
    %4791 = vmatpush.msra.mxu0 %v3359
    %4792 = vmatpush.msra.mxu0 %v3358
    %4793 = vmatmul.f32.gmra.mxu0 %v4576
    %v4794 = vpop.f32.mrf.mxu0
    %v4795 = vadd.f32 0.0, %v4794
    %4796 = vmatmul.f32.gmra.mxu0 %v4579
    %v4797 = vpop.f32.mrf.mxu0
    %v4798 = vadd.f32 0.0, %v4797
    %4799 = vmatmul.f32.gmra.mxu0 %v4582
    %v4800 = vpop.f32.mrf.mxu0
    %v4801 = vadd.f32 0.0, %v4800
    %4802 = vdwg.mxu0
    %4803 = vmatpush.msra.mxu0 0.0
    %4804 = vmatpush.msra.mxu0 0.0
    %4805 = vmatpush.msra.mxu0 0.0
    %4806 = vmatpush.msra.mxu0 0.0
    %4807 = vmatpush.msra.mxu0 %v3407
    %4808 = vmatpush.msra.mxu0 %v3406
    %4809 = vmatpush.msra.mxu0 %v3405
    %4810 = vmatpush.msra.mxu0 %v3404
    %4811 = vmatpush.msra.mxu0 %v3403
    %4812 = vmatpush.msra.mxu0 %v3402
    %4813 = vmatpush.msra.mxu0 %v3401
    %4814 = vmatpush.msra.mxu0 %v3400
    %4815 = vmatpush.msra.mxu0 %v3399
    %4816 = vmatpush.msra.mxu0 %v3398
    %4817 = vmatpush.msra.mxu0 %v3397
    %4818 = vmatpush.msra.mxu0 %v3396
    %4819 = vmatmul.f32.gmra.mxu0 %v4576
    %v4820 = vpop.f32.mrf.mxu0
    %v4821 = vadd.f32 0.0, %v4820
    %4822 = vmatmul.f32.gmra.mxu0 %v4579
    %v4823 = vpop.f32.mrf.mxu0
    %v4824 = vadd.f32 0.0, %v4823
    %4825 = vmatmul.f32.gmra.mxu0 %v4582
    %v4826 = vpop.f32.mrf.mxu0
    %v4827 = vadd.f32 0.0, %v4826
    %4828 = vdwg.mxu0
    %4829 = vmatpush.msra.mxu0 0.0
    %4830 = vmatpush.msra.mxu0 0.0
    %4831 = vmatpush.msra.mxu0 0.0
    %4832 = vmatpush.msra.mxu0 0.0
    %4833 = vmatpush.msra.mxu0 %v3445
    %4834 = vmatpush.msra.mxu0 %v3444
    %4835 = vmatpush.msra.mxu0 %v3443
    %4836 = vmatpush.msra.mxu0 %v3442
    %4837 = vmatpush.msra.mxu0 %v3441
    %4838 = vmatpush.msra.mxu0 %v3440
    %4839 = vmatpush.msra.mxu0 %v3439
    %4840 = vmatpush.msra.mxu0 %v3438
    %4841 = vmatpush.msra.mxu0 %v3437
    %4842 = vmatpush.msra.mxu0 %v3436
    %4843 = vmatpush.msra.mxu0 %v3435
    %4844 = vmatpush.msra.mxu0 %v3434
    %4845 = vmatmul.f32.gmra.mxu0 %v4576
    %v4846 = vpop.f32.mrf.mxu0
    %v4847 = vadd.f32 0.0, %v4846
    %4848 = vmatmul.f32.gmra.mxu0 %v4579
    %v4849 = vpop.f32.mrf.mxu0
    %v4850 = vadd.f32 0.0, %v4849
    %4851 = vmatmul.f32.gmra.mxu0 %v4582
    %v4852 = vpop.f32.mrf.mxu0
    %v4853 = vadd.f32 0.0, %v4852
    %4854 = vdwg.mxu0
    %v4856 = vsel %vm379, %v4795, 0
    %v4859 = vsel %vm379, %v4798, 0
    %v4862 = vsel %vm379, %v4801, 0
    %v4865 = vsel %vm379, %v4821, 0
    %v4868 = vsel %vm379, %v4824, 0
    %v4871 = vsel %vm379, %v4827, 0
    %4873 = vmatpush.xpose.msra.mxu0 0.0
    %4874 = vmatpush.xpose.msra.mxu0 0.0
    %4875 = vmatpush.xpose.msra.mxu0 0.0
    %4876 = vmatpush.xpose.msra.mxu0 0.0
    %4877 = vmatpush.xpose.msra.mxu0 0.0
    %4878 = vmatpush.xpose.msra.mxu0 0.0
    %4879 = vmatpush.xpose.msra.mxu0 0.0
    %4880 = vmatpush.xpose.msra.mxu0 0.0
    %4881 = vmatpush.xpose.msra.mxu0 0.0
    %4882 = vmatpush.xpose.msra.mxu0 0.0
    %4883 = vmatpush.xpose.msra.mxu0 0.0
    %4884 = vmatpush.xpose.msra.mxu0 0.0
    %4885 = vmatpush.xpose.msra.mxu0 0.0
    %4886 = vmatpush.xpose.msra.mxu0 %v4871
    %4887 = vmatpush.xpose.msra.mxu0 %v4868
    %4888 = vmatpush.xpose.msra.mxu0 %v4865
    %4889 = vmatmul.f32.gmra.mxu0 %v4856
    %v4890 = vpop.f32.mrf.mxu0
    %v4891 = vadd.f32 0.0, %v4890
    %4892 = vmatmul.f32.gmra.mxu0 %v4859
    %v4893 = vpop.f32.mrf.mxu0
    %v4894 = vadd.f32 0.0, %v4893
    %4895 = vmatmul.f32.gmra.mxu0 %v4862
    %v4896 = vpop.f32.mrf.mxu0
    %v4897 = vadd.f32 0.0, %v4896
    %4898 = vdwg.mxu0
    %v4899 = vsel %vm424, %v4891, -inf
    %4900 = vmax.xlane.f32.xlu0 %v4899
    %v4901 = vpop.xlane.xlu0 %4900
    %v4902 = vsel %vm424, %v4894, -inf
    %4903 = vmax.xlane.f32.xlu0 %v4902
    %v4904 = vpop.xlane.xlu0 %4903
    %v4905 = vsel %vm431, %v4897, -inf
    %4906 = vmax.xlane.f32.xlu0 %v4905
    %v4907 = vpop.xlane.xlu0 %4906
    %v4908 = vsub.f32 %v4891, %v4901
    %v4909 = vsub.f32 %v4894, %v4904
    %v4910 = vsub.f32 %v4897, %v4907
    %v4911 = vmul.f32 %v4908, 1.442695
    %v4912 = vpow.pop %v4911
    %v4913 = vmul.f32 %v4909, 1.442695
    %v4914 = vpow.pop %v4913
    %v4915 = vmul.f32 %v4910, 1.442695
    %v4916 = vpow.pop %v4915
    %v4917 = vsel %vm424, %v4912, 0.0
    %4918 = vadd.xlane.f32.xlu0 %v4917
    %v4919 = vpop.xlane.xlu0 %4918
    %v4920 = vsel %vm424, %v4914, 0.0
    %4921 = vadd.xlane.f32.xlu0 %v4920
    %v4922 = vpop.xlane.xlu0 %4921
    %v4923 = vsel %vm431, %v4916, 0.0
    %4924 = vadd.xlane.f32.xlu0 %v4923
    %v4925 = vpop.xlane.xlu0 %4924
    %v4926 = vrcp.pop %v4919
    %v4927 = vrcp.pop %v4922
    %v4928 = vrcp.pop %v4925
    %v4929 = vmul.f32 %v4912, %v4926
    %v4930 = vmul.f32 %v4914, %v4927
    %v4931 = vmul.f32 %v4916, %v4928
    %v4933 = vsel %vm424, %v4929, 0
    %v4936 = vsel %vm424, %v4930, 0
    %v4939 = vsel %vm424, %v4931, 0
    %v4942 = vsel %vm468, %v4853, 0
    %4944 = vmatpush.msra.mxu0 0.0
    %4945 = vmatpush.msra.mxu0 0.0
    %4946 = vmatpush.msra.mxu0 0.0
    %4947 = vmatpush.msra.mxu0 0.0
    %4948 = vmatpush.msra.mxu0 0.0
    %4949 = vmatpush.msra.mxu0 0.0
    %4950 = vmatpush.msra.mxu0 0.0
    %4951 = vmatpush.msra.mxu0 0.0
    %4952 = vmatpush.msra.mxu0 0.0
    %4953 = vmatpush.msra.mxu0 0.0
    %4954 = vmatpush.msra.mxu0 0.0
    %4955 = vmatpush.msra.mxu0 0.0
    %4956 = vmatpush.msra.mxu0 0.0
    %4957 = vmatpush.msra.mxu0 %v4942
    %4958 = vmatpush.msra.mxu0 %v4850
    %4959 = vmatpush.msra.mxu0 %v4847
    %4960 = vmatmul.f32.gmra.mxu0 %v4933
    %v4961 = vpop.f32.mrf.mxu0
    %v4962 = vadd.f32 0.0, %v4961
    %4963 = vmatmul.f32.gmra.mxu0 %v4936
    %v4964 = vpop.f32.mrf.mxu0
    %v4965 = vadd.f32 0.0, %v4964
    %4966 = vmatmul.f32.gmra.mxu0 %v4939
    %v4967 = vpop.f32.mrf.mxu0
    %v4968 = vadd.f32 0.0, %v4967
    %4969 = vdwg.mxu0
    %v4971 = vsel %vm379, %v4962, 0
    %v4974 = vsel %vm379, %v4965, 0
    %v4977 = vsel %vm379, %v4968, 0
    %4979 = vmatpush.msra.mxu0 0.0
    %4980 = vmatpush.msra.mxu0 0.0
    %4981 = vmatpush.msra.mxu0 0.0
    %4982 = vmatpush.msra.mxu0 0.0
    %4983 = vmatpush.msra.mxu0 0.0
    %4984 = vmatpush.msra.mxu0 0.0
    %4985 = vmatpush.msra.mxu0 0.0
    %4986 = vmatpush.msra.mxu0 0.0
    %4987 = vmatpush.msra.mxu0 0.0
    %4988 = vmatpush.msra.mxu0 0.0
    %4989 = vmatpush.msra.mxu0 0.0
    %4990 = vmatpush.msra.mxu0 0.0
    %4991 = vmatpush.msra.mxu0 0.0
    %4992 = vmatpush.msra.mxu0 0.0
    %4993 = vmatpush.msra.mxu0 0.0
    %4994 = vmatpush.msra.mxu0 %v3587
    %4995 = vmatmul.f32.gmra.mxu0 %v4971
    %v4996 = vpop.f32.mrf.mxu0
    %v4997 = vadd.f32 0.0, %v4996
    %4998 = vmatmul.f32.gmra.mxu0 %v4974
    %v4999 = vpop.f32.mrf.mxu0
    %v5000 = vadd.f32 0.0, %v4999
    %5001 = vmatmul.f32.gmra.mxu0 %v4977
    %v5002 = vpop.f32.mrf.mxu0
    %v5003 = vadd.f32 0.0, %v5002
    %5004 = vdwg.mxu0
    %v5006 = vsel %vm379, %v4769, 0
    %v5009 = vsel %vm379, %v4772, 0
    %v5012 = vsel %vm379, %v4775, 0
    %5014 = vmatpush.msra.mxu0 0.0
    %5015 = vmatpush.msra.mxu0 0.0
    %5016 = vmatpush.msra.mxu0 0.0
    %5017 = vmatpush.msra.mxu0 0.0
    %5018 = vmatpush.msra.mxu0 0.0
    %5019 = vmatpush.msra.mxu0 0.0
    %5020 = vmatpush.msra.mxu0 0.0
    %5021 = vmatpush.msra.mxu0 0.0
    %5022 = vmatpush.msra.mxu0 0.0
    %5023 = vmatpush.msra.mxu0 0.0
    %5024 = vmatpush.msra.mxu0 0.0
    %5025 = vmatpush.msra.mxu0 0.0
    %5026 = vmatpush.msra.mxu0 0.0
    %5027 = vmatpush.msra.mxu0 0.0
    %5028 = vmatpush.msra.mxu0 0.0
    %5029 = vmatpush.msra.mxu0 %v3357
    %5030 = vmatmul.f32.gmra.mxu0 %v5006
    %v5031 = vpop.f32.mrf.mxu0
    %v5032 = vadd.f32 %v4997, %v5031
    %5033 = vmatmul.f32.gmra.mxu0 %v5009
    %v5034 = vpop.f32.mrf.mxu0
    %v5035 = vadd.f32 %v5000, %v5034
    %5036 = vmatmul.f32.gmra.mxu0 %v5012
    %v5037 = vpop.f32.mrf.mxu0
    %v5038 = vadd.f32 %v5003, %v5037
    %5039 = vdwg.mxu0
    %5040 = vmatpush.msra.mxu0 0.0
    %5041 = vmatpush.msra.mxu0 0.0
    %5042 = vmatpush.msra.mxu0 0.0
    %5043 = vmatpush.msra.mxu0 0.0
    %5044 = vmatpush.msra.mxu0 %v3669
    %5045 = vmatpush.msra.mxu0 %v3668
    %5046 = vmatpush.msra.mxu0 %v3667
    %5047 = vmatpush.msra.mxu0 %v3666
    %5048 = vmatpush.msra.mxu0 %v3665
    %5049 = vmatpush.msra.mxu0 %v3664
    %5050 = vmatpush.msra.mxu0 %v3663
    %5051 = vmatpush.msra.mxu0 %v3662
    %5052 = vmatpush.msra.mxu0 %v3661
    %5053 = vmatpush.msra.mxu0 %v3660
    %5054 = vmatpush.msra.mxu0 %v3659
    %5055 = vmatpush.msra.mxu0 %v3658
    %5056 = vmatmul.f32.gmra.mxu0 %v4576
    %v5057 = vpop.f32.mrf.mxu0
    %v5058 = vadd.f32 0.0, %v5057
    %5059 = vmatmul.f32.gmra.mxu0 %v4579
    %v5060 = vpop.f32.mrf.mxu0
    %v5061 = vadd.f32 0.0, %v5060
    %5062 = vmatmul.f32.gmra.mxu0 %v4582
    %v5063 = vpop.f32.mrf.mxu0
    %v5064 = vadd.f32 0.0, %v5063
    %5065 = vdwg.mxu0
    %5066 = vmatpush.msra.mxu0 0.0
    %5067 = vmatpush.msra.mxu0 0.0
    %5068 = vmatpush.msra.mxu0 0.0
    %5069 = vmatpush.msra.mxu0 0.0
    %5070 = vmatpush.msra.mxu0 %v3707
    %5071 = vmatpush.msra.mxu0 %v3706
    %5072 = vmatpush.msra.mxu0 %v3705
    %5073 = vmatpush.msra.mxu0 %v3704
    %5074 = vmatpush.msra.mxu0 %v3703
    %5075 = vmatpush.msra.mxu0 %v3702
    %5076 = vmatpush.msra.mxu0 %v3701
    %5077 = vmatpush.msra.mxu0 %v3700
    %5078 = vmatpush.msra.mxu0 %v3699
    %5079 = vmatpush.msra.mxu0 %v3698
    %5080 = vmatpush.msra.mxu0 %v3697
    %5081 = vmatpush.msra.mxu0 %v3696
    %5082 = vmatmul.f32.gmra.mxu0 %v4576
    %v5083 = vpop.f32.mrf.mxu0
    %v5084 = vadd.f32 0.0, %v5083
    %5085 = vmatmul.f32.gmra.mxu0 %v4579
    %v5086 = vpop.f32.mrf.mxu0
    %v5087 = vadd.f32 0.0, %v5086
    %5088 = vmatmul.f32.gmra.mxu0 %v4582
    %v5089 = vpop.f32.mrf.mxu0
    %v5090 = vadd.f32 0.0, %v5089
    %5091 = vdwg.mxu0
    %5092 = vmatpush.msra.mxu0 0.0
    %5093 = vmatpush.msra.mxu0 0.0
    %5094 = vmatpush.msra.mxu0 0.0
    %5095 = vmatpush.msra.mxu0 0.0
    %5096 = vmatpush.msra.mxu0 %v3745
    %5097 = vmatpush.msra.mxu0 %v3744
    %5098 = vmatpush.msra.mxu0 %v3743
    %5099 = vmatpush.msra.mxu0 %v3742
    %5100 = vmatpush.msra.mxu0 %v3741
    %5101 = vmatpush.msra.mxu0 %v3740
    %5102 = vmatpush.msra.mxu0 %v3739
    %5103 = vmatpush.msra.mxu0 %v3738
    %5104 = vmatpush.msra.mxu0 %v3737
    %5105 = vmatpush.msra.mxu0 %v3736
    %5106 = vmatpush.msra.mxu0 %v3735
    %5107 = vmatpush.msra.mxu0 %v3734
    %5108 = vmatmul.f32.gmra.mxu0 %v4576
    %v5109 = vpop.f32.mrf.mxu0
    %v5110 = vadd.f32 0.0, %v5109
    %5111 = vmatmul.f32.gmra.mxu0 %v4579
    %v5112 = vpop.f32.mrf.mxu0
    %v5113 = vadd.f32 0.0, %v5112
    %5114 = vmatmul.f32.gmra.mxu0 %v4582
    %v5115 = vpop.f32.mrf.mxu0
    %v5116 = vadd.f32 0.0, %v5115
    %5117 = vdwg.mxu0
    %v5119 = vsel %vm379, %v5058, 0
    %v5122 = vsel %vm379, %v5061, 0
    %v5125 = vsel %vm379, %v5064, 0
    %v5128 = vsel %vm379, %v5084, 0
    %v5131 = vsel %vm379, %v5087, 0
    %v5134 = vsel %vm379, %v5090, 0
    %5136 = vmatpush.xpose.msra.mxu0 0.0
    %5137 = vmatpush.xpose.msra.mxu0 0.0
    %5138 = vmatpush.xpose.msra.mxu0 0.0
    %5139 = vmatpush.xpose.msra.mxu0 0.0
    %5140 = vmatpush.xpose.msra.mxu0 0.0
    %5141 = vmatpush.xpose.msra.mxu0 0.0
    %5142 = vmatpush.xpose.msra.mxu0 0.0
    %5143 = vmatpush.xpose.msra.mxu0 0.0
    %5144 = vmatpush.xpose.msra.mxu0 0.0
    %5145 = vmatpush.xpose.msra.mxu0 0.0
    %5146 = vmatpush.xpose.msra.mxu0 0.0
    %5147 = vmatpush.xpose.msra.mxu0 0.0
    %5148 = vmatpush.xpose.msra.mxu0 0.0
    %5149 = vmatpush.xpose.msra.mxu0 %v5134
    %5150 = vmatpush.xpose.msra.mxu0 %v5131
    %5151 = vmatpush.xpose.msra.mxu0 %v5128
    %5152 = vmatmul.f32.gmra.mxu0 %v5119
    %v5153 = vpop.f32.mrf.mxu0
    %v5154 = vadd.f32 0.0, %v5153
    %5155 = vmatmul.f32.gmra.mxu0 %v5122
    %v5156 = vpop.f32.mrf.mxu0
    %v5157 = vadd.f32 0.0, %v5156
    %5158 = vmatmul.f32.gmra.mxu0 %v5125
    %v5159 = vpop.f32.mrf.mxu0
    %v5160 = vadd.f32 0.0, %v5159
    %5161 = vdwg.mxu0
    %v5162 = vsel %vm424, %v5154, -inf
    %5163 = vmax.xlane.f32.xlu0 %v5162
    %v5164 = vpop.xlane.xlu0 %5163
    %v5165 = vsel %vm424, %v5157, -inf
    %5166 = vmax.xlane.f32.xlu0 %v5165
    %v5167 = vpop.xlane.xlu0 %5166
    %v5168 = vsel %vm431, %v5160, -inf
    %5169 = vmax.xlane.f32.xlu0 %v5168
    %v5170 = vpop.xlane.xlu0 %5169
    %v5171 = vsub.f32 %v5154, %v5164
    %v5172 = vsub.f32 %v5157, %v5167
    %v5173 = vsub.f32 %v5160, %v5170
    %v5174 = vmul.f32 %v5171, 1.442695
    %v5175 = vpow.pop %v5174
    %v5176 = vmul.f32 %v5172, 1.442695
    %v5177 = vpow.pop %v5176
    %v5178 = vmul.f32 %v5173, 1.442695
    %v5179 = vpow.pop %v5178
    %v5180 = vsel %vm424, %v5175, 0.0
    %5181 = vadd.xlane.f32.xlu0 %v5180
    %v5182 = vpop.xlane.xlu0 %5181
    %v5183 = vsel %vm424, %v5177, 0.0
    %5184 = vadd.xlane.f32.xlu0 %v5183
    %v5185 = vpop.xlane.xlu0 %5184
    %v5186 = vsel %vm431, %v5179, 0.0
    %5187 = vadd.xlane.f32.xlu0 %v5186
    %v5188 = vpop.xlane.xlu0 %5187
    %v5189 = vrcp.pop %v5182
    %v5190 = vrcp.pop %v5185
    %v5191 = vrcp.pop %v5188
    %v5192 = vmul.f32 %v5175, %v5189
    %v5193 = vmul.f32 %v5177, %v5190
    %v5194 = vmul.f32 %v5179, %v5191
    %v5196 = vsel %vm424, %v5192, 0
    %v5199 = vsel %vm424, %v5193, 0
    %v5202 = vsel %vm424, %v5194, 0
    %v5205 = vsel %vm468, %v5116, 0
    %5207 = vmatpush.msra.mxu0 0.0
    %5208 = vmatpush.msra.mxu0 0.0
    %5209 = vmatpush.msra.mxu0 0.0
    %5210 = vmatpush.msra.mxu0 0.0
    %5211 = vmatpush.msra.mxu0 0.0
    %5212 = vmatpush.msra.mxu0 0.0
    %5213 = vmatpush.msra.mxu0 0.0
    %5214 = vmatpush.msra.mxu0 0.0
    %5215 = vmatpush.msra.mxu0 0.0
    %5216 = vmatpush.msra.mxu0 0.0
    %5217 = vmatpush.msra.mxu0 0.0
    %5218 = vmatpush.msra.mxu0 0.0
    %5219 = vmatpush.msra.mxu0 0.0
    %5220 = vmatpush.msra.mxu0 %v5205
    %5221 = vmatpush.msra.mxu0 %v5113
    %5222 = vmatpush.msra.mxu0 %v5110
    %5223 = vmatmul.f32.gmra.mxu0 %v5196
    %v5224 = vpop.f32.mrf.mxu0
    %v5225 = vadd.f32 0.0, %v5224
    %5226 = vmatmul.f32.gmra.mxu0 %v5199
    %v5227 = vpop.f32.mrf.mxu0
    %v5228 = vadd.f32 0.0, %v5227
    %5229 = vmatmul.f32.gmra.mxu0 %v5202
    %v5230 = vpop.f32.mrf.mxu0
    %v5231 = vadd.f32 0.0, %v5230
    %5232 = vdwg.mxu0
    %v5234 = vsel %vm379, %v5225, 0
    %v5237 = vsel %vm379, %v5228, 0
    %v5240 = vsel %vm379, %v5231, 0
    %5242 = vmatpush.msra.mxu0 0.0
    %5243 = vmatpush.msra.mxu0 0.0
    %5244 = vmatpush.msra.mxu0 0.0
    %5245 = vmatpush.msra.mxu0 0.0
    %5246 = vmatpush.msra.mxu0 0.0
    %5247 = vmatpush.msra.mxu0 0.0
    %5248 = vmatpush.msra.mxu0 0.0
    %5249 = vmatpush.msra.mxu0 0.0
    %5250 = vmatpush.msra.mxu0 0.0
    %5251 = vmatpush.msra.mxu0 0.0
    %5252 = vmatpush.msra.mxu0 0.0
    %5253 = vmatpush.msra.mxu0 0.0
    %5254 = vmatpush.msra.mxu0 0.0
    %5255 = vmatpush.msra.mxu0 0.0
    %5256 = vmatpush.msra.mxu0 0.0
    %5257 = vmatpush.msra.mxu0 %v3887
    %5258 = vmatmul.f32.gmra.mxu0 %v5234
    %v5259 = vpop.f32.mrf.mxu0
    %v5260 = vadd.f32 0.0, %v5259
    %5261 = vmatmul.f32.gmra.mxu0 %v5237
    %v5262 = vpop.f32.mrf.mxu0
    %v5263 = vadd.f32 0.0, %v5262
    %5264 = vmatmul.f32.gmra.mxu0 %v5240
    %v5265 = vpop.f32.mrf.mxu0
    %v5266 = vadd.f32 0.0, %v5265
    %5267 = vdwg.mxu0
    %v5268 = vadd.f32 %v5032, %v5260
    %v5269 = vadd.f32 %v5035, %v5263
    %v5270 = vadd.f32 %v5038, %v5266
    %5271 = vmatpush.msra.mxu0 0.0
    %5272 = vmatpush.msra.mxu0 0.0
    %5273 = vmatpush.msra.mxu0 0.0
    %5274 = vmatpush.msra.mxu0 0.0
    %5275 = vmatpush.msra.mxu0 %v3937
    %5276 = vmatpush.msra.mxu0 %v3936
    %5277 = vmatpush.msra.mxu0 %v3935
    %5278 = vmatpush.msra.mxu0 %v3934
    %5279 = vmatpush.msra.mxu0 %v3933
    %5280 = vmatpush.msra.mxu0 %v3932
    %5281 = vmatpush.msra.mxu0 %v3931
    %5282 = vmatpush.msra.mxu0 %v3930
    %5283 = vmatpush.msra.mxu0 %v3929
    %5284 = vmatpush.msra.mxu0 %v3928
    %5285 = vmatpush.msra.mxu0 %v3927
    %5286 = vmatpush.msra.mxu0 %v3926
    %5287 = vmatmul.f32.gmra.mxu0 %v4576
    %v5288 = vpop.f32.mrf.mxu0
    %v5289 = vadd.f32 0.0, %v5288
    %5290 = vmatmul.f32.gmra.mxu0 %v4579
    %v5291 = vpop.f32.mrf.mxu0
    %v5292 = vadd.f32 0.0, %v5291
    %5293 = vmatmul.f32.gmra.mxu0 %v4582
    %v5294 = vpop.f32.mrf.mxu0
    %v5295 = vadd.f32 0.0, %v5294
    %5296 = vdwg.mxu0
    %5297 = vmatpush.msra.mxu0 0.0
    %5298 = vmatpush.msra.mxu0 0.0
    %5299 = vmatpush.msra.mxu0 0.0
    %5300 = vmatpush.msra.mxu0 0.0
    %5301 = vmatpush.msra.mxu0 %v3975
    %5302 = vmatpush.msra.mxu0 %v3974
    %5303 = vmatpush.msra.mxu0 %v3973
    %5304 = vmatpush.msra.mxu0 %v3972
    %5305 = vmatpush.msra.mxu0 %v3971
    %5306 = vmatpush.msra.mxu0 %v3970
    %5307 = vmatpush.msra.mxu0 %v3969
    %5308 = vmatpush.msra.mxu0 %v3968
    %5309 = vmatpush.msra.mxu0 %v3967
    %5310 = vmatpush.msra.mxu0 %v3966
    %5311 = vmatpush.msra.mxu0 %v3965
    %5312 = vmatpush.msra.mxu0 %v3964
    %5313 = vmatmul.f32.gmra.mxu0 %v4576
    %v5314 = vpop.f32.mrf.mxu0
    %v5315 = vadd.f32 0.0, %v5314
    %5316 = vmatmul.f32.gmra.mxu0 %v4579
    %v5317 = vpop.f32.mrf.mxu0
    %v5318 = vadd.f32 0.0, %v5317
    %5319 = vmatmul.f32.gmra.mxu0 %v4582
    %v5320 = vpop.f32.mrf.mxu0
    %v5321 = vadd.f32 0.0, %v5320
    %5322 = vdwg.mxu0
    %5323 = vmatpush.msra.mxu0 0.0
    %5324 = vmatpush.msra.mxu0 0.0
    %5325 = vmatpush.msra.mxu0 0.0
    %5326 = vmatpush.msra.mxu0 0.0
    %5327 = vmatpush.msra.mxu0 %v4013
    %5328 = vmatpush.msra.mxu0 %v4012
    %5329 = vmatpush.msra.mxu0 %v4011
    %5330 = vmatpush.msra.mxu0 %v4010
    %5331 = vmatpush.msra.mxu0 %v4009
    %5332 = vmatpush.msra.mxu0 %v4008
    %5333 = vmatpush.msra.mxu0 %v4007
    %5334 = vmatpush.msra.mxu0 %v4006
    %5335 = vmatpush.msra.mxu0 %v4005
    %5336 = vmatpush.msra.mxu0 %v4004
    %5337 = vmatpush.msra.mxu0 %v4003
    %5338 = vmatpush.msra.mxu0 %v4002
    %5339 = vmatmul.f32.gmra.mxu0 %v4576
    %v5340 = vpop.f32.mrf.mxu0
    %v5341 = vadd.f32 0.0, %v5340
    %5342 = vmatmul.f32.gmra.mxu0 %v4579
    %v5343 = vpop.f32.mrf.mxu0
    %v5344 = vadd.f32 0.0, %v5343
    %5345 = vmatmul.f32.gmra.mxu0 %v4582
    %v5346 = vpop.f32.mrf.mxu0
    %v5347 = vadd.f32 0.0, %v5346
    %5348 = vdwg.mxu0
    %v5350 = vsel %vm379, %v5289, 0
    %v5353 = vsel %vm379, %v5292, 0
    %v5356 = vsel %vm379, %v5295, 0
    %v5359 = vsel %vm379, %v5315, 0
    %v5362 = vsel %vm379, %v5318, 0
    %v5365 = vsel %vm379, %v5321, 0
    %5367 = vmatpush.xpose.msra.mxu0 0.0
    %5368 = vmatpush.xpose.msra.mxu0 0.0
    %5369 = vmatpush.xpose.msra.mxu0 0.0
    %5370 = vmatpush.xpose.msra.mxu0 0.0
    %5371 = vmatpush.xpose.msra.mxu0 0.0
    %5372 = vmatpush.xpose.msra.mxu0 0.0
    %5373 = vmatpush.xpose.msra.mxu0 0.0
    %5374 = vmatpush.xpose.msra.mxu0 0.0
    %5375 = vmatpush.xpose.msra.mxu0 0.0
    %5376 = vmatpush.xpose.msra.mxu0 0.0
    %5377 = vmatpush.xpose.msra.mxu0 0.0
    %5378 = vmatpush.xpose.msra.mxu0 0.0
    %5379 = vmatpush.xpose.msra.mxu0 0.0
    %5380 = vmatpush.xpose.msra.mxu0 %v5365
    %5381 = vmatpush.xpose.msra.mxu0 %v5362
    %5382 = vmatpush.xpose.msra.mxu0 %v5359
    %5383 = vmatmul.f32.gmra.mxu0 %v5350
    %v5384 = vpop.f32.mrf.mxu0
    %v5385 = vadd.f32 0.0, %v5384
    %5386 = vmatmul.f32.gmra.mxu0 %v5353
    %v5387 = vpop.f32.mrf.mxu0
    %v5388 = vadd.f32 0.0, %v5387
    %5389 = vmatmul.f32.gmra.mxu0 %v5356
    %v5390 = vpop.f32.mrf.mxu0
    %v5391 = vadd.f32 0.0, %v5390
    %5392 = vdwg.mxu0
    %v5393 = vsel %vm424, %v5385, -inf
    %5394 = vmax.xlane.f32.xlu0 %v5393
    %v5395 = vpop.xlane.xlu0 %5394
    %v5396 = vsel %vm424, %v5388, -inf
    %5397 = vmax.xlane.f32.xlu0 %v5396
    %v5398 = vpop.xlane.xlu0 %5397
    %v5399 = vsel %vm431, %v5391, -inf
    %5400 = vmax.xlane.f32.xlu0 %v5399
    %v5401 = vpop.xlane.xlu0 %5400
    %v5402 = vsub.f32 %v5385, %v5395
    %v5403 = vsub.f32 %v5388, %v5398
    %v5404 = vsub.f32 %v5391, %v5401
    %v5405 = vmul.f32 %v5402, 1.442695
    %v5406 = vpow.pop %v5405
    %v5407 = vmul.f32 %v5403, 1.442695
    %v5408 = vpow.pop %v5407
    %v5409 = vmul.f32 %v5404, 1.442695
    %v5410 = vpow.pop %v5409
    %v5411 = vsel %vm424, %v5406, 0.0
    %5412 = vadd.xlane.f32.xlu0 %v5411
    %v5413 = vpop.xlane.xlu0 %5412
    %v5414 = vsel %vm424, %v5408, 0.0
    %5415 = vadd.xlane.f32.xlu0 %v5414
    %v5416 = vpop.xlane.xlu0 %5415
    %v5417 = vsel %vm431, %v5410, 0.0
    %5418 = vadd.xlane.f32.xlu0 %v5417
    %v5419 = vpop.xlane.xlu0 %5418
    %v5420 = vrcp.pop %v5413
    %v5421 = vrcp.pop %v5416
    %v5422 = vrcp.pop %v5419
    %v5423 = vmul.f32 %v5406, %v5420
    %v5424 = vmul.f32 %v5408, %v5421
    %v5425 = vmul.f32 %v5410, %v5422
    %v5427 = vsel %vm424, %v5423, 0
    %v5430 = vsel %vm424, %v5424, 0
    %v5433 = vsel %vm424, %v5425, 0
    %v5436 = vsel %vm468, %v5347, 0
    %5438 = vmatpush.msra.mxu0 0.0
    %5439 = vmatpush.msra.mxu0 0.0
    %5440 = vmatpush.msra.mxu0 0.0
    %5441 = vmatpush.msra.mxu0 0.0
    %5442 = vmatpush.msra.mxu0 0.0
    %5443 = vmatpush.msra.mxu0 0.0
    %5444 = vmatpush.msra.mxu0 0.0
    %5445 = vmatpush.msra.mxu0 0.0
    %5446 = vmatpush.msra.mxu0 0.0
    %5447 = vmatpush.msra.mxu0 0.0
    %5448 = vmatpush.msra.mxu0 0.0
    %5449 = vmatpush.msra.mxu0 0.0
    %5450 = vmatpush.msra.mxu0 0.0
    %5451 = vmatpush.msra.mxu0 %v5436
    %5452 = vmatpush.msra.mxu0 %v5344
    %5453 = vmatpush.msra.mxu0 %v5341
    %5454 = vmatmul.f32.gmra.mxu0 %v5427
    %v5455 = vpop.f32.mrf.mxu0
    %v5456 = vadd.f32 0.0, %v5455
    %5457 = vmatmul.f32.gmra.mxu0 %v5430
    %v5458 = vpop.f32.mrf.mxu0
    %v5459 = vadd.f32 0.0, %v5458
    %5460 = vmatmul.f32.gmra.mxu0 %v5433
    %v5461 = vpop.f32.mrf.mxu0
    %v5462 = vadd.f32 0.0, %v5461
    %5463 = vdwg.mxu0
    %v5465 = vsel %vm379, %v5456, 0
    %v5468 = vsel %vm379, %v5459, 0
    %v5471 = vsel %vm379, %v5462, 0
    %5473 = vmatpush.msra.mxu0 0.0
    %5474 = vmatpush.msra.mxu0 0.0
    %5475 = vmatpush.msra.mxu0 0.0
    %5476 = vmatpush.msra.mxu0 0.0
    %5477 = vmatpush.msra.mxu0 0.0
    %5478 = vmatpush.msra.mxu0 0.0
    %5479 = vmatpush.msra.mxu0 0.0
    %5480 = vmatpush.msra.mxu0 0.0
    %5481 = vmatpush.msra.mxu0 0.0
    %5482 = vmatpush.msra.mxu0 0.0
    %5483 = vmatpush.msra.mxu0 0.0
    %5484 = vmatpush.msra.mxu0 0.0
    %5485 = vmatpush.msra.mxu0 0.0
    %5486 = vmatpush.msra.mxu0 0.0
    %5487 = vmatpush.msra.mxu0 0.0
    %5488 = vmatpush.msra.mxu0 %v4155
    %5489 = vmatmul.f32.gmra.mxu0 %v5465
    %v5490 = vpop.f32.mrf.mxu0
    %v5491 = vadd.f32 0.0, %v5490
    %5492 = vmatmul.f32.gmra.mxu0 %v5468
    %v5493 = vpop.f32.mrf.mxu0
    %v5494 = vadd.f32 0.0, %v5493
    %5495 = vmatmul.f32.gmra.mxu0 %v5471
    %v5496 = vpop.f32.mrf.mxu0
    %v5497 = vadd.f32 0.0, %v5496
    %5498 = vdwg.mxu0
    %v5499 = vadd.f32 %v5268, %v5491
    %v5500 = vadd.f32 %v5269, %v5494
    %v5501 = vadd.f32 %v5270, %v5497
    %v5502 = vld [vmem:[%s2660] sm:$0xff]
    %v5503 = vld [vmem:[%s2660 + $0x8] sm:$0xff]
    %v5504 = vld [vmem:[%s2660 + $0x10] sm:$0xff]
    %v5505 = vld [vmem:[%s2660 + $0x18] sm:$0xff]
    %v5506 = vld [vmem:[%s2665] sm:$0x1]
    %v5508 = vperm.slane %v5506, 0
    %v5511 = vsel %vm119, %v5499, 0
    %v5514 = vsel %vm119, %v5500, 0
    %v5517 = vsel %vm119, %v5501, 0
    %5519 = vmatpush.msra.mxu0 0.0
    %5520 = vmatpush.msra.mxu0 0.0
    %5521 = vmatpush.msra.mxu0 0.0
    %5522 = vmatpush.msra.mxu0 0.0
    %5523 = vmatpush.msra.mxu0 0.0
    %5524 = vmatpush.msra.mxu0 0.0
    %5525 = vmatpush.msra.mxu0 0.0
    %5526 = vmatpush.msra.mxu0 0.0
    %5527 = vmatpush.msra.mxu0 0.0
    %5528 = vmatpush.msra.mxu0 0.0
    %5529 = vmatpush.msra.mxu0 0.0
    %5530 = vmatpush.msra.mxu0 0.0
    %5531 = vmatpush.msra.mxu0 %v5505
    %5532 = vmatpush.msra.mxu0 %v5504
    %5533 = vmatpush.msra.mxu0 %v5503
    %5534 = vmatpush.msra.mxu0 %v5502
    %5535 = vmatmul.f32.gmra.mxu0 %v5511
    %v5536 = vpop.f32.mrf.mxu0
    %v5537 = vadd.f32 %v5508, %v5536
    %5538 = vmatmul.f32.gmra.mxu0 %v5514
    %v5539 = vpop.f32.mrf.mxu0
    %v5540 = vadd.f32 %v5508, %v5539
    %5541 = vmatmul.f32.gmra.mxu0 %v5517
    %v5542 = vpop.f32.mrf.mxu0
    %v5543 = vadd.f32 %v5508, %v5542
    %5544 = vdwg.mxu0
    %v5545 = vadd.f32 %v4443, %v5537
    %v5546 = vadd.f32 %v4444, %v5540
    %v5547 = vadd.f32 %v4445, %v5543
    %v5548 = vld [vmem:[%s2708] sm:$0x1]
    %v5549 = vld [vmem:[%s2710] sm:$0x1]
    %v5550 = vsel %vm119, %v5545, 0.0
    %5551 = vadd.xlane.f32.xlu0 %v5550
    %v5552 = vpop.xlane.xlu0 %5551
    %v5553 = vsel %vm119, %v5546, 0.0
    %5554 = vadd.xlane.f32.xlu0 %v5553
    %v5555 = vpop.xlane.xlu0 %5554
    %v5556 = vsel %vm126, %v5547, 0.0
    %5557 = vadd.xlane.f32.xlu0 %v5556
    %v5558 = vpop.xlane.xlu0 %5557
    %v5559 = vmul.f32 %v5552, %v136
    %v5560 = vmul.f32 %v5555, %v136
    %v5561 = vmul.f32 %v5558, %v136
    %v5562 = vmul.f32 %v5545, %v5545
    %v5563 = vmul.f32 %v5546, %v5546
    %v5564 = vmul.f32 %v5547, %v5547
    %v5565 = vsel %vm119, %v5562, 0.0
    %5566 = vadd.xlane.f32.xlu0 %v5565
    %v5567 = vpop.xlane.xlu0 %5566
    %v5568 = vsel %vm119, %v5563, 0.0
    %5569 = vadd.xlane.f32.xlu0 %v5568
    %v5570 = vpop.xlane.xlu0 %5569
    %v5571 = vsel %vm126, %v5564, 0.0
    %5572 = vadd.xlane.f32.xlu0 %v5571
    %v5573 = vpop.xlane.xlu0 %5572
    %v5574 = vmul.f32 %v5567, %v136
    %v5575 = vmul.f32 %v5570, %v136
    %v5576 = vmul.f32 %v5573, %v136
    %v5577 = vmul.f32 %v5559, %v5559
    %v5578 = vmul.f32 %v5560, %v5560
    %v5579 = vmul.f32 %v5561, %v5561
    %v5580 = vsub.f32 %v5574, %v5577
    %v5581 = vsub.f32 %v5575, %v5578
    %v5582 = vsub.f32 %v5576, %v5579
    %v5583 = vsub.f32 %v5545, %v5559
    %v5584 = vsub.f32 %v5546, %v5560
    %v5585 = vsub.f32 %v5547, %v5561
    %v5586 = vadd.f32 %v5580, 1e-06
    %v5587 = vadd.f32 %v5581, 1e-06
    %v5588 = vadd.f32 %v5582, 1e-06
    %v5589 = vrsqrt.pop %v5586
    %v5590 = vmul.f32 %v5589, %v5586
    %v5591 = vmul.f32 %v5590, %v5589
    %v5592 = vmul.f32 0.5, %v5591
    %v5593 = vsub.f32 1.5, %v5592
    %v5594 = vmul.f32 %v5589, %v5593
    %vm5595 = vweird.f32 %v5586
    %vm5596 = vweird.f32 %v5589
    %vm5597 = vmor %vm5595, %vm5596
    %v5598 = vsel %vm5597, %v5589, %v5594
    %v5599 = vrsqrt.pop %v5587
    %v5600 = vmul.f32 %v5599, %v5587
    %v5601 = vmul.f32 %v5600, %v5599
    %v5602 = vmul.f32 0.5, %v5601
    %v5603 = vsub.f32 1.5, %v5602
    %v5604 = vmul.f32 %v5599, %v5603
    %vm5605 = vweird.f32 %v5587
    %vm5606 = vweird.f32 %v5599
    %vm5607 = vmor %vm5605, %vm5606
    %v5608 = vsel %vm5607, %v5599, %v5604
    %v5609 = vrsqrt.pop %v5588
    %v5610 = vmul.f32 %v5609, %v5588
    %v5611 = vmul.f32 %v5610, %v5609
    %v5612 = vmul.f32 0.5, %v5611
    %v5613 = vsub.f32 1.5, %v5612
    %v5614 = vmul.f32 %v5609, %v5613
    %vm5615 = vweird.f32 %v5588
    %vm5616 = vweird.f32 %v5609
    %vm5617 = vmor %vm5615, %vm5616
    %v5618 = vsel %vm5617, %v5609, %v5614
    %v5619 = vmul.f32 %v5583, %v5598
    %v5620 = vmul.f32 %v5584, %v5608
    %v5621 = vmul.f32 %v5585, %v5618
    %v5623 = vperm.slane %v5548, 0
    %v5625 = vmul.f32 %v5619, %v5623
    %v5626 = vmul.f32 %v5620, %v5623
    %v5627 = vmul.f32 %v5621, %v5623
    %v5629 = vperm.slane %v5549, 0
    %v5631 = vadd.f32 %v5625, %v5629
    %v5632 = vadd.f32 %v5626, %v5629
    %v5633 = vadd.f32 %v5627, %v5629
    %v5634 = vld [vmem:[%s2796] sm:$0xff]
    %v5635 = vld [vmem:[%s2796 + $0x8] sm:$0xff]
    %v5636 = vld [vmem:[%s2796 + $0x10] sm:$0xff]
    %v5637 = vld [vmem:[%s2796 + $0x18] sm:$0xff]
    %v5638 = vld [vmem:[%s2801] sm:$0x1]
    %v5640 = vperm.slane %v5638, 0
    %v5643 = vsel %vm119, %v5631, 0
    %v5646 = vsel %vm119, %v5632, 0
    %v5649 = vsel %vm119, %v5633, 0
    %5651 = vmatpush.msra.mxu0 0.0
    %5652 = vmatpush.msra.mxu0 0.0
    %5653 = vmatpush.msra.mxu0 0.0
    %5654 = vmatpush.msra.mxu0 0.0
    %5655 = vmatpush.msra.mxu0 0.0
    %5656 = vmatpush.msra.mxu0 0.0
    %5657 = vmatpush.msra.mxu0 0.0
    %5658 = vmatpush.msra.mxu0 0.0
    %5659 = vmatpush.msra.mxu0 0.0
    %5660 = vmatpush.msra.mxu0 0.0
    %5661 = vmatpush.msra.mxu0 0.0
    %5662 = vmatpush.msra.mxu0 0.0
    %5663 = vmatpush.msra.mxu0 %v5637
    %5664 = vmatpush.msra.mxu0 %v5636
    %5665 = vmatpush.msra.mxu0 %v5635
    %5666 = vmatpush.msra.mxu0 %v5634
    %5667 = vmatmul.f32.gmra.mxu0 %v5643
    %v5668 = vpop.f32.mrf.mxu0
    %v5669 = vadd.f32 %v5640, %v5668
    %5670 = vmatmul.f32.gmra.mxu0 %v5646
    %v5671 = vpop.f32.mrf.mxu0
    %v5672 = vadd.f32 %v5640, %v5671
    %5673 = vmatmul.f32.gmra.mxu0 %v5649
    %v5674 = vpop.f32.mrf.mxu0
    %v5675 = vadd.f32 %v5640, %v5674
    %5676 = vdwg.mxu0
    %v5677 = vmul.f32 %v5669, %v5669
    %v5678 = vmul.f32 %v5672, %v5672
    %v5679 = vmul.f32 %v5675, %v5675
    %v5680 = vmul.f32 %v5669, %v5677
    %v5681 = vmul.f32 %v5672, %v5678
    %v5682 = vmul.f32 %v5675, %v5679
    %v5683 = vmul.f32 %v5680, 0.044715
    %v5684 = vmul.f32 %v5681, 0.044715
    %v5685 = vmul.f32 %v5682, 0.044715
    %v5686 = vadd.f32 %v5669, %v5683
    %v5687 = vadd.f32 %v5672, %v5684
    %v5688 = vadd.f32 %v5675, %v5685
    %v5689 = vmul.f32 %v5686, 0.7978846
    %v5690 = vmul.f32 %v5687, 0.7978846
    %v5691 = vmul.f32 %v5688, 0.7978846
    %v5692 = vtanh.pop %v5689
    %v5693 = vtanh.pop %v5690
    %v5694 = vtanh.pop %v5691
    %v5695 = vadd.f32 %v5692, 1.0
    %v5696 = vadd.f32 %v5693, 1.0
    %v5697 = vadd.f32 %v5694, 1.0
    %v5698 = vmul.f32 %v5695, 0.5
    %v5699 = vmul.f32 %v5696, 0.5
    %v5700 = vmul.f32 %v5697, 0.5
    %v5701 = vmul.f32 %v5669, %v5698
    %v5702 = vmul.f32 %v5672, %v5699
    %v5703 = vmul.f32 %v5675, %v5700
    %v5704 = vld [vmem:[%s2868] sm:$0xff]
    %v5705 = vld [vmem:[%s2868 + $0x8] sm:$0xff]
    %v5706 = vld [vmem:[%s2868 + $0x10] sm:$0xff]
    %v5707 = vld [vmem:[%s2868 + $0x18] sm:$0xff]
    %v5708 = vld [vmem:[%s2868 + $0x20] sm:$0xff]
    %v5709 = vld [vmem:[%s2868 + $0x28] sm:$0xff]
    %v5710 = vld [vmem:[%s2868 + $0x30] sm:$0xff]
    %v5711 = vld [vmem:[%s2868 + $0x38] sm:$0xff]
    %v5712 = vld [vmem:[%s2877] sm:$0x1]
    %v5714 = vperm.slane %v5712, 0
    %v5717 = vsel %vm1561, %v5701, 0
    %v5720 = vsel %vm1561, %v5702, 0
    %v5723 = vsel %vm1561, %v5703, 0
    %5725 = vmatpush.msra.mxu0 0.0
    %5726 = vmatpush.msra.mxu0 0.0
    %5727 = vmatpush.msra.mxu0 0.0
    %5728 = vmatpush.msra.mxu0 0.0
    %5729 = vmatpush.msra.mxu0 0.0
    %5730 = vmatpush.msra.mxu0 0.0
    %5731 = vmatpush.msra.mxu0 0.0
    %5732 = vmatpush.msra.mxu0 0.0
    %5733 = vmatpush.msra.mxu0 %v5711
    %5734 = vmatpush.msra.mxu0 %v5710
    %5735 = vmatpush.msra.mxu0 %v5709
    %5736 = vmatpush.msra.mxu0 %v5708
    %5737 = vmatpush.msra.mxu0 %v5707
    %5738 = vmatpush.msra.mxu0 %v5706
    %5739 = vmatpush.msra.mxu0 %v5705
    %5740 = vmatpush.msra.mxu0 %v5704
    %5741 = vmatmul.f32.gmra.mxu0 %v5717
    %v5742 = vpop.f32.mrf.mxu0
    %v5743 = vadd.f32 %v5714, %v5742
    %5744 = vmatmul.f32.gmra.mxu0 %v5720
    %v5745 = vpop.f32.mrf.mxu0
    %5746 = vmatmul.f32.gmra.mxu0 %v5723
    %v5747 = vpop.f32.mrf.mxu0
    %5748 = vdwg.mxu0
    %v5749 = vadd.f32 %v5545, %v5743
    %v5750 = vld [vmem:[%s15] sm:$0x1]
    %v5751 = vld [vmem:[%s16] sm:$0x1]
    %v5752 = vsel %vm119, %v5749, 0.0
    %5753 = vadd.xlane.f32.xlu0 %v5752
    %v5754 = vpop.xlane.xlu0 %5753
    %v5755 = vmul.f32 %v5754, %v136
    %v5756 = vmul.f32 %v5749, %v5749
    %v5757 = vsel %vm119, %v5756, 0.0
    %5758 = vadd.xlane.f32.xlu0 %v5757
    %v5759 = vpop.xlane.xlu0 %5758
    %v5760 = vmul.f32 %v5759, %v136
    %v5761 = vmul.f32 %v5755, %v5755
    %v5762 = vsub.f32 %v5760, %v5761
    %v5763 = vsub.f32 %v5749, %v5755
    %v5764 = vadd.f32 %v5762, 1e-06
    %v5765 = vrsqrt.pop %v5764
    %v5766 = vmul.f32 %v5765, %v5764
    %v5767 = vmul.f32 %v5766, %v5765
    %v5768 = vmul.f32 0.5, %v5767
    %v5769 = vsub.f32 1.5, %v5768
    %v5770 = vmul.f32 %v5765, %v5769
    %vm5771 = vweird.f32 %v5764
    %vm5772 = vweird.f32 %v5765
    %vm5773 = vmor %vm5771, %vm5772
    %v5774 = vsel %vm5773, %v5765, %v5770
    %v5775 = vmul.f32 %v5763, %v5774
    %v5777 = vperm.slane %v5750, 0
    %v5779 = vmul.f32 %v5775, %v5777
    %v5781 = vperm.slane %v5751, 0
    %v5783 = vadd.f32 %v5779, %v5781
    %5784 = vst.msk [vmem:[#allocation2 + $0x1] sm:$0x1] %vm126, %v5783
    // Predicated region
    $region86: #{vit_image_encoder_forward.1} parent=1 // pred_check
      _
    $region87: #{vit_image_encoder_forward.1} parent=1 // pred_check_branch
      %5786 = sbr.rel (0) target = $region89
    $region88: #{vit_image_encoder_forward.1} parent=1 // pred_region
      %5788 = vsyncadd [#allocation3], 0
      %s5790 = sshll.u32 [#allocation2], 4
      %s5791 = int_to_ptr.vmem [resolvable:$true] %s5790
      %s5792 = sshll.u32 %s21, 4
      %s5793 = int_to_ptr.hbm [resolvable:$true] %s5792
      %5795 = dma.vmem_to_hbm [thread:$0]  %s5791, 32, %s5793, [#allocation3]
    $region89: #{vit_image_encoder_forward.1} parent=1 // pred_fallthru
      _
    // Predicated region
    $region90: #{vit_image_encoder_forward.1} parent=1 // pred_check
      _
    $region91: #{vit_image_encoder_forward.1} parent=1 // pred_check_branch
      %5797 = sbr.rel (0) target = $region93
    $region92: #{vit_image_encoder_forward.1} parent=1 // pred_region
      %5799 = dma.done [#allocation3], 32
    $region93: #{vit_image_encoder_forward.1} parent=1 // pred_fallthru
      _
    %5800 = vsyncpa [#allocation3], 1

</llo_original>
